<compile_context>
chip_gen: v7x
topology: tpu7x:2x2x1
jax: 0.10.0
libtpu: 0.0.40
codegen_flags: <defaults>
</compile_context>

<pallas_src>
import numpy as np
import jax
import jax.numpy as jnp
from jax import lax
from jax.experimental import pallas as pl
from jax.experimental.pallas import tpu as pltpu

SR_FACTOR = 4
DS_FACTOR = 1.0 / (2.0 * SR_FACTOR)
BOUNDARY_IGNORE = None        # reference default -> no crop
BI = 5                        # crop used inside sca_utils.match_colors
COLOR_ERR_THRESH = 20.0
MC_SIGMA = 1.5
MC_KSZ = int(4 * MC_SIGMA + 1)   # 7
SSIM_WIN = 11
SSIM_SIGMA = 1.5
LANE = 128                    # lane-dense padding width for small outputs
CROP_PAD = 8                  # per-channel sublane slab for the cropped gt output


# -----------------------------------------------------------------------------
# deterministic trace-time constants (numpy): gaussian band matrices & bilinear
# interpolation matrices (reflect padding / torch coordinate rules folded in).
# -----------------------------------------------------------------------------
def gaussian_1d_np(ksz, sigma):
    x = np.arange(ksz, dtype=np.float64) - ksz // 2
    g = np.exp(-(x ** 2) / (2.0 * sigma ** 2))
    return g / g.sum()


def gaussian_band_matrix_np(n, ksz, sigma):
    """(n, n) matrix G so that G @ x is a 'same' 1-D gaussian conv over rows of x with
    reflect_101 (PyTorch 'reflect') boundaries.  Column conv = x @ G^T."""
    g = gaussian_1d_np(ksz, sigma)
    half = ksz // 2
    B = np.zeros((n, n), dtype=np.float64)
    for i in range(n):
        for t in range(ksz):
            j = i + t - half
            if j < 0:
                j = -j
            if j > n - 1:
                j = 2 * (n - 1) - j
            B[i, j] += g[t]
    return B.astype(np.float32)


def bilinear_weight_matrix_np(n_in, n_out, align_corners):
    """Interp matrix W (n_out, n_in) reproducing torch bilinear F.interpolate on one axis."""
    if align_corners and n_out > 1:
        src = np.arange(n_out, dtype=np.float64) * (n_in - 1) / (n_out - 1)
    else:
        src = (np.arange(n_out, dtype=np.float64) + 0.5) * (n_in / n_out) - 0.5
        src = np.maximum(src, 0.0)
    i0 = np.clip(np.floor(src).astype(np.int64), 0, n_in - 1)
    i1 = np.minimum(i0 + 1, n_in - 1)
    w1 = src - i0
    w0 = 1.0 - w1
    W = np.zeros((n_out, n_in), dtype=np.float32)
    W[np.arange(n_out), i0] += w0
    W[np.arange(n_out), i1] += w1
    return W


def pad_cols_np(m, ncols):
    """Zero-pad a matrix along columns to `ncols` (lane-dense matmul outputs)."""
    out = np.zeros((m.shape[0], ncols), dtype=np.float32)
    out[:, :m.shape[1]] = m
    return out


def block_diag_rows_np(block, n_blocks, row_pad):
    """Block-diagonal stack of `block` (r, c) repeated n_blocks times, each block's rows
    padded to `row_pad` so the output sublane layout is (n_blocks * row_pad, n_blocks * c)."""
    r, c = block.shape
    out = np.zeros((n_blocks * row_pad, n_blocks * c), dtype=np.float32)
    for i in range(n_blocks):
        out[i * row_pad:i * row_pad + r, i * c:(i + 1) * c] = block
    return out


# -----------------------------------------------------------------------------
# Pallas kernel A: fused downsample(gt, flow) + 7x7 smooth + crop   (grid over B)
# All per-channel work is batched into single MXU matmuls; outputs lane-dense.
# -----------------------------------------------------------------------------
def _prep_kernel(gt_ref, fl_ref, wrd_ref, wcp_ref, bdg_ref, gcp_ref,
                 flds_ref, rcrop_ref):
    H, W = gt_ref.shape[2], gt_ref.shape[3]
    Hd = wrd_ref.shape[0]

    # 2 flow + 3 gt channels stacked along lanes -> one lane-dense H-contraction matmul
    # (Hd x H x 5W), then restack along sublanes for one W-contraction matmul against the
    # zero-padded (W, 128) interpolation matrix so the result is already lane-dense.
    x = jnp.concatenate([fl_ref[0, 0], fl_ref[0, 1],
                         gt_ref[0, 0], gt_ref[0, 1], gt_ref[0, 2]], axis=1)      # (H, 5W)
    yh = jnp.dot(wrd_ref[...], x, preferred_element_type=jnp.float32)            # (Hd, 5W)
    ys = jnp.concatenate([yh[:, c * W:(c + 1) * W] for c in range(5)], axis=0)   # (5Hd, W)
    ds = jnp.dot(ys, wcp_ref[...], preferred_element_type=jnp.float32)           # (5Hd, 128)

    # flow_ds: channels stacked along sublanes; lanes >= Wd already zero (padded matrix).
    flds_ref[0] = DS_FACTOR * ds[:2 * Hd]                                        # (2Hd, 128)

    # gt channels: 7x7 gaussian smooth (reflect folded) + bi=5 crop.
    # Row pass: block-diagonal (3*CROP_PAD, 3*Hd) band matrix with the row-crop folded in,
    # keeping all 3 channels in a single MXU matmul with channels along sublanes.
    # Column pass: zero-padded (128, 128) band matrix with the column-crop folded in ->
    # the result slab is lane-dense and written directly.
    dg = ds[2 * Hd:]                                                             # (3Hd, 128)
    rs = jnp.dot(bdg_ref[...], dg, preferred_element_type=jnp.float32)           # (3*CP, 128)
    rcrop_ref[0] = jnp.dot(rs, gcp_ref[...], preferred_element_type=jnp.float32)


def pallas_prep(gt, flow, wrd, wcp, bdg, gcp, Wd, hc, wc):
    B, _, H, W = gt.shape
    Hd = wrd.shape[0]
    flds_pad, rcrop_pad = pl.pallas_call(
        _prep_kernel,
        grid=(B,),
        out_shape=(jax.ShapeDtypeStruct((B, 2 * Hd, LANE), jnp.float32),
                   jax.ShapeDtypeStruct((B, 3 * CROP_PAD, LANE), jnp.float32)),
        in_specs=[
            pl.BlockSpec((1, 3, H, W), lambda b: (b, 0, 0, 0)),
            pl.BlockSpec((1, 2, H, W), lambda b: (b, 0, 0, 0)),
            pl.BlockSpec((Hd, H), lambda b: (0, 0)),
            pl.BlockSpec((W, LANE), lambda b: (0, 0)),
            pl.BlockSpec((3 * CROP_PAD, 3 * Hd), lambda b: (0, 0)),
            pl.BlockSpec((LANE, LANE), lambda b: (0, 0)),
        ],
        out_specs=(
            pl.BlockSpec((1, 2 * Hd, LANE), lambda b: (b, 0, 0)),
            pl.BlockSpec((1, 3 * CROP_PAD, LANE), lambda b: (b, 0, 0)),
        ),
        compiler_params=pltpu.CompilerParams(dimension_semantics=("parallel",)),
    )(gt.astype(jnp.float32), flow.astype(jnp.float32), wrd, wcp, bdg, gcp)
    flow_ds = flds_pad[:, :, :Wd].reshape(B, 2, Hd, Wd)
    r_crop = rcrop_pad.reshape(B, 3, CROP_PAD, LANE)[:, :, :hc, :wc]
    return flow_ds, r_crop


# -----------------------------------------------------------------------------
# query-branch 7x7 smooth + bi=5 crop of the warped base frame: plain JAX.
# (B*3 matmuls of 16x16 are far below Pallas per-step overhead; XLA fuses this
#  with the adjacent warp gather / lstsq math.)
# -----------------------------------------------------------------------------
def smooth_crop_ref(q, gdrc, gdcc):
    return jnp.einsum('ih,bchw,wj->bcij', gdrc, q, gdcc)


# -----------------------------------------------------------------------------
# Pallas kernel C (hot path): colour transform + valid upsample + 11x11 SSIM +
# masked reduction, one full-resolution image per grid step        (grid over B)
# -----------------------------------------------------------------------------
def _ssim_kernel(c_ref, pw_ref, gt0_ref, vpad_ref, wur_ref, wuct_ref,
                 sr_ref, sct_ref, out_ref):
    b = pl.program_id(0)
    H, W = gt0_ref.shape[1], gt0_ref.shape[2]

    # valid mask: bilinear upsample (align_corners=False) via two matmuls, then > 0.9
    v = jnp.dot(jnp.dot(wur_ref[...], vpad_ref[0], preferred_element_type=jnp.float32),
                wuct_ref[...], preferred_element_type=jnp.float32)
    valid = (v > 0.9).astype(jnp.float32)

    # channel 0 of the colour-matched warped prediction: 3 scalar-broadcast FMAs (VPU),
    # colour weights read from SMEM (no per-step (3,3) DMA, no K=3 MXU matmul).
    c0 = c_ref[b, 0]
    c1 = c_ref[b, 1]
    c2 = c_ref[b, 2]
    img1 = (c0 * pw_ref[0, 0] + c1 * pw_ref[0, 1] + c2 * pw_ref[0, 2]) * 255.0
    img2 = gt0_ref[0] * 255.0

    # All five 11x11 gaussian smoothing passes batched into TWO large MXU matmuls:
    # row pass with the 5 planes tiled along lanes (H x H x 5W, lane-dense N), then
    # restacked along sublanes (aligned 128-lane slices) for the column pass (5H x W x W).
    x5 = jnp.concatenate([img1, img2, img1 * img1, img2 * img2, img1 * img2],
                         axis=1)                                                  # (H, 5W)
    r5 = jnp.dot(sr_ref[...], x5, preferred_element_type=jnp.float32)             # (H, 5W)
    y5 = jnp.concatenate([r5[:, i * W:(i + 1) * W] for i in range(5)], axis=0)    # (5H, W)
    s5 = jnp.dot(y5, sct_ref[...], preferred_element_type=jnp.float32)            # (5H, W)

    mu1, mu2 = s5[0 * H:1 * H], s5[1 * H:2 * H]
    e11, e22, e12 = s5[2 * H:3 * H], s5[3 * H:4 * H], s5[4 * H:5 * H]
    mu1_sq = mu1 * mu1
    mu2_sq = mu2 * mu2
    mu1_mu2 = mu1 * mu2
    sigma1_sq = e11 - mu1_sq
    sigma2_sq = e22 - mu2_sq
    sigma12 = e12 - mu1_mu2

    C1 = (0.01 * 255.0) ** 2
    C2 = (0.03 * 255.0) ** 2
    numer = (2.0 * mu1_mu2 + C1) * (2.0 * sigma12 + C2)
    denom = (mu1_sq + mu2_sq + C1) * (sigma1_sq + sigma2_sq + C2)
    # divide -> EUP approx reciprocal (frees VALU slots; loss-level tolerance is fine)
    ssim_map = numer * pl.reciprocal(denom, approx=True)

    num = jnp.sum(ssim_map * valid)
    den = jnp.sum(valid)
    lane = lax.broadcasted_iota(jnp.int32, (1, 128), 1)
    out_ref[0] = jnp.where(lane == 0, num, jnp.where(lane == 1, den, 0.0))


def pallas_masked_ssim(pred_warped, gt0, valid_pad, c_col, wur, wuct, sr, sct):
    B, _, H, W = pred_warped.shape
    Hd, Wd = valid_pad.shape[1], valid_pad.shape[2]
    # TODO(synk): at production resolutions (>=512) add an H-strip "parallel" grid axis
    # (slice sr rows, keep full W) so v7x's 2 TensorCores stay busy for any B and the
    # ~14 full-res intermediates fit its 64 MiB VMEM; at 128x128 one image per step fits
    # comfortably, so we only budget VMEM explicitly here.
    out = pl.pallas_call(
        _ssim_kernel,
        grid=(B,),
        out_shape=jax.ShapeDtypeStruct((B, 1, 128), jnp.float32),
        in_specs=[
            pl.BlockSpec(memory_space=pltpu.MemorySpace.SMEM),      # c_col (B, 3) scalars
            pl.BlockSpec((1, 3, H, W), lambda b: (b, 0, 0, 0)),
            pl.BlockSpec((1, H, W), lambda b: (b, 0, 0)),
            pl.BlockSpec((1, Hd, Wd), lambda b: (b, 0, 0)),
            pl.BlockSpec((H, Hd), lambda b: (0, 0)),
            pl.BlockSpec((Wd, W), lambda b: (0, 0)),
            pl.BlockSpec((H, H), lambda b: (0, 0)),
            pl.BlockSpec((W, W), lambda b: (0, 0)),
        ],
        out_specs=pl.BlockSpec((1, 1, 128), lambda b: (b, 0, 0)),   # lane-dense output
        compiler_params=pltpu.CompilerParams(
            dimension_semantics=("parallel",),
            vmem_limit_bytes=32 * 1024 * 1024),
    )(c_col.astype(jnp.float32), pred_warped.astype(jnp.float32),
      gt0.astype(jnp.float32), valid_pad.astype(jnp.float32), wur, wuct, sr, sct)
    return out[:, 0, 0], out[:, 0, 1]


# -----------------------------------------------------------------------------
# plain-JAX glue: warp (grid_sample gather) and alignment-net stand-in
# -----------------------------------------------------------------------------
def warp_single(img, flow):
    """torch warp(): grid_sample(bilinear, padding_mode='zeros', align_corners=False)
    at the pixel-centre grid + flow, single (C,H,W) image."""
    # TODO(synk): the data-dependent bilinear gather of grid_sample has no clean
    # BlockSpec expression for an unbounded flow; it stays in plain JAX (XLA gather).
    C, H, W = img.shape
    x = jnp.arange(W, dtype=jnp.float32)[None, :] + flow[0]
    y = jnp.arange(H, dtype=jnp.float32)[:, None] + flow[1]
    x0 = jnp.floor(x)
    y0 = jnp.floor(y)
    wx1 = x - x0
    wy1 = y - y0

    def tap(yy, xx, wgt):
        inb = (xx >= 0) & (xx <= W - 1) & (yy >= 0) & (yy <= H - 1)
        xi = jnp.clip(xx, 0, W - 1).astype(jnp.int32)
        yi = jnp.clip(yy, 0, H - 1).astype(jnp.int32)
        return img[:, yi, xi] * (wgt * inb.astype(jnp.float32))[None]

    return (tap(y0, x0, (1 - wy1) * (1 - wx1)) + tap(y0, x0 + 1, (1 - wy1) * wx1)
            + tap(y0 + 1, x0, wy1 * (1 - wx1)) + tap(y0 + 1, x0 + 1, wy1 * wx1))


def alignment_net(pred_n, gt_n, w):
    # TODO(synk): the upstream alignment_net (external flow network, e.g. PWC-Net) is
    # injected and unspecified; deterministic stand-in = fixed-weight 3x3 conv -> small flow.
    x = jnp.concatenate([pred_n, gt_n], axis=1)          # (B, 6, H, W)
    f = lax.conv_general_dilated(x, w, window_strides=(1, 1), padding="SAME",
                                 dimension_numbers=("NCHW", "OIHW", "NCHW"))
    return jnp.tanh(f) * 1.5


# -----------------------------------------------------------------------------
# AlignedSSIM_loss forward: batched, two Pallas launches total
# -----------------------------------------------------------------------------
def aligned_ssim_loss(pred, gt, burst, align_w, consts):
    B, _, H, W = pred.shape
    Hd, Wd, hc, wc = consts["Hd"], consts["Wd"], consts["hc"], consts["wc"]

    # per-sample normalisation + flow (torch.no_grad in the reference)
    pred_n = pred / (jnp.max(pred, axis=(1, 2, 3), keepdims=True) + 1e-6)
    gt_n = gt / (jnp.max(gt, axis=(1, 2, 3), keepdims=True) + 1e-6)
    flow = lax.stop_gradient(alignment_net(pred_n, gt_n, align_w))

    pred_warped = jax.vmap(warp_single)(pred.astype(jnp.float32), flow)

    # Kernel A: downsample gt & flow, smooth + crop reference branch of match_colors
    flow_ds, r_crop = pallas_prep(gt, flow, consts["wrd"], consts["wcp"],
                                  consts["bdg"], consts["gcp"], Wd, hc, wc)

    burst_0 = burst[:, 0][:, jnp.array([0, 1, 3])].astype(jnp.float32)   # (B, 3, Hd, Wd)
    burst_0_warped = jax.vmap(warp_single)(burst_0, flow_ds)

    # query branch: smooth + crop (plain JAX, crop folded into the band matrices)
    q_crop = smooth_crop_ref(burst_0_warped, consts["gdrc"], consts["gdcc"])

    # tiny 3x3 colour fit (torch.linalg.lstsq equivalent) + validity mask, plain JAX
    r2 = r_crop.reshape(B, 3, hc * wc)
    q2 = q_crop.reshape(B, 3, hc * wc)

    def _fit(q2_b, r2_b):
        return jnp.linalg.lstsq(q2_b.T, r2_b.T)[0]       # (3, 3)

    c_mat = jax.vmap(_fit)(q2, r2)                       # (B, 3, 3)
    q_conv = jnp.einsum('bkc,bkn->bcn', c_mat, q2)
    err = jnp.sqrt(jnp.sum(((q_conv - r2) * 255.0) ** 2, axis=1)).reshape(B, hc, wc)
    valid_small = (err < COLOR_ERR_THRESH).astype(jnp.float32)
    valid_pad = jnp.pad(valid_small, ((0, 0), (BI, BI), (BI, BI)))       # zeros, -> (B,Hd,Wd)
    c_col = c_mat[:, :, 0]                               # channel-0 colour weights (B, 3)

    # Kernel C: boundary_ignore is None -> no crop; SSIM on channel 0 only.
    # TODO(synk): the exact numpy cal_ssim is external; 'same' reflect windowing
    # (full-size ssim_map, elem_ratio = 1) is assumed so the valid-mask multiply is defined.
    gt0 = gt[:, 0].astype(jnp.float32)
    num, den = pallas_masked_ssim(pred_warped, gt0, valid_pad, c_col,
                                  consts["wur"], consts["wuct"], consts["sr"], consts["sct"])

    elem_ratio = float(H * W) / float(H * W)             # ssim_map.numel() / valid.numel()
    ssim_val = num / (den * elem_ratio + 1e-12)
    return jnp.mean(1.0 - ssim_val)


# -----------------------------------------------------------------------------
if __name__ == "__main__":
    B, H, W = 2, 128, 128
    Hd, Wd = int(H * DS_FACTOR), int(W * DS_FACTOR)
    hc, wc = Hd - 2 * BI, Wd - 2 * BI
    h, w = H // (2 * SR_FACTOR), W // (2 * SR_FACTOR)    # burst raw resolution (== Hd, Wd)

    key = jax.random.PRNGKey(0)
    k1, k2, k3, k4, k5 = jax.random.split(key, 5)

    gt = jax.random.uniform(k1, (B, 3, H, W), jnp.float32)
    pred = jnp.clip(gt + 0.05 * jax.random.normal(k2, (B, 3, H, W), jnp.float32), 0.0, 1.0)

    # burst frame 0: RGGB-like raw roughly consistent with gt so the colour fit is meaningful
    gt_lr = gt.reshape(B, 3, h, H // h, w, W // w).mean(axis=(3, 5))
    b013 = jnp.clip(gt_lr + 0.02 * jax.random.normal(k3, (B, 3, h, w), jnp.float32), 0.0, 1.0)
    burst = jax.random.uniform(k4, (B, 2, 4, h, w), jnp.float32)
    burst = burst.at[:, 0, 0].set(b013[:, 0])
    burst = burst.at[:, 0, 1].set(b013[:, 1])
    burst = burst.at[:, 0, 2].set(b013[:, 1])
    burst = burst.at[:, 0, 3].set(b013[:, 2])

    align_w = 0.05 * jax.random.normal(k5, (2, 6, 3, 3), jnp.float32)

    # trace-time constant matrices (interpolation + gaussian band, reflect + crop folded)
    # TODO(synk): downsample uses align_corners=True (matches F.interpolate in the reference),
    # the valid-mask upsample align_corners=False (sca_utils.match_colors default).
    wrd = jnp.asarray(bilinear_weight_matrix_np(H, Hd, align_corners=True))        # (Hd, H)
    wcdt_np = bilinear_weight_matrix_np(W, Wd, align_corners=True).T                # (W, Wd)
    wcp = jnp.asarray(pad_cols_np(wcdt_np, LANE))                                   # (W, 128)
    gdr_np = gaussian_band_matrix_np(Hd, MC_KSZ, MC_SIGMA)                          # (Hd, Hd)
    gdct_np = gaussian_band_matrix_np(Wd, MC_KSZ, MC_SIGMA).T                       # (Wd, Wd)
    gdrc_np = gdr_np[BI:-BI, :]                                                     # (hc, Hd)
    gdcc_np = gdct_np[:, BI:-BI]                                                    # (Wd, wc)
    bdg = jnp.asarray(block_diag_rows_np(gdrc_np, 3, CROP_PAD))                     # (24, 3Hd)
    gcp_np = np.zeros((LANE, LANE), dtype=np.float32)
    gcp_np[:Wd, :wc] = gdcc_np
    gcp = jnp.asarray(gcp_np)                                                       # (128,128)
    gdrc = jnp.asarray(gdrc_np)
    gdcc = jnp.asarray(gdcc_np)
    wur = jnp.asarray(bilinear_weight_matrix_np(Hd, H, align_corners=False))        # (H, Hd)
    wuct = jnp.asarray(bilinear_weight_matrix_np(Wd, W, align_corners=False).T)     # (Wd, W)
    sr = jnp.asarray(gaussian_band_matrix_np(H, SSIM_WIN, SSIM_SIGMA))              # (H, H)
    sct = jnp.asarray(gaussian_band_matrix_np(W, SSIM_WIN, SSIM_SIGMA).T)           # (W, W)

    consts = dict(wrd=wrd, wcp=wcp, bdg=bdg, gcp=gcp, gdrc=gdrc, gdcc=gdcc,
                  wur=wur, wuct=wuct, sr=sr, sct=sct, Hd=Hd, Wd=Wd, hc=hc, wc=wc)

    @jax.jit
    def loss_fn(pred_, gt_, burst_):
        return aligned_ssim_loss(pred_, gt_, burst_, align_w, consts)

    out = loss_fn(pred, gt, burst)
    jax.block_until_ready(out)
    print("KERNEL_OK")
</pallas_src>

<mosaic_0001>
module attributes {stable_mosaic.version = 11 : i64} {
  func.func private @main(%arg0: i32) attributes {dimension_semantics = [#tpu.dimension_semantics<core_parallel>], iteration_bounds = array<i64: 2>, tpu.core_type = #tpu.core_type<sc_scalar_subcore>, window_params = []} {
    return
  }
}

module attributes {stable_mosaic.version = 11 : i64} {
  func.func private @main(%arg0: i32) attributes {dimension_semantics = [#tpu.dimension_semantics<core_parallel>], iteration_bounds = array<i64: 2>, tpu.core_type = #tpu.core_type<sc_scalar_subcore>, window_params = []} {
    return
  }
}

module attributes {stable_mosaic.version = 11 : i64} {
  func.func @_prep_kernel(%arg0: i32, %arg1: memref<1x3x128x128xf32, #tpu.memory_space<vmem>>, %arg2: memref<1x2x128x128xf32, #tpu.memory_space<vmem>>, %arg3: memref<16x128xf32, #tpu.memory_space<vmem>>, %arg4: memref<128x128xf32, #tpu.memory_space<vmem>>, %arg5: memref<24x48xf32, #tpu.memory_space<vmem>>, %arg6: memref<128x128xf32, #tpu.memory_space<vmem>>, %arg7: memref<1x32x128xf32, #tpu.memory_space<vmem>>, %arg8: memref<1x24x128xf32, #tpu.memory_space<vmem>>) attributes {dimension_semantics = [#tpu.dimension_semantics<parallel>], iteration_bounds = array<i64: 2>, scalar_prefetch = 0 : i64, scratch_operands = 0 : i64, tpu.core_type = #tpu.core_type<tc>, window_params = [{transform_indices = @transform_0, window_bounds = array<i64: 1, 3, 128, 128>}, {transform_indices = @transform_1, window_bounds = array<i64: 1, 2, 128, 128>}, {pipeline_mode = #tpu.pipeline_mode<synchronous>, transform_indices = @transform_2, window_bounds = array<i64: 16, 128>}, {pipeline_mode = #tpu.pipeline_mode<synchronous>, transform_indices = @transform_3, window_bounds = array<i64: 128, 128>}, {pipeline_mode = #tpu.pipeline_mode<synchronous>, transform_indices = @transform_4, window_bounds = array<i64: 24, 48>}, {pipeline_mode = #tpu.pipeline_mode<synchronous>, transform_indices = @transform_5, window_bounds = array<i64: 128, 128>}, {transform_indices = @transform_6, window_bounds = array<i64: 1, 32, 128>}, {transform_indices = @transform_7, window_bounds = array<i64: 1, 24, 128>}]} {
    %c0 = arith.constant 0 : index
    %c0_0 = arith.constant 0 : index
    %c0_1 = arith.constant 0 : index
    %c0_2 = arith.constant 0 : index
    %0 = vector.load %arg2[%c0, %c0_0, %c0_1, %c0_2] : memref<1x2x128x128xf32, #tpu.memory_space<vmem>>, vector<1x1x128x128xf32>
    %1 = vector.shape_cast %0 : vector<1x1x128x128xf32> to vector<128x128xf32>
    %c0_3 = arith.constant 0 : index
    %c1 = arith.constant 1 : index
    %c0_4 = arith.constant 0 : index
    %c0_5 = arith.constant 0 : index
    %2 = vector.load %arg2[%c0_3, %c1, %c0_4, %c0_5] : memref<1x2x128x128xf32, #tpu.memory_space<vmem>>, vector<1x1x128x128xf32>
    %3 = vector.shape_cast %2 : vector<1x1x128x128xf32> to vector<128x128xf32>
    %c0_6 = arith.constant 0 : index
    %c0_7 = arith.constant 0 : index
    %c0_8 = arith.constant 0 : index
    %c0_9 = arith.constant 0 : index
    %4 = vector.load %arg1[%c0_6, %c0_7, %c0_8, %c0_9] : memref<1x3x128x128xf32, #tpu.memory_space<vmem>>, vector<1x1x128x128xf32>
    %5 = vector.shape_cast %4 : vector<1x1x128x128xf32> to vector<128x128xf32>
    %c0_10 = arith.constant 0 : index
    %c1_11 = arith.constant 1 : index
    %c0_12 = arith.constant 0 : index
    %c0_13 = arith.constant 0 : index
    %6 = vector.load %arg1[%c0_10, %c1_11, %c0_12, %c0_13] : memref<1x3x128x128xf32, #tpu.memory_space<vmem>>, vector<1x1x128x128xf32>
    %7 = vector.shape_cast %6 : vector<1x1x128x128xf32> to vector<128x128xf32>
    %c0_14 = arith.constant 0 : index
    %c2 = arith.constant 2 : index
    %c0_15 = arith.constant 0 : index
    %c0_16 = arith.constant 0 : index
    %8 = vector.load %arg1[%c0_14, %c2, %c0_15, %c0_16] : memref<1x3x128x128xf32, #tpu.memory_space<vmem>>, vector<1x1x128x128xf32>
    %9 = vector.shape_cast %8 : vector<1x1x128x128xf32> to vector<128x128xf32>
    %10 = tpu.concatenate %1, %3, %5, %7, %9 in 1 : vector<128x128xf32>, vector<128x128xf32>, vector<128x128xf32>, vector<128x128xf32>, vector<128x128xf32> -> vector<128x640xf32>
    %c0_17 = arith.constant 0 : index
    %c0_18 = arith.constant 0 : index
    %11 = vector.load %arg3[%c0_17, %c0_18] : memref<16x128xf32, #tpu.memory_space<vmem>>, vector<16x128xf32>
    %cst = arith.constant dense<0.000000e+00> : vector<16x640xf32>
    %12 = tpu.matmul %11, %10, %cst {dimension_numbers = #tpu.dot_dimension_numbers<[1], [0], [0], [1], [0, 0, 1, 1], [], []>} : vector<16x128xf32>, vector<128x640xf32>, vector<16x640xf32> -> vector<16x640xf32>
    %13 = vector.extract_strided_slice %12 {offsets = [0, 0], sizes = [16, 128], strides = [1, 1]} : vector<16x640xf32> to vector<16x128xf32>
    %14 = vector.extract_strided_slice %12 {offsets = [0, 128], sizes = [16, 128], strides = [1, 1]} : vector<16x640xf32> to vector<16x128xf32>
    %15 = vector.extract_strided_slice %12 {offsets = [0, 256], sizes = [16, 128], strides = [1, 1]} : vector<16x640xf32> to vector<16x128xf32>
    %16 = vector.extract_strided_slice %12 {offsets = [0, 384], sizes = [16, 128], strides = [1, 1]} : vector<16x640xf32> to vector<16x128xf32>
    %17 = vector.extract_strided_slice %12 {offsets = [0, 512], sizes = [16, 128], strides = [1, 1]} : vector<16x640xf32> to vector<16x128xf32>
    %18 = tpu.concatenate %13, %14, %15, %16, %17 in 0 : vector<16x128xf32>, vector<16x128xf32>, vector<16x128xf32>, vector<16x128xf32>, vector<16x128xf32> -> vector<80x128xf32>
    %c0_19 = arith.constant 0 : index
    %c0_20 = arith.constant 0 : index
    %19 = vector.load %arg4[%c0_19, %c0_20] : memref<128x128xf32, #tpu.memory_space<vmem>>, vector<128x128xf32>
    %cst_21 = arith.constant dense<0.000000e+00> : vector<80x128xf32>
    %20 = tpu.matmul %18, %19, %cst_21 {dimension_numbers = #tpu.dot_dimension_numbers<[1], [0], [0], [1], [0, 0, 1, 1], [], []>} : vector<80x128xf32>, vector<128x128xf32>, vector<80x128xf32> -> vector<80x128xf32>
    %21 = vector.extract_strided_slice %20 {offsets = [0, 0], sizes = [32, 128], strides = [1, 1]} : vector<80x128xf32> to vector<32x128xf32>
    %cst_22 = arith.constant 1.250000e-01 : f32
    %22 = vector.broadcast %cst_22 : f32 to vector<32x128xf32>
    %23 = arith.mulf %22, %21 : vector<32x128xf32>
    %c0_23 = arith.constant 0 : index
    %c0_24 = arith.constant 0 : index
    %c0_25 = arith.constant 0 : index
    %24 = vector.load %arg7[%c0_23, %c0_24, %c0_25] : memref<1x32x128xf32, #tpu.memory_space<vmem>>, vector<1x32x128xf32>
    %25 = vector.shape_cast %24 : vector<1x32x128xf32> to vector<32x128xf32>
    %26 = vector.shape_cast %23 : vector<32x128xf32> to vector<1x32x128xf32>
    tpu.vector_store %arg7[%c0_23, %c0_24, %c0_25], %26 {strides = array<i32>} : memref<1x32x128xf32, #tpu.memory_space<vmem>>, vector<1x32x128xf32>,
    %27 = vector.extract_strided_slice %20 {offsets = [32, 0], sizes = [48, 128], strides = [1, 1]} : vector<80x128xf32> to vector<48x128xf32>
    %c0_26 = arith.constant 0 : index
    %c0_27 = arith.constant 0 : index
    %28 = vector.load %arg5[%c0_26, %c0_27] : memref<24x48xf32, #tpu.memory_space<vmem>>, vector<24x48xf32>
    %cst_28 = arith.constant dense<0.000000e+00> : vector<24x128xf32>
    %29 = tpu.matmul %28, %27, %cst_28 {dimension_numbers = #tpu.dot_dimension_numbers<[1], [0], [0], [1], [0, 0, 1, 1], [], []>} : vector<24x48xf32>, vector<48x128xf32>, vector<24x128xf32> -> vector<24x128xf32>
    %c0_29 = arith.constant 0 : index
    %c0_30 = arith.constant 0 : index
    %30 = vector.load %arg6[%c0_29, %c0_30] : memref<128x128xf32, #tpu.memory_space<vmem>>, vector<128x128xf32>
    %cst_31 = arith.constant dense<0.000000e+00> : vector<24x128xf32>
    %31 = tpu.matmul %29, %30, %cst_31 {dimension_numbers = #tpu.dot_dimension_numbers<[1], [0], [0], [1], [0, 0, 1, 1], [], []>} : vector<24x128xf32>, vector<128x128xf32>, vector<24x128xf32> -> vector<24x128xf32>
    %c0_32 = arith.constant 0 : index
    %c0_33 = arith.constant 0 : index
    %c0_34 = arith.constant 0 : index
    %32 = vector.load %arg8[%c0_32, %c0_33, %c0_34] : memref<1x24x128xf32, #tpu.memory_space<vmem>>, vector<1x24x128xf32>
    %33 = vector.shape_cast %32 : vector<1x24x128xf32> to vector<24x128xf32>
    %34 = vector.shape_cast %31 : vector<24x128xf32> to vector<1x24x128xf32>
    tpu.vector_store %arg8[%c0_32, %c0_33, %c0_34], %34 {strides = array<i32>} : memref<1x24x128xf32, #tpu.memory_space<vmem>>, vector<1x24x128xf32>,
    return
  }
  func.func @transform_0(%arg0: i32) -> (i32, i32, i32, i32) {
    %c0_i32 = arith.constant 0 : i32
    %c0_i32_0 = arith.constant 0 : i32
    %c0_i32_1 = arith.constant 0 : i32
    %c0_i32_2 = arith.constant 0 : i32
    return %arg0, %c0_i32, %c0_i32_0, %c0_i32_1 : i32, i32, i32, i32
  }
  func.func @transform_1(%arg0: i32) -> (i32, i32, i32, i32) {
    %c0_i32 = arith.constant 0 : i32
    %c0_i32_0 = arith.constant 0 : i32
    %c0_i32_1 = arith.constant 0 : i32
    %c0_i32_2 = arith.constant 0 : i32
    return %arg0, %c0_i32, %c0_i32_0, %c0_i32_1 : i32, i32, i32, i32
  }
  func.func @transform_2(%arg0: i32) -> (i32, i32) {
    %c0_i32 = arith.constant 0 : i32
    %c0_i32_0 = arith.constant 0 : i32
    %c0_i32_1 = arith.constant 0 : i32
    return %c0_i32, %c0_i32_0 : i32, i32
  }
  func.func @transform_3(%arg0: i32) -> (i32, i32) {
    %c0_i32 = arith.constant 0 : i32
    %c0_i32_0 = arith.constant 0 : i32
    %c0_i32_1 = arith.constant 0 : i32
    return %c0_i32, %c0_i32_0 : i32, i32
  }
  func.func @transform_4(%arg0: i32) -> (i32, i32) {
    %c0_i32 = arith.constant 0 : i32
    %c0_i32_0 = arith.constant 0 : i32
    %c0_i32_1 = arith.constant 0 : i32
    return %c0_i32, %c0_i32_0 : i32, i32
  }
  func.func @transform_5(%arg0: i32) -> (i32, i32) {
    %c0_i32 = arith.constant 0 : i32
    %c0_i32_0 = arith.constant 0 : i32
    %c0_i32_1 = arith.constant 0 : i32
    return %c0_i32, %c0_i32_0 : i32, i32
  }
  func.func @transform_6(%arg0: i32) -> (i32, i32, i32) {
    %c0_i32 = arith.constant 0 : i32
    %c0_i32_0 = arith.constant 0 : i32
    %c0_i32_1 = arith.constant 0 : i32
    return %arg0, %c0_i32, %c0_i32_0 : i32, i32, i32
  }
  func.func @transform_7(%arg0: i32) -> (i32, i32, i32) {
    %c0_i32 = arith.constant 0 : i32
    %c0_i32_0 = arith.constant 0 : i32
    %c0_i32_1 = arith.constant 0 : i32
    return %arg0, %c0_i32, %c0_i32_0 : i32, i32, i32
  }
}

module attributes {stable_mosaic.version = 11 : i64} {
  func.func @_ssim_kernel(%arg0: i32, %arg1: memref<2x3xf32, #tpu.memory_space<smem>>, %arg2: memref<1x3x128x128xf32, #tpu.memory_space<vmem>>, %arg3: memref<1x128x128xf32, #tpu.memory_space<vmem>>, %arg4: memref<1x16x16xf32, #tpu.memory_space<vmem>>, %arg5: memref<128x16xf32, #tpu.memory_space<vmem>>, %arg6: memref<16x128xf32, #tpu.memory_space<vmem>>, %arg7: memref<128x128xf32, #tpu.memory_space<vmem>>, %arg8: memref<128x128xf32, #tpu.memory_space<vmem>>, %arg9: memref<1x1x128xf32, #tpu.memory_space<vmem>>) attributes {dimension_semantics = [#tpu.dimension_semantics<parallel>], iteration_bounds = array<i64: 2>, scalar_prefetch = 0 : i64, scratch_operands = 0 : i64, tpu.core_type = #tpu.core_type<tc>, window_params = [{transform_indices = @transform_0, window_bounds = array<i64: 2, 3>}, {transform_indices = @transform_1, window_bounds = array<i64: 1, 3, 128, 128>}, {transform_indices = @transform_2, window_bounds = array<i64: 1, 128, 128>}, {transform_indices = @transform_3, window_bounds = array<i64: 1, 16, 16>}, {pipeline_mode = #tpu.pipeline_mode<synchronous>, transform_indices = @transform_4, window_bounds = array<i64: 128, 16>}, {pipeline_mode = #tpu.pipeline_mode<synchronous>, transform_indices = @transform_5, window_bounds = array<i64: 16, 128>}, {pipeline_mode = #tpu.pipeline_mode<synchronous>, transform_indices = @transform_6, window_bounds = array<i64: 128, 128>}, {pipeline_mode = #tpu.pipeline_mode<synchronous>, transform_indices = @transform_7, window_bounds = array<i64: 128, 128>}, {transform_indices = @transform_8, window_bounds = array<i64: 1, 1, 128>}]} {
    %c0 = arith.constant 0 : index
    %c0_0 = arith.constant 0 : index
    %0 = vector.load %arg5[%c0, %c0_0] : memref<128x16xf32, #tpu.memory_space<vmem>>, vector<128x16xf32>
    %c0_1 = arith.constant 0 : index
    %c0_2 = arith.constant 0 : index
    %c0_3 = arith.constant 0 : index
    %1 = vector.load %arg4[%c0_1, %c0_2, %c0_3] : memref<1x16x16xf32, #tpu.memory_space<vmem>>, vector<1x16x16xf32>
    %2 = vector.shape_cast %1 : vector<1x16x16xf32> to vector<16x16xf32>
    %cst = arith.constant dense<0.000000e+00> : vector<128x16xf32>
    %3 = tpu.matmul %0, %2, %cst {dimension_numbers = #tpu.dot_dimension_numbers<[1], [0], [0], [1], [0, 0, 1, 1], [], []>} : vector<128x16xf32>, vector<16x16xf32>, vector<128x16xf32> -> vector<128x16xf32>
    %c0_4 = arith.constant 0 : index
    %c0_5 = arith.constant 0 : index
    %4 = vector.load %arg6[%c0_4, %c0_5] : memref<16x128xf32, #tpu.memory_space<vmem>>, vector<16x128xf32>
    %cst_6 = arith.constant dense<0.000000e+00> : vector<128x128xf32>
    %5 = tpu.matmul %3, %4, %cst_6 {dimension_numbers = #tpu.dot_dimension_numbers<[1], [0], [0], [1], [0, 0, 1, 1], [], []>} : vector<128x16xf32>, vector<16x128xf32>, vector<128x128xf32> -> vector<128x128xf32>
    %cst_7 = arith.constant 0.899999976 : f32
    %6 = vector.broadcast %cst_7 : f32 to vector<128x128xf32>
    %7 = arith.cmpf ogt, %5, %6 : vector<128x128xf32>
    %8 = arith.extui %7 : vector<128x128xi1> to vector<128x128xi32>
    %9 = arith.sitofp %8 : vector<128x128xi32> to vector<128x128xf32>
    %10 = arith.index_cast %arg0 : i32 to index
    %c0_8 = arith.constant 0 : index
    %11 = memref.load %arg1[%10, %c0_8] : memref<2x3xf32, #tpu.memory_space<smem>>
    %12 = arith.index_cast %arg0 : i32 to index
    %c1 = arith.constant 1 : index
    %13 = memref.load %arg1[%12, %c1] : memref<2x3xf32, #tpu.memory_space<smem>>
    %14 = arith.index_cast %arg0 : i32 to index
    %c2 = arith.constant 2 : index
    %15 = memref.load %arg1[%14, %c2] : memref<2x3xf32, #tpu.memory_space<smem>>
    %c0_9 = arith.constant 0 : index
    %c0_10 = arith.constant 0 : index
    %c0_11 = arith.constant 0 : index
    %c0_12 = arith.constant 0 : index
    %16 = vector.load %arg2[%c0_9, %c0_10, %c0_11, %c0_12] : memref<1x3x128x128xf32, #tpu.memory_space<vmem>>, vector<1x1x128x128xf32>
    %17 = vector.shape_cast %16 : vector<1x1x128x128xf32> to vector<128x128xf32>
    %18 = vector.broadcast %11 : f32 to vector<128x128xf32>
    %19 = arith.mulf %18, %17 : vector<128x128xf32>
    %c0_13 = arith.constant 0 : index
    %c1_14 = arith.constant 1 : index
    %c0_15 = arith.constant 0 : index
    %c0_16 = arith.constant 0 : index
    %20 = vector.load %arg2[%c0_13, %c1_14, %c0_15, %c0_16] : memref<1x3x128x128xf32, #tpu.memory_space<vmem>>, vector<1x1x128x128xf32>
    %21 = vector.shape_cast %20 : vector<1x1x128x128xf32> to vector<128x128xf32>
    %22 = vector.broadcast %13 : f32 to vector<128x128xf32>
    %23 = arith.mulf %22, %21 : vector<128x128xf32>
    %24 = arith.addf %19, %23 : vector<128x128xf32>
    %c0_17 = arith.constant 0 : index
    %c2_18 = arith.constant 2 : index
    %c0_19 = arith.constant 0 : index
    %c0_20 = arith.constant 0 : index
    %25 = vector.load %arg2[%c0_17, %c2_18, %c0_19, %c0_20] : memref<1x3x128x128xf32, #tpu.memory_space<vmem>>, vector<1x1x128x128xf32>
    %26 = vector.shape_cast %25 : vector<1x1x128x128xf32> to vector<128x128xf32>
    %27 = vector.broadcast %15 : f32 to vector<128x128xf32>
    %28 = arith.mulf %27, %26 : vector<128x128xf32>
    %29 = arith.addf %24, %28 : vector<128x128xf32>
    %cst_21 = arith.constant 2.550000e+02 : f32
    %30 = vector.broadcast %cst_21 : f32 to vector<128x128xf32>
    %31 = arith.mulf %29, %30 : vector<128x128xf32>
    %c0_22 = arith.constant 0 : index
    %c0_23 = arith.constant 0 : index
    %c0_24 = arith.constant 0 : index
    %32 = vector.load %arg3[%c0_22, %c0_23, %c0_24] : memref<1x128x128xf32, #tpu.memory_space<vmem>>, vector<1x128x128xf32>
    %33 = vector.shape_cast %32 : vector<1x128x128xf32> to vector<128x128xf32>
    %cst_25 = arith.constant 2.550000e+02 : f32
    %34 = vector.broadcast %cst_25 : f32 to vector<128x128xf32>
    %35 = arith.mulf %33, %34 : vector<128x128xf32>
    %36 = arith.mulf %31, %31 : vector<128x128xf32>
    %37 = arith.mulf %35, %35 : vector<128x128xf32>
    %38 = arith.mulf %31, %35 : vector<128x128xf32>
    %39 = tpu.concatenate %31, %35, %36, %37, %38 in 1 : vector<128x128xf32>, vector<128x128xf32>, vector<128x128xf32>, vector<128x128xf32>, vector<128x128xf32> -> vector<128x640xf32>
    %c0_26 = arith.constant 0 : index
    %c0_27 = arith.constant 0 : index
    %40 = vector.load %arg7[%c0_26, %c0_27] : memref<128x128xf32, #tpu.memory_space<vmem>>, vector<128x128xf32>
    %cst_28 = arith.constant dense<0.000000e+00> : vector<128x640xf32>
    %41 = tpu.matmul %40, %39, %cst_28 {dimension_numbers = #tpu.dot_dimension_numbers<[1], [0], [0], [1], [0, 0, 1, 1], [], []>} : vector<128x128xf32>, vector<128x640xf32>, vector<128x640xf32> -> vector<128x640xf32>
    %42 = vector.extract_strided_slice %41 {offsets = [0, 0], sizes = [128, 128], strides = [1, 1]} : vector<128x640xf32> to vector<128x128xf32>
    %43 = vector.extract_strided_slice %41 {offsets = [0, 128], sizes = [128, 128], strides = [1, 1]} : vector<128x640xf32> to vector<128x128xf32>
    %44 = vector.extract_strided_slice %41 {offsets = [0, 256], sizes = [128, 128], strides = [1, 1]} : vector<128x640xf32> to vector<128x128xf32>
    %45 = vector.extract_strided_slice %41 {offsets = [0, 384], sizes = [128, 128], strides = [1, 1]} : vector<128x640xf32> to vector<128x128xf32>
    %46 = vector.extract_strided_slice %41 {offsets = [0, 512], sizes = [128, 128], strides = [1, 1]} : vector<128x640xf32> to vector<128x128xf32>
    %47 = tpu.concatenate %42, %43, %44, %45, %46 in 0 : vector<128x128xf32>, vector<128x128xf32>, vector<128x128xf32>, vector<128x128xf32>, vector<128x128xf32> -> vector<640x128xf32>
    %c0_29 = arith.constant 0 : index
    %c0_30 = arith.constant 0 : index
    %48 = vector.load %arg8[%c0_29, %c0_30] : memref<128x128xf32, #tpu.memory_space<vmem>>, vector<128x128xf32>
    %cst_31 = arith.constant dense<0.000000e+00> : vector<640x128xf32>
    %49 = tpu.matmul %47, %48, %cst_31 {dimension_numbers = #tpu.dot_dimension_numbers<[1], [0], [0], [1], [0, 0, 1, 1], [], []>} : vector<640x128xf32>, vector<128x128xf32>, vector<640x128xf32> -> vector<640x128xf32>
    %50 = vector.extract_strided_slice %49 {offsets = [0, 0], sizes = [128, 128], strides = [1, 1]} : vector<640x128xf32> to vector<128x128xf32>
    %51 = vector.extract_strided_slice %49 {offsets = [128, 0], sizes = [128, 128], strides = [1, 1]} : vector<640x128xf32> to vector<128x128xf32>
    %52 = vector.extract_strided_slice %49 {offsets = [256, 0], sizes = [128, 128], strides = [1, 1]} : vector<640x128xf32> to vector<128x128xf32>
    %53 = vector.extract_strided_slice %49 {offsets = [384, 0], sizes = [128, 128], strides = [1, 1]} : vector<640x128xf32> to vector<128x128xf32>
    %54 = vector.extract_strided_slice %49 {offsets = [512, 0], sizes = [128, 128], strides = [1, 1]} : vector<640x128xf32> to vector<128x128xf32>
    %55 = arith.mulf %50, %50 : vector<128x128xf32>
    %56 = arith.mulf %51, %51 : vector<128x128xf32>
    %57 = arith.mulf %50, %51 : vector<128x128xf32>
    %58 = arith.subf %52, %55 : vector<128x128xf32>
    %59 = arith.subf %53, %56 : vector<128x128xf32>
    %60 = arith.subf %54, %57 : vector<128x128xf32>
    %cst_32 = arith.constant 2.000000e+00 : f32
    %61 = vector.broadcast %cst_32 : f32 to vector<128x128xf32>
    %62 = arith.mulf %61, %57 : vector<128x128xf32>
    %cst_33 = arith.constant 6.502500e+00 : f32
    %63 = vector.broadcast %cst_33 : f32 to vector<128x128xf32>
    %64 = arith.addf %62, %63 : vector<128x128xf32>
    %cst_34 = arith.constant 2.000000e+00 : f32
    %65 = vector.broadcast %cst_34 : f32 to vector<128x128xf32>
    %66 = arith.mulf %65, %60 : vector<128x128xf32>
    %cst_35 = arith.constant 5.852250e+01 : f32
    %67 = vector.broadcast %cst_35 : f32 to vector<128x128xf32>
    %68 = arith.addf %66, %67 : vector<128x128xf32>
    %69 = arith.mulf %64, %68 : vector<128x128xf32>
    %70 = arith.addf %55, %56 : vector<128x128xf32>
    %cst_36 = arith.constant 6.502500e+00 : f32
    %71 = vector.broadcast %cst_36 : f32 to vector<128x128xf32>
    %72 = arith.addf %70, %71 : vector<128x128xf32>
    %73 = arith.addf %58, %59 : vector<128x128xf32>
    %cst_37 = arith.constant 5.852250e+01 : f32
    %74 = vector.broadcast %cst_37 : f32 to vector<128x128xf32>
    %75 = arith.addf %73, %74 : vector<128x128xf32>
    %76 = arith.mulf %72, %75 : vector<128x128xf32>
    %77 = tpu.reciprocal %76 {approx = true} : vector<128x128xf32> -> vector<128x128xf32>
    %78 = arith.mulf %69, %77 : vector<128x128xf32>
    %79 = arith.mulf %78, %9 : vector<128x128xf32>
    %80 = vector.shape_cast %79 : vector<128x128xf32> to vector<1x128x128xf32>
    %cst_38 = arith.constant dense<0.000000e+00> : vector<1xf32>
    %81 = vector.multi_reduction <add>, %80, %cst_38 [1, 2] : vector<1x128x128xf32> to vector<1xf32>
    %82 = vector.shape_cast %81 : vector<1xf32> to vector<1x1x1xf32>
    %83 = vector.extract %82[0, 0, 0] : f32 from vector<1x1x1xf32>
    %84 = vector.shape_cast %9 : vector<128x128xf32> to vector<1x128x128xf32>
    %cst_39 = arith.constant dense<0.000000e+00> : vector<1xf32>
    %85 = vector.multi_reduction <add>, %84, %cst_39 [1, 2] : vector<1x128x128xf32> to vector<1xf32>
    %86 = vector.shape_cast %85 : vector<1xf32> to vector<1x1x1xf32>
    %87 = vector.extract %86[0, 0, 0] : f32 from vector<1x1x1xf32>
    %88 = tpu.iota {dimensions = array<i32: 1>} : vector<1x128xi32>
    %c0_i32 = arith.constant 0 : i32
    %89 = vector.broadcast %c0_i32 : i32 to vector<1x128xi32>
    %90 = arith.cmpi eq, %88, %89 : vector<1x128xi32>
    %c1_i32 = arith.constant 1 : i32
    %91 = vector.broadcast %c1_i32 : i32 to vector<1x128xi32>
    %92 = arith.cmpi eq, %88, %91 : vector<1x128xi32>
    %cst_40 = arith.constant 0.000000e+00 : f32
    %93 = vector.broadcast %87 : f32 to vector<1x128xf32>
    %94 = vector.broadcast %cst_40 : f32 to vector<1x128xf32>
    %95 = arith.select %92, %93, %94 : vector<1x128xi1>, vector<1x128xf32>
    %96 = vector.broadcast %83 : f32 to vector<1x128xf32>
    %97 = arith.select %90, %96, %95 : vector<1x128xi1>, vector<1x128xf32>
    %c0_41 = arith.constant 0 : index
    %c0_42 = arith.constant 0 : index
    %c0_43 = arith.constant 0 : index
    %98 = vector.load %arg9[%c0_41, %c0_42, %c0_43] : memref<1x1x128xf32, #tpu.memory_space<vmem>>, vector<1x1x128xf32>
    %99 = vector.shape_cast %98 : vector<1x1x128xf32> to vector<1x128xf32>
    %100 = vector.shape_cast %97 : vector<1x128xf32> to vector<1x1x128xf32>
    tpu.vector_store %arg9[%c0_41, %c0_42, %c0_43], %100 {strides = array<i32>} : memref<1x1x128xf32, #tpu.memory_space<vmem>>, vector<1x1x128xf32>,
    return
  }
  func.func @transform_0(%arg0: i32) -> (i32, i32) {
    %c0_i32 = arith.constant 0 : i32
    %c0_i32_0 = arith.constant 0 : i32
    %c0_i32_1 = arith.constant 0 : i32
    return %c0_i32, %c0_i32_0 : i32, i32
  }
  func.func @transform_1(%arg0: i32) -> (i32, i32, i32, i32) {
    %c0_i32 = arith.constant 0 : i32
    %c0_i32_0 = arith.constant 0 : i32
    %c0_i32_1 = arith.constant 0 : i32
    %c0_i32_2 = arith.constant 0 : i32
    return %arg0, %c0_i32, %c0_i32_0, %c0_i32_1 : i32, i32, i32, i32
  }
  func.func @transform_2(%arg0: i32) -> (i32, i32, i32) {
    %c0_i32 = arith.constant 0 : i32
    %c0_i32_0 = arith.constant 0 : i32
    %c0_i32_1 = arith.constant 0 : i32
    return %arg0, %c0_i32, %c0_i32_0 : i32, i32, i32
  }
  func.func @transform_3(%arg0: i32) -> (i32, i32, i32) {
    %c0_i32 = arith.constant 0 : i32
    %c0_i32_0 = arith.constant 0 : i32
    %c0_i32_1 = arith.constant 0 : i32
    return %arg0, %c0_i32, %c0_i32_0 : i32, i32, i32
  }
  func.func @transform_4(%arg0: i32) -> (i32, i32) {
    %c0_i32 = arith.constant 0 : i32
    %c0_i32_0 = arith.constant 0 : i32
    %c0_i32_1 = arith.constant 0 : i32
    return %c0_i32, %c0_i32_0 : i32, i32
  }
  func.func @transform_5(%arg0: i32) -> (i32, i32) {
    %c0_i32 = arith.constant 0 : i32
    %c0_i32_0 = arith.constant 0 : i32
    %c0_i32_1 = arith.constant 0 : i32
    return %c0_i32, %c0_i32_0 : i32, i32
  }
  func.func @transform_6(%arg0: i32) -> (i32, i32) {
    %c0_i32 = arith.constant 0 : i32
    %c0_i32_0 = arith.constant 0 : i32
    %c0_i32_1 = arith.constant 0 : i32
    return %c0_i32, %c0_i32_0 : i32, i32
  }
  func.func @transform_7(%arg0: i32) -> (i32, i32) {
    %c0_i32 = arith.constant 0 : i32
    %c0_i32_0 = arith.constant 0 : i32
    %c0_i32_1 = arith.constant 0 : i32
    return %c0_i32, %c0_i32_0 : i32, i32
  }
  func.func @transform_8(%arg0: i32) -> (i32, i32, i32) {
    %c0_i32 = arith.constant 0 : i32
    %c0_i32_0 = arith.constant 0 : i32
    %c0_i32_1 = arith.constant 0 : i32
    return %arg0, %c0_i32, %c0_i32_0 : i32, i32, i32
  }
}

</mosaic_0001>

<llo_original>
// kernel: loss_fn.2
$region0: #{loss_fn.2}
  #allocation0 [shape = 'u32[]', space=smem, size = 0x4, offset = 0x4, fixed_abs, tag = 'smem constant byte address 0x4 - core index']
  #allocation1 [shape = 'u32[144,128]{1,0:T(1,128)}', space=vmem, size = 0x12000, scoped, tag = 'internal scratch']
  %s0 = inlined_call_operand.vmem [shape: f32[2,3,128,128], index: 0, kind: input, shape index: {}]
  %s1 = inlined_call_operand.vmem [shape: f32[2,2,128,128], index: 1, kind: input, shape index: {}]
  %s2 = inlined_call_operand.vmem [shape: f32[16,128], index: 2, kind: input, shape index: {}]
  %s3 = inlined_call_operand.vmem [shape: f32[128,128], index: 3, kind: input, shape index: {}]
  %s4 = inlined_call_operand.vmem [shape: f32[24,48], index: 4, kind: input, shape index: {}]
  %s5 = inlined_call_operand.vmem [shape: f32[128,128], index: 5, kind: input, shape index: {}]
  %s6 = inlined_call_operand.vmem [shape: f32[2,32,128], index: 6, kind: output, shape index: {0}]
  %s7 = inlined_call_operand.vmem [shape: f32[2,24,128], index: 7, kind: output, shape index: {1}]
  %8 = xla_tuple %s6, %s7
  %s9 = sld [smem:[#allocation0]]
  $region65: #{loss_fn.2} parent=0
    _
  %s11 = ssub.s32 1, %s9
  %s12 = scalar_select 0, %s11, %s9
  loop: start=0, step=1, limit=4
  $region2: #{loss_fn.2} parent=0 // loop_pre_header
    _
  $region3: #{loss_fn.2} parent=0 // loop_header
    %s14 = sphi 0, %s18
    %p15 = scmp.ge.s32.totalorder %s14, 4
    %s24 = sphi 0, %s26
    %s27 = sphi 0, %s24
    %s28 = sphi 0, %s27
    %s44 = sphi 0, %s28
    %s50 = sphi 0, %s52
    %s53 = sphi 0, %s50
    %s54 = sphi 0, %s53
    %s70 = sphi 0, %s54
    %s74 = sphi 0, %s74
    %s76 = sphi 0, %s74
    %s77 = sphi 0, %s76
    %s91 = sphi 0, %s77
    %s95 = sphi 0, %s95
    %s97 = sphi 0, %s95
    %s98 = sphi 0, %s97
    %s112 = sphi 0, %s98
    %s116 = sphi 0, %s116
    %s118 = sphi 0, %s116
    %s119 = sphi 0, %s118
    %s133 = sphi 0, %s119
    %s137 = sphi 0, %s137
    %s139 = sphi 0, %s137
    %s140 = sphi 0, %s139
    %s154 = sphi 0, %s140
    %s160 = sphi 0, %s162
    %s163 = sphi 0, %s160
    %s164 = sphi 0, %s163
    %s180 = sphi 0, %s164
    %s186 = sphi 0, %s188
    %s189 = sphi 0, %s186
    %s190 = sphi 0, %s189
    %s206 = sphi 0, %s190
  $region4: #{loss_fn.2} parent=0 // loop_header_branch
    %17 = sbr.rel (%p15) target = $region8
  $region5: #{loss_fn.2} parent=0 // loop_body
    %s19 = ssub.s32 %s14, 1
    %s20 = ssub.s32 %s14, 2
    %s21 = sadd.s32 %s14, 1
    %s22 = ssub.s32 %s14, %s21
    %p23 = scmp.eq.s32.totalorder %s22, 0
    %s25 = sadd.s32 %s24, 1
    %s26 = scalar_select %p23, %s24, %s25
    %p29 = pneg %p23
    %p30 = scmp.eq.s32.totalorder %s14, 1
    %p31 = por %p29, %p30
    %p32 = scmp.ne.s32.totalorder %s24, %s27
    %p33 = scmp.eq.s32.totalorder %s14, 0
    %p34 = por %p32, %p33
    %p35 = scmp.ne.s32.totalorder %s24, %s27
    %p36 = scmp.eq.s32.totalorder %s19, 1
    %p37 = por %p35, %p36
    %p38 = scmp.ne.s32.totalorder %s27, %s28
    %p39 = scmp.eq.s32.totalorder %s19, 0
    %p40 = por %p38, %p39
    %p41 = scmp.ne.s32.totalorder %s27, %s28
    %p42 = scmp.eq.s32.totalorder %s20, 1
    %p43 = por %p41, %p42
    %p45 = scmp.ne.s32.totalorder %s28, %s44
    %p46 = scmp.eq.s32.totalorder %s20, 0
    %p47 = por %p45, %p46
    %s48 = ssub.s32 %s14, %s21
    %p49 = scmp.eq.s32.totalorder %s48, 0
    %s51 = sadd.s32 %s50, 1
    %s52 = scalar_select %p49, %s50, %s51
    %p55 = pneg %p49
    %p56 = scmp.eq.s32.totalorder %s14, 1
    %p57 = por %p55, %p56
    %p58 = scmp.ne.s32.totalorder %s50, %s53
    %p59 = scmp.eq.s32.totalorder %s14, 0
    %p60 = por %p58, %p59
    %p61 = scmp.ne.s32.totalorder %s50, %s53
    %p62 = scmp.eq.s32.totalorder %s19, 1
    %p63 = por %p61, %p62
    %p64 = scmp.ne.s32.totalorder %s53, %s54
    %p65 = scmp.eq.s32.totalorder %s19, 0
    %p66 = por %p64, %p65
    %p67 = scmp.ne.s32.totalorder %s53, %s54
    %p68 = scmp.eq.s32.totalorder %s20, 1
    %p69 = por %p67, %p68
    %p71 = scmp.ne.s32.totalorder %s54, %s70
    %p72 = scmp.eq.s32.totalorder %s20, 0
    %p73 = por %p71, %p72
    %s75 = sadd.s32 %s74, 1
    %p78 = scmp.eq.s32.totalorder %s14, 1
    %p79 = scmp.ne.s32.totalorder %s74, %s76
    %p80 = scmp.eq.s32.totalorder %s14, 0
    %p81 = por %p79, %p80
    %p82 = scmp.ne.s32.totalorder %s74, %s76
    %p83 = scmp.eq.s32.totalorder %s19, 1
    %p84 = por %p82, %p83
    %p85 = scmp.ne.s32.totalorder %s76, %s77
    %p86 = scmp.eq.s32.totalorder %s19, 0
    %p87 = por %p85, %p86
    %p88 = scmp.ne.s32.totalorder %s76, %s77
    %p89 = scmp.eq.s32.totalorder %s20, 1
    %p90 = por %p88, %p89
    %p92 = scmp.ne.s32.totalorder %s77, %s91
    %p93 = scmp.eq.s32.totalorder %s20, 0
    %p94 = por %p92, %p93
    %s96 = sadd.s32 %s95, 1
    %p99 = scmp.eq.s32.totalorder %s14, 1
    %p100 = scmp.ne.s32.totalorder %s95, %s97
    %p101 = scmp.eq.s32.totalorder %s14, 0
    %p102 = por %p100, %p101
    %p103 = scmp.ne.s32.totalorder %s95, %s97
    %p104 = scmp.eq.s32.totalorder %s19, 1
    %p105 = por %p103, %p104
    %p106 = scmp.ne.s32.totalorder %s97, %s98
    %p107 = scmp.eq.s32.totalorder %s19, 0
    %p108 = por %p106, %p107
    %p109 = scmp.ne.s32.totalorder %s97, %s98
    %p110 = scmp.eq.s32.totalorder %s20, 1
    %p111 = por %p109, %p110
    %p113 = scmp.ne.s32.totalorder %s98, %s112
    %p114 = scmp.eq.s32.totalorder %s20, 0
    %p115 = por %p113, %p114
    %s117 = sadd.s32 %s116, 1
    %p120 = scmp.eq.s32.totalorder %s14, 1
    %p121 = scmp.ne.s32.totalorder %s116, %s118
    %p122 = scmp.eq.s32.totalorder %s14, 0
    %p123 = por %p121, %p122
    %p124 = scmp.ne.s32.totalorder %s116, %s118
    %p125 = scmp.eq.s32.totalorder %s19, 1
    %p126 = por %p124, %p125
    %p127 = scmp.ne.s32.totalorder %s118, %s119
    %p128 = scmp.eq.s32.totalorder %s19, 0
    %p129 = por %p127, %p128
    %p130 = scmp.ne.s32.totalorder %s118, %s119
    %p131 = scmp.eq.s32.totalorder %s20, 1
    %p132 = por %p130, %p131
    %p134 = scmp.ne.s32.totalorder %s119, %s133
    %p135 = scmp.eq.s32.totalorder %s20, 0
    %p136 = por %p134, %p135
    %s138 = sadd.s32 %s137, 1
    %p141 = scmp.eq.s32.totalorder %s14, 1
    %p142 = scmp.ne.s32.totalorder %s137, %s139
    %p143 = scmp.eq.s32.totalorder %s14, 0
    %p144 = por %p142, %p143
    %p145 = scmp.ne.s32.totalorder %s137, %s139
    %p146 = scmp.eq.s32.totalorder %s19, 1
    %p147 = por %p145, %p146
    %p148 = scmp.ne.s32.totalorder %s139, %s140
    %p149 = scmp.eq.s32.totalorder %s19, 0
    %p150 = por %p148, %p149
    %p151 = scmp.ne.s32.totalorder %s139, %s140
    %p152 = scmp.eq.s32.totalorder %s20, 1
    %p153 = por %p151, %p152
    %p155 = scmp.ne.s32.totalorder %s140, %s154
    %p156 = scmp.eq.s32.totalorder %s20, 0
    %p157 = por %p155, %p156
    %s158 = ssub.s32 %s14, %s21
    %p159 = scmp.eq.s32.totalorder %s158, 0
    %s161 = sadd.s32 %s160, 1
    %s162 = scalar_select %p159, %s160, %s161
    %p165 = pneg %p159
    %p166 = scmp.eq.s32.totalorder %s14, 1
    %p167 = por %p165, %p166
    %p168 = scmp.ne.s32.totalorder %s160, %s163
    %p169 = scmp.eq.s32.totalorder %s14, 0
    %p170 = por %p168, %p169
    %p171 = scmp.ne.s32.totalorder %s160, %s163
    %p172 = scmp.eq.s32.totalorder %s19, 1
    %p173 = por %p171, %p172
    %p174 = scmp.ne.s32.totalorder %s163, %s164
    %p175 = scmp.eq.s32.totalorder %s19, 0
    %p176 = por %p174, %p175
    %p177 = scmp.ne.s32.totalorder %s163, %s164
    %p178 = scmp.eq.s32.totalorder %s20, 1
    %p179 = por %p177, %p178
    %p181 = scmp.ne.s32.totalorder %s164, %s180
    %p182 = scmp.eq.s32.totalorder %s20, 0
    %p183 = por %p181, %p182
    %s184 = ssub.s32 %s14, %s21
    %p185 = scmp.eq.s32.totalorder %s184, 0
    %s187 = sadd.s32 %s186, 1
    %s188 = scalar_select %p185, %s186, %s187
    %p191 = pneg %p185
    %p192 = scmp.eq.s32.totalorder %s14, 1
    %p193 = por %p191, %p192
    %p194 = scmp.ne.s32.totalorder %s186, %s189
    %p195 = scmp.eq.s32.totalorder %s14, 0
    %p196 = por %p194, %p195
    %p197 = scmp.ne.s32.totalorder %s186, %s189
    %p198 = scmp.eq.s32.totalorder %s19, 1
    %p199 = por %p197, %p198
    %p200 = scmp.ne.s32.totalorder %s189, %s190
    %p201 = scmp.eq.s32.totalorder %s19, 0
    %p202 = por %p200, %p201
    %p203 = scmp.ne.s32.totalorder %s189, %s190
    %p204 = scmp.eq.s32.totalorder %s20, 1
    %p205 = por %p203, %p204
    %p207 = scmp.ne.s32.totalorder %s190, %s206
    %p208 = scmp.eq.s32.totalorder %s20, 0
    %p209 = por %p207, %p208
    %p210 = scmp.le.s32.totalorder 1, %s14
    %p211 = scmp.lt.s32.totalorder %s14, 3
    %p212 = pnand %p210, %p211
    %p213 = pneg %p212
    // Predicated region
    $region9: #{loss_fn.2} parent=5 // pred_check
      _
    $region10: #{loss_fn.2} parent=5 // pred_check_branch
      %215 = sbr.rel (%p212) target = $region12
    $region11: #{loss_fn.2} parent=5 // pred_region
      %s216 = ssub.s32 %s14, 1
      // Predicated region
      $region13: #{loss_fn.2} parent=11 // pred_check
        %p217 = pneg %p87
      $region14: #{loss_fn.2} parent=11 // pred_check_branch
        %219 = sbr.rel (%p217) target = $region16
      $region15: #{loss_fn.2} parent=11 // pred_region
        _
      $region16: #{loss_fn.2} parent=11 // pred_fallthru
        _
      // Predicated region
      $region17: #{loss_fn.2} parent=11 // pred_check
        %p220 = pneg %p108
      $region18: #{loss_fn.2} parent=11 // pred_check_branch
        %222 = sbr.rel (%p220) target = $region20
      $region19: #{loss_fn.2} parent=11 // pred_region
        _
      $region20: #{loss_fn.2} parent=11 // pred_fallthru
        _
      // Predicated region
      $region21: #{loss_fn.2} parent=11 // pred_check
        %p223 = pneg %p129
      $region22: #{loss_fn.2} parent=11 // pred_check_branch
        %225 = sbr.rel (%p223) target = $region24
      $region23: #{loss_fn.2} parent=11 // pred_region
        _
      $region24: #{loss_fn.2} parent=11 // pred_fallthru
        _
      // Predicated region
      $region25: #{loss_fn.2} parent=11 // pred_check
        %p226 = pneg %p150
      $region26: #{loss_fn.2} parent=11 // pred_check_branch
        %228 = sbr.rel (%p226) target = $region28
      $region27: #{loss_fn.2} parent=11 // pred_region
        _
      $region28: #{loss_fn.2} parent=11 // pred_fallthru
        _
    $region12: #{loss_fn.2} parent=5 // pred_fallthru
      _
    %p229 = scmp.lt.s32.totalorder %s14, 2
    // Predicated region
    $region29: #{loss_fn.2} parent=5 // pred_check
      %p230 = pneg %p229
    $region30: #{loss_fn.2} parent=5 // pred_check_branch
      %232 = sbr.rel (%p230) target = $region32
    $region31: #{loss_fn.2} parent=5 // pred_region
      // Predicated region
      $region33: #{loss_fn.2} parent=31 // pred_check
        %p233 = pneg %p34
      $region34: #{loss_fn.2} parent=31 // pred_check_branch
        %235 = sbr.rel (%p233) target = $region36
      $region35: #{loss_fn.2} parent=31 // pred_region
        %p236 = scmp.lt.s32.totalorder %s14, 1
        %s237 = scalar_select %p236, %s14, 1
        %s238 = smul.addr %s237, 48
        %s239 = smul.addr %s238, 8
        %s240 = scalar_lea.vmem %s0, %s239
      $region36: #{loss_fn.2} parent=31 // pred_fallthru
        _
      // Predicated region
      $region37: #{loss_fn.2} parent=31 // pred_check
        %p241 = pneg %p60
      $region38: #{loss_fn.2} parent=31 // pred_check_branch
        %243 = sbr.rel (%p241) target = $region40
      $region39: #{loss_fn.2} parent=31 // pred_region
        %p244 = scmp.lt.s32.totalorder %s14, 1
        %s245 = scalar_select %p244, %s14, 1
        %s246 = smul.addr %s245, 32
        %s247 = smul.addr %s246, 8
        %s248 = scalar_lea.vmem %s1, %s247
      $region40: #{loss_fn.2} parent=31 // pred_fallthru
        _
    $region32: #{loss_fn.2} parent=5 // pred_fallthru
      _
    %p249 = scmp.le.s32.totalorder 1, %s14
    %p250 = scmp.lt.s32.totalorder %s14, 3
    %p251 = pnand %p249, %p250
    %p252 = pneg %p251
    // Predicated region
    $region41: #{loss_fn.2} parent=5 // pred_check
      _
    $region42: #{loss_fn.2} parent=5 // pred_check_branch
      %254 = sbr.rel (%p251) target = $region44
    $region43: #{loss_fn.2} parent=5 // pred_region
      %s255 = ssub.s32 %s14, 1
      %p256 = scmp.lt.s32.totalorder %s19, 1
      %s257 = scalar_select %p256, %s19, 1
      %s258 = smul.addr %s257, 48
      %s259 = smul.addr %s258, 8
      %s260 = scalar_lea.vmem %s0, %s259
      %p261 = pneg %p40
      %p262 = pneg %p37
      %p263 = scmp.lt.s32.totalorder %s19, 1
      %s264 = scalar_select %p263, %s19, 1
      %s265 = smul.addr %s264, 32
      %s266 = smul.addr %s265, 8
      %s267 = scalar_lea.vmem %s1, %s266
      %p268 = pneg %p66
      %p269 = pneg %p63
      %p270 = pneg %p87
      %p271 = pneg %p84
      %p272 = pneg %p108
      %p273 = pneg %p105
      %p274 = pneg %p129
      %p275 = pneg %p126
      %p276 = pneg %p150
      %p277 = pneg %p147
      %p278 = pneg %p176
      %p279 = pneg %p173
      %p280 = scmp.lt.s32.totalorder %s19, 1
      %s281 = scalar_select %p280, %s19, 1
      %s282 = smul.addr %s281, 4
      %s283 = smul.addr %s282, 8
      %s284 = scalar_lea.vmem %s6, %s283
      %p285 = pneg %p202
      %p286 = pneg %p199
      %p287 = scmp.lt.s32.totalorder %s19, 1
      %s288 = scalar_select %p287, %s19, 1
      %s289 = smul.addr %s288, 3
      %s290 = smul.addr %s289, 8
      %s291 = scalar_lea.vmem %s7, %s290
      %p292 = scmp.lt.s32.totalorder %s19, 1
      %s293 = scalar_select %p292, %s19, 1
      %s294 = smul.addr %s293, 48
      %s295 = smul.addr %s294, 8
      %s296 = scalar_lea.vmem %s0, %s295
      %p297 = scmp.lt.s32.totalorder %s19, 1
      %s298 = scalar_select %p297, %s19, 1
      %s299 = smul.addr %s298, 32
      %s300 = smul.addr %s299, 8
      %s301 = scalar_lea.vmem %s1, %s300
      %p302 = scmp.lt.s32.totalorder %s19, 1
      %s303 = scalar_select %p302, %s19, 1
      %s304 = smul.addr %s303, 4
      %s305 = smul.addr %s304, 8
      %s306 = scalar_lea.vmem %s6, %s305
      %p307 = scmp.lt.s32.totalorder %s19, 1
      %s308 = scalar_select %p307, %s19, 1
      %s309 = smul.addr %s308, 3
      %s310 = smul.addr %s309, 8
      %s311 = scalar_lea.vmem %s7, %s310
      %v312 = vld [vmem:[%s301] sm:$0xff]
      %v313 = vld [vmem:[%s301 + $0x8] sm:$0xff]
      %v314 = vld [vmem:[%s301 + $0x10] sm:$0xff]
      %v315 = vld [vmem:[%s301 + $0x18] sm:$0xff]
      %v316 = vld [vmem:[%s301 + $0x20] sm:$0xff]
      %v317 = vld [vmem:[%s301 + $0x28] sm:$0xff]
      %v318 = vld [vmem:[%s301 + $0x30] sm:$0xff]
      %v319 = vld [vmem:[%s301 + $0x38] sm:$0xff]
      %v320 = vld [vmem:[%s301 + $0x40] sm:$0xff]
      %v321 = vld [vmem:[%s301 + $0x48] sm:$0xff]
      %v322 = vld [vmem:[%s301 + $0x50] sm:$0xff]
      %v323 = vld [vmem:[%s301 + $0x58] sm:$0xff]
      %v324 = vld [vmem:[%s301 + $0x60] sm:$0xff]
      %v325 = vld [vmem:[%s301 + $0x68] sm:$0xff]
      %v326 = vld [vmem:[%s301 + $0x70] sm:$0xff]
      %v327 = vld [vmem:[%s301 + $0x78] sm:$0xff]
      %s328 = scalar_lea.vmem %s301, 128
      %v329 = vld [vmem:[%s328] sm:$0xff]
      %v330 = vld [vmem:[%s328 + $0x8] sm:$0xff]
      %v331 = vld [vmem:[%s328 + $0x10] sm:$0xff]
      %v332 = vld [vmem:[%s328 + $0x18] sm:$0xff]
      %v333 = vld [vmem:[%s328 + $0x20] sm:$0xff]
      %v334 = vld [vmem:[%s328 + $0x28] sm:$0xff]
      %v335 = vld [vmem:[%s328 + $0x30] sm:$0xff]
      %v336 = vld [vmem:[%s328 + $0x38] sm:$0xff]
      %v337 = vld [vmem:[%s328 + $0x40] sm:$0xff]
      %v338 = vld [vmem:[%s328 + $0x48] sm:$0xff]
      %v339 = vld [vmem:[%s328 + $0x50] sm:$0xff]
      %v340 = vld [vmem:[%s328 + $0x58] sm:$0xff]
      %v341 = vld [vmem:[%s328 + $0x60] sm:$0xff]
      %v342 = vld [vmem:[%s328 + $0x68] sm:$0xff]
      %v343 = vld [vmem:[%s328 + $0x70] sm:$0xff]
      %v344 = vld [vmem:[%s328 + $0x78] sm:$0xff]
      %v345 = vld [vmem:[%s296] sm:$0xff]
      %v346 = vld [vmem:[%s296 + $0x8] sm:$0xff]
      %v347 = vld [vmem:[%s296 + $0x10] sm:$0xff]
      %v348 = vld [vmem:[%s296 + $0x18] sm:$0xff]
      %v349 = vld [vmem:[%s296 + $0x20] sm:$0xff]
      %v350 = vld [vmem:[%s296 + $0x28] sm:$0xff]
      %v351 = vld [vmem:[%s296 + $0x30] sm:$0xff]
      %v352 = vld [vmem:[%s296 + $0x38] sm:$0xff]
      %v353 = vld [vmem:[%s296 + $0x40] sm:$0xff]
      %v354 = vld [vmem:[%s296 + $0x48] sm:$0xff]
      %v355 = vld [vmem:[%s296 + $0x50] sm:$0xff]
      %v356 = vld [vmem:[%s296 + $0x58] sm:$0xff]
      %v357 = vld [vmem:[%s296 + $0x60] sm:$0xff]
      %v358 = vld [vmem:[%s296 + $0x68] sm:$0xff]
      %v359 = vld [vmem:[%s296 + $0x70] sm:$0xff]
      %v360 = vld [vmem:[%s296 + $0x78] sm:$0xff]
      %s361 = scalar_lea.vmem %s296, 128
      %v362 = vld [vmem:[%s361] sm:$0xff]
      %v363 = vld [vmem:[%s361 + $0x8] sm:$0xff]
      %v364 = vld [vmem:[%s361 + $0x10] sm:$0xff]
      %v365 = vld [vmem:[%s361 + $0x18] sm:$0xff]
      %v366 = vld [vmem:[%s361 + $0x20] sm:$0xff]
      %v367 = vld [vmem:[%s361 + $0x28] sm:$0xff]
      %v368 = vld [vmem:[%s361 + $0x30] sm:$0xff]
      %v369 = vld [vmem:[%s361 + $0x38] sm:$0xff]
      %v370 = vld [vmem:[%s361 + $0x40] sm:$0xff]
      %v371 = vld [vmem:[%s361 + $0x48] sm:$0xff]
      %v372 = vld [vmem:[%s361 + $0x50] sm:$0xff]
      %v373 = vld [vmem:[%s361 + $0x58] sm:$0xff]
      %v374 = vld [vmem:[%s361 + $0x60] sm:$0xff]
      %v375 = vld [vmem:[%s361 + $0x68] sm:$0xff]
      %v376 = vld [vmem:[%s361 + $0x70] sm:$0xff]
      %v377 = vld [vmem:[%s361 + $0x78] sm:$0xff]
      %s378 = scalar_lea.vmem %s296, 256
      %v379 = vld [vmem:[%s378] sm:$0xff]
      %v380 = vld [vmem:[%s378 + $0x8] sm:$0xff]
      %v381 = vld [vmem:[%s378 + $0x10] sm:$0xff]
      %v382 = vld [vmem:[%s378 + $0x18] sm:$0xff]
      %v383 = vld [vmem:[%s378 + $0x20] sm:$0xff]
      %v384 = vld [vmem:[%s378 + $0x28] sm:$0xff]
      %v385 = vld [vmem:[%s378 + $0x30] sm:$0xff]
      %v386 = vld [vmem:[%s378 + $0x38] sm:$0xff]
      %v387 = vld [vmem:[%s378 + $0x40] sm:$0xff]
      %v388 = vld [vmem:[%s378 + $0x48] sm:$0xff]
      %v389 = vld [vmem:[%s378 + $0x50] sm:$0xff]
      %v390 = vld [vmem:[%s378 + $0x58] sm:$0xff]
      %v391 = vld [vmem:[%s378 + $0x60] sm:$0xff]
      %v392 = vld [vmem:[%s378 + $0x68] sm:$0xff]
      %v393 = vld [vmem:[%s378 + $0x70] sm:$0xff]
      %v394 = vld [vmem:[%s378 + $0x78] sm:$0xff]
      %v395 = vld [vmem:[%s2] sm:$0xff]
      %v396 = vld [vmem:[%s2 + $0x8] sm:$0xff]
      %397 = vmatprep.subr.mxu0 %v329
      %398 = vmatpush1.msra.mxu0 %v312
      %399 = vmatprep.subr.mxu0 %v330
      %400 = vmatpush1.msra.mxu0 %v313
      %401 = vmatprep.subr.mxu0 %v331
      %402 = vmatpush1.msra.mxu0 %v314
      %403 = vmatprep.subr.mxu0 %v332
      %404 = vmatpush1.msra.mxu0 %v315
      %405 = vmatprep.subr.mxu0 %v333
      %406 = vmatpush1.msra.mxu0 %v316
      %407 = vmatprep.subr.mxu0 %v334
      %408 = vmatpush1.msra.mxu0 %v317
      %409 = vmatprep.subr.mxu0 %v335
      %410 = vmatpush1.msra.mxu0 %v318
      %411 = vmatprep.subr.mxu0 %v336
      %412 = vmatpush1.msra.mxu0 %v319
      %413 = vmatprep.subr.mxu0 %v337
      %414 = vmatpush1.msra.mxu0 %v320
      %415 = vmatprep.subr.mxu0 %v338
      %416 = vmatpush1.msra.mxu0 %v321
      %417 = vmatprep.subr.mxu0 %v339
      %418 = vmatpush1.msra.mxu0 %v322
      %419 = vmatprep.subr.mxu0 %v340
      %420 = vmatpush1.msra.mxu0 %v323
      %421 = vmatprep.subr.mxu0 %v341
      %422 = vmatpush1.msra.mxu0 %v324
      %423 = vmatprep.subr.mxu0 %v342
      %424 = vmatpush1.msra.mxu0 %v325
      %425 = vmatprep.subr.mxu0 %v343
      %426 = vmatpush1.msra.mxu0 %v326
      %427 = vmatprep.subr.mxu0 %v344
      %428 = vmatpush1.msra.mxu0 %v327
      %429 = vmatprep.subr.mxu0 0.0
      %430 = vmatpush1.msra.mxu0 0.0
      %431 = vmatprep.subr.mxu0 0.0
      %432 = vmatpush1.msra.mxu0 0.0
      %433 = vmatprep.subr.mxu0 0.0
      %434 = vmatpush1.msra.mxu0 0.0
      %435 = vmatprep.subr.mxu0 0.0
      %436 = vmatpush1.msra.mxu0 0.0
      %437 = vmatprep.subr.mxu0 0.0
      %438 = vmatpush1.msra.mxu0 0.0
      %439 = vmatprep.subr.mxu0 0.0
      %440 = vmatpush1.msra.mxu0 0.0
      %441 = vmatprep.subr.mxu0 0.0
      %442 = vmatpush1.msra.mxu0 0.0
      %443 = vmatprep.subr.mxu0 0.0
      %444 = vmatpush1.msra.mxu0 0.0
      %445 = vmatprep.subr.mxu0 0.0
      %446 = vmatpush1.msra.mxu0 0.0
      %447 = vmatprep.subr.mxu0 0.0
      %448 = vmatpush1.msra.mxu0 0.0
      %449 = vmatprep.subr.mxu0 0.0
      %450 = vmatpush1.msra.mxu0 0.0
      %451 = vmatprep.subr.mxu0 0.0
      %452 = vmatpush1.msra.mxu0 0.0
      %453 = vmatprep.subr.mxu0 0.0
      %454 = vmatpush1.msra.mxu0 0.0
      %455 = vmatprep.subr.mxu0 0.0
      %456 = vmatpush1.msra.mxu0 0.0
      %457 = vmatprep.subr.mxu0 0.0
      %458 = vmatpush1.msra.mxu0 0.0
      %459 = vmatprep.subr.mxu0 0.0
      %460 = vmatpush1.msra.mxu0 0.0
      %461 = vmatprep.mubr.f32.mxu0 0.0
      %462 = vmatmul.mubr.f32.gmra.mrb[0].mxu0 %v395
      %v463 = vpop.f32.mrb[0].mxu0
      %v464 = vadd.f32 0.0, %v463
      %v465 = vpop.f32.mrb[0].mxu0
      %v466 = vadd.f32 0.0, %v465
      %467 = vmatprep.mubr.f32.mxu0 0.0
      %468 = vmatmul.mubr.f32.gmra.mrb[0].mxu0 %v396
      %v469 = vpop.f32.mrb[0].mxu0
      %v470 = vadd.f32 0.0, %v469
      %v471 = vpop.f32.mrb[0].mxu0
      %v472 = vadd.f32 0.0, %v471
      %473 = vdwg.mxu0
      %474 = vmatprep.subr.mxu0 %v362
      %475 = vmatpush1.msra.mxu0 %v345
      %476 = vmatprep.subr.mxu0 %v363
      %477 = vmatpush1.msra.mxu0 %v346
      %478 = vmatprep.subr.mxu0 %v364
      %479 = vmatpush1.msra.mxu0 %v347
      %480 = vmatprep.subr.mxu0 %v365
      %481 = vmatpush1.msra.mxu0 %v348
      %482 = vmatprep.subr.mxu0 %v366
      %483 = vmatpush1.msra.mxu0 %v349
      %484 = vmatprep.subr.mxu0 %v367
      %485 = vmatpush1.msra.mxu0 %v350
      %486 = vmatprep.subr.mxu0 %v368
      %487 = vmatpush1.msra.mxu0 %v351
      %488 = vmatprep.subr.mxu0 %v369
      %489 = vmatpush1.msra.mxu0 %v352
      %490 = vmatprep.subr.mxu0 %v370
      %491 = vmatpush1.msra.mxu0 %v353
      %492 = vmatprep.subr.mxu0 %v371
      %493 = vmatpush1.msra.mxu0 %v354
      %494 = vmatprep.subr.mxu0 %v372
      %495 = vmatpush1.msra.mxu0 %v355
      %496 = vmatprep.subr.mxu0 %v373
      %497 = vmatpush1.msra.mxu0 %v356
      %498 = vmatprep.subr.mxu0 %v374
      %499 = vmatpush1.msra.mxu0 %v357
      %500 = vmatprep.subr.mxu0 %v375
      %501 = vmatpush1.msra.mxu0 %v358
      %502 = vmatprep.subr.mxu0 %v376
      %503 = vmatpush1.msra.mxu0 %v359
      %504 = vmatprep.subr.mxu0 %v377
      %505 = vmatpush1.msra.mxu0 %v360
      %506 = vmatprep.subr.mxu0 0.0
      %507 = vmatpush1.msra.mxu0 0.0
      %508 = vmatprep.subr.mxu0 0.0
      %509 = vmatpush1.msra.mxu0 0.0
      %510 = vmatprep.subr.mxu0 0.0
      %511 = vmatpush1.msra.mxu0 0.0
      %512 = vmatprep.subr.mxu0 0.0
      %513 = vmatpush1.msra.mxu0 0.0
      %514 = vmatprep.subr.mxu0 0.0
      %515 = vmatpush1.msra.mxu0 0.0
      %516 = vmatprep.subr.mxu0 0.0
      %517 = vmatpush1.msra.mxu0 0.0
      %518 = vmatprep.subr.mxu0 0.0
      %519 = vmatpush1.msra.mxu0 0.0
      %520 = vmatprep.subr.mxu0 0.0
      %521 = vmatpush1.msra.mxu0 0.0
      %522 = vmatprep.subr.mxu0 0.0
      %523 = vmatpush1.msra.mxu0 0.0
      %524 = vmatprep.subr.mxu0 0.0
      %525 = vmatpush1.msra.mxu0 0.0
      %526 = vmatprep.subr.mxu0 0.0
      %527 = vmatpush1.msra.mxu0 0.0
      %528 = vmatprep.subr.mxu0 0.0
      %529 = vmatpush1.msra.mxu0 0.0
      %530 = vmatprep.subr.mxu0 0.0
      %531 = vmatpush1.msra.mxu0 0.0
      %532 = vmatprep.subr.mxu0 0.0
      %533 = vmatpush1.msra.mxu0 0.0
      %534 = vmatprep.subr.mxu0 0.0
      %535 = vmatpush1.msra.mxu0 0.0
      %536 = vmatprep.subr.mxu0 0.0
      %537 = vmatpush1.msra.mxu0 0.0
      %538 = vmatprep.mubr.f32.mxu0 0.0
      %539 = vmatmul.mubr.f32.gmra.mrb[0].mxu0 %v395
      %v540 = vpop.f32.mrb[0].mxu0
      %v541 = vadd.f32 0.0, %v540
      %v542 = vpop.f32.mrb[0].mxu0
      %v543 = vadd.f32 0.0, %v542
      %544 = vmatprep.mubr.f32.mxu0 0.0
      %545 = vmatmul.mubr.f32.gmra.mrb[0].mxu0 %v396
      %v546 = vpop.f32.mrb[0].mxu0
      %v547 = vadd.f32 0.0, %v546
      %v548 = vpop.f32.mrb[0].mxu0
      %v549 = vadd.f32 0.0, %v548
      %550 = vdwg.mxu0
      %551 = vmatprep.subr.mxu0 0.0
      %552 = vmatpush1.msra.mxu0 %v379
      %553 = vmatprep.subr.mxu0 0.0
      %554 = vmatpush1.msra.mxu0 %v380
      %555 = vmatprep.subr.mxu0 0.0
      %556 = vmatpush1.msra.mxu0 %v381
      %557 = vmatprep.subr.mxu0 0.0
      %558 = vmatpush1.msra.mxu0 %v382
      %559 = vmatprep.subr.mxu0 0.0
      %560 = vmatpush1.msra.mxu0 %v383
      %561 = vmatprep.subr.mxu0 0.0
      %562 = vmatpush1.msra.mxu0 %v384
      %563 = vmatprep.subr.mxu0 0.0
      %564 = vmatpush1.msra.mxu0 %v385
      %565 = vmatprep.subr.mxu0 0.0
      %566 = vmatpush1.msra.mxu0 %v386
      %567 = vmatprep.subr.mxu0 0.0
      %568 = vmatpush1.msra.mxu0 %v387
      %569 = vmatprep.subr.mxu0 0.0
      %570 = vmatpush1.msra.mxu0 %v388
      %571 = vmatprep.subr.mxu0 0.0
      %572 = vmatpush1.msra.mxu0 %v389
      %573 = vmatprep.subr.mxu0 0.0
      %574 = vmatpush1.msra.mxu0 %v390
      %575 = vmatprep.subr.mxu0 0.0
      %576 = vmatpush1.msra.mxu0 %v391
      %577 = vmatprep.subr.mxu0 0.0
      %578 = vmatpush1.msra.mxu0 %v392
      %579 = vmatprep.subr.mxu0 0.0
      %580 = vmatpush1.msra.mxu0 %v393
      %581 = vmatprep.subr.mxu0 0.0
      %582 = vmatpush1.msra.mxu0 %v394
      %583 = vmatprep.subr.mxu0 0.0
      %584 = vmatpush1.msra.mxu0 0.0
      %585 = vmatprep.subr.mxu0 0.0
      %586 = vmatpush1.msra.mxu0 0.0
      %587 = vmatprep.subr.mxu0 0.0
      %588 = vmatpush1.msra.mxu0 0.0
      %589 = vmatprep.subr.mxu0 0.0
      %590 = vmatpush1.msra.mxu0 0.0
      %591 = vmatprep.subr.mxu0 0.0
      %592 = vmatpush1.msra.mxu0 0.0
      %593 = vmatprep.subr.mxu0 0.0
      %594 = vmatpush1.msra.mxu0 0.0
      %595 = vmatprep.subr.mxu0 0.0
      %596 = vmatpush1.msra.mxu0 0.0
      %597 = vmatprep.subr.mxu0 0.0
      %598 = vmatpush1.msra.mxu0 0.0
      %599 = vmatprep.subr.mxu0 0.0
      %600 = vmatpush1.msra.mxu0 0.0
      %601 = vmatprep.subr.mxu0 0.0
      %602 = vmatpush1.msra.mxu0 0.0
      %603 = vmatprep.subr.mxu0 0.0
      %604 = vmatpush1.msra.mxu0 0.0
      %605 = vmatprep.subr.mxu0 0.0
      %606 = vmatpush1.msra.mxu0 0.0
      %607 = vmatprep.subr.mxu0 0.0
      %608 = vmatpush1.msra.mxu0 0.0
      %609 = vmatprep.subr.mxu0 0.0
      %610 = vmatpush1.msra.mxu0 0.0
      %611 = vmatprep.subr.mxu0 0.0
      %612 = vmatpush1.msra.mxu0 0.0
      %613 = vmatprep.subr.mxu0 0.0
      %614 = vmatpush1.msra.mxu0 0.0
      %615 = vmatprep.mubr.f32.mxu0 0.0
      %616 = vmatmul.mubr.f32.gmra.mrb[0].mxu0 %v395
      %v617 = vpop.f32.mrb[0].mxu0
      %v618 = vadd.f32 0.0, %v617
      %v619 = vpop.f32.mrb[0].mxu0
      %620 = vmatprep.mubr.f32.mxu0 0.0
      %621 = vmatmul.mubr.f32.gmra.mrb[0].mxu0 %v396
      %v622 = vpop.f32.mrb[0].mxu0
      %v623 = vadd.f32 0.0, %v622
      %v624 = vpop.f32.mrb[0].mxu0
      %625 = vdwg.mxu0
      %v626 = vld [vmem:[%s3] sm:$0xff]
      %v627 = vld [vmem:[%s3 + $0x8] sm:$0xff]
      %v628 = vld [vmem:[%s3 + $0x10] sm:$0xff]
      %v629 = vld [vmem:[%s3 + $0x18] sm:$0xff]
      %v630 = vld [vmem:[%s3 + $0x20] sm:$0xff]
      %v631 = vld [vmem:[%s3 + $0x28] sm:$0xff]
      %v632 = vld [vmem:[%s3 + $0x30] sm:$0xff]
      %v633 = vld [vmem:[%s3 + $0x38] sm:$0xff]
      %v634 = vld [vmem:[%s3 + $0x40] sm:$0xff]
      %v635 = vld [vmem:[%s3 + $0x48] sm:$0xff]
      %v636 = vld [vmem:[%s3 + $0x50] sm:$0xff]
      %v637 = vld [vmem:[%s3 + $0x58] sm:$0xff]
      %v638 = vld [vmem:[%s3 + $0x60] sm:$0xff]
      %v639 = vld [vmem:[%s3 + $0x68] sm:$0xff]
      %v640 = vld [vmem:[%s3 + $0x70] sm:$0xff]
      %v641 = vld [vmem:[%s3 + $0x78] sm:$0xff]
      %642 = vmatprep.subr.mxu0 0.0
      %643 = vmatpush1.msra.mxu0 %v626
      %644 = vmatprep.subr.mxu0 0.0
      %645 = vmatpush1.msra.mxu0 %v627
      %646 = vmatprep.subr.mxu0 0.0
      %647 = vmatpush1.msra.mxu0 %v628
      %648 = vmatprep.subr.mxu0 0.0
      %649 = vmatpush1.msra.mxu0 %v629
      %650 = vmatprep.subr.mxu0 0.0
      %651 = vmatpush1.msra.mxu0 %v630
      %652 = vmatprep.subr.mxu0 0.0
      %653 = vmatpush1.msra.mxu0 %v631
      %654 = vmatprep.subr.mxu0 0.0
      %655 = vmatpush1.msra.mxu0 %v632
      %656 = vmatprep.subr.mxu0 0.0
      %657 = vmatpush1.msra.mxu0 %v633
      %658 = vmatprep.subr.mxu0 0.0
      %659 = vmatpush1.msra.mxu0 %v634
      %660 = vmatprep.subr.mxu0 0.0
      %661 = vmatpush1.msra.mxu0 %v635
      %662 = vmatprep.subr.mxu0 0.0
      %663 = vmatpush1.msra.mxu0 %v636
      %664 = vmatprep.subr.mxu0 0.0
      %665 = vmatpush1.msra.mxu0 %v637
      %666 = vmatprep.subr.mxu0 0.0
      %667 = vmatpush1.msra.mxu0 %v638
      %668 = vmatprep.subr.mxu0 0.0
      %669 = vmatpush1.msra.mxu0 %v639
      %670 = vmatprep.subr.mxu0 0.0
      %671 = vmatpush1.msra.mxu0 %v640
      %672 = vmatprep.subr.mxu0 0.0
      %673 = vmatpush1.msra.mxu0 %v641
      %674 = vmatprep.subr.mxu0 0.0
      %675 = vmatpush1.msra.mxu0 0.0
      %676 = vmatprep.subr.mxu0 0.0
      %677 = vmatpush1.msra.mxu0 0.0
      %678 = vmatprep.subr.mxu0 0.0
      %679 = vmatpush1.msra.mxu0 0.0
      %680 = vmatprep.subr.mxu0 0.0
      %681 = vmatpush1.msra.mxu0 0.0
      %682 = vmatprep.subr.mxu0 0.0
      %683 = vmatpush1.msra.mxu0 0.0
      %684 = vmatprep.subr.mxu0 0.0
      %685 = vmatpush1.msra.mxu0 0.0
      %686 = vmatprep.subr.mxu0 0.0
      %687 = vmatpush1.msra.mxu0 0.0
      %688 = vmatprep.subr.mxu0 0.0
      %689 = vmatpush1.msra.mxu0 0.0
      %690 = vmatprep.subr.mxu0 0.0
      %691 = vmatpush1.msra.mxu0 0.0
      %692 = vmatprep.subr.mxu0 0.0
      %693 = vmatpush1.msra.mxu0 0.0
      %694 = vmatprep.subr.mxu0 0.0
      %695 = vmatpush1.msra.mxu0 0.0
      %696 = vmatprep.subr.mxu0 0.0
      %697 = vmatpush1.msra.mxu0 0.0
      %698 = vmatprep.subr.mxu0 0.0
      %699 = vmatpush1.msra.mxu0 0.0
      %700 = vmatprep.subr.mxu0 0.0
      %701 = vmatpush1.msra.mxu0 0.0
      %702 = vmatprep.subr.mxu0 0.0
      %703 = vmatpush1.msra.mxu0 0.0
      %704 = vmatprep.subr.mxu0 0.0
      %705 = vmatpush1.msra.mxu0 0.0
      %706 = vmatprep.mubr.f32.mxu0 0.0
      %707 = vmatmul.mubr.f32.gmra.mrb[0].mxu0 %v464
      %v708 = vpop.f32.mrb[0].mxu0
      %v709 = vadd.f32 0.0, %v708
      %v710 = vpop.f32.mrb[0].mxu0
      %711 = vmatprep.mubr.f32.mxu0 0.0
      %712 = vmatmul.mubr.f32.gmra.mrb[0].mxu0 %v470
      %v713 = vpop.f32.mrb[0].mxu0
      %v714 = vadd.f32 0.0, %v713
      %v715 = vpop.f32.mrb[0].mxu0
      %716 = vmatprep.mubr.f32.mxu0 0.0
      %717 = vmatmul.mubr.f32.gmra.mrb[0].mxu0 %v466
      %v718 = vpop.f32.mrb[0].mxu0
      %v719 = vadd.f32 0.0, %v718
      %v720 = vpop.f32.mrb[0].mxu0
      %721 = vmatprep.mubr.f32.mxu0 0.0
      %722 = vmatmul.mubr.f32.gmra.mrb[0].mxu0 %v472
      %v723 = vpop.f32.mrb[0].mxu0
      %v724 = vadd.f32 0.0, %v723
      %v725 = vpop.f32.mrb[0].mxu0
      %726 = vmatprep.mubr.f32.mxu0 0.0
      %727 = vmatmul.mubr.f32.gmra.mrb[0].mxu0 %v541
      %v728 = vpop.f32.mrb[0].mxu0
      %v729 = vadd.f32 0.0, %v728
      %v730 = vpop.f32.mrb[0].mxu0
      %731 = vmatprep.mubr.f32.mxu0 0.0
      %732 = vmatmul.mubr.f32.gmra.mrb[0].mxu0 %v547
      %v733 = vpop.f32.mrb[0].mxu0
      %v734 = vadd.f32 0.0, %v733
      %v735 = vpop.f32.mrb[0].mxu0
      %736 = vmatprep.mubr.f32.mxu0 0.0
      %737 = vmatmul.mubr.f32.gmra.mrb[0].mxu0 %v543
      %v738 = vpop.f32.mrb[0].mxu0
      %v739 = vadd.f32 0.0, %v738
      %v740 = vpop.f32.mrb[0].mxu0
      %741 = vmatprep.mubr.f32.mxu0 0.0
      %742 = vmatmul.mubr.f32.gmra.mrb[0].mxu0 %v549
      %v743 = vpop.f32.mrb[0].mxu0
      %v744 = vadd.f32 0.0, %v743
      %v745 = vpop.f32.mrb[0].mxu0
      %746 = vmatprep.mubr.f32.mxu0 0.0
      %747 = vmatmul.mubr.f32.gmra.mrb[0].mxu0 %v618
      %v748 = vpop.f32.mrb[0].mxu0
      %v749 = vadd.f32 0.0, %v748
      %v750 = vpop.f32.mrb[0].mxu0
      %751 = vmatprep.mubr.f32.mxu0 0.0
      %752 = vmatmul.mubr.f32.gmra.mrb[0].mxu0 %v623
      %v753 = vpop.f32.mrb[0].mxu0
      %v754 = vadd.f32 0.0, %v753
      %v755 = vpop.f32.mrb[0].mxu0
      %756 = vdwg.mxu0
      %v757 = vmul.f32 %v709, 0.125
      %v758 = vmul.f32 %v714, 0.125
      %v759 = vmul.f32 %v719, 0.125
      %v760 = vmul.f32 %v724, 0.125
      %761 = vst [vmem:[%s306] sm:$0xff] %v757
      %762 = vst [vmem:[%s306 + $0x8] sm:$0xff] %v758
      %763 = vst [vmem:[%s306 + $0x10] sm:$0xff] %v759
      %764 = vst [vmem:[%s306 + $0x18] sm:$0xff] %v760
      %v765 = vld [vmem:[%s4] sm:$0xff]
      %v766 = vld [vmem:[%s4 + $0x8] sm:$0xff]
      %v767 = vld [vmem:[%s4 + $0x10] sm:$0xff]
      %vm768 = vcmask 392192
      %v770 = vsel %vm768, %v765, 0
      %v773 = vsel %vm768, %v766, 0
      %v776 = vsel %vm768, %v767, 0
      %778 = vmatprep.subr.mxu0 0.0
      %779 = vmatpush1.msra.mxu0 %v729
      %780 = vmatprep.subr.mxu0 0.0
      %781 = vmatpush1.msra.mxu0 %v734
      %782 = vmatprep.subr.mxu0 0.0
      %783 = vmatpush1.msra.mxu0 %v739
      %784 = vmatprep.subr.mxu0 0.0
      %785 = vmatpush1.msra.mxu0 %v744
      %786 = vmatprep.subr.mxu0 0.0
      %787 = vmatpush1.msra.mxu0 %v749
      %788 = vmatprep.subr.mxu0 0.0
      %789 = vmatpush1.msra.mxu0 %v754
      %790 = vmatprep.subr.mxu0 0.0
      %791 = vmatpush1.msra.mxu0 0.0
      %792 = vmatprep.subr.mxu0 0.0
      %793 = vmatpush1.msra.mxu0 0.0
      %794 = vmatprep.subr.mxu0 0.0
      %795 = vmatpush1.msra.mxu0 0.0
      %796 = vmatprep.subr.mxu0 0.0
      %797 = vmatpush1.msra.mxu0 0.0
      %798 = vmatprep.subr.mxu0 0.0
      %799 = vmatpush1.msra.mxu0 0.0
      %800 = vmatprep.subr.mxu0 0.0
      %801 = vmatpush1.msra.mxu0 0.0
      %802 = vmatprep.subr.mxu0 0.0
      %803 = vmatpush1.msra.mxu0 0.0
      %804 = vmatprep.subr.mxu0 0.0
      %805 = vmatpush1.msra.mxu0 0.0
      %806 = vmatprep.subr.mxu0 0.0
      %807 = vmatpush1.msra.mxu0 0.0
      %808 = vmatprep.subr.mxu0 0.0
      %809 = vmatpush1.msra.mxu0 0.0
      %810 = vmatprep.subr.mxu0 0.0
      %811 = vmatpush1.msra.mxu0 0.0
      %812 = vmatprep.subr.mxu0 0.0
      %813 = vmatpush1.msra.mxu0 0.0
      %814 = vmatprep.subr.mxu0 0.0
      %815 = vmatpush1.msra.mxu0 0.0
      %816 = vmatprep.subr.mxu0 0.0
      %817 = vmatpush1.msra.mxu0 0.0
      %818 = vmatprep.subr.mxu0 0.0
      %819 = vmatpush1.msra.mxu0 0.0
      %820 = vmatprep.subr.mxu0 0.0
      %821 = vmatpush1.msra.mxu0 0.0
      %822 = vmatprep.subr.mxu0 0.0
      %823 = vmatpush1.msra.mxu0 0.0
      %824 = vmatprep.subr.mxu0 0.0
      %825 = vmatpush1.msra.mxu0 0.0
      %826 = vmatprep.subr.mxu0 0.0
      %827 = vmatpush1.msra.mxu0 0.0
      %828 = vmatprep.subr.mxu0 0.0
      %829 = vmatpush1.msra.mxu0 0.0
      %830 = vmatprep.subr.mxu0 0.0
      %831 = vmatpush1.msra.mxu0 0.0
      %832 = vmatprep.subr.mxu0 0.0
      %833 = vmatpush1.msra.mxu0 0.0
      %834 = vmatprep.subr.mxu0 0.0
      %835 = vmatpush1.msra.mxu0 0.0
      %836 = vmatprep.subr.mxu0 0.0
      %837 = vmatpush1.msra.mxu0 0.0
      %838 = vmatprep.subr.mxu0 0.0
      %839 = vmatpush1.msra.mxu0 0.0
      %840 = vmatprep.subr.mxu0 0.0
      %841 = vmatpush1.msra.mxu0 0.0
      %842 = vmatprep.mubr.f32.mxu0 0.0
      %843 = vmatmul.mubr.f32.gmra.mrb[0].mxu0 %v770
      %v844 = vpop.f32.mrb[0].mxu0
      %v845 = vadd.f32 0.0, %v844
      %v846 = vpop.f32.mrb[0].mxu0
      %847 = vmatprep.mubr.f32.mxu0 0.0
      %848 = vmatmul.mubr.f32.gmra.mrb[0].mxu0 %v773
      %v849 = vpop.f32.mrb[0].mxu0
      %v850 = vadd.f32 0.0, %v849
      %v851 = vpop.f32.mrb[0].mxu0
      %852 = vmatprep.mubr.f32.mxu0 0.0
      %853 = vmatmul.mubr.f32.gmra.mrb[0].mxu0 %v776
      %v854 = vpop.f32.mrb[0].mxu0
      %v855 = vadd.f32 0.0, %v854
      %v856 = vpop.f32.mrb[0].mxu0
      %857 = vdwg.mxu0
      %v858 = vld [vmem:[%s5] sm:$0xff]
      %v859 = vld [vmem:[%s5 + $0x8] sm:$0xff]
      %v860 = vld [vmem:[%s5 + $0x10] sm:$0xff]
      %v861 = vld [vmem:[%s5 + $0x18] sm:$0xff]
      %v862 = vld [vmem:[%s5 + $0x20] sm:$0xff]
      %v863 = vld [vmem:[%s5 + $0x28] sm:$0xff]
      %v864 = vld [vmem:[%s5 + $0x30] sm:$0xff]
      %v865 = vld [vmem:[%s5 + $0x38] sm:$0xff]
      %v866 = vld [vmem:[%s5 + $0x40] sm:$0xff]
      %v867 = vld [vmem:[%s5 + $0x48] sm:$0xff]
      %v868 = vld [vmem:[%s5 + $0x50] sm:$0xff]
      %v869 = vld [vmem:[%s5 + $0x58] sm:$0xff]
      %v870 = vld [vmem:[%s5 + $0x60] sm:$0xff]
      %v871 = vld [vmem:[%s5 + $0x68] sm:$0xff]
      %v872 = vld [vmem:[%s5 + $0x70] sm:$0xff]
      %v873 = vld [vmem:[%s5 + $0x78] sm:$0xff]
      %874 = vmatprep.subr.mxu0 0.0
      %875 = vmatpush1.msra.mxu0 %v858
      %876 = vmatprep.subr.mxu0 0.0
      %877 = vmatpush1.msra.mxu0 %v859
      %878 = vmatprep.subr.mxu0 0.0
      %879 = vmatpush1.msra.mxu0 %v860
      %880 = vmatprep.subr.mxu0 0.0
      %881 = vmatpush1.msra.mxu0 %v861
      %882 = vmatprep.subr.mxu0 0.0
      %883 = vmatpush1.msra.mxu0 %v862
      %884 = vmatprep.subr.mxu0 0.0
      %885 = vmatpush1.msra.mxu0 %v863
      %886 = vmatprep.subr.mxu0 0.0
      %887 = vmatpush1.msra.mxu0 %v864
      %888 = vmatprep.subr.mxu0 0.0
      %889 = vmatpush1.msra.mxu0 %v865
      %890 = vmatprep.subr.mxu0 0.0
      %891 = vmatpush1.msra.mxu0 %v866
      %892 = vmatprep.subr.mxu0 0.0
      %893 = vmatpush1.msra.mxu0 %v867
      %894 = vmatprep.subr.mxu0 0.0
      %895 = vmatpush1.msra.mxu0 %v868
      %896 = vmatprep.subr.mxu0 0.0
      %897 = vmatpush1.msra.mxu0 %v869
      %898 = vmatprep.subr.mxu0 0.0
      %899 = vmatpush1.msra.mxu0 %v870
      %900 = vmatprep.subr.mxu0 0.0
      %901 = vmatpush1.msra.mxu0 %v871
      %902 = vmatprep.subr.mxu0 0.0
      %903 = vmatpush1.msra.mxu0 %v872
      %904 = vmatprep.subr.mxu0 0.0
      %905 = vmatpush1.msra.mxu0 %v873
      %906 = vmatprep.subr.mxu0 0.0
      %907 = vmatpush1.msra.mxu0 0.0
      %908 = vmatprep.subr.mxu0 0.0
      %909 = vmatpush1.msra.mxu0 0.0
      %910 = vmatprep.subr.mxu0 0.0
      %911 = vmatpush1.msra.mxu0 0.0
      %912 = vmatprep.subr.mxu0 0.0
      %913 = vmatpush1.msra.mxu0 0.0
      %914 = vmatprep.subr.mxu0 0.0
      %915 = vmatpush1.msra.mxu0 0.0
      %916 = vmatprep.subr.mxu0 0.0
      %917 = vmatpush1.msra.mxu0 0.0
      %918 = vmatprep.subr.mxu0 0.0
      %919 = vmatpush1.msra.mxu0 0.0
      %920 = vmatprep.subr.mxu0 0.0
      %921 = vmatpush1.msra.mxu0 0.0
      %922 = vmatprep.subr.mxu0 0.0
      %923 = vmatpush1.msra.mxu0 0.0
      %924 = vmatprep.subr.mxu0 0.0
      %925 = vmatpush1.msra.mxu0 0.0
      %926 = vmatprep.subr.mxu0 0.0
      %927 = vmatpush1.msra.mxu0 0.0
      %928 = vmatprep.subr.mxu0 0.0
      %929 = vmatpush1.msra.mxu0 0.0
      %930 = vmatprep.subr.mxu0 0.0
      %931 = vmatpush1.msra.mxu0 0.0
      %932 = vmatprep.subr.mxu0 0.0
      %933 = vmatpush1.msra.mxu0 0.0
      %934 = vmatprep.subr.mxu0 0.0
      %935 = vmatpush1.msra.mxu0 0.0
      %936 = vmatprep.subr.mxu0 0.0
      %937 = vmatpush1.msra.mxu0 0.0
      %938 = vmatprep.mubr.f32.mxu0 0.0
      %939 = vmatmul.mubr.f32.gmra.mrb[0].mxu0 %v845
      %v940 = vpop.f32.mrb[0].mxu0
      %v941 = vadd.f32 0.0, %v940
      %v942 = vpop.f32.mrb[0].mxu0
      %943 = vmatprep.mubr.f32.mxu0 0.0
      %944 = vmatmul.mubr.f32.gmra.mrb[0].mxu0 %v850
      %v945 = vpop.f32.mrb[0].mxu0
      %v946 = vadd.f32 0.0, %v945
      %v947 = vpop.f32.mrb[0].mxu0
      %948 = vmatprep.mubr.f32.mxu0 0.0
      %949 = vmatmul.mubr.f32.gmra.mrb[0].mxu0 %v855
      %v950 = vpop.f32.mrb[0].mxu0
      %v951 = vadd.f32 0.0, %v950
      %v952 = vpop.f32.mrb[0].mxu0
      %953 = vdwg.mxu0
      %954 = vst [vmem:[%s311] sm:$0xff] %v941
      %955 = vst [vmem:[%s311 + $0x8] sm:$0xff] %v946
      %956 = vst [vmem:[%s311 + $0x10] sm:$0xff] %v951
      %p957 = scmp.lt.s32.totalorder %s19, 1
      %s958 = scalar_select %p957, %s19, 1
      %s959 = smul.addr %s958, 4
      %s960 = smul.addr %s959, 8
      %s961 = scalar_lea.vmem %s6, %s960
      %p962 = scmp.lt.s32.totalorder %s19, 1
      %s963 = scalar_select %p962, %s19, 1
      %s964 = smul.addr %s963, 3
      %s965 = smul.addr %s964, 8
      %s966 = scalar_lea.vmem %s7, %s965
      // Predicated region
      $region45: #{loss_fn.2} parent=43 // pred_check
        %p967 = pneg %p173
      $region46: #{loss_fn.2} parent=43 // pred_check_branch
        %969 = sbr.rel (%p967) target = $region48
      $region47: #{loss_fn.2} parent=43 // pred_region
        _
      $region48: #{loss_fn.2} parent=43 // pred_fallthru
        _
      // Predicated region
      $region49: #{loss_fn.2} parent=43 // pred_check
        %p970 = pneg %p199
      $region50: #{loss_fn.2} parent=43 // pred_check_branch
        %972 = sbr.rel (%p970) target = $region52
      $region51: #{loss_fn.2} parent=43 // pred_region
        _
      $region52: #{loss_fn.2} parent=43 // pred_fallthru
        _
    $region44: #{loss_fn.2} parent=5 // pred_fallthru
      _
    %p973 = scmp.le.s32.totalorder 2, %s14
    // Predicated region
    $region53: #{loss_fn.2} parent=5 // pred_check
      %p974 = pneg %p973
    $region54: #{loss_fn.2} parent=5 // pred_check_branch
      %976 = sbr.rel (%p974) target = $region56
    $region55: #{loss_fn.2} parent=5 // pred_region
      %s977 = ssub.s32 %s14, 2
      // Predicated region
      $region57: #{loss_fn.2} parent=55 // pred_check
        %p978 = pneg %p179
      $region58: #{loss_fn.2} parent=55 // pred_check_branch
        %980 = sbr.rel (%p978) target = $region60
      $region59: #{loss_fn.2} parent=55 // pred_region
        %p981 = scmp.lt.s32.totalorder %s20, 1
        %s982 = scalar_select %p981, %s20, 1
        %s983 = smul.addr %s982, 4
        %s984 = smul.addr %s983, 8
        %s985 = scalar_lea.vmem %s6, %s984
      $region60: #{loss_fn.2} parent=55 // pred_fallthru
        _
      // Predicated region
      $region61: #{loss_fn.2} parent=55 // pred_check
        %p986 = pneg %p205
      $region62: #{loss_fn.2} parent=55 // pred_check_branch
        %988 = sbr.rel (%p986) target = $region64
      $region63: #{loss_fn.2} parent=55 // pred_region
        %p989 = scmp.lt.s32.totalorder %s20, 1
        %s990 = scalar_select %p989, %s20, 1
        %s991 = smul.addr %s990, 3
        %s992 = smul.addr %s991, 8
        %s993 = scalar_lea.vmem %s7, %s992
      $region64: #{loss_fn.2} parent=55 // pred_fallthru
        _
    $region56: #{loss_fn.2} parent=5 // pred_fallthru
      _
  $region6: #{loss_fn.2} parent=0 // loop_footer
    %s18 = sadd.s32 1, %s14
  $region7: #{loss_fn.2} parent=0 // loop_footer_branch
    %13 = sbr.rel target = $region3
  $region8: #{loss_fn.2} parent=0 // loop_exit
    _

// kernel: custom-call.35
$region0: #{custom-call.35}
  %s0 = inlined_call_operand.vmem [shape: f32[2,36,3], index: 0, kind: input, shape index: {}]
  %s1 = inlined_call_operand.vmem [shape: f32[2,36,3], index: 1, kind: output, shape index: {0}]
  %s2 = inlined_call_operand.vmem [shape: f32[2,3], index: 2, kind: output, shape index: {1}]
  %3 = xla_tuple %s1, %s2
  $region1: #{custom-call.35} parent=0
    #allocation0 [shape = 'u8[40960]{0}', space=vmem, size = 0xa000, scoped, tag = 'operand span for operand 0']
    #allocation1 [shape = 'u8[40960]{0}', space=vmem, size = 0xa000, scoped, tag = 'operand span for operand 1']
    #allocation2 [shape = 'u8[4096]{0}', space=vmem, size = 0x1000, scoped, tag = 'operand span for operand 2']
    #allocation3 [shape = 'u8[2048]{0}', space=vmem, size = 0x800, scoped, tag = 'packed  for operand 2']
    loop: start=0, step=1, limit=4
    $region2: #{custom-call.35} parent=1 // loop_pre_header
      _
    $region3: #{custom-call.35} parent=1 // loop_header
      %s5 = sphi 0, %s9
      %p6 = scmp.ge.s32.totalorder %s5, 4
      %s12 = sphi 0, %s31
      %s13 = sphi 0, %s27
      %s14 = sphi 0, %s23
      %s15 = sphi 0, %s12
      %s16 = sphi 0, %s13
      %s17 = sphi 0, %s14
      %s18 = sphi 0, %s15
      %s19 = sphi 0, %s16
      %s20 = sphi 0, %s17
      %s46 = sphi 0, %s48
      %s49 = sphi 0, %s46
      %s50 = sphi 0, %s49
      %s66 = sphi 0, %s50
    $region4: #{custom-call.35} parent=1 // loop_header_branch
      %8 = sbr.rel (%p6) target = $region8
    $region5: #{custom-call.35} parent=1 // loop_body
      %s10 = ssub.s32 %s5, 1
      %s11 = ssub.s32 %s5, 2
      %s21 = sadd.s32 1, %s14
      %p22 = scmp.ge.s32.totalorder %s21, 1
      %s23 = scalar_select %p22, 0, %s21
      %s24 = sadd.s32 1, %s13
      %s25 = scalar_select %p22, %s24, %s13
      %p26 = scmp.ge.s32.totalorder %s25, 1
      %s27 = scalar_select %p26, 0, %s25
      %s28 = sadd.s32 1, %s12
      %s29 = scalar_select %p26, %s28, %s12
      %p30 = scmp.ge.s32.totalorder %s29, 2
      %s31 = scalar_select %p30, 0, %s29
      %p32 = scmp.lt.s32.totalorder %s12, 0
      %s33 = ssub.s32 0, %s12
      %s34 = scalar_select %p32, %s33, %s12
      %s35 = sshrl.u32 %s34, 3
      %s36 = ssub.s32 0, %s35
      %s37 = scalar_select %p32, %s36, %s35
      %p38 = scmp.lt.s32.totalorder %s31, 0
      %s39 = ssub.s32 0, %s31
      %s40 = scalar_select %p38, %s39, %s31
      %s41 = sshrl.u32 %s40, 3
      %s42 = ssub.s32 0, %s41
      %s43 = scalar_select %p38, %s42, %s41
      %s44 = ssub.s32 %s37, %s43
      %p45 = scmp.eq.s32.totalorder %s44, 0
      %s47 = sadd.s32 %s46, 1
      %s48 = scalar_select %p45, %s46, %s47
      %p51 = pneg %p45
      %p52 = scmp.eq.s32.totalorder %s5, 1
      %p53 = por %p51, %p52
      %p54 = scmp.ne.s32.totalorder %s46, %s49
      %p55 = scmp.eq.s32.totalorder %s5, 0
      %p56 = por %p54, %p55
      %p57 = scmp.ne.s32.totalorder %s46, %s49
      %p58 = scmp.eq.s32.totalorder %s10, 1
      %p59 = por %p57, %p58
      %p60 = scmp.ne.s32.totalorder %s49, %s50
      %p61 = scmp.eq.s32.totalorder %s10, 0
      %p62 = por %p60, %p61
      %p63 = scmp.ne.s32.totalorder %s49, %s50
      %p64 = scmp.eq.s32.totalorder %s11, 1
      %p65 = por %p63, %p64
      %p67 = scmp.ne.s32.totalorder %s50, %s66
      %p68 = scmp.eq.s32.totalorder %s11, 0
      %p69 = por %p67, %p68
      %p70 = scmp.le.s32.totalorder 1, %s5
      %p71 = scmp.lt.s32.totalorder %s5, 3
      %p72 = pnand %p70, %p71
      %p73 = pneg %p72
      // Predicated region
      $region9: #{custom-call.35} parent=5 // pred_check
        _
      $region10: #{custom-call.35} parent=5 // pred_check_branch
        %75 = sbr.rel (%p72) target = $region12
      $region11: #{custom-call.35} parent=5 // pred_region
        %s76 = ssub.s32 %s5, 1
      $region12: #{custom-call.35} parent=5 // pred_fallthru
        _
      %p77 = scmp.lt.s32.totalorder %s5, 2
      // Predicated region
      $region13: #{custom-call.35} parent=5 // pred_check
        %p78 = pneg %p77
      $region14: #{custom-call.35} parent=5 // pred_check_branch
        %80 = sbr.rel (%p78) target = $region16
      $region15: #{custom-call.35} parent=5 // pred_region
        %s81 = sand.u32 %s5, 1
        %s82 = sand.u32 %s5, 1
        %s83 = smul.addr %s82, 40
        %s84 = scalar_lea.vmem [#allocation0], %s83
        %s85 = smul.u32 5, %s13
        %s86 = sadd.s32 %s14, %s85
        %s87 = smul.addr %s12, 5
        %s88 = sadd.s32 %s86, %s87
        %s89 = smul.addr %s88, 8
        %s90 = scalar_lea.vmem %s0, %s89
        // Predicated region
        $region17: #{custom-call.35} parent=15 // pred_check
          _
        $region18: #{custom-call.35} parent=15 // pred_check_branch
          %92 = sbr.rel (0) target = $region20
        $region19: #{custom-call.35} parent=15 // pred_region
          // Predicated region
          $region21: #{custom-call.35} parent=19 // pred_check
            _
          $region22: #{custom-call.35} parent=19 // pred_check_branch
            %94 = sbr.rel (0) target = $region24
          $region23: #{custom-call.35} parent=19 // pred_region
            // Predicated region
            $region36: #{custom-call.35} parent=23 // pred_check
              _
            $region37: #{custom-call.35} parent=23 // pred_check_branch
              %117 = sbr.rel (0) target = $region39
            $region38: #{custom-call.35} parent=23 // pred_region
              loop: start=0, step=1, limit=1
              $region40: #{custom-call.35} parent=38 // loop_pre_header
                _
              $region41: #{custom-call.35} parent=38 // loop_header
                %s119 = sphi 0, %s123
                %p120 = scmp.ge.s32.totalorder %s119, 1
                %s124 = sphi %s90, %s90
                %s125 = sphi %s84, %s84
              $region42: #{custom-call.35} parent=38 // loop_header_branch
                %122 = sbr.rel (%p120) target = $region46
              $region43: #{custom-call.35} parent=38 // loop_body
                %v126 = vld [vmem:[%s124] sm:$0xff]
                %127 = vst [vmem:[%s125] sm:$0xff] %v126
                %v128 = vld [vmem:[%s124 + $0x8] sm:$0xff]
                %129 = vst [vmem:[%s125 + $0x8] sm:$0xff] %v128
                %v130 = vld [vmem:[%s124 + $0x10] sm:$0xff]
                %131 = vst [vmem:[%s125 + $0x10] sm:$0xff] %v130
                %v132 = vld [vmem:[%s124 + $0x18] sm:$0xff]
                %133 = vst [vmem:[%s125 + $0x18] sm:$0xff] %v132
                %v134 = vld [vmem:[%s124 + $0x20] sm:$0xff]
                %135 = vst [vmem:[%s125 + $0x20] sm:$0xff] %v134
              $region44: #{custom-call.35} parent=38 // loop_footer
                %s123 = sadd.s32 1, %s119
              $region45: #{custom-call.35} parent=38 // loop_footer_branch
                %118 = sbr.rel target = $region41
              $region46: #{custom-call.35} parent=38 // loop_exit
                _
            $region39: #{custom-call.35} parent=23 // pred_fallthru
              _
            // Predicated region
            $region47: #{custom-call.35} parent=23 // pred_check
              _
            $region48: #{custom-call.35} parent=23 // pred_check_branch
              %137 = sbr.rel target = $region50
            $region49: #{custom-call.35} parent=23 // pred_region
              _
            $region50: #{custom-call.35} parent=23 // pred_fallthru
              _
          $region24: #{custom-call.35} parent=19 // pred_fallthru
            _
          // Predicated region
          $region25: #{custom-call.35} parent=19 // pred_check
            _
          $region26: #{custom-call.35} parent=19 // pred_check_branch
            %96 = sbr.rel target = $region28
          $region27: #{custom-call.35} parent=19 // pred_region
            loop: start=0, step=1, limit=1
            $region29: #{custom-call.35} parent=27 // loop_pre_header
              _
            $region30: #{custom-call.35} parent=27 // loop_header
              %s99 = sphi 0, %s103
              %p100 = scmp.ge.s32.totalorder %s99, 1
              %s104 = sphi %s90, %s90
              %s105 = sphi %s84, %s84
            $region31: #{custom-call.35} parent=27 // loop_header_branch
              %102 = sbr.rel (%p100) target = $region35
            $region32: #{custom-call.35} parent=27 // loop_body
              %v106 = vld [vmem:[%s104] sm:$0xff]
              %107 = vst [vmem:[%s105] sm:$0xff] %v106
              %v108 = vld [vmem:[%s104 + $0x8] sm:$0xff]
              %109 = vst [vmem:[%s105 + $0x8] sm:$0xff] %v108
              %v110 = vld [vmem:[%s104 + $0x10] sm:$0xff]
              %111 = vst [vmem:[%s105 + $0x10] sm:$0xff] %v110
              %v112 = vld [vmem:[%s104 + $0x18] sm:$0xff]
              %113 = vst [vmem:[%s105 + $0x18] sm:$0xff] %v112
              %v114 = vld [vmem:[%s104 + $0x20] sm:$0xff]
              %115 = vst [vmem:[%s105 + $0x20] sm:$0xff] %v114
            $region33: #{custom-call.35} parent=27 // loop_footer
              %s103 = sadd.s32 1, %s99
            $region34: #{custom-call.35} parent=27 // loop_footer_branch
              %98 = sbr.rel target = $region30
            $region35: #{custom-call.35} parent=27 // loop_exit
              _
          $region28: #{custom-call.35} parent=19 // pred_fallthru
            _
        $region20: #{custom-call.35} parent=15 // pred_fallthru
          _
        %138 = vnop
      $region16: #{custom-call.35} parent=5 // pred_fallthru
        _
      %p139 = scmp.le.s32.totalorder 1, %s5
      %p140 = scmp.lt.s32.totalorder %s5, 3
      %p141 = pnand %p139, %p140
      %p142 = pneg %p141
      // Predicated region
      $region51: #{custom-call.35} parent=5 // pred_check
        _
      $region52: #{custom-call.35} parent=5 // pred_check_branch
        %144 = sbr.rel (%p141) target = $region54
      $region53: #{custom-call.35} parent=5 // pred_region
        #allocation4 [shape = 'f32[36,128]{1,0}', space=vmem, size = 0x5000, scoped, tag = 'scratch for Householder reflectors']
        %s145 = ssub.s32 %s5, 1
        %s146 = sand.u32 %s10, 1
        %s147 = sand.u32 %s10, 1
        %s148 = smul.addr %s147, 40
        %s149 = scalar_lea.vmem [#allocation0], %s148
        %s150 = sand.u32 %s10, 1
        %s151 = sand.u32 %s10, 1
        %s152 = smul.addr %s151, 40
        %s153 = scalar_lea.vmem [#allocation0], %s152
        %s154 = sand.u32 %s10, 1
        %s155 = sand.u32 %s10, 1
        %s156 = smul.addr %s155, 40
        %s157 = scalar_lea.vmem [#allocation1], %s156
        %p158 = pneg %p62
        %p159 = pneg %p59
        %s160 = sand.u32 %s49, 1
        %s161 = sand.u32 %s49, 1
        %s162 = smul.addr %s161, 2
        %s163 = scalar_lea.vmem [#allocation3], %s162
        %s164 = smul.u32 5, %s16
        %s165 = smul.u32 5, %s16
        %p166 = scmp.lt.s32.totalorder %s15, 0
        %s167 = ssub.s32 0, %s15
        %s168 = scalar_select %p166, %s167, %s15
        %s169 = sshrl.u32 %s168, 3
        %s170 = ssub.s32 0, %s169
        %s171 = scalar_select %p166, %s170, %s169
        %s172 = sand.u32 %s15, 7
        %s173 = scalar_lea.vmem [#allocation2], %s172
        %v174 = vld [vmem:[%s149] sm:$0xff]
        %175 = vst [vmem:[%s157] sm:$0xff] %v174
        %s176 = scalar_lea.vmem %s157, 8 [#allocation1]
        %s177 = scalar_lea.vmem %s149, 8 [#allocation0]
        %v178 = vld [vmem:[%s177] sm:$0xff]
        %179 = vst [vmem:[%s176] sm:$0xff] %v178
        %s180 = scalar_lea.vmem %s157, 16 [#allocation1]
        %s181 = scalar_lea.vmem %s149, 16 [#allocation0]
        %v182 = vld [vmem:[%s181] sm:$0xff]
        %183 = vst [vmem:[%s180] sm:$0xff] %v182
        %s184 = scalar_lea.vmem %s157, 24 [#allocation1]
        %s185 = scalar_lea.vmem %s149, 24 [#allocation0]
        %v186 = vld [vmem:[%s185] sm:$0xff]
        %187 = vst [vmem:[%s184] sm:$0xff] %v186
        %s188 = scalar_lea.vmem %s157, 32 [#allocation1]
        %s189 = scalar_lea.vmem %s149, 32 [#allocation0]
        %v190 = vld [vmem:[%s189] sm:$0xff]
        %191 = vst [vmem:[%s188] sm:$0xff] %v190
        %192 = vst [vmem:[%s173] sm:$0x1] 0.0
        loop: start=0, step=1, limit=3
        $region55: #{custom-call.35} parent=53 // loop_pre_header
          _
        $region56: #{custom-call.35} parent=53 // loop_header
          %s194 = sphi 0, %s198
          %p195 = scmp.ge.s32.totalorder %s194, 3
        $region57: #{custom-call.35} parent=53 // loop_header_branch
          %197 = sbr.rel (%p195) target = $region61
        $region58: #{custom-call.35} parent=53 // loop_body
          %v199 = vld [vmem:[%s157] sm:$0xff]
          %v200 = vlaneseq
          %v201 = vshrl.u32 %v200, 7
          %v203 = vstv %s194
          %vm204 = vcmp.gt.s32.totalorder %v201, %v203
          %v205 = vsel %vm204, %v199, 0.0
          %v206 = vmul.f32 %v205, %v205
          %s207 = scalar_lea.vmem %s157, 8 [#allocation1]
          %v208 = vld [vmem:[%s207] sm:$0xff]
          %v209 = vlaneseq
          %v210 = vshrl.u32 %v209, 7
          %v211 = vadd.s32 %v210, 8
          %v212 = vstv %s194
          %vm213 = vcmp.gt.s32.totalorder %v211, %v212
          %v214 = vsel %vm213, %v208, 0.0
          %v215 = vmul.f32 %v214, %v214
          %v216 = vadd.f32 %v206, %v215
          %s217 = scalar_lea.vmem %s157, 16 [#allocation1]
          %v218 = vld [vmem:[%s217] sm:$0xff]
          %v219 = vlaneseq
          %v220 = vshrl.u32 %v219, 7
          %v221 = vadd.s32 %v220, 16
          %v222 = vstv %s194
          %vm223 = vcmp.gt.s32.totalorder %v221, %v222
          %v224 = vsel %vm223, %v218, 0.0
          %v225 = vmul.f32 %v224, %v224
          %v226 = vadd.f32 %v216, %v225
          %s227 = scalar_lea.vmem %s157, 24 [#allocation1]
          %v228 = vld [vmem:[%s227] sm:$0xff]
          %v229 = vlaneseq
          %v230 = vshrl.u32 %v229, 7
          %v231 = vadd.s32 %v230, 24
          %v232 = vstv %s194
          %vm233 = vcmp.gt.s32.totalorder %v231, %v232
          %v234 = vsel %vm233, %v228, 0.0
          %v235 = vmul.f32 %v234, %v234
          %v236 = vadd.f32 %v226, %v235
          %s237 = scalar_lea.vmem %s157, 32 [#allocation1]
          %v238 = vld [vmem:[%s237] sm:$0xff]
          %v239 = vlaneseq
          %v240 = vshrl.u32 %v239, 7
          %v241 = vadd.s32 %v240, 32
          %v242 = vstv %s194
          %vm243 = vcmp.gt.s32.totalorder %v241, %v242
          %vm244 = vcmp.lt.s32.totalorder %v241, 36
          %vm245 = vmand %vm243, %vm244
          %v246 = vsel %vm245, %v238, 0.0
          %v247 = vmul.f32 %v246, %v246
          %v248 = vadd.f32 %v236, %v247
          %v249 = vrot.slane %v248, 4
          %v250 = vadd.f32 %v248, %v249
          %v251 = vrot.slane %v250, 2
          %v252 = vadd.f32 %v250, %v251
          %v253 = vrot.slane %v252, 1
          %v254 = vadd.f32 %v252, %v253
          %v255 = vrsqrt.pop %v254
          %v256 = vmul.f32 %v254, %v255
          %vm257 = vcmp.eq.f32.partialorder %v254, inf
          %v258 = vsel %vm257, %v254, %v256
          %vm259 = vcmp.eq.f32.partialorder %v254, 0.0
          %v260 = vand.u32 %v254, 2147483648
          %v261 = vsel %vm259, %v260, %v258
          %vm262 = vcmp.eq.f32.partialorder %v254, 0.0
          %s263 = sshrl.u32 %s194, 3
          %s264 = sand.u32 %s194, 7
          %s265 = smul.addr %s263, 8
          %s266 = sadd.s32 %s264, %s265
          %s267 = scalar_lea.vmem %s157, %s266 [#allocation1]
          %v268 = vld [vmem:[%s267] ss:$0 sm:$0xff]
          %v269 = vand.u32 2147483647, %v268
          %v270 = vmax.f32 %v269, 0.0
          %v271 = vand.u32 2147483647, %v261
          %v272 = vmax.f32 %v270, %v271
          %v273 = vrcp.pop %v272
          %v274 = vmul.f32 %v269, %v273
          %v275 = vmul.f32 %v274, %v274
          %v276 = vrcp.pop %v272
          %v277 = vmul.f32 0.0, %v276
          %v278 = vmul.f32 %v277, %v277
          %v279 = vadd.f32 %v275, %v278
          %v280 = vrcp.pop %v272
          %v281 = vmul.f32 %v271, %v280
          %v282 = vmul.f32 %v281, %v281
          %v283 = vadd.f32 %v279, %v282
          %vm284 = vcmp.eq.f32.partialorder %v272, 0.0
          %v285 = vrsqrt.pop %v283
          %v286 = vmul.f32 %v283, %v285
          %vm287 = vcmp.eq.f32.partialorder %v283, inf
          %v288 = vsel %vm287, %v283, %v286
          %vm289 = vcmp.eq.f32.partialorder %v283, 0.0
          %v290 = vand.u32 %v283, 2147483648
          %v291 = vsel %vm289, %v290, %v288
          %v292 = vmul.f32 %v272, %v291
          %v293 = vsel %vm284, 0.0, %v292
          %vm294 = vcmp.lt.f32.partialorder %v268, 0.0
          %v295 = vxor.u32 %v293, 2147483648
          %v296 = vsel %vm294, %v293, %v295
          %v297 = vsub.f32 %v296, %v268
          %v298 = vrcp.pop %v296
          %v299 = vmul.f32 %v297, %v298
          %v300 = vsel %vm262, %v268, %v296
          %v301 = vsel %vm262, 0.0, %v299
          %v302 = vsub.f32 %v268, %v300
          %s303 = smov %s157
          %v304 = vlaneseq
          %v305 = vshrl.u32 %v304, 7
          %v306 = vmov %v305
          %v307 = vld [vmem:[%s303] sm:$0xff]
          %v309 = vstv %s194
          %vm310 = vcmp.gt.s32.totalorder %v306, %v309
          %v311 = vsel %vm310, %v307, 0.0
          %v312 = vrcp.pop %v302
          %v313 = vmul.f32 %v311, %v312
          %v314 = vsel %vm262, 0.0, %v313
          %v315 = vstv %s194
          %v316 = vlaneseq
          %v317 = vand.u32 %v316, 127
          %vm318 = vcmp.eq.s32.totalorder %v317, %v315
          %v319 = vsel %vm318, %v314, 0.0
          %320 = vadd.xlane.f32.xlu0 %v319
          %v321 = vpop.xlane.xlu0 %320
          %322 = vst [vmem:[#allocation4] sm:$0xff] %v321
          %s323 = scalar_lea.vmem %s303, 8
          %v324 = vld [vmem:[%s323] sm:$0xff]
          %v325 = vadd.s32 %v306, 8
          %v326 = vstv %s194
          %vm327 = vcmp.gt.s32.totalorder %v325, %v326
          %v328 = vsel %vm327, %v324, 0.0
          %v329 = vrcp.pop %v302
          %v330 = vmul.f32 %v328, %v329
          %v331 = vsel %vm262, 0.0, %v330
          %v332 = vstv %s194
          %v333 = vlaneseq
          %v334 = vand.u32 %v333, 127
          %vm335 = vcmp.eq.s32.totalorder %v334, %v332
          %v336 = vsel %vm335, %v331, 0.0
          %337 = vadd.xlane.f32.xlu0 %v336
          %v338 = vpop.xlane.xlu0 %337
          %s339 = scalar_lea.vmem [#allocation4], 8
          %340 = vst [vmem:[%s339] sm:$0xff] %v338
          %s341 = scalar_lea.vmem %s303, 16
          %v342 = vld [vmem:[%s341] sm:$0xff]
          %v343 = vadd.s32 %v306, 16
          %v344 = vstv %s194
          %vm345 = vcmp.gt.s32.totalorder %v343, %v344
          %v346 = vsel %vm345, %v342, 0.0
          %v347 = vrcp.pop %v302
          %v348 = vmul.f32 %v346, %v347
          %v349 = vsel %vm262, 0.0, %v348
          %v350 = vstv %s194
          %v351 = vlaneseq
          %v352 = vand.u32 %v351, 127
          %vm353 = vcmp.eq.s32.totalorder %v352, %v350
          %v354 = vsel %vm353, %v349, 0.0
          %355 = vadd.xlane.f32.xlu0 %v354
          %v356 = vpop.xlane.xlu0 %355
          %s357 = scalar_lea.vmem [#allocation4], 16
          %358 = vst [vmem:[%s357] sm:$0xff] %v356
          %s359 = scalar_lea.vmem %s303, 24
          %v360 = vld [vmem:[%s359] sm:$0xff]
          %v361 = vadd.s32 %v306, 24
          %v362 = vstv %s194
          %vm363 = vcmp.gt.s32.totalorder %v361, %v362
          %v364 = vsel %vm363, %v360, 0.0
          %v365 = vrcp.pop %v302
          %v366 = vmul.f32 %v364, %v365
          %v367 = vsel %vm262, 0.0, %v366
          %v368 = vstv %s194
          %v369 = vlaneseq
          %v370 = vand.u32 %v369, 127
          %vm371 = vcmp.eq.s32.totalorder %v370, %v368
          %v372 = vsel %vm371, %v367, 0.0
          %373 = vadd.xlane.f32.xlu0 %v372
          %v374 = vpop.xlane.xlu0 %373
          %s375 = scalar_lea.vmem [#allocation4], 24
          %376 = vst [vmem:[%s375] sm:$0xff] %v374
          %s377 = scalar_lea.vmem %s303, 32
          %v378 = vld [vmem:[%s377] sm:$0xff]
          %v379 = vadd.s32 %v306, 32
          %v380 = vstv %s194
          %vm381 = vcmp.gt.s32.totalorder %v379, %v380
          %vm382 = vcmp.lt.s32.totalorder %v379, 36
          %vm383 = vmand %vm381, %vm382
          %v384 = vsel %vm383, %v378, 0.0
          %v385 = vrcp.pop %v302
          %v386 = vmul.f32 %v384, %v385
          %v387 = vsel %vm262, 0.0, %v386
          %v388 = vstv %s194
          %v389 = vlaneseq
          %v390 = vand.u32 %v389, 127
          %vm391 = vcmp.eq.s32.totalorder %v390, %v388
          %v392 = vsel %vm391, %v387, 0.0
          %393 = vadd.xlane.f32.xlu0 %v392
          %v394 = vpop.xlane.xlu0 %393
          %s395 = scalar_lea.vmem [#allocation4], 32
          %396 = vst [vmem:[%s395] sm:$0xff] %v394
          %s397 = scalar_lea.vmem [#allocation4], %s194
          %398 = vst [vmem:[%s397] sm:$0x1] 1.0
          %v399 = vstv %s194
          %v400 = vlaneseq
          %v401 = vand.u32 %v400, 127
          %vm402 = vcmp.eq.s32.totalorder %v401, %v399
          %v403 = vsel %vm402, %v301, 0.0
          %404 = vadd.xlane.f32.xlu0 %v403
          %v405 = vpop.xlane.xlu0 %404
          %v406 = vstv %s194
          %v407 = vlaneseq
          %v408 = vand.u32 %v407, 127
          %vm409 = vcmp.eq.s32.totalorder %v408, %v406
          %v410 = vld [vmem:[%s173] ss:$0 sm:$0xff]
          %v411 = vsel %vm409, %v405, %v410
          %412 = vst [vmem:[%s173] sm:$0x1] %v411
          %s413 = smov %s157
          %s414 = smov [#allocation4]
          %v415 = vlaneseq
          %v416 = vshrl.u32 %v415, 7
          %v417 = vmov %v416
          %v419 = vld [vmem:[%s414] sm:$0xff]
          %v420 = vld [vmem:[%s413] sm:$0xff]
          %v421 = vmul.f32 %v419, %v420
          %v422 = vadd.s32 %v417, 8
          %s423 = scalar_lea.vmem %s414, 8
          %v424 = vld [vmem:[%s423] sm:$0xff]
          %s425 = scalar_lea.vmem %s413, 8
          %v426 = vld [vmem:[%s425] sm:$0xff]
          %v427 = vmul.f32 %v424, %v426
          %v428 = vadd.f32 %v421, %v427
          %v429 = vadd.s32 %v417, 16
          %s430 = scalar_lea.vmem %s414, 16
          %v431 = vld [vmem:[%s430] sm:$0xff]
          %s432 = scalar_lea.vmem %s413, 16
          %v433 = vld [vmem:[%s432] sm:$0xff]
          %v434 = vmul.f32 %v431, %v433
          %v435 = vadd.f32 %v428, %v434
          %v436 = vadd.s32 %v417, 24
          %s437 = scalar_lea.vmem %s414, 24
          %v438 = vld [vmem:[%s437] sm:$0xff]
          %s439 = scalar_lea.vmem %s413, 24
          %v440 = vld [vmem:[%s439] sm:$0xff]
          %v441 = vmul.f32 %v438, %v440
          %v442 = vadd.f32 %v435, %v441
          %v443 = vadd.s32 %v417, 32
          %s444 = scalar_lea.vmem %s414, 32
          %v445 = vld [vmem:[%s444] sm:$0xff]
          %s446 = scalar_lea.vmem %s413, 32
          %v447 = vld [vmem:[%s446] sm:$0xff]
          %v448 = vmul.f32 %v445, %v447
          %vm449 = vcmp.lt.s32.totalorder %v443, 36
          %v450 = vsel %vm449, %v448, 0.0
          %v451 = vadd.f32 %v442, %v450
          %v452 = vrot.slane %v451, 4
          %v453 = vadd.f32 %v451, %v452
          %v454 = vrot.slane %v453, 2
          %v455 = vadd.f32 %v453, %v454
          %v456 = vrot.slane %v455, 1
          %v457 = vadd.f32 %v455, %v456
          %s458 = smov %s413
          %s459 = smov %s414
          %v460 = vlaneseq
          %v461 = vshrl.u32 %v460, 7
          %v462 = vmov %v461
          %v463 = vmul.f32 %v457, %v405
          %v465 = vlaneseq
          %v466 = vand.u32 %v465, 127
          %v467 = vld [vmem:[%s459] sm:$0xff]
          %v468 = vmul.f32 %v467, %v463
          %v469 = vld [vmem:[%s458] sm:$0xff]
          %v470 = vstv %s194
          %vm471 = vcmp.gt.s32.totalorder %v466, %v470
          %v472 = vsub.f32 %v469, %v468
          %v473 = vsel %vm471, %v472, %v469
          %v474 = vstv %s194
          %v475 = vlaneseq
          %v476 = vand.u32 %v475, 127
          %vm477 = vcmp.eq.s32.totalorder %v476, %v474
          %v478 = vstv %s194
          %vm479 = vcmp.ge.s32.totalorder %v462, %v478
          %vm480 = vmand %vm477, %vm479
          %v481 = vsel %vm480, %v467, %v473
          %482 = vst [vmem:[%s458] sm:$0xff] %v481
          %v483 = vadd.s32 %v462, 8
          %v484 = vlaneseq
          %v485 = vand.u32 %v484, 127
          %s486 = scalar_lea.vmem %s459, 8
          %v487 = vld [vmem:[%s486] sm:$0xff]
          %v488 = vmul.f32 %v487, %v463
          %s489 = scalar_lea.vmem %s458, 8
          %v490 = vld [vmem:[%s489] sm:$0xff]
          %v491 = vstv %s194
          %vm492 = vcmp.gt.s32.totalorder %v485, %v491
          %v493 = vsub.f32 %v490, %v488
          %v494 = vsel %vm492, %v493, %v490
          %v495 = vstv %s194
          %v496 = vlaneseq
          %v497 = vand.u32 %v496, 127
          %vm498 = vcmp.eq.s32.totalorder %v497, %v495
          %v499 = vstv %s194
          %vm500 = vcmp.ge.s32.totalorder %v483, %v499
          %vm501 = vmand %vm498, %vm500
          %v502 = vsel %vm501, %v487, %v494
          %503 = vst [vmem:[%s489] sm:$0xff] %v502
          %v504 = vadd.s32 %v462, 16
          %v505 = vlaneseq
          %v506 = vand.u32 %v505, 127
          %s507 = scalar_lea.vmem %s459, 16
          %v508 = vld [vmem:[%s507] sm:$0xff]
          %v509 = vmul.f32 %v508, %v463
          %s510 = scalar_lea.vmem %s458, 16
          %v511 = vld [vmem:[%s510] sm:$0xff]
          %v512 = vstv %s194
          %vm513 = vcmp.gt.s32.totalorder %v506, %v512
          %v514 = vsub.f32 %v511, %v509
          %v515 = vsel %vm513, %v514, %v511
          %v516 = vstv %s194
          %v517 = vlaneseq
          %v518 = vand.u32 %v517, 127
          %vm519 = vcmp.eq.s32.totalorder %v518, %v516
          %v520 = vstv %s194
          %vm521 = vcmp.ge.s32.totalorder %v504, %v520
          %vm522 = vmand %vm519, %vm521
          %v523 = vsel %vm522, %v508, %v515
          %524 = vst [vmem:[%s510] sm:$0xff] %v523
          %v525 = vadd.s32 %v462, 24
          %v526 = vlaneseq
          %v527 = vand.u32 %v526, 127
          %s528 = scalar_lea.vmem %s459, 24
          %v529 = vld [vmem:[%s528] sm:$0xff]
          %v530 = vmul.f32 %v529, %v463
          %s531 = scalar_lea.vmem %s458, 24
          %v532 = vld [vmem:[%s531] sm:$0xff]
          %v533 = vstv %s194
          %vm534 = vcmp.gt.s32.totalorder %v527, %v533
          %v535 = vsub.f32 %v532, %v530
          %v536 = vsel %vm534, %v535, %v532
          %v537 = vstv %s194
          %v538 = vlaneseq
          %v539 = vand.u32 %v538, 127
          %vm540 = vcmp.eq.s32.totalorder %v539, %v537
          %v541 = vstv %s194
          %vm542 = vcmp.ge.s32.totalorder %v525, %v541
          %vm543 = vmand %vm540, %vm542
          %v544 = vsel %vm543, %v529, %v536
          %545 = vst [vmem:[%s531] sm:$0xff] %v544
          %v546 = vadd.s32 %v462, 32
          %v547 = vlaneseq
          %v548 = vand.u32 %v547, 127
          %s549 = scalar_lea.vmem %s459, 32
          %v550 = vld [vmem:[%s549] sm:$0xff]
          %v551 = vmul.f32 %v550, %v463
          %s552 = scalar_lea.vmem %s458, 32
          %v553 = vld [vmem:[%s552] sm:$0xff]
          %v554 = vstv %s194
          %vm555 = vcmp.gt.s32.totalorder %v548, %v554
          %v556 = vsub.f32 %v553, %v551
          %v557 = vsel %vm555, %v556, %v553
          %v558 = vstv %s194
          %v559 = vlaneseq
          %v560 = vand.u32 %v559, 127
          %vm561 = vcmp.eq.s32.totalorder %v560, %v558
          %v562 = vstv %s194
          %vm563 = vcmp.ge.s32.totalorder %v546, %v562
          %vm564 = vmand %vm561, %vm563
          %v565 = vsel %vm564, %v550, %v557
          %566 = vst [vmem:[%s552] sm:$0xff] %v565
          %s567 = scalar_lea.vmem %s458, %s194
          %v568 = vld [vmem:[%s567] ss:$0 sm:$0xff]
          %v569 = vstv %s194
          %v570 = vlaneseq
          %v571 = vand.u32 %v570, 127
          %vm572 = vcmp.eq.s32.totalorder %v571, %v569
          %v573 = vsel %vm572, %v300, %v568
          %574 = vst [vmem:[%s567] sm:$0x1] %v573
        $region59: #{custom-call.35} parent=53 // loop_footer
          %s198 = sadd.s32 1, %s194
        $region60: #{custom-call.35} parent=53 // loop_footer_branch
          %193 = sbr.rel target = $region56
        $region61: #{custom-call.35} parent=53 // loop_exit
          _
        %s576 = sshllo.u32 0, 2
        %v578 = vld [vmem:[#allocation2] sm:%s576]
        %s579 = sshllo.u32 0, 2
        %580 = vst [vmem:[%s163] sm:%s579] %v578
        %s581 = sand.u32 %s10, 1
        %s582 = sand.u32 %s10, 1
        %s583 = smul.addr %s582, 40
        %s584 = scalar_lea.vmem [#allocation1], %s583
        %s585 = sand.u32 %s49, 1
        %s586 = sand.u32 %s49, 1
        %s587 = smul.addr %s586, 2
        %s588 = scalar_lea.vmem [#allocation3], %s587
        %s589 = smul.u32 5, %s16
        %s590 = sadd.s32 %s17, %s589
        %s591 = smul.addr %s15, 5
        %s592 = sadd.s32 %s590, %s591
        %s593 = smul.addr %s592, 8
        %s594 = scalar_lea.vmem %s1, %s593
        // Predicated region
        $region62: #{custom-call.35} parent=53 // pred_check
          _
        $region63: #{custom-call.35} parent=53 // pred_check_branch
          %596 = sbr.rel (0) target = $region65
        $region64: #{custom-call.35} parent=53 // pred_region
          // Predicated region
          $region66: #{custom-call.35} parent=64 // pred_check
            _
          $region67: #{custom-call.35} parent=64 // pred_check_branch
            %598 = sbr.rel (0) target = $region69
          $region68: #{custom-call.35} parent=64 // pred_region
            // Predicated region
            $region81: #{custom-call.35} parent=68 // pred_check
              _
            $region82: #{custom-call.35} parent=68 // pred_check_branch
              %621 = sbr.rel (0) target = $region84
            $region83: #{custom-call.35} parent=68 // pred_region
              loop: start=0, step=1, limit=1
              $region85: #{custom-call.35} parent=83 // loop_pre_header
                _
              $region86: #{custom-call.35} parent=83 // loop_header
                %s623 = sphi 0, %s627
                %p624 = scmp.ge.s32.totalorder %s623, 1
                %s628 = sphi %s584, %s584
                %s629 = sphi %s594, %s594
              $region87: #{custom-call.35} parent=83 // loop_header_branch
                %626 = sbr.rel (%p624) target = $region91
              $region88: #{custom-call.35} parent=83 // loop_body
                %v630 = vld [vmem:[%s628] sm:$0xff]
                %631 = vst [vmem:[%s629] sm:$0xff] %v630
                %v632 = vld [vmem:[%s628 + $0x8] sm:$0xff]
                %633 = vst [vmem:[%s629 + $0x8] sm:$0xff] %v632
                %v634 = vld [vmem:[%s628 + $0x10] sm:$0xff]
                %635 = vst [vmem:[%s629 + $0x10] sm:$0xff] %v634
                %v636 = vld [vmem:[%s628 + $0x18] sm:$0xff]
                %637 = vst [vmem:[%s629 + $0x18] sm:$0xff] %v636
                %v638 = vld [vmem:[%s628 + $0x20] sm:$0xff]
                %639 = vst [vmem:[%s629 + $0x20] sm:$0xff] %v638
              $region89: #{custom-call.35} parent=83 // loop_footer
                %s627 = sadd.s32 1, %s623
              $region90: #{custom-call.35} parent=83 // loop_footer_branch
                %622 = sbr.rel target = $region86
              $region91: #{custom-call.35} parent=83 // loop_exit
                _
            $region84: #{custom-call.35} parent=68 // pred_fallthru
              _
            // Predicated region
            $region92: #{custom-call.35} parent=68 // pred_check
              _
            $region93: #{custom-call.35} parent=68 // pred_check_branch
              %641 = sbr.rel target = $region95
            $region94: #{custom-call.35} parent=68 // pred_region
              _
            $region95: #{custom-call.35} parent=68 // pred_fallthru
              _
          $region69: #{custom-call.35} parent=64 // pred_fallthru
            _
          // Predicated region
          $region70: #{custom-call.35} parent=64 // pred_check
            _
          $region71: #{custom-call.35} parent=64 // pred_check_branch
            %600 = sbr.rel target = $region73
          $region72: #{custom-call.35} parent=64 // pred_region
            loop: start=0, step=1, limit=1
            $region74: #{custom-call.35} parent=72 // loop_pre_header
              _
            $region75: #{custom-call.35} parent=72 // loop_header
              %s603 = sphi 0, %s607
              %p604 = scmp.ge.s32.totalorder %s603, 1
              %s608 = sphi %s584, %s584
              %s609 = sphi %s594, %s594
            $region76: #{custom-call.35} parent=72 // loop_header_branch
              %606 = sbr.rel (%p604) target = $region80
            $region77: #{custom-call.35} parent=72 // loop_body
              %v610 = vld [vmem:[%s608] sm:$0xff]
              %611 = vst [vmem:[%s609] sm:$0xff] %v610
              %v612 = vld [vmem:[%s608 + $0x8] sm:$0xff]
              %613 = vst [vmem:[%s609 + $0x8] sm:$0xff] %v612
              %v614 = vld [vmem:[%s608 + $0x10] sm:$0xff]
              %615 = vst [vmem:[%s609 + $0x10] sm:$0xff] %v614
              %v616 = vld [vmem:[%s608 + $0x18] sm:$0xff]
              %617 = vst [vmem:[%s609 + $0x18] sm:$0xff] %v616
              %v618 = vld [vmem:[%s608 + $0x20] sm:$0xff]
              %619 = vst [vmem:[%s609 + $0x20] sm:$0xff] %v618
            $region78: #{custom-call.35} parent=72 // loop_footer
              %s607 = sadd.s32 1, %s603
            $region79: #{custom-call.35} parent=72 // loop_footer_branch
              %602 = sbr.rel target = $region75
            $region80: #{custom-call.35} parent=72 // loop_exit
              _
          $region73: #{custom-call.35} parent=64 // pred_fallthru
            _
        $region65: #{custom-call.35} parent=53 // pred_fallthru
          _
        %642 = vnop
        // Predicated region
        $region96: #{custom-call.35} parent=53 // pred_check
          %p643 = pneg %p59
        $region97: #{custom-call.35} parent=53 // pred_check_branch
          %645 = sbr.rel (%p643) target = $region99
        $region98: #{custom-call.35} parent=53 // pred_region
          %p646 = scmp.lt.s32.totalorder %s15, 0
          %s647 = ssub.s32 0, %s15
          %s648 = scalar_select %p646, %s647, %s15
          %s649 = sshrl.u32 %s648, 3
          %s650 = ssub.s32 0, %s649
          %s651 = scalar_select %p646, %s650, %s649
          %s652 = smul.addr %s651, 2
          %s653 = scalar_lea.vmem %s2, %s652
          // Predicated region
          $region100: #{custom-call.35} parent=98 // pred_check
            _
          $region101: #{custom-call.35} parent=98 // pred_check_branch
            %655 = sbr.rel (0) target = $region103
          $region102: #{custom-call.35} parent=98 // pred_region
            // Predicated region
            $region104: #{custom-call.35} parent=102 // pred_check
              _
            $region105: #{custom-call.35} parent=102 // pred_check_branch
              %657 = sbr.rel target = $region107
            $region106: #{custom-call.35} parent=102 // pred_region
              // Predicated region
              $region119: #{custom-call.35} parent=106 // pred_check
                _
              $region120: #{custom-call.35} parent=106 // pred_check_branch
                %672 = sbr.rel (0) target = $region122
              $region121: #{custom-call.35} parent=106 // pred_region
                loop: start=0, step=1, limit=1
                $region123: #{custom-call.35} parent=121 // loop_pre_header
                  _
                $region124: #{custom-call.35} parent=121 // loop_header
                  %s675 = sphi 0, %s679
                  %p676 = scmp.ge.s32.totalorder %s675, 1
                  %s680 = sphi %s588, %s588
                  %s681 = sphi %s653, %s653
                $region125: #{custom-call.35} parent=121 // loop_header_branch
                  %678 = sbr.rel (%p676) target = $region129
                $region126: #{custom-call.35} parent=121 // loop_body
                  %v682 = vld [vmem:[%s680] sm:$0x3]
                  %683 = vst [vmem:[%s681] sm:$0x3] %v682
                $region127: #{custom-call.35} parent=121 // loop_footer
                  %s679 = sadd.s32 1, %s675
                $region128: #{custom-call.35} parent=121 // loop_footer_branch
                  %674 = sbr.rel target = $region124
                $region129: #{custom-call.35} parent=121 // loop_exit
                  _
              $region122: #{custom-call.35} parent=106 // pred_fallthru
                _
            $region107: #{custom-call.35} parent=102 // pred_fallthru
              _
            // Predicated region
            $region108: #{custom-call.35} parent=102 // pred_check
              _
            $region109: #{custom-call.35} parent=102 // pred_check_branch
              %659 = sbr.rel (0) target = $region111
            $region110: #{custom-call.35} parent=102 // pred_region
              loop: start=0, step=1, limit=1
              $region112: #{custom-call.35} parent=110 // loop_pre_header
                _
              $region113: #{custom-call.35} parent=110 // loop_header
                %s662 = sphi 0, %s666
                %p663 = scmp.ge.s32.totalorder %s662, 1
                %s667 = sphi %s588, %s588
                %s668 = sphi %s653, %s653
              $region114: #{custom-call.35} parent=110 // loop_header_branch
                %665 = sbr.rel (%p663) target = $region118
              $region115: #{custom-call.35} parent=110 // loop_body
                %v669 = vld [vmem:[%s667] sm:$0x3]
                %670 = vst [vmem:[%s668] sm:$0x3] %v669
              $region116: #{custom-call.35} parent=110 // loop_footer
                %s666 = sadd.s32 1, %s662
              $region117: #{custom-call.35} parent=110 // loop_footer_branch
                %661 = sbr.rel target = $region113
              $region118: #{custom-call.35} parent=110 // loop_exit
                _
            $region111: #{custom-call.35} parent=102 // pred_fallthru
              _
          $region103: #{custom-call.35} parent=98 // pred_fallthru
            _
          %684 = vnop
        $region99: #{custom-call.35} parent=53 // pred_fallthru
          _
      $region54: #{custom-call.35} parent=5 // pred_fallthru
        _
      %p685 = scmp.le.s32.totalorder 2, %s5
      // Predicated region
      $region130: #{custom-call.35} parent=5 // pred_check
        %p686 = pneg %p685
      $region131: #{custom-call.35} parent=5 // pred_check_branch
        %688 = sbr.rel (%p686) target = $region133
      $region132: #{custom-call.35} parent=5 // pred_region
        %s689 = ssub.s32 %s5, 2
        %s690 = sand.u32 %s11, 1
        %s691 = sand.u32 %s11, 1
        %s692 = smul.addr %s691, 40
        %s693 = scalar_lea.vmem [#allocation1], %s692
        // Predicated region
        $region134: #{custom-call.35} parent=132 // pred_check
          %p694 = pneg %p65
        $region135: #{custom-call.35} parent=132 // pred_check_branch
          %696 = sbr.rel (%p694) target = $region137
        $region136: #{custom-call.35} parent=132 // pred_region
          %s697 = sand.u32 %s50, 1
          %s698 = sand.u32 %s50, 1
          %s699 = smul.addr %s698, 2
          %s700 = scalar_lea.vmem [#allocation3], %s699
        $region137: #{custom-call.35} parent=132 // pred_fallthru
          _
      $region133: #{custom-call.35} parent=5 // pred_fallthru
        _
    $region6: #{custom-call.35} parent=1 // loop_footer
      %s9 = sadd.s32 1, %s5
    $region7: #{custom-call.35} parent=1 // loop_footer_branch
      %4 = sbr.rel target = $region3
    $region8: #{custom-call.35} parent=1 // loop_exit
      _

// kernel: custom-call.84
$region0: #{custom-call.84}
  %s0 = inlined_call_operand.hbm [shape: pred[2], index: 0, kind: output, shape index: {}]

// kernel: custom-call.91
$region0: #{custom-call.91}
  %s0 = inlined_call_operand.vmem [shape: f32[2,6,3], index: 0, kind: input, shape index: {}]
  %s1 = inlined_call_operand.vmem [shape: f32[2,6,3], index: 1, kind: output, shape index: {0}]
  %s2 = inlined_call_operand.vmem [shape: f32[2,3], index: 2, kind: output, shape index: {1}]
  %3 = xla_tuple %s1, %s2
  $region1: #{custom-call.91} parent=0
    #allocation0 [shape = 'u8[8192]{0}', space=vmem, size = 0x2000, scoped, tag = 'operand span for operand 0']
    #allocation1 [shape = 'u8[8192]{0}', space=vmem, size = 0x2000, scoped, tag = 'operand span for operand 1']
    #allocation2 [shape = 'u8[4096]{0}', space=vmem, size = 0x1000, scoped, tag = 'operand span for operand 2']
    #allocation3 [shape = 'u8[2048]{0}', space=vmem, size = 0x800, scoped, tag = 'packed  for operand 2']
    loop: start=0, step=1, limit=4
    $region2: #{custom-call.91} parent=1 // loop_pre_header
      _
    $region3: #{custom-call.91} parent=1 // loop_header
      %s5 = sphi 0, %s9
      %p6 = scmp.ge.s32.totalorder %s5, 4
      %s12 = sphi 0, %s31
      %s13 = sphi 0, %s27
      %s14 = sphi 0, %s23
      %s15 = sphi 0, %s12
      %s16 = sphi 0, %s13
      %s17 = sphi 0, %s14
      %s18 = sphi 0, %s15
      %s19 = sphi 0, %s16
      %s20 = sphi 0, %s17
      %s46 = sphi 0, %s48
      %s49 = sphi 0, %s46
      %s50 = sphi 0, %s49
      %s66 = sphi 0, %s50
    $region4: #{custom-call.91} parent=1 // loop_header_branch
      %8 = sbr.rel (%p6) target = $region8
    $region5: #{custom-call.91} parent=1 // loop_body
      %s10 = ssub.s32 %s5, 1
      %s11 = ssub.s32 %s5, 2
      %s21 = sadd.s32 1, %s14
      %p22 = scmp.ge.s32.totalorder %s21, 1
      %s23 = scalar_select %p22, 0, %s21
      %s24 = sadd.s32 1, %s13
      %s25 = scalar_select %p22, %s24, %s13
      %p26 = scmp.ge.s32.totalorder %s25, 1
      %s27 = scalar_select %p26, 0, %s25
      %s28 = sadd.s32 1, %s12
      %s29 = scalar_select %p26, %s28, %s12
      %p30 = scmp.ge.s32.totalorder %s29, 2
      %s31 = scalar_select %p30, 0, %s29
      %p32 = scmp.lt.s32.totalorder %s12, 0
      %s33 = ssub.s32 0, %s12
      %s34 = scalar_select %p32, %s33, %s12
      %s35 = sshrl.u32 %s34, 3
      %s36 = ssub.s32 0, %s35
      %s37 = scalar_select %p32, %s36, %s35
      %p38 = scmp.lt.s32.totalorder %s31, 0
      %s39 = ssub.s32 0, %s31
      %s40 = scalar_select %p38, %s39, %s31
      %s41 = sshrl.u32 %s40, 3
      %s42 = ssub.s32 0, %s41
      %s43 = scalar_select %p38, %s42, %s41
      %s44 = ssub.s32 %s37, %s43
      %p45 = scmp.eq.s32.totalorder %s44, 0
      %s47 = sadd.s32 %s46, 1
      %s48 = scalar_select %p45, %s46, %s47
      %p51 = pneg %p45
      %p52 = scmp.eq.s32.totalorder %s5, 1
      %p53 = por %p51, %p52
      %p54 = scmp.ne.s32.totalorder %s46, %s49
      %p55 = scmp.eq.s32.totalorder %s5, 0
      %p56 = por %p54, %p55
      %p57 = scmp.ne.s32.totalorder %s46, %s49
      %p58 = scmp.eq.s32.totalorder %s10, 1
      %p59 = por %p57, %p58
      %p60 = scmp.ne.s32.totalorder %s49, %s50
      %p61 = scmp.eq.s32.totalorder %s10, 0
      %p62 = por %p60, %p61
      %p63 = scmp.ne.s32.totalorder %s49, %s50
      %p64 = scmp.eq.s32.totalorder %s11, 1
      %p65 = por %p63, %p64
      %p67 = scmp.ne.s32.totalorder %s50, %s66
      %p68 = scmp.eq.s32.totalorder %s11, 0
      %p69 = por %p67, %p68
      %p70 = scmp.le.s32.totalorder 1, %s5
      %p71 = scmp.lt.s32.totalorder %s5, 3
      %p72 = pnand %p70, %p71
      %p73 = pneg %p72
      // Predicated region
      $region9: #{custom-call.91} parent=5 // pred_check
        _
      $region10: #{custom-call.91} parent=5 // pred_check_branch
        %75 = sbr.rel (%p72) target = $region12
      $region11: #{custom-call.91} parent=5 // pred_region
        %s76 = ssub.s32 %s5, 1
      $region12: #{custom-call.91} parent=5 // pred_fallthru
        _
      %p77 = scmp.lt.s32.totalorder %s5, 2
      // Predicated region
      $region13: #{custom-call.91} parent=5 // pred_check
        %p78 = pneg %p77
      $region14: #{custom-call.91} parent=5 // pred_check_branch
        %80 = sbr.rel (%p78) target = $region16
      $region15: #{custom-call.91} parent=5 // pred_region
        %s81 = sand.u32 %s5, 1
        %s82 = sand.u32 %s5, 1
        %s83 = smul.addr %s82, 8
        %s84 = scalar_lea.vmem [#allocation0], %s83
        %s85 = sadd.s32 %s14, %s13
        %s86 = sadd.s32 %s85, %s12
        %s87 = smul.addr %s86, 8
        %s88 = scalar_lea.vmem %s0, %s87
        // Predicated region
        $region17: #{custom-call.91} parent=15 // pred_check
          _
        $region18: #{custom-call.91} parent=15 // pred_check_branch
          %90 = sbr.rel (0) target = $region20
        $region19: #{custom-call.91} parent=15 // pred_region
          // Predicated region
          $region21: #{custom-call.91} parent=19 // pred_check
            _
          $region22: #{custom-call.91} parent=19 // pred_check_branch
            %92 = sbr.rel (0) target = $region24
          $region23: #{custom-call.91} parent=19 // pred_region
            // Predicated region
            $region36: #{custom-call.91} parent=23 // pred_check
              _
            $region37: #{custom-call.91} parent=23 // pred_check_branch
              %107 = sbr.rel (0) target = $region39
            $region38: #{custom-call.91} parent=23 // pred_region
              loop: start=0, step=1, limit=1
              $region40: #{custom-call.91} parent=38 // loop_pre_header
                _
              $region41: #{custom-call.91} parent=38 // loop_header
                %s109 = sphi 0, %s113
                %p110 = scmp.ge.s32.totalorder %s109, 1
                %s114 = sphi %s88, %s88
                %s115 = sphi %s84, %s84
              $region42: #{custom-call.91} parent=38 // loop_header_branch
                %112 = sbr.rel (%p110) target = $region46
              $region43: #{custom-call.91} parent=38 // loop_body
                %v116 = vld [vmem:[%s114] sm:$0xff]
                %117 = vst [vmem:[%s115] sm:$0xff] %v116
              $region44: #{custom-call.91} parent=38 // loop_footer
                %s113 = sadd.s32 1, %s109
              $region45: #{custom-call.91} parent=38 // loop_footer_branch
                %108 = sbr.rel target = $region41
              $region46: #{custom-call.91} parent=38 // loop_exit
                _
            $region39: #{custom-call.91} parent=23 // pred_fallthru
              _
            // Predicated region
            $region47: #{custom-call.91} parent=23 // pred_check
              _
            $region48: #{custom-call.91} parent=23 // pred_check_branch
              %119 = sbr.rel target = $region50
            $region49: #{custom-call.91} parent=23 // pred_region
              _
            $region50: #{custom-call.91} parent=23 // pred_fallthru
              _
          $region24: #{custom-call.91} parent=19 // pred_fallthru
            _
          // Predicated region
          $region25: #{custom-call.91} parent=19 // pred_check
            _
          $region26: #{custom-call.91} parent=19 // pred_check_branch
            %94 = sbr.rel target = $region28
          $region27: #{custom-call.91} parent=19 // pred_region
            loop: start=0, step=1, limit=1
            $region29: #{custom-call.91} parent=27 // loop_pre_header
              _
            $region30: #{custom-call.91} parent=27 // loop_header
              %s97 = sphi 0, %s101
              %p98 = scmp.ge.s32.totalorder %s97, 1
              %s102 = sphi %s88, %s88
              %s103 = sphi %s84, %s84
            $region31: #{custom-call.91} parent=27 // loop_header_branch
              %100 = sbr.rel (%p98) target = $region35
            $region32: #{custom-call.91} parent=27 // loop_body
              %v104 = vld [vmem:[%s102] sm:$0xff]
              %105 = vst [vmem:[%s103] sm:$0xff] %v104
            $region33: #{custom-call.91} parent=27 // loop_footer
              %s101 = sadd.s32 1, %s97
            $region34: #{custom-call.91} parent=27 // loop_footer_branch
              %96 = sbr.rel target = $region30
            $region35: #{custom-call.91} parent=27 // loop_exit
              _
          $region28: #{custom-call.91} parent=19 // pred_fallthru
            _
        $region20: #{custom-call.91} parent=15 // pred_fallthru
          _
        %120 = vnop
      $region16: #{custom-call.91} parent=5 // pred_fallthru
        _
      %p121 = scmp.le.s32.totalorder 1, %s5
      %p122 = scmp.lt.s32.totalorder %s5, 3
      %p123 = pnand %p121, %p122
      %p124 = pneg %p123
      // Predicated region
      $region51: #{custom-call.91} parent=5 // pred_check
        _
      $region52: #{custom-call.91} parent=5 // pred_check_branch
        %126 = sbr.rel (%p123) target = $region54
      $region53: #{custom-call.91} parent=5 // pred_region
        #allocation4 [shape = 'f32[6,128]{1,0}', space=vmem, size = 0x1000, scoped, tag = 'scratch for Householder reflectors']
        %s127 = ssub.s32 %s5, 1
        %s128 = sand.u32 %s10, 1
        %s129 = sand.u32 %s10, 1
        %s130 = smul.addr %s129, 8
        %s131 = scalar_lea.vmem [#allocation0], %s130
        %s132 = sand.u32 %s10, 1
        %s133 = sand.u32 %s10, 1
        %s134 = smul.addr %s133, 8
        %s135 = scalar_lea.vmem [#allocation0], %s134
        %s136 = sand.u32 %s10, 1
        %s137 = sand.u32 %s10, 1
        %s138 = smul.addr %s137, 8
        %s139 = scalar_lea.vmem [#allocation1], %s138
        %p140 = pneg %p62
        %p141 = pneg %p59
        %s142 = sand.u32 %s49, 1
        %s143 = sand.u32 %s49, 1
        %s144 = smul.addr %s143, 2
        %s145 = scalar_lea.vmem [#allocation3], %s144
        %p146 = scmp.lt.s32.totalorder %s15, 0
        %s147 = ssub.s32 0, %s15
        %s148 = scalar_select %p146, %s147, %s15
        %s149 = sshrl.u32 %s148, 3
        %s150 = ssub.s32 0, %s149
        %s151 = scalar_select %p146, %s150, %s149
        %s152 = sand.u32 %s15, 7
        %s153 = scalar_lea.vmem [#allocation2], %s152
        %v154 = vld [vmem:[%s131] sm:$0xff]
        %155 = vst [vmem:[%s139] sm:$0xff] %v154
        %156 = vst [vmem:[%s153] sm:$0x1] 0.0
        loop: start=0, step=1, limit=3
        $region55: #{custom-call.91} parent=53 // loop_pre_header
          _
        $region56: #{custom-call.91} parent=53 // loop_header
          %s158 = sphi 0, %s162
          %p159 = scmp.ge.s32.totalorder %s158, 3
        $region57: #{custom-call.91} parent=53 // loop_header_branch
          %161 = sbr.rel (%p159) target = $region61
        $region58: #{custom-call.91} parent=53 // loop_body
          %v163 = vld [vmem:[%s139] sm:$0xff]
          %v164 = vlaneseq
          %v165 = vshrl.u32 %v164, 7
          %v167 = vstv %s158
          %vm168 = vcmp.gt.s32.totalorder %v165, %v167
          %vm169 = vcmp.lt.s32.totalorder %v165, 6
          %vm170 = vmand %vm168, %vm169
          %v171 = vsel %vm170, %v163, 0.0
          %v172 = vmul.f32 %v171, %v171
          %v173 = vrot.slane %v172, 4
          %v174 = vadd.f32 %v172, %v173
          %v175 = vrot.slane %v174, 2
          %v176 = vadd.f32 %v174, %v175
          %v177 = vrot.slane %v176, 1
          %v178 = vadd.f32 %v176, %v177
          %v179 = vrsqrt.pop %v178
          %v180 = vmul.f32 %v178, %v179
          %vm181 = vcmp.eq.f32.partialorder %v178, inf
          %v182 = vsel %vm181, %v178, %v180
          %vm183 = vcmp.eq.f32.partialorder %v178, 0.0
          %v184 = vand.u32 %v178, 2147483648
          %v185 = vsel %vm183, %v184, %v182
          %vm186 = vcmp.eq.f32.partialorder %v178, 0.0
          %s187 = sshrl.u32 %s158, 3
          %s188 = sand.u32 %s158, 7
          %s189 = smul.addr %s187, 8
          %s190 = sadd.s32 %s188, %s189
          %s191 = scalar_lea.vmem %s139, %s190 [#allocation1]
          %v192 = vld [vmem:[%s191] ss:$0 sm:$0xff]
          %v193 = vand.u32 2147483647, %v192
          %v194 = vmax.f32 %v193, 0.0
          %v195 = vand.u32 2147483647, %v185
          %v196 = vmax.f32 %v194, %v195
          %v197 = vrcp.pop %v196
          %v198 = vmul.f32 %v193, %v197
          %v199 = vmul.f32 %v198, %v198
          %v200 = vrcp.pop %v196
          %v201 = vmul.f32 0.0, %v200
          %v202 = vmul.f32 %v201, %v201
          %v203 = vadd.f32 %v199, %v202
          %v204 = vrcp.pop %v196
          %v205 = vmul.f32 %v195, %v204
          %v206 = vmul.f32 %v205, %v205
          %v207 = vadd.f32 %v203, %v206
          %vm208 = vcmp.eq.f32.partialorder %v196, 0.0
          %v209 = vrsqrt.pop %v207
          %v210 = vmul.f32 %v207, %v209
          %vm211 = vcmp.eq.f32.partialorder %v207, inf
          %v212 = vsel %vm211, %v207, %v210
          %vm213 = vcmp.eq.f32.partialorder %v207, 0.0
          %v214 = vand.u32 %v207, 2147483648
          %v215 = vsel %vm213, %v214, %v212
          %v216 = vmul.f32 %v196, %v215
          %v217 = vsel %vm208, 0.0, %v216
          %vm218 = vcmp.lt.f32.partialorder %v192, 0.0
          %v219 = vxor.u32 %v217, 2147483648
          %v220 = vsel %vm218, %v217, %v219
          %v221 = vsub.f32 %v220, %v192
          %v222 = vrcp.pop %v220
          %v223 = vmul.f32 %v221, %v222
          %v224 = vsel %vm186, %v192, %v220
          %v225 = vsel %vm186, 0.0, %v223
          %v226 = vsub.f32 %v192, %v224
          %s227 = smov %s139
          %v228 = vlaneseq
          %v229 = vshrl.u32 %v228, 7
          %v230 = vmov %v229
          %v231 = vld [vmem:[%s227] sm:$0xff]
          %v233 = vstv %s158
          %vm234 = vcmp.gt.s32.totalorder %v230, %v233
          %vm235 = vcmp.lt.s32.totalorder %v230, 6
          %vm236 = vmand %vm234, %vm235
          %v237 = vsel %vm236, %v231, 0.0
          %v238 = vrcp.pop %v226
          %v239 = vmul.f32 %v237, %v238
          %v240 = vsel %vm186, 0.0, %v239
          %v241 = vstv %s158
          %v242 = vlaneseq
          %v243 = vand.u32 %v242, 127
          %vm244 = vcmp.eq.s32.totalorder %v243, %v241
          %v245 = vsel %vm244, %v240, 0.0
          %246 = vadd.xlane.f32.xlu0 %v245
          %v247 = vpop.xlane.xlu0 %246
          %248 = vst [vmem:[#allocation4] sm:$0xff] %v247
          %s249 = scalar_lea.vmem [#allocation4], %s158
          %250 = vst [vmem:[%s249] sm:$0x1] 1.0
          %v251 = vstv %s158
          %v252 = vlaneseq
          %v253 = vand.u32 %v252, 127
          %vm254 = vcmp.eq.s32.totalorder %v253, %v251
          %v255 = vsel %vm254, %v225, 0.0
          %256 = vadd.xlane.f32.xlu0 %v255
          %v257 = vpop.xlane.xlu0 %256
          %v258 = vstv %s158
          %v259 = vlaneseq
          %v260 = vand.u32 %v259, 127
          %vm261 = vcmp.eq.s32.totalorder %v260, %v258
          %v262 = vld [vmem:[%s153] ss:$0 sm:$0xff]
          %v263 = vsel %vm261, %v257, %v262
          %264 = vst [vmem:[%s153] sm:$0x1] %v263
          %s265 = smov %s139
          %s266 = smov [#allocation4]
          %v267 = vlaneseq
          %v268 = vshrl.u32 %v267, 7
          %v269 = vmov %v268
          %v271 = vld [vmem:[%s266] sm:$0xff]
          %v272 = vld [vmem:[%s265] sm:$0xff]
          %v273 = vmul.f32 %v271, %v272
          %vm274 = vcmp.lt.s32.totalorder %v269, 6
          %v275 = vsel %vm274, %v273, 0.0
          %v276 = vrot.slane %v275, 4
          %v277 = vadd.f32 %v275, %v276
          %v278 = vrot.slane %v277, 2
          %v279 = vadd.f32 %v277, %v278
          %v280 = vrot.slane %v279, 1
          %v281 = vadd.f32 %v279, %v280
          %s282 = smov %s265
          %s283 = smov %s266
          %v284 = vlaneseq
          %v285 = vshrl.u32 %v284, 7
          %v286 = vmov %v285
          %v287 = vmul.f32 %v281, %v257
          %v289 = vlaneseq
          %v290 = vand.u32 %v289, 127
          %v291 = vld [vmem:[%s283] sm:$0xff]
          %v292 = vmul.f32 %v291, %v287
          %v293 = vld [vmem:[%s282] sm:$0xff]
          %v294 = vstv %s158
          %vm295 = vcmp.gt.s32.totalorder %v290, %v294
          %v296 = vsub.f32 %v293, %v292
          %v297 = vsel %vm295, %v296, %v293
          %v298 = vstv %s158
          %v299 = vlaneseq
          %v300 = vand.u32 %v299, 127
          %vm301 = vcmp.eq.s32.totalorder %v300, %v298
          %v302 = vstv %s158
          %vm303 = vcmp.ge.s32.totalorder %v286, %v302
          %vm304 = vmand %vm301, %vm303
          %v305 = vsel %vm304, %v291, %v297
          %306 = vst [vmem:[%s282] sm:$0xff] %v305
          %s307 = scalar_lea.vmem %s282, %s158
          %v308 = vld [vmem:[%s307] ss:$0 sm:$0xff]
          %v309 = vstv %s158
          %v310 = vlaneseq
          %v311 = vand.u32 %v310, 127
          %vm312 = vcmp.eq.s32.totalorder %v311, %v309
          %v313 = vsel %vm312, %v224, %v308
          %314 = vst [vmem:[%s307] sm:$0x1] %v313
        $region59: #{custom-call.91} parent=53 // loop_footer
          %s162 = sadd.s32 1, %s158
        $region60: #{custom-call.91} parent=53 // loop_footer_branch
          %157 = sbr.rel target = $region56
        $region61: #{custom-call.91} parent=53 // loop_exit
          _
        %s316 = sshllo.u32 0, 2
        %v318 = vld [vmem:[#allocation2] sm:%s316]
        %s319 = sshllo.u32 0, 2
        %320 = vst [vmem:[%s145] sm:%s319] %v318
        %s321 = sand.u32 %s10, 1
        %s322 = sand.u32 %s10, 1
        %s323 = smul.addr %s322, 8
        %s324 = scalar_lea.vmem [#allocation1], %s323
        %s325 = sand.u32 %s49, 1
        %s326 = sand.u32 %s49, 1
        %s327 = smul.addr %s326, 2
        %s328 = scalar_lea.vmem [#allocation3], %s327
        %s329 = sadd.s32 %s17, %s16
        %s330 = sadd.s32 %s329, %s15
        %s331 = smul.addr %s330, 8
        %s332 = scalar_lea.vmem %s1, %s331
        // Predicated region
        $region62: #{custom-call.91} parent=53 // pred_check
          _
        $region63: #{custom-call.91} parent=53 // pred_check_branch
          %334 = sbr.rel (0) target = $region65
        $region64: #{custom-call.91} parent=53 // pred_region
          // Predicated region
          $region66: #{custom-call.91} parent=64 // pred_check
            _
          $region67: #{custom-call.91} parent=64 // pred_check_branch
            %336 = sbr.rel (0) target = $region69
          $region68: #{custom-call.91} parent=64 // pred_region
            // Predicated region
            $region81: #{custom-call.91} parent=68 // pred_check
              _
            $region82: #{custom-call.91} parent=68 // pred_check_branch
              %351 = sbr.rel (0) target = $region84
            $region83: #{custom-call.91} parent=68 // pred_region
              loop: start=0, step=1, limit=1
              $region85: #{custom-call.91} parent=83 // loop_pre_header
                _
              $region86: #{custom-call.91} parent=83 // loop_header
                %s353 = sphi 0, %s357
                %p354 = scmp.ge.s32.totalorder %s353, 1
                %s358 = sphi %s324, %s324
                %s359 = sphi %s332, %s332
              $region87: #{custom-call.91} parent=83 // loop_header_branch
                %356 = sbr.rel (%p354) target = $region91
              $region88: #{custom-call.91} parent=83 // loop_body
                %v360 = vld [vmem:[%s358] sm:$0xff]
                %361 = vst [vmem:[%s359] sm:$0xff] %v360
              $region89: #{custom-call.91} parent=83 // loop_footer
                %s357 = sadd.s32 1, %s353
              $region90: #{custom-call.91} parent=83 // loop_footer_branch
                %352 = sbr.rel target = $region86
              $region91: #{custom-call.91} parent=83 // loop_exit
                _
            $region84: #{custom-call.91} parent=68 // pred_fallthru
              _
            // Predicated region
            $region92: #{custom-call.91} parent=68 // pred_check
              _
            $region93: #{custom-call.91} parent=68 // pred_check_branch
              %363 = sbr.rel target = $region95
            $region94: #{custom-call.91} parent=68 // pred_region
              _
            $region95: #{custom-call.91} parent=68 // pred_fallthru
              _
          $region69: #{custom-call.91} parent=64 // pred_fallthru
            _
          // Predicated region
          $region70: #{custom-call.91} parent=64 // pred_check
            _
          $region71: #{custom-call.91} parent=64 // pred_check_branch
            %338 = sbr.rel target = $region73
          $region72: #{custom-call.91} parent=64 // pred_region
            loop: start=0, step=1, limit=1
            $region74: #{custom-call.91} parent=72 // loop_pre_header
              _
            $region75: #{custom-call.91} parent=72 // loop_header
              %s341 = sphi 0, %s345
              %p342 = scmp.ge.s32.totalorder %s341, 1
              %s346 = sphi %s324, %s324
              %s347 = sphi %s332, %s332
            $region76: #{custom-call.91} parent=72 // loop_header_branch
              %344 = sbr.rel (%p342) target = $region80
            $region77: #{custom-call.91} parent=72 // loop_body
              %v348 = vld [vmem:[%s346] sm:$0xff]
              %349 = vst [vmem:[%s347] sm:$0xff] %v348
            $region78: #{custom-call.91} parent=72 // loop_footer
              %s345 = sadd.s32 1, %s341
            $region79: #{custom-call.91} parent=72 // loop_footer_branch
              %340 = sbr.rel target = $region75
            $region80: #{custom-call.91} parent=72 // loop_exit
              _
          $region73: #{custom-call.91} parent=64 // pred_fallthru
            _
        $region65: #{custom-call.91} parent=53 // pred_fallthru
          _
        %364 = vnop
        // Predicated region
        $region96: #{custom-call.91} parent=53 // pred_check
          %p365 = pneg %p59
        $region97: #{custom-call.91} parent=53 // pred_check_branch
          %367 = sbr.rel (%p365) target = $region99
        $region98: #{custom-call.91} parent=53 // pred_region
          %p368 = scmp.lt.s32.totalorder %s15, 0
          %s369 = ssub.s32 0, %s15
          %s370 = scalar_select %p368, %s369, %s15
          %s371 = sshrl.u32 %s370, 3
          %s372 = ssub.s32 0, %s371
          %s373 = scalar_select %p368, %s372, %s371
          %s374 = smul.addr %s373, 2
          %s375 = scalar_lea.vmem %s2, %s374
          // Predicated region
          $region100: #{custom-call.91} parent=98 // pred_check
            _
          $region101: #{custom-call.91} parent=98 // pred_check_branch
            %377 = sbr.rel (0) target = $region103
          $region102: #{custom-call.91} parent=98 // pred_region
            // Predicated region
            $region104: #{custom-call.91} parent=102 // pred_check
              _
            $region105: #{custom-call.91} parent=102 // pred_check_branch
              %379 = sbr.rel target = $region107
            $region106: #{custom-call.91} parent=102 // pred_region
              // Predicated region
              $region119: #{custom-call.91} parent=106 // pred_check
                _
              $region120: #{custom-call.91} parent=106 // pred_check_branch
                %394 = sbr.rel (0) target = $region122
              $region121: #{custom-call.91} parent=106 // pred_region
                loop: start=0, step=1, limit=1
                $region123: #{custom-call.91} parent=121 // loop_pre_header
                  _
                $region124: #{custom-call.91} parent=121 // loop_header
                  %s397 = sphi 0, %s401
                  %p398 = scmp.ge.s32.totalorder %s397, 1
                  %s402 = sphi %s328, %s328
                  %s403 = sphi %s375, %s375
                $region125: #{custom-call.91} parent=121 // loop_header_branch
                  %400 = sbr.rel (%p398) target = $region129
                $region126: #{custom-call.91} parent=121 // loop_body
                  %v404 = vld [vmem:[%s402] sm:$0x3]
                  %405 = vst [vmem:[%s403] sm:$0x3] %v404
                $region127: #{custom-call.91} parent=121 // loop_footer
                  %s401 = sadd.s32 1, %s397
                $region128: #{custom-call.91} parent=121 // loop_footer_branch
                  %396 = sbr.rel target = $region124
                $region129: #{custom-call.91} parent=121 // loop_exit
                  _
              $region122: #{custom-call.91} parent=106 // pred_fallthru
                _
            $region107: #{custom-call.91} parent=102 // pred_fallthru
              _
            // Predicated region
            $region108: #{custom-call.91} parent=102 // pred_check
              _
            $region109: #{custom-call.91} parent=102 // pred_check_branch
              %381 = sbr.rel (0) target = $region111
            $region110: #{custom-call.91} parent=102 // pred_region
              loop: start=0, step=1, limit=1
              $region112: #{custom-call.91} parent=110 // loop_pre_header
                _
              $region113: #{custom-call.91} parent=110 // loop_header
                %s384 = sphi 0, %s388
                %p385 = scmp.ge.s32.totalorder %s384, 1
                %s389 = sphi %s328, %s328
                %s390 = sphi %s375, %s375
              $region114: #{custom-call.91} parent=110 // loop_header_branch
                %387 = sbr.rel (%p385) target = $region118
              $region115: #{custom-call.91} parent=110 // loop_body
                %v391 = vld [vmem:[%s389] sm:$0x3]
                %392 = vst [vmem:[%s390] sm:$0x3] %v391
              $region116: #{custom-call.91} parent=110 // loop_footer
                %s388 = sadd.s32 1, %s384
              $region117: #{custom-call.91} parent=110 // loop_footer_branch
                %383 = sbr.rel target = $region113
              $region118: #{custom-call.91} parent=110 // loop_exit
                _
            $region111: #{custom-call.91} parent=102 // pred_fallthru
              _
          $region103: #{custom-call.91} parent=98 // pred_fallthru
            _
          %406 = vnop
        $region99: #{custom-call.91} parent=53 // pred_fallthru
          _
      $region54: #{custom-call.91} parent=5 // pred_fallthru
        _
      %p407 = scmp.le.s32.totalorder 2, %s5
      // Predicated region
      $region130: #{custom-call.91} parent=5 // pred_check
        %p408 = pneg %p407
      $region131: #{custom-call.91} parent=5 // pred_check_branch
        %410 = sbr.rel (%p408) target = $region133
      $region132: #{custom-call.91} parent=5 // pred_region
        %s411 = ssub.s32 %s5, 2
        %s412 = sand.u32 %s11, 1
        %s413 = sand.u32 %s11, 1
        %s414 = smul.addr %s413, 8
        %s415 = scalar_lea.vmem [#allocation1], %s414
        // Predicated region
        $region134: #{custom-call.91} parent=132 // pred_check
          %p416 = pneg %p65
        $region135: #{custom-call.91} parent=132 // pred_check_branch
          %418 = sbr.rel (%p416) target = $region137
        $region136: #{custom-call.91} parent=132 // pred_region
          %s419 = sand.u32 %s50, 1
          %s420 = sand.u32 %s50, 1
          %s421 = smul.addr %s420, 2
          %s422 = scalar_lea.vmem [#allocation3], %s421
        $region137: #{custom-call.91} parent=132 // pred_fallthru
          _
      $region133: #{custom-call.91} parent=5 // pred_fallthru
        _
    $region6: #{custom-call.91} parent=1 // loop_footer
      %s9 = sadd.s32 1, %s5
    $region7: #{custom-call.91} parent=1 // loop_footer_branch
      %4 = sbr.rel target = $region3
    $region8: #{custom-call.91} parent=1 // loop_exit
      _

// kernel: custom-call.92
$region0: #{custom-call.92}
  %s0 = inlined_call_operand.vmem [shape: f32[2,3,3], index: 0, kind: input, shape index: {}]
  %s1 = inlined_call_operand.vmem [shape: f32[2,3,3], index: 1, kind: output, shape index: {}]
  $region1: #{custom-call.92} parent=0
    #allocation0 [shape = 'u8[4096]{0}', space=vmem, size = 0x1000, scoped, tag = 'operand span for operand 0']
    #allocation1 [shape = 'u8[4096]{0}', space=vmem, size = 0x1000, scoped, tag = 'packed  for operand 0']
    #allocation2 [shape = 'u8[4096]{0}', space=vmem, size = 0x1000, scoped, tag = 'operand span for operand 1']
    #allocation3 [shape = 'u8[4096]{0}', space=vmem, size = 0x1000, scoped, tag = 'packed  for operand 1']
    loop: start=0, step=1, limit=4
    $region2: #{custom-call.92} parent=1 // loop_pre_header
      _
    $region3: #{custom-call.92} parent=1 // loop_header
      %s3 = sphi 0, %s7
      %p4 = scmp.ge.s32.totalorder %s3, 4
    $region4: #{custom-call.92} parent=1 // loop_header_branch
      %6 = sbr.rel (%p4) target = $region8
    $region5: #{custom-call.92} parent=1 // loop_body
      %s8 = ssub.s32 %s3, 1
      %s9 = ssub.s32 %s3, 2
      %s10 = sadd.s32 %s3, 1
      %p11 = scmp.le.s32.totalorder 1, %s3
      %p12 = scmp.lt.s32.totalorder %s3, 3
      %p13 = pnand %p11, %p12
      %p14 = pneg %p13
      // Predicated region
      $region9: #{custom-call.92} parent=5 // pred_check
        _
      $region10: #{custom-call.92} parent=5 // pred_check_branch
        %16 = sbr.rel (%p13) target = $region12
      $region11: #{custom-call.92} parent=5 // pred_region
        %s17 = ssub.s32 %s3, 1
      $region12: #{custom-call.92} parent=5 // pred_fallthru
        _
      %p18 = scmp.lt.s32.totalorder %s3, 2
      // Predicated region
      $region13: #{custom-call.92} parent=5 // pred_check
        %p19 = pneg %p18
      $region14: #{custom-call.92} parent=5 // pred_check_branch
        %21 = sbr.rel (%p19) target = $region16
      $region15: #{custom-call.92} parent=5 // pred_region
        %s22 = sand.u32 %s3, 1
        %s23 = sand.u32 %s3, 1
        %s24 = smul.addr %s23, 4
        %s25 = scalar_lea.vmem [#allocation1], %s24
        %s26 = smul.addr %s3, 4
        %s27 = scalar_lea.vmem %s0, %s26
        // Predicated region
        $region17: #{custom-call.92} parent=15 // pred_check
          _
        $region18: #{custom-call.92} parent=15 // pred_check_branch
          %29 = sbr.rel (0) target = $region20
        $region19: #{custom-call.92} parent=15 // pred_region
          // Predicated region
          $region21: #{custom-call.92} parent=19 // pred_check
            _
          $region22: #{custom-call.92} parent=19 // pred_check_branch
            %31 = sbr.rel target = $region24
          $region23: #{custom-call.92} parent=19 // pred_region
            // Predicated region
            $region36: #{custom-call.92} parent=23 // pred_check
              _
            $region37: #{custom-call.92} parent=23 // pred_check_branch
              %46 = sbr.rel (0) target = $region39
            $region38: #{custom-call.92} parent=23 // pred_region
              loop: start=0, step=1, limit=1
              $region40: #{custom-call.92} parent=38 // loop_pre_header
                _
              $region41: #{custom-call.92} parent=38 // loop_header
                %s49 = sphi 0, %s53
                %p50 = scmp.ge.s32.totalorder %s49, 1
                %s54 = sphi %s27, %s27
                %s55 = sphi %s25, %s25
              $region42: #{custom-call.92} parent=38 // loop_header_branch
                %52 = sbr.rel (%p50) target = $region46
              $region43: #{custom-call.92} parent=38 // loop_body
                %v56 = vld [vmem:[%s54] sm:$0xf]
                %57 = vst [vmem:[%s55] sm:$0xf] %v56
              $region44: #{custom-call.92} parent=38 // loop_footer
                %s53 = sadd.s32 1, %s49
              $region45: #{custom-call.92} parent=38 // loop_footer_branch
                %48 = sbr.rel target = $region41
              $region46: #{custom-call.92} parent=38 // loop_exit
                _
            $region39: #{custom-call.92} parent=23 // pred_fallthru
              _
          $region24: #{custom-call.92} parent=19 // pred_fallthru
            _
          // Predicated region
          $region25: #{custom-call.92} parent=19 // pred_check
            _
          $region26: #{custom-call.92} parent=19 // pred_check_branch
            %33 = sbr.rel (0) target = $region28
          $region27: #{custom-call.92} parent=19 // pred_region
            loop: start=0, step=1, limit=1
            $region29: #{custom-call.92} parent=27 // loop_pre_header
              _
            $region30: #{custom-call.92} parent=27 // loop_header
              %s36 = sphi 0, %s40
              %p37 = scmp.ge.s32.totalorder %s36, 1
              %s41 = sphi %s27, %s27
              %s42 = sphi %s25, %s25
            $region31: #{custom-call.92} parent=27 // loop_header_branch
              %39 = sbr.rel (%p37) target = $region35
            $region32: #{custom-call.92} parent=27 // loop_body
              %v43 = vld [vmem:[%s41] sm:$0xf]
              %44 = vst [vmem:[%s42] sm:$0xf] %v43
            $region33: #{custom-call.92} parent=27 // loop_footer
              %s40 = sadd.s32 1, %s36
            $region34: #{custom-call.92} parent=27 // loop_footer_branch
              %35 = sbr.rel target = $region30
            $region35: #{custom-call.92} parent=27 // loop_exit
              _
          $region28: #{custom-call.92} parent=19 // pred_fallthru
            _
        $region20: #{custom-call.92} parent=15 // pred_fallthru
          _
        %58 = vnop
      $region16: #{custom-call.92} parent=5 // pred_fallthru
        _
      %p59 = scmp.le.s32.totalorder 1, %s3
      %p60 = scmp.lt.s32.totalorder %s3, 3
      %p61 = pnand %p59, %p60
      %p62 = pneg %p61
      // Predicated region
      $region47: #{custom-call.92} parent=5 // pred_check
        _
      $region48: #{custom-call.92} parent=5 // pred_check_branch
        %64 = sbr.rel (%p61) target = $region50
      $region49: #{custom-call.92} parent=5 // pred_region
        %s65 = ssub.s32 %s3, 1
        %s66 = sand.u32 %s8, 1
        %s67 = sand.u32 %s8, 1
        %s68 = smul.addr %s67, 4
        %s69 = scalar_lea.vmem [#allocation1], %s68
        %s70 = sand.u32 %s8, 1
        %s71 = sand.u32 %s8, 1
        %s72 = smul.addr %s71, 4
        %s73 = scalar_lea.vmem [#allocation1], %s72
        %s74 = sand.u32 %s8, 1
        %s75 = sand.u32 %s8, 1
        %s76 = smul.addr %s75, 4
        %s77 = scalar_lea.vmem [#allocation3], %s76
        %s79 = sshllo.u32 0, 4
        %v80 = vld [vmem:[%s73] sm:%s79]
        %81 = vst [vmem:[#allocation0] sm:%s79] %v80
        %v82 = vlaneseq
        %v83 = vand.u32 %v82, 127
        %v84 = vlaneseq
        %v85 = vshrl.u32 %v84, 7
        %vm87 = vcmp.eq.s32.totalorder %v83, %v85
        %v88 = vld [vmem:[#allocation0] sm:$0xff]
        %v89 = vlaneseq
        %v90 = vand.u32 %v89, 127
        %vm91 = vcmp.eq.s32.totalorder %v90, 0
        %v92 = vsel %vm91, %v88, 1.0
        %v93 = vsel %vm87, %v92, 0.0
        %s94 = scalar_lea.vmem [#allocation0], 1
        %v95 = vld [vmem:[%s94] ss:$0 sm:$0xff]
        %vm96 = vcmask 23552
        %v97 = vsel %vm96, %v95, 0.0
        %v98 = vlaneseq
        %v99 = vand.u32 %v98, 127
        %vm100 = vcmp.eq.s32.totalorder %v99, 1
        %v101 = vmul.f32 %v97, %v93
        %102 = vadd.xlane.f32.xlu0 %v101
        %v103 = vpop.xlane.xlu0 %102
        %v104 = vsel %vm100, %v103, %v93
        %s105 = scalar_lea.vmem [#allocation0], 2
        %v106 = vld [vmem:[%s105] ss:$0 sm:$0xff]
        %vm107 = vcmask 23552
        %v108 = vsel %vm107, %v106, 0.0
        %v109 = vlaneseq
        %v110 = vand.u32 %v109, 127
        %vm111 = vcmp.eq.s32.totalorder %v110, 2
        %v112 = vmul.f32 %v108, %v104
        %113 = vadd.xlane.f32.xlu0 %v112
        %v114 = vpop.xlane.xlu0 %113
        %v115 = vsel %vm111, %v114, %v104
        %116 = vst [vmem:[#allocation2] sm:$0xff] %v115
        %s118 = sshllo.u32 0, 4
        %v120 = vld [vmem:[#allocation2] sm:%s118]
        %s121 = sshllo.u32 0, 4
        %122 = vst [vmem:[%s77] sm:%s121] %v120
        %s123 = sand.u32 %s8, 1
        %s124 = sand.u32 %s8, 1
        %s125 = smul.addr %s124, 4
        %s126 = scalar_lea.vmem [#allocation3], %s125
        %s127 = smul.addr %s8, 4
        %s128 = scalar_lea.vmem %s1, %s127
        // Predicated region
        $region51: #{custom-call.92} parent=49 // pred_check
          _
        $region52: #{custom-call.92} parent=49 // pred_check_branch
          %130 = sbr.rel (0) target = $region54
        $region53: #{custom-call.92} parent=49 // pred_region
          // Predicated region
          $region55: #{custom-call.92} parent=53 // pred_check
            _
          $region56: #{custom-call.92} parent=53 // pred_check_branch
            %132 = sbr.rel target = $region58
          $region57: #{custom-call.92} parent=53 // pred_region
            // Predicated region
            $region70: #{custom-call.92} parent=57 // pred_check
              _
            $region71: #{custom-call.92} parent=57 // pred_check_branch
              %147 = sbr.rel (0) target = $region73
            $region72: #{custom-call.92} parent=57 // pred_region
              loop: start=0, step=1, limit=1
              $region74: #{custom-call.92} parent=72 // loop_pre_header
                _
              $region75: #{custom-call.92} parent=72 // loop_header
                %s150 = sphi 0, %s154
                %p151 = scmp.ge.s32.totalorder %s150, 1
                %s155 = sphi %s126, %s126
                %s156 = sphi %s128, %s128
              $region76: #{custom-call.92} parent=72 // loop_header_branch
                %153 = sbr.rel (%p151) target = $region80
              $region77: #{custom-call.92} parent=72 // loop_body
                %v157 = vld [vmem:[%s155] sm:$0xf]
                %158 = vst [vmem:[%s156] sm:$0xf] %v157
              $region78: #{custom-call.92} parent=72 // loop_footer
                %s154 = sadd.s32 1, %s150
              $region79: #{custom-call.92} parent=72 // loop_footer_branch
                %149 = sbr.rel target = $region75
              $region80: #{custom-call.92} parent=72 // loop_exit
                _
            $region73: #{custom-call.92} parent=57 // pred_fallthru
              _
          $region58: #{custom-call.92} parent=53 // pred_fallthru
            _
          // Predicated region
          $region59: #{custom-call.92} parent=53 // pred_check
            _
          $region60: #{custom-call.92} parent=53 // pred_check_branch
            %134 = sbr.rel (0) target = $region62
          $region61: #{custom-call.92} parent=53 // pred_region
            loop: start=0, step=1, limit=1
            $region63: #{custom-call.92} parent=61 // loop_pre_header
              _
            $region64: #{custom-call.92} parent=61 // loop_header
              %s137 = sphi 0, %s141
              %p138 = scmp.ge.s32.totalorder %s137, 1
              %s142 = sphi %s126, %s126
              %s143 = sphi %s128, %s128
            $region65: #{custom-call.92} parent=61 // loop_header_branch
              %140 = sbr.rel (%p138) target = $region69
            $region66: #{custom-call.92} parent=61 // loop_body
              %v144 = vld [vmem:[%s142] sm:$0xf]
              %145 = vst [vmem:[%s143] sm:$0xf] %v144
            $region67: #{custom-call.92} parent=61 // loop_footer
              %s141 = sadd.s32 1, %s137
            $region68: #{custom-call.92} parent=61 // loop_footer_branch
              %136 = sbr.rel target = $region64
            $region69: #{custom-call.92} parent=61 // loop_exit
              _
          $region62: #{custom-call.92} parent=53 // pred_fallthru
            _
        $region54: #{custom-call.92} parent=49 // pred_fallthru
          _
        %159 = vnop
      $region50: #{custom-call.92} parent=5 // pred_fallthru
        _
      %p160 = scmp.le.s32.totalorder 2, %s3
      // Predicated region
      $region81: #{custom-call.92} parent=5 // pred_check
        %p161 = pneg %p160
      $region82: #{custom-call.92} parent=5 // pred_check_branch
        %163 = sbr.rel (%p161) target = $region84
      $region83: #{custom-call.92} parent=5 // pred_region
        %s164 = ssub.s32 %s3, 2
        %s165 = sand.u32 %s9, 1
        %s166 = sand.u32 %s9, 1
        %s167 = smul.addr %s166, 4
        %s168 = scalar_lea.vmem [#allocation3], %s167
      $region84: #{custom-call.92} parent=5 // pred_fallthru
        _
    $region6: #{custom-call.92} parent=1 // loop_footer
      %s7 = sadd.s32 1, %s3
    $region7: #{custom-call.92} parent=1 // loop_footer_branch
      %2 = sbr.rel target = $region3
    $region8: #{custom-call.92} parent=1 // loop_exit
      _

// kernel: custom-call.89
$region0: #{custom-call.89}
  %s0 = inlined_call_operand.vmem [shape: f32[2,3,3], index: 0, kind: input, shape index: {}]
  %s1 = inlined_call_operand.vmem [shape: f32[2,3,3], index: 1, kind: output, shape index: {}]
  $region1: #{custom-call.89} parent=0
    #allocation0 [shape = 'u8[4096]{0}', space=vmem, size = 0x1000, scoped, tag = 'operand span for operand 0']
    #allocation1 [shape = 'u8[4096]{0}', space=vmem, size = 0x1000, scoped, tag = 'packed  for operand 0']
    #allocation2 [shape = 'u8[4096]{0}', space=vmem, size = 0x1000, scoped, tag = 'operand span for operand 1']
    #allocation3 [shape = 'u8[4096]{0}', space=vmem, size = 0x1000, scoped, tag = 'packed  for operand 1']
    loop: start=0, step=1, limit=4
    $region2: #{custom-call.89} parent=1 // loop_pre_header
      _
    $region3: #{custom-call.89} parent=1 // loop_header
      %s3 = sphi 0, %s7
      %p4 = scmp.ge.s32.totalorder %s3, 4
      %s10 = sphi 0, %s29
      %s11 = sphi 0, %s25
      %s12 = sphi 0, %s21
      %s13 = sphi 0, %s10
      %s14 = sphi 0, %s11
      %s15 = sphi 0, %s12
      %s16 = sphi 0, %s13
      %s17 = sphi 0, %s14
      %s18 = sphi 0, %s15
    $region4: #{custom-call.89} parent=1 // loop_header_branch
      %6 = sbr.rel (%p4) target = $region8
    $region5: #{custom-call.89} parent=1 // loop_body
      %s8 = ssub.s32 %s3, 1
      %s9 = ssub.s32 %s3, 2
      %s19 = sadd.s32 1, %s12
      %p20 = scmp.ge.s32.totalorder %s19, 1
      %s21 = scalar_select %p20, 0, %s19
      %s22 = sadd.s32 1, %s11
      %s23 = scalar_select %p20, %s22, %s11
      %p24 = scmp.ge.s32.totalorder %s23, 1
      %s25 = scalar_select %p24, 0, %s23
      %s26 = sadd.s32 1, %s10
      %s27 = scalar_select %p24, %s26, %s10
      %p28 = scmp.ge.s32.totalorder %s27, 2
      %s29 = scalar_select %p28, 0, %s27
      %p30 = scmp.le.s32.totalorder 1, %s3
      %p31 = scmp.lt.s32.totalorder %s3, 3
      %p32 = pnand %p30, %p31
      %p33 = pneg %p32
      // Predicated region
      $region9: #{custom-call.89} parent=5 // pred_check
        _
      $region10: #{custom-call.89} parent=5 // pred_check_branch
        %35 = sbr.rel (%p32) target = $region12
      $region11: #{custom-call.89} parent=5 // pred_region
        %s36 = ssub.s32 %s3, 1
      $region12: #{custom-call.89} parent=5 // pred_fallthru
        _
      %p37 = scmp.lt.s32.totalorder %s3, 2
      // Predicated region
      $region13: #{custom-call.89} parent=5 // pred_check
        %p38 = pneg %p37
      $region14: #{custom-call.89} parent=5 // pred_check_branch
        %40 = sbr.rel (%p38) target = $region16
      $region15: #{custom-call.89} parent=5 // pred_region
        %s41 = sand.u32 %s3, 1
        %s42 = sand.u32 %s3, 1
        %s43 = smul.addr %s42, 4
        %s44 = scalar_lea.vmem [#allocation1], %s43
        %s45 = sadd.s32 %s12, %s11
        %s46 = sadd.s32 %s45, %s10
        %s47 = smul.addr %s46, 4
        %s48 = scalar_lea.vmem %s0, %s47
        // Predicated region
        $region17: #{custom-call.89} parent=15 // pred_check
          _
        $region18: #{custom-call.89} parent=15 // pred_check_branch
          %50 = sbr.rel (0) target = $region20
        $region19: #{custom-call.89} parent=15 // pred_region
          // Predicated region
          $region21: #{custom-call.89} parent=19 // pred_check
            _
          $region22: #{custom-call.89} parent=19 // pred_check_branch
            %52 = sbr.rel target = $region24
          $region23: #{custom-call.89} parent=19 // pred_region
            // Predicated region
            $region36: #{custom-call.89} parent=23 // pred_check
              _
            $region37: #{custom-call.89} parent=23 // pred_check_branch
              %67 = sbr.rel (0) target = $region39
            $region38: #{custom-call.89} parent=23 // pred_region
              loop: start=0, step=1, limit=1
              $region40: #{custom-call.89} parent=38 // loop_pre_header
                _
              $region41: #{custom-call.89} parent=38 // loop_header
                %s70 = sphi 0, %s74
                %p71 = scmp.ge.s32.totalorder %s70, 1
                %s75 = sphi %s48, %s48
                %s76 = sphi %s44, %s44
              $region42: #{custom-call.89} parent=38 // loop_header_branch
                %73 = sbr.rel (%p71) target = $region46
              $region43: #{custom-call.89} parent=38 // loop_body
                %v77 = vld [vmem:[%s75] sm:$0xf]
                %78 = vst [vmem:[%s76] sm:$0xf] %v77
              $region44: #{custom-call.89} parent=38 // loop_footer
                %s74 = sadd.s32 1, %s70
              $region45: #{custom-call.89} parent=38 // loop_footer_branch
                %69 = sbr.rel target = $region41
              $region46: #{custom-call.89} parent=38 // loop_exit
                _
            $region39: #{custom-call.89} parent=23 // pred_fallthru
              _
          $region24: #{custom-call.89} parent=19 // pred_fallthru
            _
          // Predicated region
          $region25: #{custom-call.89} parent=19 // pred_check
            _
          $region26: #{custom-call.89} parent=19 // pred_check_branch
            %54 = sbr.rel (0) target = $region28
          $region27: #{custom-call.89} parent=19 // pred_region
            loop: start=0, step=1, limit=1
            $region29: #{custom-call.89} parent=27 // loop_pre_header
              _
            $region30: #{custom-call.89} parent=27 // loop_header
              %s57 = sphi 0, %s61
              %p58 = scmp.ge.s32.totalorder %s57, 1
              %s62 = sphi %s48, %s48
              %s63 = sphi %s44, %s44
            $region31: #{custom-call.89} parent=27 // loop_header_branch
              %60 = sbr.rel (%p58) target = $region35
            $region32: #{custom-call.89} parent=27 // loop_body
              %v64 = vld [vmem:[%s62] sm:$0xf]
              %65 = vst [vmem:[%s63] sm:$0xf] %v64
            $region33: #{custom-call.89} parent=27 // loop_footer
              %s61 = sadd.s32 1, %s57
            $region34: #{custom-call.89} parent=27 // loop_footer_branch
              %56 = sbr.rel target = $region30
            $region35: #{custom-call.89} parent=27 // loop_exit
              _
          $region28: #{custom-call.89} parent=19 // pred_fallthru
            _
        $region20: #{custom-call.89} parent=15 // pred_fallthru
          _
        %79 = vnop
      $region16: #{custom-call.89} parent=5 // pred_fallthru
        _
      %p80 = scmp.le.s32.totalorder 1, %s3
      %p81 = scmp.lt.s32.totalorder %s3, 3
      %p82 = pnand %p80, %p81
      %p83 = pneg %p82
      // Predicated region
      $region47: #{custom-call.89} parent=5 // pred_check
        _
      $region48: #{custom-call.89} parent=5 // pred_check_branch
        %85 = sbr.rel (%p82) target = $region50
      $region49: #{custom-call.89} parent=5 // pred_region
        %s86 = ssub.s32 %s3, 1
        %s87 = sand.u32 %s8, 1
        %s88 = sand.u32 %s8, 1
        %s89 = smul.addr %s88, 4
        %s90 = scalar_lea.vmem [#allocation1], %s89
        %s91 = sand.u32 %s8, 1
        %s92 = sand.u32 %s8, 1
        %s93 = smul.addr %s92, 4
        %s94 = scalar_lea.vmem [#allocation1], %s93
        %s95 = sand.u32 %s8, 1
        %s96 = sand.u32 %s8, 1
        %s97 = smul.addr %s96, 4
        %s98 = scalar_lea.vmem [#allocation3], %s97
        %s100 = sshllo.u32 0, 4
        %v101 = vld [vmem:[%s94] sm:%s100]
        %102 = vst [vmem:[#allocation0] sm:%s100] %v101
        %103 = vst [vmem:[#allocation2] sm:$0xff] 0.0
        %vm104 = vcmask 7168
        %v105 = vld [vmem:[#allocation2] ss:$0 sm:$0xff]
        %v106 = vld [vmem:[#allocation0] ss:$0 sm:$0xff]
        %v107 = vmul.f32 %v105, %v105
        %108 = vadd.xlane.f32.xlu0 %v107
        %v109 = vpop.xlane.xlu0 %108
        %v110 = vsub.f32 %v106, %v109
        %v111 = vrsqrt.pop %v110
        %v112 = vld [vmem:[#allocation0] sm:$0xff]
        %v113 = vld [vmem:[#allocation2] sm:$0xff]
        %v114 = vmul.f32 %v113, %v105
        %115 = vadd.xlane.f32.xlu0 %v114
        %v116 = vpop.xlane.xlu0 %115
        %v117 = vsub.f32 %v112, %v116
        %v118 = vmul.f32 %v117, %v111
        %v119 = vsel %vm104, %v118, 0.0
        %v120 = vadd.f32 %v113, %v119
        %121 = vst [vmem:[#allocation2] sm:$0xff] %v120
        %vm122 = vcmask 15368
        %s123 = scalar_lea.vmem [#allocation2], 1
        %v124 = vld [vmem:[%s123] ss:$0 sm:$0xff]
        %s125 = scalar_lea.vmem [#allocation0], 1
        %v126 = vld [vmem:[%s125] ss:$0 sm:$0xff]
        %v127 = vmul.f32 %v124, %v124
        %128 = vadd.xlane.f32.xlu0 %v127
        %v129 = vpop.xlane.xlu0 %128
        %v130 = vsub.f32 %v126, %v129
        %v131 = vrsqrt.pop %v130
        %v132 = vld [vmem:[#allocation0] sm:$0xff]
        %v133 = vld [vmem:[#allocation2] sm:$0xff]
        %v134 = vmul.f32 %v133, %v124
        %135 = vadd.xlane.f32.xlu0 %v134
        %v136 = vpop.xlane.xlu0 %135
        %v137 = vsub.f32 %v132, %v136
        %v138 = vmul.f32 %v137, %v131
        %vm139 = vcmask 1047553
        %vm140 = vmand %vm122, %vm139
        %v141 = vsel %vm140, %v138, 0.0
        %v142 = vadd.f32 %v133, %v141
        %143 = vst [vmem:[#allocation2] sm:$0xff] %v142
        %vm144 = vcmask 23568
        %s145 = scalar_lea.vmem [#allocation2], 2
        %v146 = vld [vmem:[%s145] ss:$0 sm:$0xff]
        %s147 = scalar_lea.vmem [#allocation0], 2
        %v148 = vld [vmem:[%s147] ss:$0 sm:$0xff]
        %v149 = vmul.f32 %v146, %v146
        %150 = vadd.xlane.f32.xlu0 %v149
        %v151 = vpop.xlane.xlu0 %150
        %v152 = vsub.f32 %v148, %v151
        %v153 = vrsqrt.pop %v152
        %v154 = vld [vmem:[#allocation0] sm:$0xff]
        %v155 = vld [vmem:[#allocation2] sm:$0xff]
        %v156 = vmul.f32 %v155, %v146
        %157 = vadd.xlane.f32.xlu0 %v156
        %v158 = vpop.xlane.xlu0 %157
        %v159 = vsub.f32 %v154, %v158
        %v160 = vmul.f32 %v159, %v153
        %vm161 = vcmask 1047554
        %vm162 = vmand %vm144, %vm161
        %v163 = vsel %vm162, %v160, 0.0
        %v164 = vadd.f32 %v155, %v163
        %165 = vst [vmem:[#allocation2] sm:$0xff] %v164
        %s167 = sshllo.u32 0, 4
        %v169 = vld [vmem:[#allocation2] sm:%s167]
        %s170 = sshllo.u32 0, 4
        %171 = vst [vmem:[%s98] sm:%s170] %v169
        %s172 = sand.u32 %s8, 1
        %s173 = sand.u32 %s8, 1
        %s174 = smul.addr %s173, 4
        %s175 = scalar_lea.vmem [#allocation3], %s174
        %s176 = sadd.s32 %s15, %s14
        %s177 = sadd.s32 %s176, %s13
        %s178 = smul.addr %s177, 4
        %s179 = scalar_lea.vmem %s1, %s178
        // Predicated region
        $region51: #{custom-call.89} parent=49 // pred_check
          _
        $region52: #{custom-call.89} parent=49 // pred_check_branch
          %181 = sbr.rel (0) target = $region54
        $region53: #{custom-call.89} parent=49 // pred_region
          // Predicated region
          $region55: #{custom-call.89} parent=53 // pred_check
            _
          $region56: #{custom-call.89} parent=53 // pred_check_branch
            %183 = sbr.rel target = $region58
          $region57: #{custom-call.89} parent=53 // pred_region
            // Predicated region
            $region70: #{custom-call.89} parent=57 // pred_check
              _
            $region71: #{custom-call.89} parent=57 // pred_check_branch
              %198 = sbr.rel (0) target = $region73
            $region72: #{custom-call.89} parent=57 // pred_region
              loop: start=0, step=1, limit=1
              $region74: #{custom-call.89} parent=72 // loop_pre_header
                _
              $region75: #{custom-call.89} parent=72 // loop_header
                %s201 = sphi 0, %s205
                %p202 = scmp.ge.s32.totalorder %s201, 1
                %s206 = sphi %s175, %s175
                %s207 = sphi %s179, %s179
              $region76: #{custom-call.89} parent=72 // loop_header_branch
                %204 = sbr.rel (%p202) target = $region80
              $region77: #{custom-call.89} parent=72 // loop_body
                %v208 = vld [vmem:[%s206] sm:$0xf]
                %209 = vst [vmem:[%s207] sm:$0xf] %v208
              $region78: #{custom-call.89} parent=72 // loop_footer
                %s205 = sadd.s32 1, %s201
              $region79: #{custom-call.89} parent=72 // loop_footer_branch
                %200 = sbr.rel target = $region75
              $region80: #{custom-call.89} parent=72 // loop_exit
                _
            $region73: #{custom-call.89} parent=57 // pred_fallthru
              _
          $region58: #{custom-call.89} parent=53 // pred_fallthru
            _
          // Predicated region
          $region59: #{custom-call.89} parent=53 // pred_check
            _
          $region60: #{custom-call.89} parent=53 // pred_check_branch
            %185 = sbr.rel (0) target = $region62
          $region61: #{custom-call.89} parent=53 // pred_region
            loop: start=0, step=1, limit=1
            $region63: #{custom-call.89} parent=61 // loop_pre_header
              _
            $region64: #{custom-call.89} parent=61 // loop_header
              %s188 = sphi 0, %s192
              %p189 = scmp.ge.s32.totalorder %s188, 1
              %s193 = sphi %s175, %s175
              %s194 = sphi %s179, %s179
            $region65: #{custom-call.89} parent=61 // loop_header_branch
              %191 = sbr.rel (%p189) target = $region69
            $region66: #{custom-call.89} parent=61 // loop_body
              %v195 = vld [vmem:[%s193] sm:$0xf]
              %196 = vst [vmem:[%s194] sm:$0xf] %v195
            $region67: #{custom-call.89} parent=61 // loop_footer
              %s192 = sadd.s32 1, %s188
            $region68: #{custom-call.89} parent=61 // loop_footer_branch
              %187 = sbr.rel target = $region64
            $region69: #{custom-call.89} parent=61 // loop_exit
              _
          $region62: #{custom-call.89} parent=53 // pred_fallthru
            _
        $region54: #{custom-call.89} parent=49 // pred_fallthru
          _
        %210 = vnop
      $region50: #{custom-call.89} parent=5 // pred_fallthru
        _
      %p211 = scmp.le.s32.totalorder 2, %s3
      // Predicated region
      $region81: #{custom-call.89} parent=5 // pred_check
        %p212 = pneg %p211
      $region82: #{custom-call.89} parent=5 // pred_check_branch
        %214 = sbr.rel (%p212) target = $region84
      $region83: #{custom-call.89} parent=5 // pred_region
        %s215 = ssub.s32 %s3, 2
        %s216 = sand.u32 %s9, 1
        %s217 = sand.u32 %s9, 1
        %s218 = smul.addr %s217, 4
        %s219 = scalar_lea.vmem [#allocation3], %s218
      $region84: #{custom-call.89} parent=5 // pred_fallthru
        _
    $region6: #{custom-call.89} parent=1 // loop_footer
      %s7 = sadd.s32 1, %s3
    $region7: #{custom-call.89} parent=1 // loop_footer_branch
      %2 = sbr.rel target = $region3
    $region8: #{custom-call.89} parent=1 // loop_exit
      _

// kernel: custom-call.90
$region0: #{custom-call.90}
  %s0 = inlined_call_operand.vmem [shape: f32[2,1,3,3], index: 0, kind: input, shape index: {}]
  %s1 = inlined_call_operand.vmem [shape: f32[2,1,3,3], index: 1, kind: output, shape index: {}]
  $region1: #{custom-call.90} parent=0
    #allocation0 [shape = 'u8[4096]{0}', space=vmem, size = 0x1000, scoped, tag = 'operand span for operand 0']
    #allocation1 [shape = 'u8[4096]{0}', space=vmem, size = 0x1000, scoped, tag = 'packed  for operand 0']
    #allocation2 [shape = 'u8[4096]{0}', space=vmem, size = 0x1000, scoped, tag = 'operand span for operand 1']
    #allocation3 [shape = 'u8[4096]{0}', space=vmem, size = 0x1000, scoped, tag = 'packed  for operand 1']
    loop: start=0, step=1, limit=4
    $region2: #{custom-call.90} parent=1 // loop_pre_header
      _
    $region3: #{custom-call.90} parent=1 // loop_header
      %s3 = sphi 0, %s7
      %p4 = scmp.ge.s32.totalorder %s3, 4
      %s10 = sphi 0, %s36
      %s11 = sphi 0, %s32
      %s12 = sphi 0, %s28
      %s13 = sphi 0, %s24
      %s14 = sphi 0, %s10
      %s15 = sphi 0, %s11
      %s16 = sphi 0, %s12
      %s17 = sphi 0, %s13
      %s18 = sphi 0, %s14
      %s19 = sphi 0, %s15
      %s20 = sphi 0, %s16
      %s21 = sphi 0, %s17
    $region4: #{custom-call.90} parent=1 // loop_header_branch
      %6 = sbr.rel (%p4) target = $region8
    $region5: #{custom-call.90} parent=1 // loop_body
      %s8 = ssub.s32 %s3, 1
      %s9 = ssub.s32 %s3, 2
      %s22 = sadd.s32 1, %s13
      %p23 = scmp.ge.s32.totalorder %s22, 1
      %s24 = scalar_select %p23, 0, %s22
      %s25 = sadd.s32 1, %s12
      %s26 = scalar_select %p23, %s25, %s12
      %p27 = scmp.ge.s32.totalorder %s26, 1
      %s28 = scalar_select %p27, 0, %s26
      %s29 = sadd.s32 1, %s11
      %s30 = scalar_select %p27, %s29, %s11
      %p31 = scmp.ge.s32.totalorder %s30, 1
      %s32 = scalar_select %p31, 0, %s30
      %s33 = sadd.s32 1, %s10
      %s34 = scalar_select %p31, %s33, %s10
      %p35 = scmp.ge.s32.totalorder %s34, 2
      %s36 = scalar_select %p35, 0, %s34
      %p37 = scmp.le.s32.totalorder 1, %s3
      %p38 = scmp.lt.s32.totalorder %s3, 3
      %p39 = pnand %p37, %p38
      %p40 = pneg %p39
      // Predicated region
      $region9: #{custom-call.90} parent=5 // pred_check
        _
      $region10: #{custom-call.90} parent=5 // pred_check_branch
        %42 = sbr.rel (%p39) target = $region12
      $region11: #{custom-call.90} parent=5 // pred_region
        %s43 = ssub.s32 %s3, 1
      $region12: #{custom-call.90} parent=5 // pred_fallthru
        _
      %p44 = scmp.lt.s32.totalorder %s3, 2
      // Predicated region
      $region13: #{custom-call.90} parent=5 // pred_check
        %p45 = pneg %p44
      $region14: #{custom-call.90} parent=5 // pred_check_branch
        %47 = sbr.rel (%p45) target = $region16
      $region15: #{custom-call.90} parent=5 // pred_region
        %s48 = sand.u32 %s3, 1
        %s49 = sand.u32 %s3, 1
        %s50 = smul.addr %s49, 4
        %s51 = scalar_lea.vmem [#allocation1], %s50
        %s52 = sadd.s32 %s13, %s12
        %s53 = sadd.s32 %s52, %s11
        %s54 = sadd.s32 %s53, %s10
        %s55 = smul.addr %s54, 4
        %s56 = scalar_lea.vmem %s0, %s55
        // Predicated region
        $region17: #{custom-call.90} parent=15 // pred_check
          _
        $region18: #{custom-call.90} parent=15 // pred_check_branch
          %58 = sbr.rel (0) target = $region20
        $region19: #{custom-call.90} parent=15 // pred_region
          // Predicated region
          $region21: #{custom-call.90} parent=19 // pred_check
            _
          $region22: #{custom-call.90} parent=19 // pred_check_branch
            %60 = sbr.rel target = $region24
          $region23: #{custom-call.90} parent=19 // pred_region
            // Predicated region
            $region36: #{custom-call.90} parent=23 // pred_check
              _
            $region37: #{custom-call.90} parent=23 // pred_check_branch
              %75 = sbr.rel (0) target = $region39
            $region38: #{custom-call.90} parent=23 // pred_region
              loop: start=0, step=1, limit=1
              $region40: #{custom-call.90} parent=38 // loop_pre_header
                _
              $region41: #{custom-call.90} parent=38 // loop_header
                %s78 = sphi 0, %s82
                %p79 = scmp.ge.s32.totalorder %s78, 1
                %s83 = sphi %s56, %s56
                %s84 = sphi %s51, %s51
              $region42: #{custom-call.90} parent=38 // loop_header_branch
                %81 = sbr.rel (%p79) target = $region46
              $region43: #{custom-call.90} parent=38 // loop_body
                %v85 = vld [vmem:[%s83] sm:$0xf]
                %86 = vst [vmem:[%s84] sm:$0xf] %v85
              $region44: #{custom-call.90} parent=38 // loop_footer
                %s82 = sadd.s32 1, %s78
              $region45: #{custom-call.90} parent=38 // loop_footer_branch
                %77 = sbr.rel target = $region41
              $region46: #{custom-call.90} parent=38 // loop_exit
                _
            $region39: #{custom-call.90} parent=23 // pred_fallthru
              _
          $region24: #{custom-call.90} parent=19 // pred_fallthru
            _
          // Predicated region
          $region25: #{custom-call.90} parent=19 // pred_check
            _
          $region26: #{custom-call.90} parent=19 // pred_check_branch
            %62 = sbr.rel (0) target = $region28
          $region27: #{custom-call.90} parent=19 // pred_region
            loop: start=0, step=1, limit=1
            $region29: #{custom-call.90} parent=27 // loop_pre_header
              _
            $region30: #{custom-call.90} parent=27 // loop_header
              %s65 = sphi 0, %s69
              %p66 = scmp.ge.s32.totalorder %s65, 1
              %s70 = sphi %s56, %s56
              %s71 = sphi %s51, %s51
            $region31: #{custom-call.90} parent=27 // loop_header_branch
              %68 = sbr.rel (%p66) target = $region35
            $region32: #{custom-call.90} parent=27 // loop_body
              %v72 = vld [vmem:[%s70] sm:$0xf]
              %73 = vst [vmem:[%s71] sm:$0xf] %v72
            $region33: #{custom-call.90} parent=27 // loop_footer
              %s69 = sadd.s32 1, %s65
            $region34: #{custom-call.90} parent=27 // loop_footer_branch
              %64 = sbr.rel target = $region30
            $region35: #{custom-call.90} parent=27 // loop_exit
              _
          $region28: #{custom-call.90} parent=19 // pred_fallthru
            _
        $region20: #{custom-call.90} parent=15 // pred_fallthru
          _
        %87 = vnop
      $region16: #{custom-call.90} parent=5 // pred_fallthru
        _
      %p88 = scmp.le.s32.totalorder 1, %s3
      %p89 = scmp.lt.s32.totalorder %s3, 3
      %p90 = pnand %p88, %p89
      %p91 = pneg %p90
      // Predicated region
      $region47: #{custom-call.90} parent=5 // pred_check
        _
      $region48: #{custom-call.90} parent=5 // pred_check_branch
        %93 = sbr.rel (%p90) target = $region50
      $region49: #{custom-call.90} parent=5 // pred_region
        #allocation4 [shape = 'f32[3,3]{1,0}', space=vmem, size = 0x1000, scoped, tag = 'rescaled input a']
        %s94 = ssub.s32 %s3, 1
        %s95 = sand.u32 %s8, 1
        %s96 = sand.u32 %s8, 1
        %s97 = smul.addr %s96, 4
        %s98 = scalar_lea.vmem [#allocation1], %s97
        %s99 = sand.u32 %s8, 1
        %s100 = sand.u32 %s8, 1
        %s101 = smul.addr %s100, 4
        %s102 = scalar_lea.vmem [#allocation1], %s101
        %s103 = sand.u32 %s8, 1
        %s104 = sand.u32 %s8, 1
        %s105 = smul.addr %s104, 4
        %s106 = scalar_lea.vmem [#allocation3], %s105
        %s108 = sshllo.u32 0, 4
        %v109 = vld [vmem:[%s102] sm:%s108]
        %110 = vst [vmem:[#allocation0] sm:%s108] %v109
        %v111 = vlaneseq
        %v112 = vand.u32 %v111, 127
        %vm113 = vcmp.lt.s32.totalorder %v112, 3
        %v114 = vlaneseq
        %v115 = vshrl.u32 %v114, 7
        %vm117 = vcmp.eq.s32.totalorder %v115, %v112
        %v118 = vld [vmem:[#allocation0] sm:$0xff]
        %v119 = vsel %vm117, %v118, 0.0
        %120 = vadd.xlane.f32.xlu0 %v119
        %v121 = vpop.xlane.xlu0 %120
        %vm122 = vcmp.ge.s32.totalorder %v115, %v112
        %vm123 = vmand %vm122, %vm113
        %v124 = vsel %vm123, %v118, 0.0
        %v125 = vrcp.pop %v121
        %v126 = vmul.f32 %v124, %v125
        %127 = vst [vmem:[#allocation4] sm:$0xff] %v126
        %v128 = vlaneseq
        %v129 = vand.u32 %v128, 127
        %v130 = vlaneseq
        %v131 = vshrl.u32 %v130, 7
        %vm133 = vcmp.eq.s32.totalorder %v129, %v131
        %v134 = vlaneseq
        %v135 = vand.u32 %v134, 127
        %vm136 = vcmp.eq.s32.totalorder %v135, 0
        %v137 = vsel %vm136, 1.0, -1.0
        %v138 = vsel %vm133, %v137, 0.0
        %s139 = scalar_lea.vmem [#allocation4], 1
        %v140 = vld [vmem:[%s139] ss:$0 sm:$0xff]
        %v141 = vxor.u32 %v140, 2147483648
        %v142 = vlaneseq
        %v143 = vand.u32 %v142, 127
        %vm144 = vcmp.eq.s32.totalorder %v143, 1
        %v145 = vmul.f32 %v141, %v138
        %146 = vadd.xlane.f32.xlu0 %v145
        %v147 = vpop.xlane.xlu0 %146
        %v148 = vsel %vm144, %v147, %v138
        %s149 = scalar_lea.vmem [#allocation4], 2
        %v150 = vld [vmem:[%s149] ss:$0 sm:$0xff]
        %v151 = vxor.u32 %v150, 2147483648
        %v152 = vlaneseq
        %v153 = vand.u32 %v152, 127
        %vm154 = vcmp.eq.s32.totalorder %v153, 2
        %v155 = vmul.f32 %v151, %v148
        %156 = vadd.xlane.f32.xlu0 %v155
        %v157 = vpop.xlane.xlu0 %156
        %v158 = vsel %vm154, %v157, %v148
        %v159 = vrcp.pop %v121
        %v160 = vmul.f32 %v158, %v159
        %vm161 = vweird.f32 %v121
        %v162 = vsel %vm161, %v158, %v160
        %163 = vst [vmem:[#allocation2] sm:$0xff] %v162
        %s165 = sshllo.u32 0, 4
        %v167 = vld [vmem:[#allocation2] sm:%s165]
        %s168 = sshllo.u32 0, 4
        %169 = vst [vmem:[%s106] sm:%s168] %v167
        %s170 = sand.u32 %s8, 1
        %s171 = sand.u32 %s8, 1
        %s172 = smul.addr %s171, 4
        %s173 = scalar_lea.vmem [#allocation3], %s172
        %s174 = sadd.s32 %s17, %s16
        %s175 = sadd.s32 %s174, %s15
        %s176 = sadd.s32 %s175, %s14
        %s177 = smul.addr %s176, 4
        %s178 = scalar_lea.vmem %s1, %s177
        // Predicated region
        $region51: #{custom-call.90} parent=49 // pred_check
          _
        $region52: #{custom-call.90} parent=49 // pred_check_branch
          %180 = sbr.rel (0) target = $region54
        $region53: #{custom-call.90} parent=49 // pred_region
          // Predicated region
          $region55: #{custom-call.90} parent=53 // pred_check
            _
          $region56: #{custom-call.90} parent=53 // pred_check_branch
            %182 = sbr.rel target = $region58
          $region57: #{custom-call.90} parent=53 // pred_region
            // Predicated region
            $region70: #{custom-call.90} parent=57 // pred_check
              _
            $region71: #{custom-call.90} parent=57 // pred_check_branch
              %197 = sbr.rel (0) target = $region73
            $region72: #{custom-call.90} parent=57 // pred_region
              loop: start=0, step=1, limit=1
              $region74: #{custom-call.90} parent=72 // loop_pre_header
                _
              $region75: #{custom-call.90} parent=72 // loop_header
                %s200 = sphi 0, %s204
                %p201 = scmp.ge.s32.totalorder %s200, 1
                %s205 = sphi %s173, %s173
                %s206 = sphi %s178, %s178
              $region76: #{custom-call.90} parent=72 // loop_header_branch
                %203 = sbr.rel (%p201) target = $region80
              $region77: #{custom-call.90} parent=72 // loop_body
                %v207 = vld [vmem:[%s205] sm:$0xf]
                %208 = vst [vmem:[%s206] sm:$0xf] %v207
              $region78: #{custom-call.90} parent=72 // loop_footer
                %s204 = sadd.s32 1, %s200
              $region79: #{custom-call.90} parent=72 // loop_footer_branch
                %199 = sbr.rel target = $region75
              $region80: #{custom-call.90} parent=72 // loop_exit
                _
            $region73: #{custom-call.90} parent=57 // pred_fallthru
              _
          $region58: #{custom-call.90} parent=53 // pred_fallthru
            _
          // Predicated region
          $region59: #{custom-call.90} parent=53 // pred_check
            _
          $region60: #{custom-call.90} parent=53 // pred_check_branch
            %184 = sbr.rel (0) target = $region62
          $region61: #{custom-call.90} parent=53 // pred_region
            loop: start=0, step=1, limit=1
            $region63: #{custom-call.90} parent=61 // loop_pre_header
              _
            $region64: #{custom-call.90} parent=61 // loop_header
              %s187 = sphi 0, %s191
              %p188 = scmp.ge.s32.totalorder %s187, 1
              %s192 = sphi %s173, %s173
              %s193 = sphi %s178, %s178
            $region65: #{custom-call.90} parent=61 // loop_header_branch
              %190 = sbr.rel (%p188) target = $region69
            $region66: #{custom-call.90} parent=61 // loop_body
              %v194 = vld [vmem:[%s192] sm:$0xf]
              %195 = vst [vmem:[%s193] sm:$0xf] %v194
            $region67: #{custom-call.90} parent=61 // loop_footer
              %s191 = sadd.s32 1, %s187
            $region68: #{custom-call.90} parent=61 // loop_footer_branch
              %186 = sbr.rel target = $region64
            $region69: #{custom-call.90} parent=61 // loop_exit
              _
          $region62: #{custom-call.90} parent=53 // pred_fallthru
            _
        $region54: #{custom-call.90} parent=49 // pred_fallthru
          _
        %209 = vnop
      $region50: #{custom-call.90} parent=5 // pred_fallthru
        _
      %p210 = scmp.le.s32.totalorder 2, %s3
      // Predicated region
      $region81: #{custom-call.90} parent=5 // pred_check
        %p211 = pneg %p210
      $region82: #{custom-call.90} parent=5 // pred_check_branch
        %213 = sbr.rel (%p211) target = $region84
      $region83: #{custom-call.90} parent=5 // pred_region
        %s214 = ssub.s32 %s3, 2
        %s215 = sand.u32 %s9, 1
        %s216 = sand.u32 %s9, 1
        %s217 = smul.addr %s216, 4
        %s218 = scalar_lea.vmem [#allocation3], %s217
      $region84: #{custom-call.90} parent=5 // pred_fallthru
        _
    $region6: #{custom-call.90} parent=1 // loop_footer
      %s7 = sadd.s32 1, %s3
    $region7: #{custom-call.90} parent=1 // loop_footer_branch
      %2 = sbr.rel target = $region3
    $region8: #{custom-call.90} parent=1 // loop_exit
      _

// kernel: custom-call.38
$region0: #{custom-call.38}
  %s0 = inlined_call_operand.vmem [shape: f32[2,2,2], index: 0, kind: input, shape index: {}]
  %s1 = inlined_call_operand.vmem [shape: f32[2,2,2], index: 1, kind: input, shape index: {}]
  %s2 = inlined_call_operand.vmem [shape: f32[2,2,2], index: 2, kind: input, shape index: {}]
  %s3 = inlined_call_operand.vmem [shape: f32[2,2,2], index: 3, kind: input, shape index: {}]
  %s4 = inlined_call_operand.vmem [shape: f32[2,2], index: 4, kind: output, shape index: {0}]
  %s5 = inlined_call_operand.vmem [shape: f32[2,2], index: 5, kind: output, shape index: {1}]
  %s6 = inlined_call_operand.vmem [shape: f32[2,2,2], index: 6, kind: output, shape index: {2}]
  %s7 = inlined_call_operand.vmem [shape: f32[2,2,2], index: 7, kind: output, shape index: {3}]
  %s8 = inlined_call_operand.vmem [shape: f32[2,2,2], index: 8, kind: output, shape index: {4}]
  %s9 = inlined_call_operand.vmem [shape: f32[2,2,2], index: 9, kind: output, shape index: {5}]
  %10 = xla_tuple %s4, %s5, %s6, %s7, %s8, %s9
  $region1: #{custom-call.38} parent=0
    #allocation0 [shape = 'u8[4096]{0}', space=vmem, size = 0x1000, scoped, tag = 'operand span for operand 0']
    #allocation1 [shape = 'u8[2048]{0}', space=vmem, size = 0x800, scoped, tag = 'packed  for operand 0']
    #allocation2 [shape = 'u8[4096]{0}', space=vmem, size = 0x1000, scoped, tag = 'operand span for operand 1']
    #allocation3 [shape = 'u8[2048]{0}', space=vmem, size = 0x800, scoped, tag = 'packed  for operand 1']
    #allocation4 [shape = 'u8[4096]{0}', space=vmem, size = 0x1000, scoped, tag = 'operand span for operand 2']
    #allocation5 [shape = 'u8[2048]{0}', space=vmem, size = 0x800, scoped, tag = 'packed  for operand 2']
    #allocation6 [shape = 'u8[4096]{0}', space=vmem, size = 0x1000, scoped, tag = 'operand span for operand 3']
    #allocation7 [shape = 'u8[2048]{0}', space=vmem, size = 0x800, scoped, tag = 'packed  for operand 3']
    #allocation8 [shape = 'u8[4096]{0}', space=vmem, size = 0x1000, scoped, tag = 'operand span for operand 4']
    #allocation9 [shape = 'u8[2048]{0}', space=vmem, size = 0x800, scoped, tag = 'packed  for operand 4']
    #allocation10 [shape = 'u8[4096]{0}', space=vmem, size = 0x1000, scoped, tag = 'operand span for operand 5']
    #allocation11 [shape = 'u8[2048]{0}', space=vmem, size = 0x800, scoped, tag = 'packed  for operand 5']
    #allocation12 [shape = 'u8[4096]{0}', space=vmem, size = 0x1000, scoped, tag = 'operand span for operand 6']
    #allocation13 [shape = 'u8[2048]{0}', space=vmem, size = 0x800, scoped, tag = 'packed  for operand 6']
    #allocation14 [shape = 'u8[4096]{0}', space=vmem, size = 0x1000, scoped, tag = 'operand span for operand 7']
    #allocation15 [shape = 'u8[2048]{0}', space=vmem, size = 0x800, scoped, tag = 'packed  for operand 7']
    #allocation16 [shape = 'u8[4096]{0}', space=vmem, size = 0x1000, scoped, tag = 'operand span for operand 8']
    #allocation17 [shape = 'u8[2048]{0}', space=vmem, size = 0x800, scoped, tag = 'packed  for operand 8']
    #allocation18 [shape = 'u8[4096]{0}', space=vmem, size = 0x1000, scoped, tag = 'operand span for operand 9']
    #allocation19 [shape = 'u8[2048]{0}', space=vmem, size = 0x800, scoped, tag = 'packed  for operand 9']
    loop: start=0, step=1, limit=4
    $region2: #{custom-call.38} parent=1 // loop_pre_header
      _
    $region3: #{custom-call.38} parent=1 // loop_header
      %s12 = sphi 0, %s16
      %p13 = scmp.ge.s32.totalorder %s12, 4
      %s24 = sphi 0, %s26
      %s27 = sphi 0, %s24
      %s28 = sphi 0, %s27
      %s44 = sphi 0, %s28
      %s52 = sphi 0, %s54
      %s55 = sphi 0, %s52
      %s56 = sphi 0, %s55
      %s72 = sphi 0, %s56
    $region4: #{custom-call.38} parent=1 // loop_header_branch
      %15 = sbr.rel (%p13) target = $region8
    $region5: #{custom-call.38} parent=1 // loop_body
      %s17 = ssub.s32 %s12, 1
      %s18 = ssub.s32 %s12, 2
      %s19 = sadd.s32 %s12, 1
      %s20 = sshrl.u32 %s12, 3
      %s21 = sshrl.u32 %s19, 3
      %s22 = ssub.s32 %s20, %s21
      %p23 = scmp.eq.s32.totalorder %s22, 0
      %s25 = sadd.s32 %s24, 1
      %s26 = scalar_select %p23, %s24, %s25
      %p29 = pneg %p23
      %p30 = scmp.eq.s32.totalorder %s12, 1
      %p31 = por %p29, %p30
      %p32 = scmp.ne.s32.totalorder %s24, %s27
      %p33 = scmp.eq.s32.totalorder %s12, 0
      %p34 = por %p32, %p33
      %p35 = scmp.ne.s32.totalorder %s24, %s27
      %p36 = scmp.eq.s32.totalorder %s17, 1
      %p37 = por %p35, %p36
      %p38 = scmp.ne.s32.totalorder %s27, %s28
      %p39 = scmp.eq.s32.totalorder %s17, 0
      %p40 = por %p38, %p39
      %p41 = scmp.ne.s32.totalorder %s27, %s28
      %p42 = scmp.eq.s32.totalorder %s18, 1
      %p43 = por %p41, %p42
      %p45 = scmp.ne.s32.totalorder %s28, %s44
      %p46 = scmp.eq.s32.totalorder %s18, 0
      %p47 = por %p45, %p46
      %s48 = sshrl.u32 %s12, 3
      %s49 = sshrl.u32 %s19, 3
      %s50 = ssub.s32 %s48, %s49
      %p51 = scmp.eq.s32.totalorder %s50, 0
      %s53 = sadd.s32 %s52, 1
      %s54 = scalar_select %p51, %s52, %s53
      %p57 = pneg %p51
      %p58 = scmp.eq.s32.totalorder %s12, 1
      %p59 = por %p57, %p58
      %p60 = scmp.ne.s32.totalorder %s52, %s55
      %p61 = scmp.eq.s32.totalorder %s12, 0
      %p62 = por %p60, %p61
      %p63 = scmp.ne.s32.totalorder %s52, %s55
      %p64 = scmp.eq.s32.totalorder %s17, 1
      %p65 = por %p63, %p64
      %p66 = scmp.ne.s32.totalorder %s55, %s56
      %p67 = scmp.eq.s32.totalorder %s17, 0
      %p68 = por %p66, %p67
      %p69 = scmp.ne.s32.totalorder %s55, %s56
      %p70 = scmp.eq.s32.totalorder %s18, 1
      %p71 = por %p69, %p70
      %p73 = scmp.ne.s32.totalorder %s56, %s72
      %p74 = scmp.eq.s32.totalorder %s18, 0
      %p75 = por %p73, %p74
      %p76 = scmp.le.s32.totalorder 1, %s12
      %p77 = scmp.lt.s32.totalorder %s12, 3
      %p78 = pnand %p76, %p77
      %p79 = pneg %p78
      // Predicated region
      $region9: #{custom-call.38} parent=5 // pred_check
        _
      $region10: #{custom-call.38} parent=5 // pred_check_branch
        %81 = sbr.rel (%p78) target = $region12
      $region11: #{custom-call.38} parent=5 // pred_region
        %s82 = ssub.s32 %s12, 1
      $region12: #{custom-call.38} parent=5 // pred_fallthru
        _
      %p83 = scmp.lt.s32.totalorder %s12, 2
      // Predicated region
      $region13: #{custom-call.38} parent=5 // pred_check
        %p84 = pneg %p83
      $region14: #{custom-call.38} parent=5 // pred_check_branch
        %86 = sbr.rel (%p84) target = $region16
      $region15: #{custom-call.38} parent=5 // pred_region
        %s87 = sand.u32 %s12, 1
        %s88 = sand.u32 %s12, 1
        %s89 = smul.addr %s88, 2
        %s90 = scalar_lea.vmem [#allocation1], %s89
        %s91 = smul.addr %s12, 2
        %s92 = scalar_lea.vmem %s0, %s91
        // Predicated region
        $region17: #{custom-call.38} parent=15 // pred_check
          _
        $region18: #{custom-call.38} parent=15 // pred_check_branch
          %94 = sbr.rel (0) target = $region20
        $region19: #{custom-call.38} parent=15 // pred_region
          // Predicated region
          $region21: #{custom-call.38} parent=19 // pred_check
            _
          $region22: #{custom-call.38} parent=19 // pred_check_branch
            %96 = sbr.rel target = $region24
          $region23: #{custom-call.38} parent=19 // pred_region
            // Predicated region
            $region36: #{custom-call.38} parent=23 // pred_check
              _
            $region37: #{custom-call.38} parent=23 // pred_check_branch
              %111 = sbr.rel (0) target = $region39
            $region38: #{custom-call.38} parent=23 // pred_region
              loop: start=0, step=1, limit=1
              $region40: #{custom-call.38} parent=38 // loop_pre_header
                _
              $region41: #{custom-call.38} parent=38 // loop_header
                %s114 = sphi 0, %s118
                %p115 = scmp.ge.s32.totalorder %s114, 1
                %s119 = sphi %s92, %s92
                %s120 = sphi %s90, %s90
              $region42: #{custom-call.38} parent=38 // loop_header_branch
                %117 = sbr.rel (%p115) target = $region46
              $region43: #{custom-call.38} parent=38 // loop_body
                %v121 = vld [vmem:[%s119] sm:$0x3]
                %122 = vst [vmem:[%s120] sm:$0x3] %v121
              $region44: #{custom-call.38} parent=38 // loop_footer
                %s118 = sadd.s32 1, %s114
              $region45: #{custom-call.38} parent=38 // loop_footer_branch
                %113 = sbr.rel target = $region41
              $region46: #{custom-call.38} parent=38 // loop_exit
                _
            $region39: #{custom-call.38} parent=23 // pred_fallthru
              _
          $region24: #{custom-call.38} parent=19 // pred_fallthru
            _
          // Predicated region
          $region25: #{custom-call.38} parent=19 // pred_check
            _
          $region26: #{custom-call.38} parent=19 // pred_check_branch
            %98 = sbr.rel (0) target = $region28
          $region27: #{custom-call.38} parent=19 // pred_region
            loop: start=0, step=1, limit=1
            $region29: #{custom-call.38} parent=27 // loop_pre_header
              _
            $region30: #{custom-call.38} parent=27 // loop_header
              %s101 = sphi 0, %s105
              %p102 = scmp.ge.s32.totalorder %s101, 1
              %s106 = sphi %s92, %s92
              %s107 = sphi %s90, %s90
            $region31: #{custom-call.38} parent=27 // loop_header_branch
              %104 = sbr.rel (%p102) target = $region35
            $region32: #{custom-call.38} parent=27 // loop_body
              %v108 = vld [vmem:[%s106] sm:$0x3]
              %109 = vst [vmem:[%s107] sm:$0x3] %v108
            $region33: #{custom-call.38} parent=27 // loop_footer
              %s105 = sadd.s32 1, %s101
            $region34: #{custom-call.38} parent=27 // loop_footer_branch
              %100 = sbr.rel target = $region30
            $region35: #{custom-call.38} parent=27 // loop_exit
              _
          $region28: #{custom-call.38} parent=19 // pred_fallthru
            _
        $region20: #{custom-call.38} parent=15 // pred_fallthru
          _
        %123 = vnop
        %s124 = sand.u32 %s12, 1
        %s125 = sand.u32 %s12, 1
        %s126 = smul.addr %s125, 2
        %s127 = scalar_lea.vmem [#allocation3], %s126
        %s128 = smul.addr %s12, 2
        %s129 = scalar_lea.vmem %s1, %s128
        // Predicated region
        $region47: #{custom-call.38} parent=15 // pred_check
          _
        $region48: #{custom-call.38} parent=15 // pred_check_branch
          %131 = sbr.rel (0) target = $region50
        $region49: #{custom-call.38} parent=15 // pred_region
          // Predicated region
          $region51: #{custom-call.38} parent=49 // pred_check
            _
          $region52: #{custom-call.38} parent=49 // pred_check_branch
            %133 = sbr.rel target = $region54
          $region53: #{custom-call.38} parent=49 // pred_region
            // Predicated region
            $region66: #{custom-call.38} parent=53 // pred_check
              _
            $region67: #{custom-call.38} parent=53 // pred_check_branch
              %148 = sbr.rel (0) target = $region69
            $region68: #{custom-call.38} parent=53 // pred_region
              loop: start=0, step=1, limit=1
              $region70: #{custom-call.38} parent=68 // loop_pre_header
                _
              $region71: #{custom-call.38} parent=68 // loop_header
                %s151 = sphi 0, %s155
                %p152 = scmp.ge.s32.totalorder %s151, 1
                %s156 = sphi %s129, %s129
                %s157 = sphi %s127, %s127
              $region72: #{custom-call.38} parent=68 // loop_header_branch
                %154 = sbr.rel (%p152) target = $region76
              $region73: #{custom-call.38} parent=68 // loop_body
                %v158 = vld [vmem:[%s156] sm:$0x3]
                %159 = vst [vmem:[%s157] sm:$0x3] %v158
              $region74: #{custom-call.38} parent=68 // loop_footer
                %s155 = sadd.s32 1, %s151
              $region75: #{custom-call.38} parent=68 // loop_footer_branch
                %150 = sbr.rel target = $region71
              $region76: #{custom-call.38} parent=68 // loop_exit
                _
            $region69: #{custom-call.38} parent=53 // pred_fallthru
              _
          $region54: #{custom-call.38} parent=49 // pred_fallthru
            _
          // Predicated region
          $region55: #{custom-call.38} parent=49 // pred_check
            _
          $region56: #{custom-call.38} parent=49 // pred_check_branch
            %135 = sbr.rel (0) target = $region58
          $region57: #{custom-call.38} parent=49 // pred_region
            loop: start=0, step=1, limit=1
            $region59: #{custom-call.38} parent=57 // loop_pre_header
              _
            $region60: #{custom-call.38} parent=57 // loop_header
              %s138 = sphi 0, %s142
              %p139 = scmp.ge.s32.totalorder %s138, 1
              %s143 = sphi %s129, %s129
              %s144 = sphi %s127, %s127
            $region61: #{custom-call.38} parent=57 // loop_header_branch
              %141 = sbr.rel (%p139) target = $region65
            $region62: #{custom-call.38} parent=57 // loop_body
              %v145 = vld [vmem:[%s143] sm:$0x3]
              %146 = vst [vmem:[%s144] sm:$0x3] %v145
            $region63: #{custom-call.38} parent=57 // loop_footer
              %s142 = sadd.s32 1, %s138
            $region64: #{custom-call.38} parent=57 // loop_footer_branch
              %137 = sbr.rel target = $region60
            $region65: #{custom-call.38} parent=57 // loop_exit
              _
          $region58: #{custom-call.38} parent=49 // pred_fallthru
            _
        $region50: #{custom-call.38} parent=15 // pred_fallthru
          _
        %160 = vnop
        %s161 = sand.u32 %s12, 1
        %s162 = sand.u32 %s12, 1
        %s163 = smul.addr %s162, 2
        %s164 = scalar_lea.vmem [#allocation5], %s163
        %s165 = smul.addr %s12, 2
        %s166 = scalar_lea.vmem %s2, %s165
        // Predicated region
        $region77: #{custom-call.38} parent=15 // pred_check
          _
        $region78: #{custom-call.38} parent=15 // pred_check_branch
          %168 = sbr.rel (0) target = $region80
        $region79: #{custom-call.38} parent=15 // pred_region
          // Predicated region
          $region81: #{custom-call.38} parent=79 // pred_check
            _
          $region82: #{custom-call.38} parent=79 // pred_check_branch
            %170 = sbr.rel target = $region84
          $region83: #{custom-call.38} parent=79 // pred_region
            // Predicated region
            $region96: #{custom-call.38} parent=83 // pred_check
              _
            $region97: #{custom-call.38} parent=83 // pred_check_branch
              %185 = sbr.rel (0) target = $region99
            $region98: #{custom-call.38} parent=83 // pred_region
              loop: start=0, step=1, limit=1
              $region100: #{custom-call.38} parent=98 // loop_pre_header
                _
              $region101: #{custom-call.38} parent=98 // loop_header
                %s188 = sphi 0, %s192
                %p189 = scmp.ge.s32.totalorder %s188, 1
                %s193 = sphi %s166, %s166
                %s194 = sphi %s164, %s164
              $region102: #{custom-call.38} parent=98 // loop_header_branch
                %191 = sbr.rel (%p189) target = $region106
              $region103: #{custom-call.38} parent=98 // loop_body
                %v195 = vld [vmem:[%s193] sm:$0x3]
                %196 = vst [vmem:[%s194] sm:$0x3] %v195
              $region104: #{custom-call.38} parent=98 // loop_footer
                %s192 = sadd.s32 1, %s188
              $region105: #{custom-call.38} parent=98 // loop_footer_branch
                %187 = sbr.rel target = $region101
              $region106: #{custom-call.38} parent=98 // loop_exit
                _
            $region99: #{custom-call.38} parent=83 // pred_fallthru
              _
          $region84: #{custom-call.38} parent=79 // pred_fallthru
            _
          // Predicated region
          $region85: #{custom-call.38} parent=79 // pred_check
            _
          $region86: #{custom-call.38} parent=79 // pred_check_branch
            %172 = sbr.rel (0) target = $region88
          $region87: #{custom-call.38} parent=79 // pred_region
            loop: start=0, step=1, limit=1
            $region89: #{custom-call.38} parent=87 // loop_pre_header
              _
            $region90: #{custom-call.38} parent=87 // loop_header
              %s175 = sphi 0, %s179
              %p176 = scmp.ge.s32.totalorder %s175, 1
              %s180 = sphi %s166, %s166
              %s181 = sphi %s164, %s164
            $region91: #{custom-call.38} parent=87 // loop_header_branch
              %178 = sbr.rel (%p176) target = $region95
            $region92: #{custom-call.38} parent=87 // loop_body
              %v182 = vld [vmem:[%s180] sm:$0x3]
              %183 = vst [vmem:[%s181] sm:$0x3] %v182
            $region93: #{custom-call.38} parent=87 // loop_footer
              %s179 = sadd.s32 1, %s175
            $region94: #{custom-call.38} parent=87 // loop_footer_branch
              %174 = sbr.rel target = $region90
            $region95: #{custom-call.38} parent=87 // loop_exit
              _
          $region88: #{custom-call.38} parent=79 // pred_fallthru
            _
        $region80: #{custom-call.38} parent=15 // pred_fallthru
          _
        %197 = vnop
        %s198 = sand.u32 %s12, 1
        %s199 = sand.u32 %s12, 1
        %s200 = smul.addr %s199, 2
        %s201 = scalar_lea.vmem [#allocation7], %s200
        %s202 = smul.addr %s12, 2
        %s203 = scalar_lea.vmem %s3, %s202
        // Predicated region
        $region107: #{custom-call.38} parent=15 // pred_check
          _
        $region108: #{custom-call.38} parent=15 // pred_check_branch
          %205 = sbr.rel (0) target = $region110
        $region109: #{custom-call.38} parent=15 // pred_region
          // Predicated region
          $region111: #{custom-call.38} parent=109 // pred_check
            _
          $region112: #{custom-call.38} parent=109 // pred_check_branch
            %207 = sbr.rel target = $region114
          $region113: #{custom-call.38} parent=109 // pred_region
            // Predicated region
            $region126: #{custom-call.38} parent=113 // pred_check
              _
            $region127: #{custom-call.38} parent=113 // pred_check_branch
              %222 = sbr.rel (0) target = $region129
            $region128: #{custom-call.38} parent=113 // pred_region
              loop: start=0, step=1, limit=1
              $region130: #{custom-call.38} parent=128 // loop_pre_header
                _
              $region131: #{custom-call.38} parent=128 // loop_header
                %s225 = sphi 0, %s229
                %p226 = scmp.ge.s32.totalorder %s225, 1
                %s230 = sphi %s203, %s203
                %s231 = sphi %s201, %s201
              $region132: #{custom-call.38} parent=128 // loop_header_branch
                %228 = sbr.rel (%p226) target = $region136
              $region133: #{custom-call.38} parent=128 // loop_body
                %v232 = vld [vmem:[%s230] sm:$0x3]
                %233 = vst [vmem:[%s231] sm:$0x3] %v232
              $region134: #{custom-call.38} parent=128 // loop_footer
                %s229 = sadd.s32 1, %s225
              $region135: #{custom-call.38} parent=128 // loop_footer_branch
                %224 = sbr.rel target = $region131
              $region136: #{custom-call.38} parent=128 // loop_exit
                _
            $region129: #{custom-call.38} parent=113 // pred_fallthru
              _
          $region114: #{custom-call.38} parent=109 // pred_fallthru
            _
          // Predicated region
          $region115: #{custom-call.38} parent=109 // pred_check
            _
          $region116: #{custom-call.38} parent=109 // pred_check_branch
            %209 = sbr.rel (0) target = $region118
          $region117: #{custom-call.38} parent=109 // pred_region
            loop: start=0, step=1, limit=1
            $region119: #{custom-call.38} parent=117 // loop_pre_header
              _
            $region120: #{custom-call.38} parent=117 // loop_header
              %s212 = sphi 0, %s216
              %p213 = scmp.ge.s32.totalorder %s212, 1
              %s217 = sphi %s203, %s203
              %s218 = sphi %s201, %s201
            $region121: #{custom-call.38} parent=117 // loop_header_branch
              %215 = sbr.rel (%p213) target = $region125
            $region122: #{custom-call.38} parent=117 // loop_body
              %v219 = vld [vmem:[%s217] sm:$0x3]
              %220 = vst [vmem:[%s218] sm:$0x3] %v219
            $region123: #{custom-call.38} parent=117 // loop_footer
              %s216 = sadd.s32 1, %s212
            $region124: #{custom-call.38} parent=117 // loop_footer_branch
              %211 = sbr.rel target = $region120
            $region125: #{custom-call.38} parent=117 // loop_exit
              _
          $region118: #{custom-call.38} parent=109 // pred_fallthru
            _
        $region110: #{custom-call.38} parent=15 // pred_fallthru
          _
        %234 = vnop
      $region16: #{custom-call.38} parent=5 // pred_fallthru
        _
      %p235 = scmp.le.s32.totalorder 1, %s12
      %p236 = scmp.lt.s32.totalorder %s12, 3
      %p237 = pnand %p235, %p236
      %p238 = pneg %p237
      // Predicated region
      $region137: #{custom-call.38} parent=5 // pred_check
        _
      $region138: #{custom-call.38} parent=5 // pred_check_branch
        %240 = sbr.rel (%p237) target = $region140
      $region139: #{custom-call.38} parent=5 // pred_region
        #allocation20 [shape = 'f32[2,2]{1,0}', space=vmem, size = 0x1000, scoped, tag = 'a top-left matrix']
        #allocation21 [shape = 'f32[2,2]{1,0}', space=vmem, size = 0x1000, scoped, tag = 'a top-right matrix']
        #allocation22 [shape = 'f32[2,2]{1,0}', space=vmem, size = 0x1000, scoped, tag = 'a bottom-left matrix']
        #allocation23 [shape = 'f32[2,2]{1,0}', space=vmem, size = 0x1000, scoped, tag = 'a bottom-right matrix']
        %s241 = ssub.s32 %s12, 1
        %s242 = sand.u32 %s17, 1
        %s243 = sand.u32 %s17, 1
        %s244 = smul.addr %s243, 2
        %s245 = scalar_lea.vmem [#allocation1], %s244
        %s246 = sand.u32 %s17, 1
        %s247 = sand.u32 %s17, 1
        %s248 = smul.addr %s247, 2
        %s249 = scalar_lea.vmem [#allocation3], %s248
        %s250 = sand.u32 %s17, 1
        %s251 = sand.u32 %s17, 1
        %s252 = smul.addr %s251, 2
        %s253 = scalar_lea.vmem [#allocation5], %s252
        %s254 = sand.u32 %s17, 1
        %s255 = sand.u32 %s17, 1
        %s256 = smul.addr %s255, 2
        %s257 = scalar_lea.vmem [#allocation7], %s256
        %s258 = sand.u32 %s17, 1
        %s259 = sand.u32 %s17, 1
        %s260 = smul.addr %s259, 2
        %s261 = scalar_lea.vmem [#allocation1], %s260
        %s262 = sand.u32 %s17, 1
        %s263 = sand.u32 %s17, 1
        %s264 = smul.addr %s263, 2
        %s265 = scalar_lea.vmem [#allocation3], %s264
        %s266 = sand.u32 %s17, 1
        %s267 = sand.u32 %s17, 1
        %s268 = smul.addr %s267, 2
        %s269 = scalar_lea.vmem [#allocation5], %s268
        %s270 = sand.u32 %s17, 1
        %s271 = sand.u32 %s17, 1
        %s272 = smul.addr %s271, 2
        %s273 = scalar_lea.vmem [#allocation7], %s272
        %p274 = pneg %p40
        %p275 = pneg %p37
        %s276 = sand.u32 %s27, 1
        %s277 = sand.u32 %s27, 1
        %s278 = smul.addr %s277, 2
        %s279 = scalar_lea.vmem [#allocation9], %s278
        %p280 = pneg %p68
        %p281 = pneg %p65
        %s282 = sand.u32 %s55, 1
        %s283 = sand.u32 %s55, 1
        %s284 = smul.addr %s283, 2
        %s285 = scalar_lea.vmem [#allocation11], %s284
        %s286 = sand.u32 %s17, 1
        %s287 = sand.u32 %s17, 1
        %s288 = smul.addr %s287, 2
        %s289 = scalar_lea.vmem [#allocation13], %s288
        %s290 = sand.u32 %s17, 1
        %s291 = sand.u32 %s17, 1
        %s292 = smul.addr %s291, 2
        %s293 = scalar_lea.vmem [#allocation15], %s292
        %s294 = sand.u32 %s17, 1
        %s295 = sand.u32 %s17, 1
        %s296 = smul.addr %s295, 2
        %s297 = scalar_lea.vmem [#allocation17], %s296
        %s298 = sand.u32 %s17, 1
        %s299 = sand.u32 %s17, 1
        %s300 = smul.addr %s299, 2
        %s301 = scalar_lea.vmem [#allocation19], %s300
        %s303 = sshllo.u32 0, 2
        %v304 = vld [vmem:[%s261] sm:%s303]
        %305 = vst [vmem:[#allocation0] sm:%s303] %v304
        %s307 = sshllo.u32 0, 2
        %v308 = vld [vmem:[%s265] sm:%s307]
        %309 = vst [vmem:[#allocation2] sm:%s307] %v308
        %s311 = sshllo.u32 0, 2
        %v312 = vld [vmem:[%s269] sm:%s311]
        %313 = vst [vmem:[#allocation4] sm:%s311] %v312
        %s315 = sshllo.u32 0, 2
        %v316 = vld [vmem:[%s273] sm:%s315]
        %317 = vst [vmem:[#allocation6] sm:%s315] %v316
        %s318 = sshrl.u32 %s17, 3
        %s319 = sshrl.u32 %s17, 3
        %s320 = smov [#allocation20]
        %v321 = vld [vmem:[#allocation0] sm:$0xff]
        %322 = vst [vmem:[%s320] sm:$0xff] %v321
        %s323 = smov [#allocation21]
        %v324 = vld [vmem:[#allocation2] sm:$0xff]
        %325 = vst [vmem:[%s323] sm:$0xff] %v324
        %s326 = smov [#allocation22]
        %v327 = vld [vmem:[#allocation4] sm:$0xff]
        %328 = vst [vmem:[%s326] sm:$0xff] %v327
        %s329 = smov [#allocation23]
        %v330 = vld [vmem:[#allocation6] sm:$0xff]
        %331 = vst [vmem:[%s329] sm:$0xff] %v330
        %332 = vst [vmem:[#allocation12] sm:$0xff] 0.0
        %333 = vst [vmem:[#allocation14] sm:$0xff] 0.0
        %334 = vst [vmem:[#allocation16] sm:$0xff] 0.0
        %335 = vst [vmem:[#allocation18] sm:$0xff] 0.0
        %s336 = smov [#allocation12]
        %v337 = vlaneseq
        %v338 = vand.u32 %v337, 127
        %v339 = vmov %v338
        %v340 = vlaneseq
        %v341 = vshrl.u32 %v340, 7
        %v342 = vmov %v341
        %v343 = vld [vmem:[%s336] sm:$0x3]
        %vm346 = vcmp.eq.s32.totalorder %v342, %v339
        %v347 = vsel %vm346, 1.0, %v343
        %348 = vst [vmem:[%s336] sm:$0x3] %v347
        %s349 = smov [#allocation18]
        %v350 = vlaneseq
        %v351 = vand.u32 %v350, 127
        %v352 = vmov %v351
        %v353 = vlaneseq
        %v354 = vshrl.u32 %v353, 7
        %v355 = vmov %v354
        %v356 = vld [vmem:[%s349] sm:$0x3]
        %vm359 = vcmp.eq.s32.totalorder %v355, %v352
        %v360 = vsel %vm359, 1.0, %v356
        %361 = vst [vmem:[%s349] sm:$0x3] %v360
        // While loop
        $region141: #{custom-call.38} parent=139 // loop_pre_header
          _
        $region142: #{custom-call.38} parent=139 // loop_header
          %s363 = sphi 0, %s905
          %v364 = vlaneseq
          %v365 = vand.u32 %v364, 127
          %v366 = vmov %v365
          %v367 = vlaneseq
          %v368 = vshrl.u32 %v367, 7
          %v369 = vmov %v368
          %s370 = smov [#allocation20]
          %v371 = vlaneseq
          %v372 = vand.u32 %v371, 127
          %vm373 = vcmp.ge.s32.totalorder %v372, 0
          %vm374 = vcmp.lt.s32.totalorder %v372, 2
          %vm375 = vmand %vm373, %vm374
          %v376 = vld [vmem:[%s370] sm:$0x3]
          %v377 = vsel %vm375, %v376, 0.0
          %v378 = vmul.f32 %v377, %v377
          %vm381 = vcmp.eq.s32.totalorder %v369, %v366
          %v382 = vsel %vm381, 0.0, %v378
          %v383 = vlaneseq
          %v384 = vand.u32 %v383, 127
          %v385 = vmov %v384
          %v386 = vlaneseq
          %v387 = vshrl.u32 %v386, 7
          %v388 = vmov %v387
          %s389 = smov [#allocation21]
          %v390 = vlaneseq
          %v391 = vand.u32 %v390, 127
          %vm392 = vcmp.ge.s32.totalorder %v391, 0
          %vm393 = vcmp.lt.s32.totalorder %v391, 2
          %vm394 = vmand %vm392, %vm393
          %v395 = vld [vmem:[%s389] sm:$0x3]
          %v396 = vsel %vm394, %v395, 0.0
          %v397 = vmul.f32 %v396, %v396
          %v398 = vadd.f32 %v382, %v397
          %v399 = vadd.f32 %v378, %v397
          %v400 = vlaneseq
          %v401 = vand.u32 %v400, 127
          %v402 = vmov %v401
          %v403 = vlaneseq
          %v404 = vshrl.u32 %v403, 7
          %v405 = vmov %v404
          %s406 = smov [#allocation22]
          %v407 = vlaneseq
          %v408 = vand.u32 %v407, 127
          %vm409 = vcmp.ge.s32.totalorder %v408, 0
          %vm410 = vcmp.lt.s32.totalorder %v408, 2
          %vm411 = vmand %vm409, %vm410
          %v412 = vld [vmem:[%s406] sm:$0x3]
          %v413 = vsel %vm411, %v412, 0.0
          %v414 = vmul.f32 %v413, %v413
          %v415 = vadd.f32 %v398, %v414
          %v416 = vadd.f32 %v399, %v414
          %v417 = vlaneseq
          %v418 = vand.u32 %v417, 127
          %v419 = vmov %v418
          %v420 = vlaneseq
          %v421 = vshrl.u32 %v420, 7
          %v422 = vmov %v421
          %s423 = smov [#allocation23]
          %v424 = vlaneseq
          %v425 = vand.u32 %v424, 127
          %vm426 = vcmp.ge.s32.totalorder %v425, 0
          %vm427 = vcmp.lt.s32.totalorder %v425, 2
          %vm428 = vmand %vm426, %vm427
          %v429 = vld [vmem:[%s423] sm:$0x3]
          %v430 = vsel %vm428, %v429, 0.0
          %v431 = vmul.f32 %v430, %v430
          %vm434 = vcmp.eq.s32.totalorder %v422, %v419
          %v435 = vsel %vm434, 0.0, %v431
          %v436 = vadd.f32 %v415, %v435
          %v437 = vadd.f32 %v416, %v431
          %438 = vadd.xlane.f32.xlu0 %v437
          %v439 = vpop.xlane.xlu0 %438
          %v440 = vrot.slane %v439, 4
          %v441 = vadd.f32 %v439, %v440
          %v442 = vrot.slane %v441, 2
          %v443 = vadd.f32 %v441, %v442
          %v444 = vrot.slane %v443, 1
          %v445 = vadd.f32 %v443, %v444
          %446 = vadd.xlane.f32.xlu0 %v436
          %v447 = vpop.xlane.xlu0 %446
          %v448 = vrot.slane %v447, 4
          %v449 = vadd.f32 %v447, %v448
          %v450 = vrot.slane %v449, 2
          %v451 = vadd.f32 %v449, %v450
          %v452 = vrot.slane %v451, 1
          %v453 = vadd.f32 %v451, %v452
          %s454 = vtos %v453
          %s455 = vtos %v445
          %s456 = smul.f32 1e-10, %s455
          %p457 = scmp.le.f32.partialorder %s454, %s456
          %p458 = scmp.ge.s32.totalorder %s363, 15
          %p459 = por %p457, %p458
        $region143: #{custom-call.38} parent=139 // loop_header_branch
          %907 = sbr.rel (%p459) target = $region147
        $region144: #{custom-call.38} parent=139 // loop_body
          loop: start=0, step=1, limit=3
          $region148: #{custom-call.38} parent=144 // loop_pre_header
            _
          $region149: #{custom-call.38} parent=144 // loop_header
            %s461 = sphi 0, %s465
            %p462 = scmp.ge.s32.totalorder %s461, 3
          $region150: #{custom-call.38} parent=144 // loop_header_branch
            %464 = sbr.rel (%p462) target = $region154
          $region151: #{custom-call.38} parent=144 // loop_body
            #allocation24 [shape = 'f32[1024]{0}', space=vmem, size = 0x1000, scoped, tag = 'a_tl_diag vmem']
            #allocation25 [shape = 'f32[1024]{0}', space=vmem, size = 0x1000, scoped, tag = 'a_tr_diag vmem']
            #allocation26 [shape = 'f32[1024]{0}', space=vmem, size = 0x1000, scoped, tag = 'a_br_diag vmem']
            #allocation27 [shape = 'f32[1024]{0}', space=vmem, size = 0x1000, scoped, tag = 'rt1 vmem']
            #allocation28 [shape = 'f32[1024]{0}', space=vmem, size = 0x1000, scoped, tag = 'rt2 vmem']
            #allocation29 [shape = 'f32[1024]{0}', space=vmem, size = 0x1000, scoped, tag = 'c vmem']
            #allocation30 [shape = 'f32[1024]{0}', space=vmem, size = 0x1000, scoped, tag = 's vmem']
            #allocation31 [shape = 'f32[4096]{0}', space=vmem, size = 0x4000, scoped, tag = 'c broadcast']
            #allocation32 [shape = 'f32[4096]{0}', space=vmem, size = 0x4000, scoped, tag = 's broadcast']
            %s466 = smov [#allocation20]
            %s467 = smov [#allocation24]
            %v468 = vlaneseq
            %v469 = vand.u32 %v468, 127
            %v470 = vmov %v469
            %v471 = vlaneseq
            %v472 = vshrl.u32 %v471, 7
            %v473 = vmov %v472
            %v474 = vld [vmem:[%s466] sm:$0x3]
            %vm477 = vcmp.eq.s32.totalorder %v473, %v470
            %v478 = vsel %vm477, %v474, 0.0
            %v479 = vrot.slane %v478, 4
            %v480 = vadd.f32 %v478, %v479
            %v481 = vrot.slane %v480, 2
            %v482 = vadd.f32 %v480, %v481
            %v483 = vrot.slane %v482, 1
            %v484 = vadd.f32 %v482, %v483
            %485 = vst [vmem:[%s467] sm:$0x1] %v484
            %s486 = smov [#allocation21]
            %s487 = smov [#allocation25]
            %v488 = vlaneseq
            %v489 = vand.u32 %v488, 127
            %v490 = vmov %v489
            %v491 = vlaneseq
            %v492 = vshrl.u32 %v491, 7
            %v493 = vmov %v492
            %v494 = vld [vmem:[%s486] sm:$0x3]
            %vm497 = vcmp.eq.s32.totalorder %v493, %v490
            %v498 = vsel %vm497, %v494, 0.0
            %v499 = vrot.slane %v498, 4
            %v500 = vadd.f32 %v498, %v499
            %v501 = vrot.slane %v500, 2
            %v502 = vadd.f32 %v500, %v501
            %v503 = vrot.slane %v502, 1
            %v504 = vadd.f32 %v502, %v503
            %505 = vst [vmem:[%s487] sm:$0x1] %v504
            %s506 = smov [#allocation23]
            %s507 = smov [#allocation26]
            %v508 = vlaneseq
            %v509 = vand.u32 %v508, 127
            %v510 = vmov %v509
            %v511 = vlaneseq
            %v512 = vshrl.u32 %v511, 7
            %v513 = vmov %v512
            %v514 = vld [vmem:[%s506] sm:$0x3]
            %vm517 = vcmp.eq.s32.totalorder %v513, %v510
            %v518 = vsel %vm517, %v514, 0.0
            %v519 = vrot.slane %v518, 4
            %v520 = vadd.f32 %v518, %v519
            %v521 = vrot.slane %v520, 2
            %v522 = vadd.f32 %v520, %v521
            %v523 = vrot.slane %v522, 1
            %v524 = vadd.f32 %v522, %v523
            %525 = vst [vmem:[%s507] sm:$0x1] %v524
            %s526 = smov [#allocation29]
            %s527 = smov [#allocation30]
            %s528 = smov [#allocation24]
            %v529 = vld [vmem:[%s528] sm:$0xff]
            %s530 = smov [#allocation25]
            %v531 = vld [vmem:[%s530] sm:$0xff]
            %s532 = smov [#allocation26]
            %v533 = vld [vmem:[%s532] sm:$0xff]
            %v534 = vsub.f32 %v533, %v529
            %v535 = vmul.f32 2.0, %v531
            %v536 = vrcp.pop %v535
            %v537 = vmul.f32 %v534, %v536
            %vm538 = vcmp.ge.f32.partialorder %v537, 0.0
            %v539 = vmul.f32 %v537, %v537
            %v540 = vadd.f32 1.0, %v539
            %v541 = vrsqrt.pop %v540
            %v542 = vmul.f32 %v540, %v541
            %vm543 = vcmp.eq.f32.partialorder %v540, inf
            %v544 = vsel %vm543, %v540, %v542
            %vm545 = vcmp.eq.f32.partialorder %v540, 0.0
            %v546 = vand.u32 %v540, 2147483648
            %v547 = vsel %vm545, %v546, %v544
            %v548 = vxor.u32 %v547, 2147483648
            %v549 = vsel %vm538, %v547, %v548
            %v550 = vadd.f32 %v537, %v549
            %v551 = vrcp.pop %v550
            %v552 = vand.u32 2147483647, %v529
            %v553 = vand.u32 2147483647, %v531
            %v554 = vand.u32 2147483647, %v533
            %v555 = vmin.f32 %v552, %v554
            %v556 = vmul.f32 1.1920929e-08, %v555
            %vm557 = vcmp.le.f32.partialorder %v553, %v556
            %v558 = vsel %vm557, 0.0, %v551
            %v559 = vmul.f32 %v558, %v558
            %v560 = vadd.f32 1.0, %v559
            %v561 = vrsqrt.pop %v560
            %v562 = vmul.f32 %v558, %v561
            %v563 = vmul.f32 %v558, %v531
            %v564 = vsub.f32 %v529, %v563
            %v565 = vmul.f32 %v558, %v531
            %v566 = vadd.f32 %v533, %v565
            %s567 = smov [#allocation27]
            %568 = vst [vmem:[%s567] sm:$0xff] %v564
            %s569 = smov [#allocation28]
            %570 = vst [vmem:[%s569] sm:$0xff] %v566
            %s571 = smov %s526
            %572 = vst [vmem:[%s571] sm:$0xff] %v561
            %s573 = smov %s527
            %574 = vst [vmem:[%s573] sm:$0xff] %v562
            %s575 = smov [#allocation29]
            %v576 = vld [vmem:[%s575] ss:$0 sm:$0xff]
            %v577 = vlaneseq
            %v578 = vand.u32 %v577, 127
            %v579 = vmov %v578
            %v580 = vlaneseq
            %v581 = vshrl.u32 %v580, 7
            %v582 = vmov %v581
            %vm584 = vcmp.eq.s32.totalorder %v582, %v579
            %v585 = vsel %vm584, %v576, 0.0
            %586 = vadd.xlane.f32.xlu0 %v585
            %v587 = vpop.xlane.xlu0 %586
            %s588 = smov [#allocation31]
            %589 = vst [vmem:[%s588] sm:$0xff] %v587
            %s590 = smov [#allocation30]
            %v591 = vld [vmem:[%s590] ss:$0 sm:$0xff]
            %v592 = vlaneseq
            %v593 = vand.u32 %v592, 127
            %v594 = vmov %v593
            %v595 = vlaneseq
            %v596 = vshrl.u32 %v595, 7
            %v597 = vmov %v596
            %vm599 = vcmp.eq.s32.totalorder %v597, %v594
            %v600 = vsel %vm599, %v591, 0.0
            %601 = vadd.xlane.f32.xlu0 %v600
            %v602 = vpop.xlane.xlu0 %601
            %s603 = smov [#allocation32]
            %604 = vst [vmem:[%s603] sm:$0xff] %v602
            %s605 = smov [#allocation31]
            %v606 = vld [vmem:[%s605] sm:$0xff]
            %s607 = smov [#allocation32]
            %v608 = vld [vmem:[%s607] sm:$0xff]
            %s609 = smov [#allocation20]
            %s610 = smov [#allocation21]
            %s611 = smov [#allocation22]
            %s612 = smov [#allocation23]
            %v613 = vld [vmem:[%s609] sm:$0x3]
            %v614 = vld [vmem:[%s610] sm:$0x3]
            %v615 = vld [vmem:[%s611] sm:$0x3]
            %v616 = vld [vmem:[%s612] sm:$0x3]
            %v617 = vmul.f32 %v606, %v613
            %v618 = vmul.f32 %v608, %v615
            %v619 = vsub.f32 %v617, %v618
            %v620 = vmul.f32 %v606, %v614
            %v621 = vmul.f32 %v608, %v616
            %v622 = vsub.f32 %v620, %v621
            %v623 = vmul.f32 %v608, %v613
            %v624 = vmul.f32 %v606, %v615
            %v625 = vadd.f32 %v623, %v624
            %v626 = vmul.f32 %v608, %v614
            %v627 = vmul.f32 %v606, %v616
            %v628 = vadd.f32 %v626, %v627
            %629 = vst [vmem:[%s609] sm:$0x3] %v619
            %630 = vst [vmem:[%s610] sm:$0x3] %v622
            %631 = vst [vmem:[%s611] sm:$0x3] %v625
            %632 = vst [vmem:[%s612] sm:$0x3] %v628
            %s633 = smov [#allocation29]
            %v634 = vld [vmem:[%s633] ss:$0 sm:$0xff]
            %s635 = smov [#allocation30]
            %v636 = vld [vmem:[%s635] ss:$0 sm:$0xff]
            %s637 = smov [#allocation20]
            %s638 = smov [#allocation21]
            %s639 = smov [#allocation22]
            %s640 = smov [#allocation23]
            %v641 = vld [vmem:[%s637] sm:$0x3]
            %v642 = vld [vmem:[%s638] sm:$0x3]
            %v643 = vld [vmem:[%s639] sm:$0x3]
            %v644 = vld [vmem:[%s640] sm:$0x3]
            %v645 = vmul.f32 %v634, %v641
            %v646 = vmul.f32 %v636, %v642
            %v647 = vsub.f32 %v645, %v646
            %v648 = vmul.f32 %v636, %v641
            %v649 = vmul.f32 %v634, %v642
            %v650 = vadd.f32 %v648, %v649
            %v651 = vmul.f32 %v634, %v643
            %v652 = vmul.f32 %v636, %v644
            %v653 = vsub.f32 %v651, %v652
            %v654 = vmul.f32 %v636, %v643
            %v655 = vmul.f32 %v634, %v644
            %v656 = vadd.f32 %v654, %v655
            %657 = vst [vmem:[%s637] sm:$0x3] %v647
            %658 = vst [vmem:[%s638] sm:$0x3] %v650
            %659 = vst [vmem:[%s639] sm:$0x3] %v653
            %660 = vst [vmem:[%s640] sm:$0x3] %v656
            %s661 = smov [#allocation20]
            %s662 = smov [#allocation27]
            %v663 = vlaneseq
            %v664 = vand.u32 %v663, 127
            %v665 = vmov %v664
            %v666 = vlaneseq
            %v667 = vshrl.u32 %v666, 7
            %v668 = vmov %v667
            %v669 = vld [vmem:[%s662] ss:$0 sm:$0xff]
            %v670 = vld [vmem:[%s661] sm:$0x3]
            %vm673 = vcmp.eq.s32.totalorder %v668, %v665
            %v674 = vsel %vm673, %v669, %v670
            %675 = vst [vmem:[%s661] sm:$0x3] %v674
            %s676 = smov [#allocation21]
            %v677 = vlaneseq
            %v678 = vand.u32 %v677, 127
            %v679 = vmov %v678
            %v680 = vlaneseq
            %v681 = vshrl.u32 %v680, 7
            %v682 = vmov %v681
            %v683 = vld [vmem:[%s676] sm:$0x3]
            %vm686 = vcmp.eq.s32.totalorder %v682, %v679
            %v687 = vsel %vm686, 0.0, %v683
            %688 = vst [vmem:[%s676] sm:$0x3] %v687
            %s689 = smov [#allocation22]
            %v690 = vlaneseq
            %v691 = vand.u32 %v690, 127
            %v692 = vmov %v691
            %v693 = vlaneseq
            %v694 = vshrl.u32 %v693, 7
            %v695 = vmov %v694
            %v696 = vld [vmem:[%s689] sm:$0x3]
            %vm699 = vcmp.eq.s32.totalorder %v695, %v692
            %v700 = vsel %vm699, 0.0, %v696
            %701 = vst [vmem:[%s689] sm:$0x3] %v700
            %s702 = smov [#allocation23]
            %s703 = smov [#allocation28]
            %v704 = vlaneseq
            %v705 = vand.u32 %v704, 127
            %v706 = vmov %v705
            %v707 = vlaneseq
            %v708 = vshrl.u32 %v707, 7
            %v709 = vmov %v708
            %v710 = vld [vmem:[%s703] ss:$0 sm:$0xff]
            %v711 = vld [vmem:[%s702] sm:$0x3]
            %vm714 = vcmp.eq.s32.totalorder %v709, %v706
            %v715 = vsel %vm714, %v710, %v711
            %716 = vst [vmem:[%s702] sm:$0x3] %v715
            %s717 = smov [#allocation20]
            %s718 = smov [#allocation21]
            %v719 = vld [vmem:[%s718] sm:$0x3]
            %720 = vrot.lane.b32.xlu0 %v719, 1
            %v721 = vpop.permute.xlu0 %720
            %v722 = vld [vmem:[%s717] sm:$0x3]
            %v723 = vld [vmem:[%s717] sm:$0x3]
            %724 = vrot.lane.b32.xlu0 %v723, 1
            %v725 = vpop.permute.xlu0 %724
            %v726 = vlaneseq
            %v727 = vand.u32 %v726, 127
            %vm728 = vcmp.eq.s32.totalorder %v727, 0
            %v729 = vsel %vm728, %v723, %v725
            %v730 = vlaneseq
            %v731 = vand.u32 %v730, 127
            %vm732 = vcmp.eq.s32.totalorder %v731, 1
            %v733 = vsel %vm732, %v721, %v729
            %v734 = vlaneseq
            %v735 = vand.u32 %v734, 127
            %vm736 = vcmp.ge.s32.totalorder %v735, 0
            %vm737 = vcmp.lt.s32.totalorder %v735, 2
            %vm738 = vmand %vm736, %vm737
            %v739 = vsel %vm738, %v733, 0.0
            %v740 = vld [vmem:[%s718] sm:$0x3]
            %741 = vrot.lane.b32.xlu0 %v740, 127
            %v742 = vpop.permute.xlu0 %741
            %v743 = vlaneseq
            %v744 = vand.u32 %v743, 127
            %vm745 = vcmp.eq.s32.totalorder %v744, 1
            %v746 = vsel %vm745, %v722, %v742
            %747 = vst [vmem:[%s717] sm:$0x3] %v739
            %748 = vst [vmem:[%s718] sm:$0x3] %v746
            %s749 = smov [#allocation22]
            %s750 = smov [#allocation23]
            %v751 = vld [vmem:[%s750] sm:$0x3]
            %752 = vrot.lane.b32.xlu0 %v751, 1
            %v753 = vpop.permute.xlu0 %752
            %v754 = vld [vmem:[%s749] sm:$0x3]
            %v755 = vld [vmem:[%s749] sm:$0x3]
            %756 = vrot.lane.b32.xlu0 %v755, 1
            %v757 = vpop.permute.xlu0 %756
            %v758 = vlaneseq
            %v759 = vand.u32 %v758, 127
            %vm760 = vcmp.eq.s32.totalorder %v759, 0
            %v761 = vsel %vm760, %v755, %v757
            %v762 = vlaneseq
            %v763 = vand.u32 %v762, 127
            %vm764 = vcmp.eq.s32.totalorder %v763, 1
            %v765 = vsel %vm764, %v753, %v761
            %v766 = vlaneseq
            %v767 = vand.u32 %v766, 127
            %vm768 = vcmp.ge.s32.totalorder %v767, 0
            %vm769 = vcmp.lt.s32.totalorder %v767, 2
            %vm770 = vmand %vm768, %vm769
            %v771 = vsel %vm770, %v765, 0.0
            %v772 = vld [vmem:[%s750] sm:$0x3]
            %773 = vrot.lane.b32.xlu0 %v772, 127
            %v774 = vpop.permute.xlu0 %773
            %v775 = vlaneseq
            %v776 = vand.u32 %v775, 127
            %vm777 = vcmp.eq.s32.totalorder %v776, 1
            %v778 = vsel %vm777, %v754, %v774
            %779 = vst [vmem:[%s749] sm:$0x3] %v771
            %780 = vst [vmem:[%s750] sm:$0x3] %v778
            %s781 = smov [#allocation20]
            %s782 = smov [#allocation22]
            %v783 = vld [vmem:[%s781] ss:$0 sm:$0xff]
            %s785 = scalar_lea.vmem %s781, 4294967295
            %v786 = vld [vmem:[%s785] sm:$0x2]
            %v787 = vlaneseq
            %v788 = vshrl.u32 %v787, 7
            %vm789 = vcmp.eq.s32.totalorder %v788, 0
            %v790 = vsel %vm789, %v783, %v786
            %s791 = scalar_lea.vmem %s781, 1
            %v792 = vld [vmem:[%s791] ss:$0 sm:$0xff]
            %793 = vst [vmem:[%s781] sm:$0x3] %v790
            %v794 = vld [vmem:[%s782] ss:$0 sm:$0xff]
            %s795 = scalar_lea.vmem %s781, 1
            %796 = vst [vmem:[%s795] sm:$0x1] %v794
            %s797 = scalar_lea.vmem %s782, 1
            %v798 = vld [vmem:[%s797] sm:$0x1]
            %v799 = vlaneseq
            %v800 = vshrl.u32 %v799, 7
            %vm801 = vcmp.eq.s32.totalorder %v800, 1
            %v802 = vsel %vm801, %v792, %v798
            %v803 = vld [vmem:[%s782] ss:$0 sm:$0xff]
            %804 = vst [vmem:[%s782] sm:$0x3] %v802
            %s805 = smov [#allocation21]
            %s806 = smov [#allocation23]
            %v807 = vld [vmem:[%s805] ss:$0 sm:$0xff]
            %s809 = scalar_lea.vmem %s805, 4294967295
            %v810 = vld [vmem:[%s809] sm:$0x2]
            %v811 = vlaneseq
            %v812 = vshrl.u32 %v811, 7
            %vm813 = vcmp.eq.s32.totalorder %v812, 0
            %v814 = vsel %vm813, %v807, %v810
            %s815 = scalar_lea.vmem %s805, 1
            %v816 = vld [vmem:[%s815] ss:$0 sm:$0xff]
            %817 = vst [vmem:[%s805] sm:$0x3] %v814
            %v818 = vld [vmem:[%s806] ss:$0 sm:$0xff]
            %s819 = scalar_lea.vmem %s805, 1
            %820 = vst [vmem:[%s819] sm:$0x1] %v818
            %s821 = scalar_lea.vmem %s806, 1
            %v822 = vld [vmem:[%s821] sm:$0x1]
            %v823 = vlaneseq
            %v824 = vshrl.u32 %v823, 7
            %vm825 = vcmp.eq.s32.totalorder %v824, 1
            %v826 = vsel %vm825, %v816, %v822
            %v827 = vld [vmem:[%s806] ss:$0 sm:$0xff]
            %828 = vst [vmem:[%s806] sm:$0x3] %v826
            %s829 = smov [#allocation31]
            %v830 = vld [vmem:[%s829] sm:$0xff]
            %s831 = smov [#allocation32]
            %v832 = vld [vmem:[%s831] sm:$0xff]
            %s833 = smov [#allocation12]
            %s834 = smov [#allocation14]
            %s835 = smov [#allocation16]
            %s836 = smov [#allocation18]
            %v837 = vld [vmem:[%s833] sm:$0x3]
            %v838 = vld [vmem:[%s834] sm:$0x3]
            %v839 = vld [vmem:[%s835] sm:$0x3]
            %v840 = vld [vmem:[%s836] sm:$0x3]
            %v841 = vmul.f32 %v830, %v837
            %v842 = vmul.f32 %v832, %v839
            %v843 = vsub.f32 %v841, %v842
            %v844 = vmul.f32 %v830, %v838
            %v845 = vmul.f32 %v832, %v840
            %v846 = vsub.f32 %v844, %v845
            %v847 = vmul.f32 %v832, %v837
            %v848 = vmul.f32 %v830, %v839
            %v849 = vadd.f32 %v847, %v848
            %v850 = vmul.f32 %v832, %v838
            %v851 = vmul.f32 %v830, %v840
            %v852 = vadd.f32 %v850, %v851
            %853 = vst [vmem:[%s833] sm:$0x3] %v843
            %854 = vst [vmem:[%s834] sm:$0x3] %v846
            %855 = vst [vmem:[%s835] sm:$0x3] %v849
            %856 = vst [vmem:[%s836] sm:$0x3] %v852
            %s857 = smov [#allocation12]
            %s858 = smov [#allocation16]
            %v859 = vld [vmem:[%s857] ss:$0 sm:$0xff]
            %s861 = scalar_lea.vmem %s857, 4294967295
            %v862 = vld [vmem:[%s861] sm:$0x2]
            %v863 = vlaneseq
            %v864 = vshrl.u32 %v863, 7
            %vm865 = vcmp.eq.s32.totalorder %v864, 0
            %v866 = vsel %vm865, %v859, %v862
            %s867 = scalar_lea.vmem %s857, 1
            %v868 = vld [vmem:[%s867] ss:$0 sm:$0xff]
            %869 = vst [vmem:[%s857] sm:$0x3] %v866
            %v870 = vld [vmem:[%s858] ss:$0 sm:$0xff]
            %s871 = scalar_lea.vmem %s857, 1
            %872 = vst [vmem:[%s871] sm:$0x1] %v870
            %s873 = scalar_lea.vmem %s858, 1
            %v874 = vld [vmem:[%s873] sm:$0x1]
            %v875 = vlaneseq
            %v876 = vshrl.u32 %v875, 7
            %vm877 = vcmp.eq.s32.totalorder %v876, 1
            %v878 = vsel %vm877, %v868, %v874
            %v879 = vld [vmem:[%s858] ss:$0 sm:$0xff]
            %880 = vst [vmem:[%s858] sm:$0x3] %v878
            %s881 = smov [#allocation14]
            %s882 = smov [#allocation18]
            %v883 = vld [vmem:[%s881] ss:$0 sm:$0xff]
            %s885 = scalar_lea.vmem %s881, 4294967295
            %v886 = vld [vmem:[%s885] sm:$0x2]
            %v887 = vlaneseq
            %v888 = vshrl.u32 %v887, 7
            %vm889 = vcmp.eq.s32.totalorder %v888, 0
            %v890 = vsel %vm889, %v883, %v886
            %s891 = scalar_lea.vmem %s881, 1
            %v892 = vld [vmem:[%s891] ss:$0 sm:$0xff]
            %893 = vst [vmem:[%s881] sm:$0x3] %v890
            %v894 = vld [vmem:[%s882] ss:$0 sm:$0xff]
            %s895 = scalar_lea.vmem %s881, 1
            %896 = vst [vmem:[%s895] sm:$0x1] %v894
            %s897 = scalar_lea.vmem %s882, 1
            %v898 = vld [vmem:[%s897] sm:$0x1]
            %v899 = vlaneseq
            %v900 = vshrl.u32 %v899, 7
            %vm901 = vcmp.eq.s32.totalorder %v900, 1
            %v902 = vsel %vm901, %v892, %v898
            %v903 = vld [vmem:[%s882] ss:$0 sm:$0xff]
            %904 = vst [vmem:[%s882] sm:$0x3] %v902
          $region152: #{custom-call.38} parent=144 // loop_footer
            %s465 = sadd.s32 1, %s461
          $region153: #{custom-call.38} parent=144 // loop_footer_branch
            %460 = sbr.rel target = $region149
          $region154: #{custom-call.38} parent=144 // loop_exit
            _
          %s905 = sadd.s32 %s363, 1
        $region145: #{custom-call.38} parent=139 // loop_footer
          _
        $region146: #{custom-call.38} parent=139 // loop_footer_branch
          %362 = sbr.rel target = $region142
        $region147: #{custom-call.38} parent=139 // loop_exit
          _
        %s908 = sand.u32 %s17, 7
        %s909 = scalar_lea.vmem [#allocation8], %s908
        %s910 = sand.u32 %s17, 7
        %s911 = scalar_lea.vmem [#allocation10], %s910
        %s912 = smov [#allocation20]
        %s913 = smov %s909
        %v914 = vlaneseq
        %v915 = vand.u32 %v914, 127
        %v916 = vmov %v915
        %v917 = vlaneseq
        %v918 = vshrl.u32 %v917, 7
        %v919 = vmov %v918
        %v920 = vld [vmem:[%s912] sm:$0x3]
        %vm923 = vcmp.eq.s32.totalorder %v919, %v916
        %v924 = vsel %vm923, %v920, 0.0
        %v925 = vrot.slane %v924, 4
        %v926 = vadd.f32 %v924, %v925
        %v927 = vrot.slane %v926, 2
        %v928 = vadd.f32 %v926, %v927
        %v929 = vrot.slane %v928, 1
        %v930 = vadd.f32 %v928, %v929
        %931 = vst [vmem:[%s913] sm:$0x1] %v930
        %s932 = smov [#allocation23]
        %s933 = smov %s911
        %v934 = vlaneseq
        %v935 = vand.u32 %v934, 127
        %v936 = vmov %v935
        %v937 = vlaneseq
        %v938 = vshrl.u32 %v937, 7
        %v939 = vmov %v938
        %v940 = vld [vmem:[%s932] sm:$0x3]
        %vm943 = vcmp.eq.s32.totalorder %v939, %v936
        %v944 = vsel %vm943, %v940, 0.0
        %v945 = vrot.slane %v944, 4
        %v946 = vadd.f32 %v944, %v945
        %v947 = vrot.slane %v946, 2
        %v948 = vadd.f32 %v946, %v947
        %v949 = vrot.slane %v948, 1
        %v950 = vadd.f32 %v948, %v949
        %951 = vst [vmem:[%s933] sm:$0x1] %v950
        %s953 = sshllo.u32 0, 2
        %v955 = vld [vmem:[#allocation8] sm:%s953]
        %s956 = sshllo.u32 0, 2
        %957 = vst [vmem:[%s279] sm:%s956] %v955
        %s959 = sshllo.u32 0, 2
        %v961 = vld [vmem:[#allocation10] sm:%s959]
        %s962 = sshllo.u32 0, 2
        %963 = vst [vmem:[%s285] sm:%s962] %v961
        %s965 = sshllo.u32 0, 2
        %v967 = vld [vmem:[#allocation12] sm:%s965]
        %s968 = sshllo.u32 0, 2
        %969 = vst [vmem:[%s289] sm:%s968] %v967
        %s971 = sshllo.u32 0, 2
        %v973 = vld [vmem:[#allocation14] sm:%s971]
        %s974 = sshllo.u32 0, 2
        %975 = vst [vmem:[%s293] sm:%s974] %v973
        %s977 = sshllo.u32 0, 2
        %v979 = vld [vmem:[#allocation16] sm:%s977]
        %s980 = sshllo.u32 0, 2
        %981 = vst [vmem:[%s297] sm:%s980] %v979
        %s983 = sshllo.u32 0, 2
        %v985 = vld [vmem:[#allocation18] sm:%s983]
        %s986 = sshllo.u32 0, 2
        %987 = vst [vmem:[%s301] sm:%s986] %v985
        %s988 = sand.u32 %s27, 1
        %s989 = sand.u32 %s27, 1
        %s990 = smul.addr %s989, 2
        %s991 = scalar_lea.vmem [#allocation9], %s990
        %s992 = sand.u32 %s55, 1
        %s993 = sand.u32 %s55, 1
        %s994 = smul.addr %s993, 2
        %s995 = scalar_lea.vmem [#allocation11], %s994
        %s996 = sand.u32 %s17, 1
        %s997 = sand.u32 %s17, 1
        %s998 = smul.addr %s997, 2
        %s999 = scalar_lea.vmem [#allocation13], %s998
        %s1000 = sand.u32 %s17, 1
        %s1001 = sand.u32 %s17, 1
        %s1002 = smul.addr %s1001, 2
        %s1003 = scalar_lea.vmem [#allocation15], %s1002
        %s1004 = sand.u32 %s17, 1
        %s1005 = sand.u32 %s17, 1
        %s1006 = smul.addr %s1005, 2
        %s1007 = scalar_lea.vmem [#allocation17], %s1006
        %s1008 = sand.u32 %s17, 1
        %s1009 = sand.u32 %s17, 1
        %s1010 = smul.addr %s1009, 2
        %s1011 = scalar_lea.vmem [#allocation19], %s1010
        // Predicated region
        $region155: #{custom-call.38} parent=139 // pred_check
          %p1012 = pneg %p37
        $region156: #{custom-call.38} parent=139 // pred_check_branch
          %1014 = sbr.rel (%p1012) target = $region158
        $region157: #{custom-call.38} parent=139 // pred_region
          %s1015 = sshrl.u32 %s17, 3
          %s1016 = smul.addr %s1015, 2
          %s1017 = scalar_lea.vmem %s4, %s1016
          // Predicated region
          $region159: #{custom-call.38} parent=157 // pred_check
            _
          $region160: #{custom-call.38} parent=157 // pred_check_branch
            %1019 = sbr.rel (0) target = $region162
          $region161: #{custom-call.38} parent=157 // pred_region
            // Predicated region
            $region163: #{custom-call.38} parent=161 // pred_check
              _
            $region164: #{custom-call.38} parent=161 // pred_check_branch
              %1021 = sbr.rel target = $region166
            $region165: #{custom-call.38} parent=161 // pred_region
              // Predicated region
              $region178: #{custom-call.38} parent=165 // pred_check
                _
              $region179: #{custom-call.38} parent=165 // pred_check_branch
                %1036 = sbr.rel (0) target = $region181
              $region180: #{custom-call.38} parent=165 // pred_region
                loop: start=0, step=1, limit=1
                $region182: #{custom-call.38} parent=180 // loop_pre_header
                  _
                $region183: #{custom-call.38} parent=180 // loop_header
                  %s1039 = sphi 0, %s1043
                  %p1040 = scmp.ge.s32.totalorder %s1039, 1
                  %s1044 = sphi %s991, %s991
                  %s1045 = sphi %s1017, %s1017
                $region184: #{custom-call.38} parent=180 // loop_header_branch
                  %1042 = sbr.rel (%p1040) target = $region188
                $region185: #{custom-call.38} parent=180 // loop_body
                  %v1046 = vld [vmem:[%s1044] sm:$0x3]
                  %1047 = vst [vmem:[%s1045] sm:$0x3] %v1046
                $region186: #{custom-call.38} parent=180 // loop_footer
                  %s1043 = sadd.s32 1, %s1039
                $region187: #{custom-call.38} parent=180 // loop_footer_branch
                  %1038 = sbr.rel target = $region183
                $region188: #{custom-call.38} parent=180 // loop_exit
                  _
              $region181: #{custom-call.38} parent=165 // pred_fallthru
                _
            $region166: #{custom-call.38} parent=161 // pred_fallthru
              _
            // Predicated region
            $region167: #{custom-call.38} parent=161 // pred_check
              _
            $region168: #{custom-call.38} parent=161 // pred_check_branch
              %1023 = sbr.rel (0) target = $region170
            $region169: #{custom-call.38} parent=161 // pred_region
              loop: start=0, step=1, limit=1
              $region171: #{custom-call.38} parent=169 // loop_pre_header
                _
              $region172: #{custom-call.38} parent=169 // loop_header
                %s1026 = sphi 0, %s1030
                %p1027 = scmp.ge.s32.totalorder %s1026, 1
                %s1031 = sphi %s991, %s991
                %s1032 = sphi %s1017, %s1017
              $region173: #{custom-call.38} parent=169 // loop_header_branch
                %1029 = sbr.rel (%p1027) target = $region177
              $region174: #{custom-call.38} parent=169 // loop_body
                %v1033 = vld [vmem:[%s1031] sm:$0x3]
                %1034 = vst [vmem:[%s1032] sm:$0x3] %v1033
              $region175: #{custom-call.38} parent=169 // loop_footer
                %s1030 = sadd.s32 1, %s1026
              $region176: #{custom-call.38} parent=169 // loop_footer_branch
                %1025 = sbr.rel target = $region172
              $region177: #{custom-call.38} parent=169 // loop_exit
                _
            $region170: #{custom-call.38} parent=161 // pred_fallthru
              _
          $region162: #{custom-call.38} parent=157 // pred_fallthru
            _
          %1048 = vnop
        $region158: #{custom-call.38} parent=139 // pred_fallthru
          _
        // Predicated region
        $region189: #{custom-call.38} parent=139 // pred_check
          %p1049 = pneg %p65
        $region190: #{custom-call.38} parent=139 // pred_check_branch
          %1051 = sbr.rel (%p1049) target = $region192
        $region191: #{custom-call.38} parent=139 // pred_region
          %s1052 = sshrl.u32 %s17, 3
          %s1053 = smul.addr %s1052, 2
          %s1054 = scalar_lea.vmem %s5, %s1053
          // Predicated region
          $region193: #{custom-call.38} parent=191 // pred_check
            _
          $region194: #{custom-call.38} parent=191 // pred_check_branch
            %1056 = sbr.rel (0) target = $region196
          $region195: #{custom-call.38} parent=191 // pred_region
            // Predicated region
            $region197: #{custom-call.38} parent=195 // pred_check
              _
            $region198: #{custom-call.38} parent=195 // pred_check_branch
              %1058 = sbr.rel target = $region200
            $region199: #{custom-call.38} parent=195 // pred_region
              // Predicated region
              $region212: #{custom-call.38} parent=199 // pred_check
                _
              $region213: #{custom-call.38} parent=199 // pred_check_branch
                %1073 = sbr.rel (0) target = $region215
              $region214: #{custom-call.38} parent=199 // pred_region
                loop: start=0, step=1, limit=1
                $region216: #{custom-call.38} parent=214 // loop_pre_header
                  _
                $region217: #{custom-call.38} parent=214 // loop_header
                  %s1076 = sphi 0, %s1080
                  %p1077 = scmp.ge.s32.totalorder %s1076, 1
                  %s1081 = sphi %s995, %s995
                  %s1082 = sphi %s1054, %s1054
                $region218: #{custom-call.38} parent=214 // loop_header_branch
                  %1079 = sbr.rel (%p1077) target = $region222
                $region219: #{custom-call.38} parent=214 // loop_body
                  %v1083 = vld [vmem:[%s1081] sm:$0x3]
                  %1084 = vst [vmem:[%s1082] sm:$0x3] %v1083
                $region220: #{custom-call.38} parent=214 // loop_footer
                  %s1080 = sadd.s32 1, %s1076
                $region221: #{custom-call.38} parent=214 // loop_footer_branch
                  %1075 = sbr.rel target = $region217
                $region222: #{custom-call.38} parent=214 // loop_exit
                  _
              $region215: #{custom-call.38} parent=199 // pred_fallthru
                _
            $region200: #{custom-call.38} parent=195 // pred_fallthru
              _
            // Predicated region
            $region201: #{custom-call.38} parent=195 // pred_check
              _
            $region202: #{custom-call.38} parent=195 // pred_check_branch
              %1060 = sbr.rel (0) target = $region204
            $region203: #{custom-call.38} parent=195 // pred_region
              loop: start=0, step=1, limit=1
              $region205: #{custom-call.38} parent=203 // loop_pre_header
                _
              $region206: #{custom-call.38} parent=203 // loop_header
                %s1063 = sphi 0, %s1067
                %p1064 = scmp.ge.s32.totalorder %s1063, 1
                %s1068 = sphi %s995, %s995
                %s1069 = sphi %s1054, %s1054
              $region207: #{custom-call.38} parent=203 // loop_header_branch
                %1066 = sbr.rel (%p1064) target = $region211
              $region208: #{custom-call.38} parent=203 // loop_body
                %v1070 = vld [vmem:[%s1068] sm:$0x3]
                %1071 = vst [vmem:[%s1069] sm:$0x3] %v1070
              $region209: #{custom-call.38} parent=203 // loop_footer
                %s1067 = sadd.s32 1, %s1063
              $region210: #{custom-call.38} parent=203 // loop_footer_branch
                %1062 = sbr.rel target = $region206
              $region211: #{custom-call.38} parent=203 // loop_exit
                _
            $region204: #{custom-call.38} parent=195 // pred_fallthru
              _
          $region196: #{custom-call.38} parent=191 // pred_fallthru
            _
          %1085 = vnop
        $region192: #{custom-call.38} parent=139 // pred_fallthru
          _
        %s1086 = smul.addr %s17, 2
        %s1087 = scalar_lea.vmem %s6, %s1086
        // Predicated region
        $region223: #{custom-call.38} parent=139 // pred_check
          _
        $region224: #{custom-call.38} parent=139 // pred_check_branch
          %1089 = sbr.rel (0) target = $region226
        $region225: #{custom-call.38} parent=139 // pred_region
          // Predicated region
          $region227: #{custom-call.38} parent=225 // pred_check
            _
          $region228: #{custom-call.38} parent=225 // pred_check_branch
            %1091 = sbr.rel target = $region230
          $region229: #{custom-call.38} parent=225 // pred_region
            // Predicated region
            $region242: #{custom-call.38} parent=229 // pred_check
              _
            $region243: #{custom-call.38} parent=229 // pred_check_branch
              %1106 = sbr.rel (0) target = $region245
            $region244: #{custom-call.38} parent=229 // pred_region
              loop: start=0, step=1, limit=1
              $region246: #{custom-call.38} parent=244 // loop_pre_header
                _
              $region247: #{custom-call.38} parent=244 // loop_header
                %s1109 = sphi 0, %s1113
                %p1110 = scmp.ge.s32.totalorder %s1109, 1
                %s1114 = sphi %s999, %s999
                %s1115 = sphi %s1087, %s1087
              $region248: #{custom-call.38} parent=244 // loop_header_branch
                %1112 = sbr.rel (%p1110) target = $region252
              $region249: #{custom-call.38} parent=244 // loop_body
                %v1116 = vld [vmem:[%s1114] sm:$0x3]
                %1117 = vst [vmem:[%s1115] sm:$0x3] %v1116
              $region250: #{custom-call.38} parent=244 // loop_footer
                %s1113 = sadd.s32 1, %s1109
              $region251: #{custom-call.38} parent=244 // loop_footer_branch
                %1108 = sbr.rel target = $region247
              $region252: #{custom-call.38} parent=244 // loop_exit
                _
            $region245: #{custom-call.38} parent=229 // pred_fallthru
              _
          $region230: #{custom-call.38} parent=225 // pred_fallthru
            _
          // Predicated region
          $region231: #{custom-call.38} parent=225 // pred_check
            _
          $region232: #{custom-call.38} parent=225 // pred_check_branch
            %1093 = sbr.rel (0) target = $region234
          $region233: #{custom-call.38} parent=225 // pred_region
            loop: start=0, step=1, limit=1
            $region235: #{custom-call.38} parent=233 // loop_pre_header
              _
            $region236: #{custom-call.38} parent=233 // loop_header
              %s1096 = sphi 0, %s1100
              %p1097 = scmp.ge.s32.totalorder %s1096, 1
              %s1101 = sphi %s999, %s999
              %s1102 = sphi %s1087, %s1087
            $region237: #{custom-call.38} parent=233 // loop_header_branch
              %1099 = sbr.rel (%p1097) target = $region241
            $region238: #{custom-call.38} parent=233 // loop_body
              %v1103 = vld [vmem:[%s1101] sm:$0x3]
              %1104 = vst [vmem:[%s1102] sm:$0x3] %v1103
            $region239: #{custom-call.38} parent=233 // loop_footer
              %s1100 = sadd.s32 1, %s1096
            $region240: #{custom-call.38} parent=233 // loop_footer_branch
              %1095 = sbr.rel target = $region236
            $region241: #{custom-call.38} parent=233 // loop_exit
              _
          $region234: #{custom-call.38} parent=225 // pred_fallthru
            _
        $region226: #{custom-call.38} parent=139 // pred_fallthru
          _
        %1118 = vnop
        %s1119 = smul.addr %s17, 2
        %s1120 = scalar_lea.vmem %s7, %s1119
        // Predicated region
        $region253: #{custom-call.38} parent=139 // pred_check
          _
        $region254: #{custom-call.38} parent=139 // pred_check_branch
          %1122 = sbr.rel (0) target = $region256
        $region255: #{custom-call.38} parent=139 // pred_region
          // Predicated region
          $region257: #{custom-call.38} parent=255 // pred_check
            _
          $region258: #{custom-call.38} parent=255 // pred_check_branch
            %1124 = sbr.rel target = $region260
          $region259: #{custom-call.38} parent=255 // pred_region
            // Predicated region
            $region272: #{custom-call.38} parent=259 // pred_check
              _
            $region273: #{custom-call.38} parent=259 // pred_check_branch
              %1139 = sbr.rel (0) target = $region275
            $region274: #{custom-call.38} parent=259 // pred_region
              loop: start=0, step=1, limit=1
              $region276: #{custom-call.38} parent=274 // loop_pre_header
                _
              $region277: #{custom-call.38} parent=274 // loop_header
                %s1142 = sphi 0, %s1146
                %p1143 = scmp.ge.s32.totalorder %s1142, 1
                %s1147 = sphi %s1003, %s1003
                %s1148 = sphi %s1120, %s1120
              $region278: #{custom-call.38} parent=274 // loop_header_branch
                %1145 = sbr.rel (%p1143) target = $region282
              $region279: #{custom-call.38} parent=274 // loop_body
                %v1149 = vld [vmem:[%s1147] sm:$0x3]
                %1150 = vst [vmem:[%s1148] sm:$0x3] %v1149
              $region280: #{custom-call.38} parent=274 // loop_footer
                %s1146 = sadd.s32 1, %s1142
              $region281: #{custom-call.38} parent=274 // loop_footer_branch
                %1141 = sbr.rel target = $region277
              $region282: #{custom-call.38} parent=274 // loop_exit
                _
            $region275: #{custom-call.38} parent=259 // pred_fallthru
              _
          $region260: #{custom-call.38} parent=255 // pred_fallthru
            _
          // Predicated region
          $region261: #{custom-call.38} parent=255 // pred_check
            _
          $region262: #{custom-call.38} parent=255 // pred_check_branch
            %1126 = sbr.rel (0) target = $region264
          $region263: #{custom-call.38} parent=255 // pred_region
            loop: start=0, step=1, limit=1
            $region265: #{custom-call.38} parent=263 // loop_pre_header
              _
            $region266: #{custom-call.38} parent=263 // loop_header
              %s1129 = sphi 0, %s1133
              %p1130 = scmp.ge.s32.totalorder %s1129, 1
              %s1134 = sphi %s1003, %s1003
              %s1135 = sphi %s1120, %s1120
            $region267: #{custom-call.38} parent=263 // loop_header_branch
              %1132 = sbr.rel (%p1130) target = $region271
            $region268: #{custom-call.38} parent=263 // loop_body
              %v1136 = vld [vmem:[%s1134] sm:$0x3]
              %1137 = vst [vmem:[%s1135] sm:$0x3] %v1136
            $region269: #{custom-call.38} parent=263 // loop_footer
              %s1133 = sadd.s32 1, %s1129
            $region270: #{custom-call.38} parent=263 // loop_footer_branch
              %1128 = sbr.rel target = $region266
            $region271: #{custom-call.38} parent=263 // loop_exit
              _
          $region264: #{custom-call.38} parent=255 // pred_fallthru
            _
        $region256: #{custom-call.38} parent=139 // pred_fallthru
          _
        %1151 = vnop
        %s1152 = smul.addr %s17, 2
        %s1153 = scalar_lea.vmem %s8, %s1152
        // Predicated region
        $region283: #{custom-call.38} parent=139 // pred_check
          _
        $region284: #{custom-call.38} parent=139 // pred_check_branch
          %1155 = sbr.rel (0) target = $region286
        $region285: #{custom-call.38} parent=139 // pred_region
          // Predicated region
          $region287: #{custom-call.38} parent=285 // pred_check
            _
          $region288: #{custom-call.38} parent=285 // pred_check_branch
            %1157 = sbr.rel target = $region290
          $region289: #{custom-call.38} parent=285 // pred_region
            // Predicated region
            $region302: #{custom-call.38} parent=289 // pred_check
              _
            $region303: #{custom-call.38} parent=289 // pred_check_branch
              %1172 = sbr.rel (0) target = $region305
            $region304: #{custom-call.38} parent=289 // pred_region
              loop: start=0, step=1, limit=1
              $region306: #{custom-call.38} parent=304 // loop_pre_header
                _
              $region307: #{custom-call.38} parent=304 // loop_header
                %s1175 = sphi 0, %s1179
                %p1176 = scmp.ge.s32.totalorder %s1175, 1
                %s1180 = sphi %s1007, %s1007
                %s1181 = sphi %s1153, %s1153
              $region308: #{custom-call.38} parent=304 // loop_header_branch
                %1178 = sbr.rel (%p1176) target = $region312
              $region309: #{custom-call.38} parent=304 // loop_body
                %v1182 = vld [vmem:[%s1180] sm:$0x3]
                %1183 = vst [vmem:[%s1181] sm:$0x3] %v1182
              $region310: #{custom-call.38} parent=304 // loop_footer
                %s1179 = sadd.s32 1, %s1175
              $region311: #{custom-call.38} parent=304 // loop_footer_branch
                %1174 = sbr.rel target = $region307
              $region312: #{custom-call.38} parent=304 // loop_exit
                _
            $region305: #{custom-call.38} parent=289 // pred_fallthru
              _
          $region290: #{custom-call.38} parent=285 // pred_fallthru
            _
          // Predicated region
          $region291: #{custom-call.38} parent=285 // pred_check
            _
          $region292: #{custom-call.38} parent=285 // pred_check_branch
            %1159 = sbr.rel (0) target = $region294
          $region293: #{custom-call.38} parent=285 // pred_region
            loop: start=0, step=1, limit=1
            $region295: #{custom-call.38} parent=293 // loop_pre_header
              _
            $region296: #{custom-call.38} parent=293 // loop_header
              %s1162 = sphi 0, %s1166
              %p1163 = scmp.ge.s32.totalorder %s1162, 1
              %s1167 = sphi %s1007, %s1007
              %s1168 = sphi %s1153, %s1153
            $region297: #{custom-call.38} parent=293 // loop_header_branch
              %1165 = sbr.rel (%p1163) target = $region301
            $region298: #{custom-call.38} parent=293 // loop_body
              %v1169 = vld [vmem:[%s1167] sm:$0x3]
              %1170 = vst [vmem:[%s1168] sm:$0x3] %v1169
            $region299: #{custom-call.38} parent=293 // loop_footer
              %s1166 = sadd.s32 1, %s1162
            $region300: #{custom-call.38} parent=293 // loop_footer_branch
              %1161 = sbr.rel target = $region296
            $region301: #{custom-call.38} parent=293 // loop_exit
              _
          $region294: #{custom-call.38} parent=285 // pred_fallthru
            _
        $region286: #{custom-call.38} parent=139 // pred_fallthru
          _
        %1184 = vnop
        %s1185 = smul.addr %s17, 2
        %s1186 = scalar_lea.vmem %s9, %s1185
        // Predicated region
        $region313: #{custom-call.38} parent=139 // pred_check
          _
        $region314: #{custom-call.38} parent=139 // pred_check_branch
          %1188 = sbr.rel (0) target = $region316
        $region315: #{custom-call.38} parent=139 // pred_region
          // Predicated region
          $region317: #{custom-call.38} parent=315 // pred_check
            _
          $region318: #{custom-call.38} parent=315 // pred_check_branch
            %1190 = sbr.rel target = $region320
          $region319: #{custom-call.38} parent=315 // pred_region
            // Predicated region
            $region332: #{custom-call.38} parent=319 // pred_check
              _
            $region333: #{custom-call.38} parent=319 // pred_check_branch
              %1205 = sbr.rel (0) target = $region335
            $region334: #{custom-call.38} parent=319 // pred_region
              loop: start=0, step=1, limit=1
              $region336: #{custom-call.38} parent=334 // loop_pre_header
                _
              $region337: #{custom-call.38} parent=334 // loop_header
                %s1208 = sphi 0, %s1212
                %p1209 = scmp.ge.s32.totalorder %s1208, 1
                %s1213 = sphi %s1011, %s1011
                %s1214 = sphi %s1186, %s1186
              $region338: #{custom-call.38} parent=334 // loop_header_branch
                %1211 = sbr.rel (%p1209) target = $region342
              $region339: #{custom-call.38} parent=334 // loop_body
                %v1215 = vld [vmem:[%s1213] sm:$0x3]
                %1216 = vst [vmem:[%s1214] sm:$0x3] %v1215
              $region340: #{custom-call.38} parent=334 // loop_footer
                %s1212 = sadd.s32 1, %s1208
              $region341: #{custom-call.38} parent=334 // loop_footer_branch
                %1207 = sbr.rel target = $region337
              $region342: #{custom-call.38} parent=334 // loop_exit
                _
            $region335: #{custom-call.38} parent=319 // pred_fallthru
              _
          $region320: #{custom-call.38} parent=315 // pred_fallthru
            _
          // Predicated region
          $region321: #{custom-call.38} parent=315 // pred_check
            _
          $region322: #{custom-call.38} parent=315 // pred_check_branch
            %1192 = sbr.rel (0) target = $region324
          $region323: #{custom-call.38} parent=315 // pred_region
            loop: start=0, step=1, limit=1
            $region325: #{custom-call.38} parent=323 // loop_pre_header
              _
            $region326: #{custom-call.38} parent=323 // loop_header
              %s1195 = sphi 0, %s1199
              %p1196 = scmp.ge.s32.totalorder %s1195, 1
              %s1200 = sphi %s1011, %s1011
              %s1201 = sphi %s1186, %s1186
            $region327: #{custom-call.38} parent=323 // loop_header_branch
              %1198 = sbr.rel (%p1196) target = $region331
            $region328: #{custom-call.38} parent=323 // loop_body
              %v1202 = vld [vmem:[%s1200] sm:$0x3]
              %1203 = vst [vmem:[%s1201] sm:$0x3] %v1202
            $region329: #{custom-call.38} parent=323 // loop_footer
              %s1199 = sadd.s32 1, %s1195
            $region330: #{custom-call.38} parent=323 // loop_footer_branch
              %1194 = sbr.rel target = $region326
            $region331: #{custom-call.38} parent=323 // loop_exit
              _
          $region324: #{custom-call.38} parent=315 // pred_fallthru
            _
        $region316: #{custom-call.38} parent=139 // pred_fallthru
          _
        %1217 = vnop
      $region140: #{custom-call.38} parent=5 // pred_fallthru
        _
      %p1218 = scmp.le.s32.totalorder 2, %s12
      // Predicated region
      $region343: #{custom-call.38} parent=5 // pred_check
        %p1219 = pneg %p1218
      $region344: #{custom-call.38} parent=5 // pred_check_branch
        %1221 = sbr.rel (%p1219) target = $region346
      $region345: #{custom-call.38} parent=5 // pred_region
        %s1222 = ssub.s32 %s12, 2
        // Predicated region
        $region347: #{custom-call.38} parent=345 // pred_check
          %p1223 = pneg %p43
        $region348: #{custom-call.38} parent=345 // pred_check_branch
          %1225 = sbr.rel (%p1223) target = $region350
        $region349: #{custom-call.38} parent=345 // pred_region
          %s1226 = sand.u32 %s28, 1
          %s1227 = sand.u32 %s28, 1
          %s1228 = smul.addr %s1227, 2
          %s1229 = scalar_lea.vmem [#allocation9], %s1228
        $region350: #{custom-call.38} parent=345 // pred_fallthru
          _
        // Predicated region
        $region351: #{custom-call.38} parent=345 // pred_check
          %p1230 = pneg %p71
        $region352: #{custom-call.38} parent=345 // pred_check_branch
          %1232 = sbr.rel (%p1230) target = $region354
        $region353: #{custom-call.38} parent=345 // pred_region
          %s1233 = sand.u32 %s56, 1
          %s1234 = sand.u32 %s56, 1
          %s1235 = smul.addr %s1234, 2
          %s1236 = scalar_lea.vmem [#allocation11], %s1235
        $region354: #{custom-call.38} parent=345 // pred_fallthru
          _
        %s1237 = sand.u32 %s18, 1
        %s1238 = sand.u32 %s18, 1
        %s1239 = smul.addr %s1238, 2
        %s1240 = scalar_lea.vmem [#allocation13], %s1239
        %s1241 = sand.u32 %s18, 1
        %s1242 = sand.u32 %s18, 1
        %s1243 = smul.addr %s1242, 2
        %s1244 = scalar_lea.vmem [#allocation15], %s1243
        %s1245 = sand.u32 %s18, 1
        %s1246 = sand.u32 %s18, 1
        %s1247 = smul.addr %s1246, 2
        %s1248 = scalar_lea.vmem [#allocation17], %s1247
        %s1249 = sand.u32 %s18, 1
        %s1250 = sand.u32 %s18, 1
        %s1251 = smul.addr %s1250, 2
        %s1252 = scalar_lea.vmem [#allocation19], %s1251
      $region346: #{custom-call.38} parent=5 // pred_fallthru
        _
    $region6: #{custom-call.38} parent=1 // loop_footer
      %s16 = sadd.s32 1, %s12
    $region7: #{custom-call.38} parent=1 // loop_footer_branch
      %11 = sbr.rel target = $region3
    $region8: #{custom-call.38} parent=1 // loop_exit
      _

// kernel: reverse
$region0: #{reverse}
  %s0 = inlined_call_operand.vmem [shape: f32[2,3], index: 0, kind: input, shape index: {}]
  %s1 = inlined_call_operand.vmem [shape: f32[2,3], index: 1, kind: output, shape index: {}]
  %v2 = vlaneseq
  %v3 = vsub.s32 2, %v2
  %4 = vset.pattern.permute.xlu0 %v3
  $region1: #{reverse} parent=0
    #allocation0 [shape = 'u8[4096]{0}', space=vmem, size = 0x1000, scoped, tag = 'operand span for operand 0']
    #allocation1 [shape = 'u8[1024]{0}', space=vmem, size = 0x400, scoped, tag = 'packed  for operand 0']
    #allocation2 [shape = 'u8[4096]{0}', space=vmem, size = 0x1000, scoped, tag = 'operand span for operand 1']
    #allocation3 [shape = 'u8[1024]{0}', space=vmem, size = 0x400, scoped, tag = 'packed  for operand 1']
    // Predicated region
    $region2: #{reverse} parent=1 // pred_check
      _
    $region3: #{reverse} parent=1 // pred_check_branch
      %6 = sbr.rel (0) target = $region5
    $region4: #{reverse} parent=1 // pred_region
      // Predicated region
      $region6: #{reverse} parent=4 // pred_check
        _
      $region7: #{reverse} parent=4 // pred_check_branch
        %8 = sbr.rel target = $region9
      $region8: #{reverse} parent=4 // pred_region
        // Predicated region
        $region21: #{reverse} parent=8 // pred_check
          _
        $region22: #{reverse} parent=8 // pred_check_branch
          %23 = sbr.rel (0) target = $region24
        $region23: #{reverse} parent=8 // pred_region
          loop: start=0, step=1, limit=1
          $region25: #{reverse} parent=23 // loop_pre_header
            _
          $region26: #{reverse} parent=23 // loop_header
            %s26 = sphi 0, %s30
            %p27 = scmp.ge.s32.totalorder %s26, 1
            %s31 = sphi %s0, %s0
            %s32 = sphi [#allocation1], [#allocation1]
          $region27: #{reverse} parent=23 // loop_header_branch
            %29 = sbr.rel (%p27) target = $region31
          $region28: #{reverse} parent=23 // loop_body
            %v33 = vld [vmem:[%s31] sm:$0x3]
            %34 = vst [vmem:[%s32] sm:$0x3] %v33
          $region29: #{reverse} parent=23 // loop_footer
            %s30 = sadd.s32 1, %s26
          $region30: #{reverse} parent=23 // loop_footer_branch
            %25 = sbr.rel target = $region26
          $region31: #{reverse} parent=23 // loop_exit
            _
        $region24: #{reverse} parent=8 // pred_fallthru
          _
      $region9: #{reverse} parent=4 // pred_fallthru
        _
      // Predicated region
      $region10: #{reverse} parent=4 // pred_check
        _
      $region11: #{reverse} parent=4 // pred_check_branch
        %10 = sbr.rel (0) target = $region13
      $region12: #{reverse} parent=4 // pred_region
        loop: start=0, step=1, limit=1
        $region14: #{reverse} parent=12 // loop_pre_header
          _
        $region15: #{reverse} parent=12 // loop_header
          %s13 = sphi 0, %s17
          %p14 = scmp.ge.s32.totalorder %s13, 1
          %s18 = sphi %s0, %s0
          %s19 = sphi [#allocation1], [#allocation1]
        $region16: #{reverse} parent=12 // loop_header_branch
          %16 = sbr.rel (%p14) target = $region20
        $region17: #{reverse} parent=12 // loop_body
          %v20 = vld [vmem:[%s18] sm:$0x3]
          %21 = vst [vmem:[%s19] sm:$0x3] %v20
        $region18: #{reverse} parent=12 // loop_footer
          %s17 = sadd.s32 1, %s13
        $region19: #{reverse} parent=12 // loop_footer_branch
          %12 = sbr.rel target = $region15
        $region20: #{reverse} parent=12 // loop_exit
          _
      $region13: #{reverse} parent=4 // pred_fallthru
        _
    $region5: #{reverse} parent=1 // pred_fallthru
      _
    %35 = vnop
    %s37 = sshllo.u32 0, 2
    %v38 = vld [vmem:[#allocation1] sm:%s37]
    %39 = vst [vmem:[#allocation0] sm:%s37] %v38
    %v40 = vld [vmem:[#allocation0] sm:$0xff]
    %41 = vperm.xlu0 %4, %v40
    %v42 = vpop.permute.xlu0 %41
    %43 = vst [vmem:[#allocation2] sm:$0xff] %v42
    %s45 = sshllo.u32 0, 2
    %v47 = vld [vmem:[#allocation2] sm:%s45]
    %s48 = sshllo.u32 0, 2
    %49 = vst [vmem:[#allocation3] sm:%s48] %v47
    // Predicated region
    $region32: #{reverse} parent=1 // pred_check
      _
    $region33: #{reverse} parent=1 // pred_check_branch
      %51 = sbr.rel (0) target = $region35
    $region34: #{reverse} parent=1 // pred_region
      // Predicated region
      $region36: #{reverse} parent=34 // pred_check
        _
      $region37: #{reverse} parent=34 // pred_check_branch
        %53 = sbr.rel target = $region39
      $region38: #{reverse} parent=34 // pred_region
        // Predicated region
        $region51: #{reverse} parent=38 // pred_check
          _
        $region52: #{reverse} parent=38 // pred_check_branch
          %68 = sbr.rel (0) target = $region54
        $region53: #{reverse} parent=38 // pred_region
          loop: start=0, step=1, limit=1
          $region55: #{reverse} parent=53 // loop_pre_header
            _
          $region56: #{reverse} parent=53 // loop_header
            %s71 = sphi 0, %s75
            %p72 = scmp.ge.s32.totalorder %s71, 1
            %s76 = sphi [#allocation3], [#allocation3]
            %s77 = sphi %s1, %s1
          $region57: #{reverse} parent=53 // loop_header_branch
            %74 = sbr.rel (%p72) target = $region61
          $region58: #{reverse} parent=53 // loop_body
            %v78 = vld [vmem:[%s76] sm:$0x3]
            %79 = vst [vmem:[%s77] sm:$0x3] %v78
          $region59: #{reverse} parent=53 // loop_footer
            %s75 = sadd.s32 1, %s71
          $region60: #{reverse} parent=53 // loop_footer_branch
            %70 = sbr.rel target = $region56
          $region61: #{reverse} parent=53 // loop_exit
            _
        $region54: #{reverse} parent=38 // pred_fallthru
          _
      $region39: #{reverse} parent=34 // pred_fallthru
        _
      // Predicated region
      $region40: #{reverse} parent=34 // pred_check
        _
      $region41: #{reverse} parent=34 // pred_check_branch
        %55 = sbr.rel (0) target = $region43
      $region42: #{reverse} parent=34 // pred_region
        loop: start=0, step=1, limit=1
        $region44: #{reverse} parent=42 // loop_pre_header
          _
        $region45: #{reverse} parent=42 // loop_header
          %s58 = sphi 0, %s62
          %p59 = scmp.ge.s32.totalorder %s58, 1
          %s63 = sphi [#allocation3], [#allocation3]
          %s64 = sphi %s1, %s1
        $region46: #{reverse} parent=42 // loop_header_branch
          %61 = sbr.rel (%p59) target = $region50
        $region47: #{reverse} parent=42 // loop_body
          %v65 = vld [vmem:[%s63] sm:$0x3]
          %66 = vst [vmem:[%s64] sm:$0x3] %v65
        $region48: #{reverse} parent=42 // loop_footer
          %s62 = sadd.s32 1, %s58
        $region49: #{reverse} parent=42 // loop_footer_branch
          %57 = sbr.rel target = $region45
        $region50: #{reverse} parent=42 // loop_exit
          _
      $region43: #{reverse} parent=34 // pred_fallthru
        _
    $region35: #{reverse} parent=1 // pred_fallthru
      _
    %80 = vnop

// kernel: custom-call.19
$region0: #{custom-call.19}
  %s0 = inlined_call_operand.vmem [shape: f32[2,3,3], index: 0, kind: input, shape index: {}]
  %s1 = inlined_call_operand.vmem [shape: f32[2,3,3], index: 1, kind: output, shape index: {0}]
  %s2 = inlined_call_operand.vmem [shape: f32[2,3], index: 2, kind: output, shape index: {1}]
  %3 = xla_tuple %s1, %s2
  $region1: #{custom-call.19} parent=0
    #allocation0 [shape = 'u8[4096]{0}', space=vmem, size = 0x1000, scoped, tag = 'operand span for operand 0']
    #allocation1 [shape = 'u8[4096]{0}', space=vmem, size = 0x1000, scoped, tag = 'packed  for operand 0']
    #allocation2 [shape = 'u8[4096]{0}', space=vmem, size = 0x1000, scoped, tag = 'operand span for operand 1']
    #allocation3 [shape = 'u8[4096]{0}', space=vmem, size = 0x1000, scoped, tag = 'packed  for operand 1']
    #allocation4 [shape = 'u8[4096]{0}', space=vmem, size = 0x1000, scoped, tag = 'operand span for operand 2']
    #allocation5 [shape = 'u8[2048]{0}', space=vmem, size = 0x800, scoped, tag = 'packed  for operand 2']
    loop: start=0, step=1, limit=4
    $region2: #{custom-call.19} parent=1 // loop_pre_header
      _
    $region3: #{custom-call.19} parent=1 // loop_header
      %s5 = sphi 0, %s9
      %p6 = scmp.ge.s32.totalorder %s5, 4
      %s12 = sphi 0, %s31
      %s13 = sphi 0, %s27
      %s14 = sphi 0, %s23
      %s15 = sphi 0, %s12
      %s16 = sphi 0, %s13
      %s17 = sphi 0, %s14
      %s18 = sphi 0, %s15
      %s19 = sphi 0, %s16
      %s20 = sphi 0, %s17
      %s46 = sphi 0, %s48
      %s49 = sphi 0, %s46
      %s50 = sphi 0, %s49
      %s66 = sphi 0, %s50
    $region4: #{custom-call.19} parent=1 // loop_header_branch
      %8 = sbr.rel (%p6) target = $region8
    $region5: #{custom-call.19} parent=1 // loop_body
      %s10 = ssub.s32 %s5, 1
      %s11 = ssub.s32 %s5, 2
      %s21 = sadd.s32 1, %s14
      %p22 = scmp.ge.s32.totalorder %s21, 1
      %s23 = scalar_select %p22, 0, %s21
      %s24 = sadd.s32 1, %s13
      %s25 = scalar_select %p22, %s24, %s13
      %p26 = scmp.ge.s32.totalorder %s25, 1
      %s27 = scalar_select %p26, 0, %s25
      %s28 = sadd.s32 1, %s12
      %s29 = scalar_select %p26, %s28, %s12
      %p30 = scmp.ge.s32.totalorder %s29, 2
      %s31 = scalar_select %p30, 0, %s29
      %p32 = scmp.lt.s32.totalorder %s12, 0
      %s33 = ssub.s32 0, %s12
      %s34 = scalar_select %p32, %s33, %s12
      %s35 = sshrl.u32 %s34, 3
      %s36 = ssub.s32 0, %s35
      %s37 = scalar_select %p32, %s36, %s35
      %p38 = scmp.lt.s32.totalorder %s31, 0
      %s39 = ssub.s32 0, %s31
      %s40 = scalar_select %p38, %s39, %s31
      %s41 = sshrl.u32 %s40, 3
      %s42 = ssub.s32 0, %s41
      %s43 = scalar_select %p38, %s42, %s41
      %s44 = ssub.s32 %s37, %s43
      %p45 = scmp.eq.s32.totalorder %s44, 0
      %s47 = sadd.s32 %s46, 1
      %s48 = scalar_select %p45, %s46, %s47
      %p51 = pneg %p45
      %p52 = scmp.eq.s32.totalorder %s5, 1
      %p53 = por %p51, %p52
      %p54 = scmp.ne.s32.totalorder %s46, %s49
      %p55 = scmp.eq.s32.totalorder %s5, 0
      %p56 = por %p54, %p55
      %p57 = scmp.ne.s32.totalorder %s46, %s49
      %p58 = scmp.eq.s32.totalorder %s10, 1
      %p59 = por %p57, %p58
      %p60 = scmp.ne.s32.totalorder %s49, %s50
      %p61 = scmp.eq.s32.totalorder %s10, 0
      %p62 = por %p60, %p61
      %p63 = scmp.ne.s32.totalorder %s49, %s50
      %p64 = scmp.eq.s32.totalorder %s11, 1
      %p65 = por %p63, %p64
      %p67 = scmp.ne.s32.totalorder %s50, %s66
      %p68 = scmp.eq.s32.totalorder %s11, 0
      %p69 = por %p67, %p68
      %p70 = scmp.le.s32.totalorder 1, %s5
      %p71 = scmp.lt.s32.totalorder %s5, 3
      %p72 = pnand %p70, %p71
      %p73 = pneg %p72
      // Predicated region
      $region9: #{custom-call.19} parent=5 // pred_check
        _
      $region10: #{custom-call.19} parent=5 // pred_check_branch
        %75 = sbr.rel (%p72) target = $region12
      $region11: #{custom-call.19} parent=5 // pred_region
        %s76 = ssub.s32 %s5, 1
      $region12: #{custom-call.19} parent=5 // pred_fallthru
        _
      %p77 = scmp.lt.s32.totalorder %s5, 2
      // Predicated region
      $region13: #{custom-call.19} parent=5 // pred_check
        %p78 = pneg %p77
      $region14: #{custom-call.19} parent=5 // pred_check_branch
        %80 = sbr.rel (%p78) target = $region16
      $region15: #{custom-call.19} parent=5 // pred_region
        %s81 = sand.u32 %s5, 1
        %s82 = sand.u32 %s5, 1
        %s83 = smul.addr %s82, 4
        %s84 = scalar_lea.vmem [#allocation1], %s83
        %s85 = sadd.s32 %s14, %s13
        %s86 = sadd.s32 %s85, %s12
        %s87 = smul.addr %s86, 4
        %s88 = scalar_lea.vmem %s0, %s87
        // Predicated region
        $region17: #{custom-call.19} parent=15 // pred_check
          _
        $region18: #{custom-call.19} parent=15 // pred_check_branch
          %90 = sbr.rel (0) target = $region20
        $region19: #{custom-call.19} parent=15 // pred_region
          // Predicated region
          $region21: #{custom-call.19} parent=19 // pred_check
            _
          $region22: #{custom-call.19} parent=19 // pred_check_branch
            %92 = sbr.rel target = $region24
          $region23: #{custom-call.19} parent=19 // pred_region
            // Predicated region
            $region36: #{custom-call.19} parent=23 // pred_check
              _
            $region37: #{custom-call.19} parent=23 // pred_check_branch
              %107 = sbr.rel (0) target = $region39
            $region38: #{custom-call.19} parent=23 // pred_region
              loop: start=0, step=1, limit=1
              $region40: #{custom-call.19} parent=38 // loop_pre_header
                _
              $region41: #{custom-call.19} parent=38 // loop_header
                %s110 = sphi 0, %s114
                %p111 = scmp.ge.s32.totalorder %s110, 1
                %s115 = sphi %s88, %s88
                %s116 = sphi %s84, %s84
              $region42: #{custom-call.19} parent=38 // loop_header_branch
                %113 = sbr.rel (%p111) target = $region46
              $region43: #{custom-call.19} parent=38 // loop_body
                %v117 = vld [vmem:[%s115] sm:$0xf]
                %118 = vst [vmem:[%s116] sm:$0xf] %v117
              $region44: #{custom-call.19} parent=38 // loop_footer
                %s114 = sadd.s32 1, %s110
              $region45: #{custom-call.19} parent=38 // loop_footer_branch
                %109 = sbr.rel target = $region41
              $region46: #{custom-call.19} parent=38 // loop_exit
                _
            $region39: #{custom-call.19} parent=23 // pred_fallthru
              _
          $region24: #{custom-call.19} parent=19 // pred_fallthru
            _
          // Predicated region
          $region25: #{custom-call.19} parent=19 // pred_check
            _
          $region26: #{custom-call.19} parent=19 // pred_check_branch
            %94 = sbr.rel (0) target = $region28
          $region27: #{custom-call.19} parent=19 // pred_region
            loop: start=0, step=1, limit=1
            $region29: #{custom-call.19} parent=27 // loop_pre_header
              _
            $region30: #{custom-call.19} parent=27 // loop_header
              %s97 = sphi 0, %s101
              %p98 = scmp.ge.s32.totalorder %s97, 1
              %s102 = sphi %s88, %s88
              %s103 = sphi %s84, %s84
            $region31: #{custom-call.19} parent=27 // loop_header_branch
              %100 = sbr.rel (%p98) target = $region35
            $region32: #{custom-call.19} parent=27 // loop_body
              %v104 = vld [vmem:[%s102] sm:$0xf]
              %105 = vst [vmem:[%s103] sm:$0xf] %v104
            $region33: #{custom-call.19} parent=27 // loop_footer
              %s101 = sadd.s32 1, %s97
            $region34: #{custom-call.19} parent=27 // loop_footer_branch
              %96 = sbr.rel target = $region30
            $region35: #{custom-call.19} parent=27 // loop_exit
              _
          $region28: #{custom-call.19} parent=19 // pred_fallthru
            _
        $region20: #{custom-call.19} parent=15 // pred_fallthru
          _
        %119 = vnop
      $region16: #{custom-call.19} parent=5 // pred_fallthru
        _
      %p120 = scmp.le.s32.totalorder 1, %s5
      %p121 = scmp.lt.s32.totalorder %s5, 3
      %p122 = pnand %p120, %p121
      %p123 = pneg %p122
      // Predicated region
      $region47: #{custom-call.19} parent=5 // pred_check
        _
      $region48: #{custom-call.19} parent=5 // pred_check_branch
        %125 = sbr.rel (%p122) target = $region50
      $region49: #{custom-call.19} parent=5 // pred_region
        #allocation6 [shape = 'f32[3,128]{1,0}', space=vmem, size = 0x1000, scoped, tag = 'scratch for Householder reflectors']
        %s126 = ssub.s32 %s5, 1
        %s127 = sand.u32 %s10, 1
        %s128 = sand.u32 %s10, 1
        %s129 = smul.addr %s128, 4
        %s130 = scalar_lea.vmem [#allocation1], %s129
        %s131 = sand.u32 %s10, 1
        %s132 = sand.u32 %s10, 1
        %s133 = smul.addr %s132, 4
        %s134 = scalar_lea.vmem [#allocation1], %s133
        %s135 = sand.u32 %s10, 1
        %s136 = sand.u32 %s10, 1
        %s137 = smul.addr %s136, 4
        %s138 = scalar_lea.vmem [#allocation3], %s137
        %p139 = pneg %p62
        %p140 = pneg %p59
        %s141 = sand.u32 %s49, 1
        %s142 = sand.u32 %s49, 1
        %s143 = smul.addr %s142, 2
        %s144 = scalar_lea.vmem [#allocation5], %s143
        %s146 = sshllo.u32 0, 4
        %v147 = vld [vmem:[%s134] sm:%s146]
        %148 = vst [vmem:[#allocation0] sm:%s146] %v147
        %p149 = scmp.lt.s32.totalorder %s15, 0
        %s150 = ssub.s32 0, %s15
        %s151 = scalar_select %p149, %s150, %s15
        %s152 = sshrl.u32 %s151, 3
        %s153 = ssub.s32 0, %s152
        %s154 = scalar_select %p149, %s153, %s152
        %s155 = sand.u32 %s15, 7
        %s156 = scalar_lea.vmem [#allocation4], %s155
        %v157 = vld [vmem:[#allocation0] sm:$0xff]
        %158 = vst [vmem:[#allocation2] sm:$0xff] %v157
        %159 = vst [vmem:[%s156] sm:$0x1] 0.0
        loop: start=0, step=1, limit=3
        $region51: #{custom-call.19} parent=49 // loop_pre_header
          _
        $region52: #{custom-call.19} parent=49 // loop_header
          %s161 = sphi 0, %s165
          %p162 = scmp.ge.s32.totalorder %s161, 3
        $region53: #{custom-call.19} parent=49 // loop_header_branch
          %164 = sbr.rel (%p162) target = $region57
        $region54: #{custom-call.19} parent=49 // loop_body
          %v166 = vld [vmem:[#allocation2] sm:$0xff]
          %v167 = vlaneseq
          %v168 = vshrl.u32 %v167, 7
          %v170 = vstv %s161
          %vm171 = vcmp.gt.s32.totalorder %v168, %v170
          %vm172 = vcmp.lt.s32.totalorder %v168, 3
          %vm173 = vmand %vm171, %vm172
          %v174 = vsel %vm173, %v166, 0.0
          %v175 = vmul.f32 %v174, %v174
          %v176 = vrot.slane %v175, 4
          %v177 = vadd.f32 %v175, %v176
          %v178 = vrot.slane %v177, 2
          %v179 = vadd.f32 %v177, %v178
          %v180 = vrot.slane %v179, 1
          %v181 = vadd.f32 %v179, %v180
          %v182 = vrsqrt.pop %v181
          %v183 = vmul.f32 %v181, %v182
          %vm184 = vcmp.eq.f32.partialorder %v181, inf
          %v185 = vsel %vm184, %v181, %v183
          %vm186 = vcmp.eq.f32.partialorder %v181, 0.0
          %v187 = vand.u32 %v181, 2147483648
          %v188 = vsel %vm186, %v187, %v185
          %vm189 = vcmp.eq.f32.partialorder %v181, 0.0
          %s190 = sshrl.u32 %s161, 3
          %s191 = sand.u32 %s161, 7
          %s192 = smul.addr %s190, 8
          %s193 = sadd.s32 %s191, %s192
          %s194 = scalar_lea.vmem [#allocation2], %s193
          %v195 = vld [vmem:[%s194] ss:$0 sm:$0xff]
          %v196 = vand.u32 2147483647, %v195
          %v197 = vmax.f32 %v196, 0.0
          %v198 = vand.u32 2147483647, %v188
          %v199 = vmax.f32 %v197, %v198
          %v200 = vrcp.pop %v199
          %v201 = vmul.f32 %v196, %v200
          %v202 = vmul.f32 %v201, %v201
          %v203 = vrcp.pop %v199
          %v204 = vmul.f32 0.0, %v203
          %v205 = vmul.f32 %v204, %v204
          %v206 = vadd.f32 %v202, %v205
          %v207 = vrcp.pop %v199
          %v208 = vmul.f32 %v198, %v207
          %v209 = vmul.f32 %v208, %v208
          %v210 = vadd.f32 %v206, %v209
          %vm211 = vcmp.eq.f32.partialorder %v199, 0.0
          %v212 = vrsqrt.pop %v210
          %v213 = vmul.f32 %v210, %v212
          %vm214 = vcmp.eq.f32.partialorder %v210, inf
          %v215 = vsel %vm214, %v210, %v213
          %vm216 = vcmp.eq.f32.partialorder %v210, 0.0
          %v217 = vand.u32 %v210, 2147483648
          %v218 = vsel %vm216, %v217, %v215
          %v219 = vmul.f32 %v199, %v218
          %v220 = vsel %vm211, 0.0, %v219
          %vm221 = vcmp.lt.f32.partialorder %v195, 0.0
          %v222 = vxor.u32 %v220, 2147483648
          %v223 = vsel %vm221, %v220, %v222
          %v224 = vsub.f32 %v223, %v195
          %v225 = vrcp.pop %v223
          %v226 = vmul.f32 %v224, %v225
          %v227 = vsel %vm189, %v195, %v223
          %v228 = vsel %vm189, 0.0, %v226
          %v229 = vsub.f32 %v195, %v227
          %s230 = smov [#allocation2]
          %v231 = vlaneseq
          %v232 = vshrl.u32 %v231, 7
          %v233 = vmov %v232
          %v234 = vld [vmem:[%s230] sm:$0xff]
          %v236 = vstv %s161
          %vm237 = vcmp.gt.s32.totalorder %v233, %v236
          %vm238 = vcmp.lt.s32.totalorder %v233, 3
          %vm239 = vmand %vm237, %vm238
          %v240 = vsel %vm239, %v234, 0.0
          %v241 = vrcp.pop %v229
          %v242 = vmul.f32 %v240, %v241
          %v243 = vsel %vm189, 0.0, %v242
          %v244 = vstv %s161
          %v245 = vlaneseq
          %v246 = vand.u32 %v245, 127
          %vm247 = vcmp.eq.s32.totalorder %v246, %v244
          %v248 = vsel %vm247, %v243, 0.0
          %249 = vadd.xlane.f32.xlu0 %v248
          %v250 = vpop.xlane.xlu0 %249
          %251 = vst [vmem:[#allocation6] sm:$0xff] %v250
          %s252 = scalar_lea.vmem [#allocation6], %s161
          %253 = vst [vmem:[%s252] sm:$0x1] 1.0
          %v254 = vstv %s161
          %v255 = vlaneseq
          %v256 = vand.u32 %v255, 127
          %vm257 = vcmp.eq.s32.totalorder %v256, %v254
          %v258 = vsel %vm257, %v228, 0.0
          %259 = vadd.xlane.f32.xlu0 %v258
          %v260 = vpop.xlane.xlu0 %259
          %v261 = vstv %s161
          %v262 = vlaneseq
          %v263 = vand.u32 %v262, 127
          %vm264 = vcmp.eq.s32.totalorder %v263, %v261
          %v265 = vld [vmem:[%s156] ss:$0 sm:$0xff]
          %v266 = vsel %vm264, %v260, %v265
          %267 = vst [vmem:[%s156] sm:$0x1] %v266
          %s268 = smov [#allocation2]
          %s269 = smov [#allocation6]
          %v270 = vlaneseq
          %v271 = vshrl.u32 %v270, 7
          %v272 = vmov %v271
          %v274 = vld [vmem:[%s269] sm:$0xff]
          %v275 = vld [vmem:[%s268] sm:$0xff]
          %v276 = vmul.f32 %v274, %v275
          %vm277 = vcmp.lt.s32.totalorder %v272, 3
          %v278 = vsel %vm277, %v276, 0.0
          %v279 = vrot.slane %v278, 4
          %v280 = vadd.f32 %v278, %v279
          %v281 = vrot.slane %v280, 2
          %v282 = vadd.f32 %v280, %v281
          %v283 = vrot.slane %v282, 1
          %v284 = vadd.f32 %v282, %v283
          %s285 = smov %s268
          %s286 = smov %s269
          %v287 = vlaneseq
          %v288 = vshrl.u32 %v287, 7
          %v289 = vmov %v288
          %v290 = vmul.f32 %v284, %v260
          %v292 = vlaneseq
          %v293 = vand.u32 %v292, 127
          %v294 = vld [vmem:[%s286] sm:$0xff]
          %v295 = vmul.f32 %v294, %v290
          %v296 = vld [vmem:[%s285] sm:$0xff]
          %v297 = vstv %s161
          %vm298 = vcmp.gt.s32.totalorder %v293, %v297
          %v299 = vsub.f32 %v296, %v295
          %v300 = vsel %vm298, %v299, %v296
          %v301 = vstv %s161
          %v302 = vlaneseq
          %v303 = vand.u32 %v302, 127
          %vm304 = vcmp.eq.s32.totalorder %v303, %v301
          %v305 = vstv %s161
          %vm306 = vcmp.ge.s32.totalorder %v289, %v305
          %vm307 = vmand %vm304, %vm306
          %v308 = vsel %vm307, %v294, %v300
          %309 = vst [vmem:[%s285] sm:$0xff] %v308
          %s310 = scalar_lea.vmem %s285, %s161
          %v311 = vld [vmem:[%s310] ss:$0 sm:$0xff]
          %v312 = vstv %s161
          %v313 = vlaneseq
          %v314 = vand.u32 %v313, 127
          %vm315 = vcmp.eq.s32.totalorder %v314, %v312
          %v316 = vsel %vm315, %v227, %v311
          %317 = vst [vmem:[%s310] sm:$0x1] %v316
        $region55: #{custom-call.19} parent=49 // loop_footer
          %s165 = sadd.s32 1, %s161
        $region56: #{custom-call.19} parent=49 // loop_footer_branch
          %160 = sbr.rel target = $region52
        $region57: #{custom-call.19} parent=49 // loop_exit
          _
        %s319 = sshllo.u32 0, 4
        %v321 = vld [vmem:[#allocation2] sm:%s319]
        %s322 = sshllo.u32 0, 4
        %323 = vst [vmem:[%s138] sm:%s322] %v321
        %s325 = sshllo.u32 0, 2
        %v327 = vld [vmem:[#allocation4] sm:%s325]
        %s328 = sshllo.u32 0, 2
        %329 = vst [vmem:[%s144] sm:%s328] %v327
        %s330 = sand.u32 %s10, 1
        %s331 = sand.u32 %s10, 1
        %s332 = smul.addr %s331, 4
        %s333 = scalar_lea.vmem [#allocation3], %s332
        %s334 = sand.u32 %s49, 1
        %s335 = sand.u32 %s49, 1
        %s336 = smul.addr %s335, 2
        %s337 = scalar_lea.vmem [#allocation5], %s336
        %s338 = sadd.s32 %s17, %s16
        %s339 = sadd.s32 %s338, %s15
        %s340 = smul.addr %s339, 4
        %s341 = scalar_lea.vmem %s1, %s340
        // Predicated region
        $region58: #{custom-call.19} parent=49 // pred_check
          _
        $region59: #{custom-call.19} parent=49 // pred_check_branch
          %343 = sbr.rel (0) target = $region61
        $region60: #{custom-call.19} parent=49 // pred_region
          // Predicated region
          $region62: #{custom-call.19} parent=60 // pred_check
            _
          $region63: #{custom-call.19} parent=60 // pred_check_branch
            %345 = sbr.rel target = $region65
          $region64: #{custom-call.19} parent=60 // pred_region
            // Predicated region
            $region77: #{custom-call.19} parent=64 // pred_check
              _
            $region78: #{custom-call.19} parent=64 // pred_check_branch
              %360 = sbr.rel (0) target = $region80
            $region79: #{custom-call.19} parent=64 // pred_region
              loop: start=0, step=1, limit=1
              $region81: #{custom-call.19} parent=79 // loop_pre_header
                _
              $region82: #{custom-call.19} parent=79 // loop_header
                %s363 = sphi 0, %s367
                %p364 = scmp.ge.s32.totalorder %s363, 1
                %s368 = sphi %s333, %s333
                %s369 = sphi %s341, %s341
              $region83: #{custom-call.19} parent=79 // loop_header_branch
                %366 = sbr.rel (%p364) target = $region87
              $region84: #{custom-call.19} parent=79 // loop_body
                %v370 = vld [vmem:[%s368] sm:$0xf]
                %371 = vst [vmem:[%s369] sm:$0xf] %v370
              $region85: #{custom-call.19} parent=79 // loop_footer
                %s367 = sadd.s32 1, %s363
              $region86: #{custom-call.19} parent=79 // loop_footer_branch
                %362 = sbr.rel target = $region82
              $region87: #{custom-call.19} parent=79 // loop_exit
                _
            $region80: #{custom-call.19} parent=64 // pred_fallthru
              _
          $region65: #{custom-call.19} parent=60 // pred_fallthru
            _
          // Predicated region
          $region66: #{custom-call.19} parent=60 // pred_check
            _
          $region67: #{custom-call.19} parent=60 // pred_check_branch
            %347 = sbr.rel (0) target = $region69
          $region68: #{custom-call.19} parent=60 // pred_region
            loop: start=0, step=1, limit=1
            $region70: #{custom-call.19} parent=68 // loop_pre_header
              _
            $region71: #{custom-call.19} parent=68 // loop_header
              %s350 = sphi 0, %s354
              %p351 = scmp.ge.s32.totalorder %s350, 1
              %s355 = sphi %s333, %s333
              %s356 = sphi %s341, %s341
            $region72: #{custom-call.19} parent=68 // loop_header_branch
              %353 = sbr.rel (%p351) target = $region76
            $region73: #{custom-call.19} parent=68 // loop_body
              %v357 = vld [vmem:[%s355] sm:$0xf]
              %358 = vst [vmem:[%s356] sm:$0xf] %v357
            $region74: #{custom-call.19} parent=68 // loop_footer
              %s354 = sadd.s32 1, %s350
            $region75: #{custom-call.19} parent=68 // loop_footer_branch
              %349 = sbr.rel target = $region71
            $region76: #{custom-call.19} parent=68 // loop_exit
              _
          $region69: #{custom-call.19} parent=60 // pred_fallthru
            _
        $region61: #{custom-call.19} parent=49 // pred_fallthru
          _
        %372 = vnop
        // Predicated region
        $region88: #{custom-call.19} parent=49 // pred_check
          %p373 = pneg %p59
        $region89: #{custom-call.19} parent=49 // pred_check_branch
          %375 = sbr.rel (%p373) target = $region91
        $region90: #{custom-call.19} parent=49 // pred_region
          %p376 = scmp.lt.s32.totalorder %s15, 0
          %s377 = ssub.s32 0, %s15
          %s378 = scalar_select %p376, %s377, %s15
          %s379 = sshrl.u32 %s378, 3
          %s380 = ssub.s32 0, %s379
          %s381 = scalar_select %p376, %s380, %s379
          %s382 = smul.addr %s381, 2
          %s383 = scalar_lea.vmem %s2, %s382
          // Predicated region
          $region92: #{custom-call.19} parent=90 // pred_check
            _
          $region93: #{custom-call.19} parent=90 // pred_check_branch
            %385 = sbr.rel (0) target = $region95
          $region94: #{custom-call.19} parent=90 // pred_region
            // Predicated region
            $region96: #{custom-call.19} parent=94 // pred_check
              _
            $region97: #{custom-call.19} parent=94 // pred_check_branch
              %387 = sbr.rel target = $region99
            $region98: #{custom-call.19} parent=94 // pred_region
              // Predicated region
              $region111: #{custom-call.19} parent=98 // pred_check
                _
              $region112: #{custom-call.19} parent=98 // pred_check_branch
                %402 = sbr.rel (0) target = $region114
              $region113: #{custom-call.19} parent=98 // pred_region
                loop: start=0, step=1, limit=1
                $region115: #{custom-call.19} parent=113 // loop_pre_header
                  _
                $region116: #{custom-call.19} parent=113 // loop_header
                  %s405 = sphi 0, %s409
                  %p406 = scmp.ge.s32.totalorder %s405, 1
                  %s410 = sphi %s337, %s337
                  %s411 = sphi %s383, %s383
                $region117: #{custom-call.19} parent=113 // loop_header_branch
                  %408 = sbr.rel (%p406) target = $region121
                $region118: #{custom-call.19} parent=113 // loop_body
                  %v412 = vld [vmem:[%s410] sm:$0x3]
                  %413 = vst [vmem:[%s411] sm:$0x3] %v412
                $region119: #{custom-call.19} parent=113 // loop_footer
                  %s409 = sadd.s32 1, %s405
                $region120: #{custom-call.19} parent=113 // loop_footer_branch
                  %404 = sbr.rel target = $region116
                $region121: #{custom-call.19} parent=113 // loop_exit
                  _
              $region114: #{custom-call.19} parent=98 // pred_fallthru
                _
            $region99: #{custom-call.19} parent=94 // pred_fallthru
              _
            // Predicated region
            $region100: #{custom-call.19} parent=94 // pred_check
              _
            $region101: #{custom-call.19} parent=94 // pred_check_branch
              %389 = sbr.rel (0) target = $region103
            $region102: #{custom-call.19} parent=94 // pred_region
              loop: start=0, step=1, limit=1
              $region104: #{custom-call.19} parent=102 // loop_pre_header
                _
              $region105: #{custom-call.19} parent=102 // loop_header
                %s392 = sphi 0, %s396
                %p393 = scmp.ge.s32.totalorder %s392, 1
                %s397 = sphi %s337, %s337
                %s398 = sphi %s383, %s383
              $region106: #{custom-call.19} parent=102 // loop_header_branch
                %395 = sbr.rel (%p393) target = $region110
              $region107: #{custom-call.19} parent=102 // loop_body
                %v399 = vld [vmem:[%s397] sm:$0x3]
                %400 = vst [vmem:[%s398] sm:$0x3] %v399
              $region108: #{custom-call.19} parent=102 // loop_footer
                %s396 = sadd.s32 1, %s392
              $region109: #{custom-call.19} parent=102 // loop_footer_branch
                %391 = sbr.rel target = $region105
              $region110: #{custom-call.19} parent=102 // loop_exit
                _
            $region103: #{custom-call.19} parent=94 // pred_fallthru
              _
          $region95: #{custom-call.19} parent=90 // pred_fallthru
            _
          %414 = vnop
        $region91: #{custom-call.19} parent=49 // pred_fallthru
          _
      $region50: #{custom-call.19} parent=5 // pred_fallthru
        _
      %p415 = scmp.le.s32.totalorder 2, %s5
      // Predicated region
      $region122: #{custom-call.19} parent=5 // pred_check
        %p416 = pneg %p415
      $region123: #{custom-call.19} parent=5 // pred_check_branch
        %418 = sbr.rel (%p416) target = $region125
      $region124: #{custom-call.19} parent=5 // pred_region
        %s419 = ssub.s32 %s5, 2
        %s420 = sand.u32 %s11, 1
        %s421 = sand.u32 %s11, 1
        %s422 = smul.addr %s421, 4
        %s423 = scalar_lea.vmem [#allocation3], %s422
        // Predicated region
        $region126: #{custom-call.19} parent=124 // pred_check
          %p424 = pneg %p65
        $region127: #{custom-call.19} parent=124 // pred_check_branch
          %426 = sbr.rel (%p424) target = $region129
        $region128: #{custom-call.19} parent=124 // pred_region
          %s427 = sand.u32 %s50, 1
          %s428 = sand.u32 %s50, 1
          %s429 = smul.addr %s428, 2
          %s430 = scalar_lea.vmem [#allocation5], %s429
        $region129: #{custom-call.19} parent=124 // pred_fallthru
          _
      $region125: #{custom-call.19} parent=5 // pred_fallthru
        _
    $region6: #{custom-call.19} parent=1 // loop_footer
      %s9 = sadd.s32 1, %s5
    $region7: #{custom-call.19} parent=1 // loop_footer_branch
      %4 = sbr.rel target = $region3
    $region8: #{custom-call.19} parent=1 // loop_exit
      _

// kernel: loss_fn.3
$region0: #{loss_fn.3}
  #allocation0 [shape = 'u32[]', space=smem, size = 0x4, offset = 0x4, fixed_abs, tag = 'smem constant byte address 0x4 - core index']
  #allocation1 [shape = 'u32[144,128]{1,0:T(1,128)}', space=vmem, size = 0x12000, scoped, tag = 'internal scratch']
  %s0 = inlined_call_operand.vmem [shape: f32[2,3], index: 0, kind: input, shape index: {}]
  %s1 = inlined_call_operand.vmem [shape: f32[2,3,128,128], index: 1, kind: input, shape index: {}]
  %s2 = inlined_call_operand.vmem [shape: f32[2,128,128], index: 2, kind: input, shape index: {}]
  %s3 = inlined_call_operand.vmem [shape: f32[2,16,16], index: 3, kind: input, shape index: {}]
  %s4 = inlined_call_operand.vmem [shape: f32[128,16], index: 4, kind: input, shape index: {}]
  %s5 = inlined_call_operand.vmem [shape: f32[16,128], index: 5, kind: input, shape index: {}]
  %s6 = inlined_call_operand.vmem [shape: f32[128,128], index: 6, kind: input, shape index: {}]
  %s7 = inlined_call_operand.vmem [shape: f32[128,128], index: 7, kind: input, shape index: {}]
  %s8 = inlined_call_operand.vmem [shape: f32[2,1,128], index: 8, kind: output, shape index: {}]
  %s9 = sld [smem:[#allocation0]]
  $region69: #{loss_fn.3} parent=0
    _
  %s11 = ssub.s32 1, %s9
  %s12 = scalar_select 0, %s11, %s9
  $region1: #{loss_fn.3} parent=0
    #allocation2 [shape = 'u8[1024]{0}', space=smem, size = 0x400, scoped, tag = 'input window, operand 0, single buffered']
    #allocation3 [shape = 's32[2]{0}', space=sflag, size = 0x8, scoped, tag = 'scoped memory for loss_fn.3']
    %13 = vsyncpa [#allocation3], 0
    loop: start=0, step=1, limit=4
    $region2: #{loss_fn.3} parent=1 // loop_pre_header
      _
    $region3: #{loss_fn.3} parent=1 // loop_header
      %s15 = sphi 0, %s19
      %p16 = scmp.ge.s32.totalorder %s15, 4
      %s23 = sphi 0, %s23
      %s25 = sphi 0, %s23
      %s26 = sphi 0, %s25
      %s40 = sphi 0, %s26
      %s46 = sphi 0, %s48
      %s49 = sphi 0, %s46
      %s50 = sphi 0, %s49
      %s66 = sphi 0, %s50
      %s72 = sphi 0, %s74
      %s75 = sphi 0, %s72
      %s76 = sphi 0, %s75
      %s92 = sphi 0, %s76
      %s98 = sphi 0, %s100
      %s101 = sphi 0, %s98
      %s102 = sphi 0, %s101
      %s118 = sphi 0, %s102
      %s122 = sphi 0, %s122
      %s124 = sphi 0, %s122
      %s125 = sphi 0, %s124
      %s139 = sphi 0, %s125
      %s143 = sphi 0, %s143
      %s145 = sphi 0, %s143
      %s146 = sphi 0, %s145
      %s160 = sphi 0, %s146
      %s164 = sphi 0, %s164
      %s166 = sphi 0, %s164
      %s167 = sphi 0, %s166
      %s181 = sphi 0, %s167
      %s185 = sphi 0, %s185
      %s187 = sphi 0, %s185
      %s188 = sphi 0, %s187
      %s202 = sphi 0, %s188
      %s208 = sphi 0, %s210
      %s211 = sphi 0, %s208
      %s212 = sphi 0, %s211
      %s228 = sphi 0, %s212
    $region4: #{loss_fn.3} parent=1 // loop_header_branch
      %18 = sbr.rel (%p16) target = $region8
    $region5: #{loss_fn.3} parent=1 // loop_body
      %s20 = ssub.s32 %s15, 1
      %s21 = ssub.s32 %s15, 2
      %s22 = sadd.s32 %s15, 1
      %s24 = sadd.s32 %s23, 1
      %p27 = scmp.eq.s32.totalorder %s15, 1
      %p28 = scmp.ne.s32.totalorder %s23, %s25
      %p29 = scmp.eq.s32.totalorder %s15, 0
      %p30 = por %p28, %p29
      %p31 = scmp.ne.s32.totalorder %s23, %s25
      %p32 = scmp.eq.s32.totalorder %s20, 1
      %p33 = por %p31, %p32
      %p34 = scmp.ne.s32.totalorder %s25, %s26
      %p35 = scmp.eq.s32.totalorder %s20, 0
      %p36 = por %p34, %p35
      %p37 = scmp.ne.s32.totalorder %s25, %s26
      %p38 = scmp.eq.s32.totalorder %s21, 1
      %p39 = por %p37, %p38
      %p41 = scmp.ne.s32.totalorder %s26, %s40
      %p42 = scmp.eq.s32.totalorder %s21, 0
      %p43 = por %p41, %p42
      %s44 = ssub.s32 %s15, %s22
      %p45 = scmp.eq.s32.totalorder %s44, 0
      %s47 = sadd.s32 %s46, 1
      %s48 = scalar_select %p45, %s46, %s47
      %p51 = pneg %p45
      %p52 = scmp.eq.s32.totalorder %s15, 1
      %p53 = por %p51, %p52
      %p54 = scmp.ne.s32.totalorder %s46, %s49
      %p55 = scmp.eq.s32.totalorder %s15, 0
      %p56 = por %p54, %p55
      %p57 = scmp.ne.s32.totalorder %s46, %s49
      %p58 = scmp.eq.s32.totalorder %s20, 1
      %p59 = por %p57, %p58
      %p60 = scmp.ne.s32.totalorder %s49, %s50
      %p61 = scmp.eq.s32.totalorder %s20, 0
      %p62 = por %p60, %p61
      %p63 = scmp.ne.s32.totalorder %s49, %s50
      %p64 = scmp.eq.s32.totalorder %s21, 1
      %p65 = por %p63, %p64
      %p67 = scmp.ne.s32.totalorder %s50, %s66
      %p68 = scmp.eq.s32.totalorder %s21, 0
      %p69 = por %p67, %p68
      %s70 = ssub.s32 %s15, %s22
      %p71 = scmp.eq.s32.totalorder %s70, 0
      %s73 = sadd.s32 %s72, 1
      %s74 = scalar_select %p71, %s72, %s73
      %p77 = pneg %p71
      %p78 = scmp.eq.s32.totalorder %s15, 1
      %p79 = por %p77, %p78
      %p80 = scmp.ne.s32.totalorder %s72, %s75
      %p81 = scmp.eq.s32.totalorder %s15, 0
      %p82 = por %p80, %p81
      %p83 = scmp.ne.s32.totalorder %s72, %s75
      %p84 = scmp.eq.s32.totalorder %s20, 1
      %p85 = por %p83, %p84
      %p86 = scmp.ne.s32.totalorder %s75, %s76
      %p87 = scmp.eq.s32.totalorder %s20, 0
      %p88 = por %p86, %p87
      %p89 = scmp.ne.s32.totalorder %s75, %s76
      %p90 = scmp.eq.s32.totalorder %s21, 1
      %p91 = por %p89, %p90
      %p93 = scmp.ne.s32.totalorder %s76, %s92
      %p94 = scmp.eq.s32.totalorder %s21, 0
      %p95 = por %p93, %p94
      %s96 = ssub.s32 %s15, %s22
      %p97 = scmp.eq.s32.totalorder %s96, 0
      %s99 = sadd.s32 %s98, 1
      %s100 = scalar_select %p97, %s98, %s99
      %p103 = pneg %p97
      %p104 = scmp.eq.s32.totalorder %s15, 1
      %p105 = por %p103, %p104
      %p106 = scmp.ne.s32.totalorder %s98, %s101
      %p107 = scmp.eq.s32.totalorder %s15, 0
      %p108 = por %p106, %p107
      %p109 = scmp.ne.s32.totalorder %s98, %s101
      %p110 = scmp.eq.s32.totalorder %s20, 1
      %p111 = por %p109, %p110
      %p112 = scmp.ne.s32.totalorder %s101, %s102
      %p113 = scmp.eq.s32.totalorder %s20, 0
      %p114 = por %p112, %p113
      %p115 = scmp.ne.s32.totalorder %s101, %s102
      %p116 = scmp.eq.s32.totalorder %s21, 1
      %p117 = por %p115, %p116
      %p119 = scmp.ne.s32.totalorder %s102, %s118
      %p120 = scmp.eq.s32.totalorder %s21, 0
      %p121 = por %p119, %p120
      %s123 = sadd.s32 %s122, 1
      %p126 = scmp.eq.s32.totalorder %s15, 1
      %p127 = scmp.ne.s32.totalorder %s122, %s124
      %p128 = scmp.eq.s32.totalorder %s15, 0
      %p129 = por %p127, %p128
      %p130 = scmp.ne.s32.totalorder %s122, %s124
      %p131 = scmp.eq.s32.totalorder %s20, 1
      %p132 = por %p130, %p131
      %p133 = scmp.ne.s32.totalorder %s124, %s125
      %p134 = scmp.eq.s32.totalorder %s20, 0
      %p135 = por %p133, %p134
      %p136 = scmp.ne.s32.totalorder %s124, %s125
      %p137 = scmp.eq.s32.totalorder %s21, 1
      %p138 = por %p136, %p137
      %p140 = scmp.ne.s32.totalorder %s125, %s139
      %p141 = scmp.eq.s32.totalorder %s21, 0
      %p142 = por %p140, %p141
      %s144 = sadd.s32 %s143, 1
      %p147 = scmp.eq.s32.totalorder %s15, 1
      %p148 = scmp.ne.s32.totalorder %s143, %s145
      %p149 = scmp.eq.s32.totalorder %s15, 0
      %p150 = por %p148, %p149
      %p151 = scmp.ne.s32.totalorder %s143, %s145
      %p152 = scmp.eq.s32.totalorder %s20, 1
      %p153 = por %p151, %p152
      %p154 = scmp.ne.s32.totalorder %s145, %s146
      %p155 = scmp.eq.s32.totalorder %s20, 0
      %p156 = por %p154, %p155
      %p157 = scmp.ne.s32.totalorder %s145, %s146
      %p158 = scmp.eq.s32.totalorder %s21, 1
      %p159 = por %p157, %p158
      %p161 = scmp.ne.s32.totalorder %s146, %s160
      %p162 = scmp.eq.s32.totalorder %s21, 0
      %p163 = por %p161, %p162
      %s165 = sadd.s32 %s164, 1
      %p168 = scmp.eq.s32.totalorder %s15, 1
      %p169 = scmp.ne.s32.totalorder %s164, %s166
      %p170 = scmp.eq.s32.totalorder %s15, 0
      %p171 = por %p169, %p170
      %p172 = scmp.ne.s32.totalorder %s164, %s166
      %p173 = scmp.eq.s32.totalorder %s20, 1
      %p174 = por %p172, %p173
      %p175 = scmp.ne.s32.totalorder %s166, %s167
      %p176 = scmp.eq.s32.totalorder %s20, 0
      %p177 = por %p175, %p176
      %p178 = scmp.ne.s32.totalorder %s166, %s167
      %p179 = scmp.eq.s32.totalorder %s21, 1
      %p180 = por %p178, %p179
      %p182 = scmp.ne.s32.totalorder %s167, %s181
      %p183 = scmp.eq.s32.totalorder %s21, 0
      %p184 = por %p182, %p183
      %s186 = sadd.s32 %s185, 1
      %p189 = scmp.eq.s32.totalorder %s15, 1
      %p190 = scmp.ne.s32.totalorder %s185, %s187
      %p191 = scmp.eq.s32.totalorder %s15, 0
      %p192 = por %p190, %p191
      %p193 = scmp.ne.s32.totalorder %s185, %s187
      %p194 = scmp.eq.s32.totalorder %s20, 1
      %p195 = por %p193, %p194
      %p196 = scmp.ne.s32.totalorder %s187, %s188
      %p197 = scmp.eq.s32.totalorder %s20, 0
      %p198 = por %p196, %p197
      %p199 = scmp.ne.s32.totalorder %s187, %s188
      %p200 = scmp.eq.s32.totalorder %s21, 1
      %p201 = por %p199, %p200
      %p203 = scmp.ne.s32.totalorder %s188, %s202
      %p204 = scmp.eq.s32.totalorder %s21, 0
      %p205 = por %p203, %p204
      %s206 = ssub.s32 %s15, %s22
      %p207 = scmp.eq.s32.totalorder %s206, 0
      %s209 = sadd.s32 %s208, 1
      %s210 = scalar_select %p207, %s208, %s209
      %p213 = pneg %p207
      %p214 = scmp.eq.s32.totalorder %s15, 1
      %p215 = por %p213, %p214
      %p216 = scmp.ne.s32.totalorder %s208, %s211
      %p217 = scmp.eq.s32.totalorder %s15, 0
      %p218 = por %p216, %p217
      %p219 = scmp.ne.s32.totalorder %s208, %s211
      %p220 = scmp.eq.s32.totalorder %s20, 1
      %p221 = por %p219, %p220
      %p222 = scmp.ne.s32.totalorder %s211, %s212
      %p223 = scmp.eq.s32.totalorder %s20, 0
      %p224 = por %p222, %p223
      %p225 = scmp.ne.s32.totalorder %s211, %s212
      %p226 = scmp.eq.s32.totalorder %s21, 1
      %p227 = por %p225, %p226
      %p229 = scmp.ne.s32.totalorder %s212, %s228
      %p230 = scmp.eq.s32.totalorder %s21, 0
      %p231 = por %p229, %p230
      %p232 = scmp.le.s32.totalorder 1, %s15
      %p233 = scmp.lt.s32.totalorder %s15, 3
      %p234 = pnand %p232, %p233
      %p235 = pneg %p234
      // Predicated region
      $region9: #{loss_fn.3} parent=5 // pred_check
        _
      $region10: #{loss_fn.3} parent=5 // pred_check_branch
        %237 = sbr.rel (%p234) target = $region12
      $region11: #{loss_fn.3} parent=5 // pred_region
        %s238 = ssub.s32 %s15, 1
        // Predicated region
        $region13: #{loss_fn.3} parent=11 // pred_check
          %p239 = pneg %p36
        $region14: #{loss_fn.3} parent=11 // pred_check_branch
          %241 = sbr.rel (%p239) target = $region16
        $region15: #{loss_fn.3} parent=11 // pred_region
          %s243 = ssub.s32 32, 32
          %244 = vsyncadd [#allocation3], %s243
          %s246 = sshll.u32 %s0, 4
          %s247 = int_to_ptr.vmem [resolvable:$true] %s246
          %249 = dma.vmem_to_smem %s247, 32, [#allocation2], [#allocation3]
        $region16: #{loss_fn.3} parent=11 // pred_fallthru
          _
        // Predicated region
        $region17: #{loss_fn.3} parent=11 // pred_check
          %p250 = pneg %p135
        $region18: #{loss_fn.3} parent=11 // pred_check_branch
          %252 = sbr.rel (%p250) target = $region20
        $region19: #{loss_fn.3} parent=11 // pred_region
          _
        $region20: #{loss_fn.3} parent=11 // pred_fallthru
          _
        // Predicated region
        $region21: #{loss_fn.3} parent=11 // pred_check
          %p253 = pneg %p156
        $region22: #{loss_fn.3} parent=11 // pred_check_branch
          %255 = sbr.rel (%p253) target = $region24
        $region23: #{loss_fn.3} parent=11 // pred_region
          _
        $region24: #{loss_fn.3} parent=11 // pred_fallthru
          _
        // Predicated region
        $region25: #{loss_fn.3} parent=11 // pred_check
          %p256 = pneg %p177
        $region26: #{loss_fn.3} parent=11 // pred_check_branch
          %258 = sbr.rel (%p256) target = $region28
        $region27: #{loss_fn.3} parent=11 // pred_region
          _
        $region28: #{loss_fn.3} parent=11 // pred_fallthru
          _
        // Predicated region
        $region29: #{loss_fn.3} parent=11 // pred_check
          %p259 = pneg %p198
        $region30: #{loss_fn.3} parent=11 // pred_check_branch
          %261 = sbr.rel (%p259) target = $region32
        $region31: #{loss_fn.3} parent=11 // pred_region
          _
        $region32: #{loss_fn.3} parent=11 // pred_fallthru
          _
      $region12: #{loss_fn.3} parent=5 // pred_fallthru
        _
      %p262 = scmp.lt.s32.totalorder %s15, 2
      // Predicated region
      $region33: #{loss_fn.3} parent=5 // pred_check
        %p263 = pneg %p262
      $region34: #{loss_fn.3} parent=5 // pred_check_branch
        %265 = sbr.rel (%p263) target = $region36
      $region35: #{loss_fn.3} parent=5 // pred_region
        // Predicated region
        $region37: #{loss_fn.3} parent=35 // pred_check
          %p266 = pneg %p56
        $region38: #{loss_fn.3} parent=35 // pred_check_branch
          %268 = sbr.rel (%p266) target = $region40
        $region39: #{loss_fn.3} parent=35 // pred_region
          %p269 = scmp.lt.s32.totalorder %s15, 1
          %s270 = scalar_select %p269, %s15, 1
          %s271 = smul.addr %s270, 48
          %s272 = smul.addr %s271, 8
          %s273 = scalar_lea.vmem %s1, %s272
        $region40: #{loss_fn.3} parent=35 // pred_fallthru
          _
        // Predicated region
        $region41: #{loss_fn.3} parent=35 // pred_check
          %p274 = pneg %p82
        $region42: #{loss_fn.3} parent=35 // pred_check_branch
          %276 = sbr.rel (%p274) target = $region44
        $region43: #{loss_fn.3} parent=35 // pred_region
          %p277 = scmp.lt.s32.totalorder %s15, 1
          %s278 = scalar_select %p277, %s15, 1
          %s279 = smul.addr %s278, 16
          %s280 = smul.addr %s279, 8
          %s281 = scalar_lea.vmem %s2, %s280
        $region44: #{loss_fn.3} parent=35 // pred_fallthru
          _
        // Predicated region
        $region45: #{loss_fn.3} parent=35 // pred_check
          %p282 = pneg %p108
        $region46: #{loss_fn.3} parent=35 // pred_check_branch
          %284 = sbr.rel (%p282) target = $region48
        $region47: #{loss_fn.3} parent=35 // pred_region
          %p285 = scmp.lt.s32.totalorder %s15, 1
          %s286 = scalar_select %p285, %s15, 1
          %s287 = smul.addr %s286, 2
          %s288 = smul.addr %s287, 8
          %s289 = scalar_lea.vmem %s3, %s288
        $region48: #{loss_fn.3} parent=35 // pred_fallthru
          _
      $region36: #{loss_fn.3} parent=5 // pred_fallthru
        _
      %p290 = scmp.le.s32.totalorder 1, %s15
      %p291 = scmp.lt.s32.totalorder %s15, 3
      %p292 = pnand %p290, %p291
      %p293 = pneg %p292
      // Predicated region
      $region49: #{loss_fn.3} parent=5 // pred_check
        _
      $region50: #{loss_fn.3} parent=5 // pred_check_branch
        %295 = sbr.rel (%p292) target = $region52
      $region51: #{loss_fn.3} parent=5 // pred_region
        %s296 = ssub.s32 %s15, 1
        // Predicated region
        $region53: #{loss_fn.3} parent=51 // pred_check
          %p297 = pneg %p36
        $region54: #{loss_fn.3} parent=51 // pred_check_branch
          %299 = sbr.rel (%p297) target = $region56
        $region55: #{loss_fn.3} parent=51 // pred_region
          %300 = dma.done [#allocation3], 32
        $region56: #{loss_fn.3} parent=51 // pred_fallthru
          _
        %301 = sfence
        %p302 = pneg %p36
        %p303 = pneg %p33
        %p304 = scmp.lt.s32.totalorder %s20, 1
        %s305 = scalar_select %p304, %s20, 1
        %s306 = smul.addr %s305, 48
        %s307 = smul.addr %s306, 8
        %s308 = scalar_lea.vmem %s1, %s307
        %p309 = pneg %p62
        %p310 = pneg %p59
        %p311 = scmp.lt.s32.totalorder %s20, 1
        %s312 = scalar_select %p311, %s20, 1
        %s313 = smul.addr %s312, 16
        %s314 = smul.addr %s313, 8
        %s315 = scalar_lea.vmem %s2, %s314
        %p316 = pneg %p88
        %p317 = pneg %p85
        %p318 = scmp.lt.s32.totalorder %s20, 1
        %s319 = scalar_select %p318, %s20, 1
        %s320 = smul.addr %s319, 2
        %s321 = smul.addr %s320, 8
        %s322 = scalar_lea.vmem %s3, %s321
        %p323 = pneg %p114
        %p324 = pneg %p111
        %p325 = pneg %p135
        %p326 = pneg %p132
        %p327 = pneg %p156
        %p328 = pneg %p153
        %p329 = pneg %p177
        %p330 = pneg %p174
        %p331 = pneg %p198
        %p332 = pneg %p195
        %p333 = pneg %p224
        %p334 = pneg %p221
        %p335 = scmp.lt.s32.totalorder %s20, 1
        %s336 = scalar_select %p335, %s20, 1
        %s337 = scalar_lea.vmem %s8, %s336
        %p338 = scmp.lt.s32.totalorder %s20, 1
        %s339 = scalar_select %p338, %s20, 1
        %s340 = smul.addr %s339, 48
        %s341 = smul.addr %s340, 8
        %s342 = scalar_lea.vmem %s1, %s341
        %p343 = scmp.lt.s32.totalorder %s20, 1
        %s344 = scalar_select %p343, %s20, 1
        %s345 = smul.addr %s344, 16
        %s346 = smul.addr %s345, 8
        %s347 = scalar_lea.vmem %s2, %s346
        %p348 = scmp.lt.s32.totalorder %s20, 1
        %s349 = scalar_select %p348, %s20, 1
        %s350 = smul.addr %s349, 2
        %s351 = smul.addr %s350, 8
        %s352 = scalar_lea.vmem %s3, %s351
        %p353 = scmp.lt.s32.totalorder %s20, 1
        %s354 = scalar_select %p353, %s20, 1
        %s355 = scalar_lea.vmem %s8, %s354
        %v356 = vld [vmem:[%s4] sm:$0xff]
        %v357 = vld [vmem:[%s4 + $0x8] sm:$0xff]
        %v358 = vld [vmem:[%s4 + $0x10] sm:$0xff]
        %v359 = vld [vmem:[%s4 + $0x18] sm:$0xff]
        %v360 = vld [vmem:[%s4 + $0x20] sm:$0xff]
        %v361 = vld [vmem:[%s4 + $0x28] sm:$0xff]
        %v362 = vld [vmem:[%s4 + $0x30] sm:$0xff]
        %v363 = vld [vmem:[%s4 + $0x38] sm:$0xff]
        %v364 = vld [vmem:[%s4 + $0x40] sm:$0xff]
        %v365 = vld [vmem:[%s4 + $0x48] sm:$0xff]
        %v366 = vld [vmem:[%s4 + $0x50] sm:$0xff]
        %v367 = vld [vmem:[%s4 + $0x58] sm:$0xff]
        %v368 = vld [vmem:[%s4 + $0x60] sm:$0xff]
        %v369 = vld [vmem:[%s4 + $0x68] sm:$0xff]
        %v370 = vld [vmem:[%s4 + $0x70] sm:$0xff]
        %v371 = vld [vmem:[%s4 + $0x78] sm:$0xff]
        %v372 = vld [vmem:[%s352] sm:$0xff]
        %v373 = vld [vmem:[%s352 + $0x8] sm:$0xff]
        %vm374 = vcmask 130048
        %v376 = vsel %vm374, %v356, 0
        %v379 = vsel %vm374, %v357, 0
        %v382 = vsel %vm374, %v358, 0
        %v385 = vsel %vm374, %v359, 0
        %v388 = vsel %vm374, %v360, 0
        %v391 = vsel %vm374, %v361, 0
        %v394 = vsel %vm374, %v362, 0
        %v397 = vsel %vm374, %v363, 0
        %v400 = vsel %vm374, %v364, 0
        %v403 = vsel %vm374, %v365, 0
        %v406 = vsel %vm374, %v366, 0
        %v409 = vsel %vm374, %v367, 0
        %v412 = vsel %vm374, %v368, 0
        %v415 = vsel %vm374, %v369, 0
        %v418 = vsel %vm374, %v370, 0
        %v421 = vsel %vm374, %v371, 0
        %423 = vmatprep.subr.mxu0 0.0
        %424 = vmatpush1.msra.mxu0 %v372
        %425 = vmatprep.subr.mxu0 0.0
        %426 = vmatpush1.msra.mxu0 %v373
        %427 = vmatprep.subr.mxu0 0.0
        %428 = vmatpush1.msra.mxu0 0.0
        %429 = vmatprep.subr.mxu0 0.0
        %430 = vmatpush1.msra.mxu0 0.0
        %431 = vmatprep.subr.mxu0 0.0
        %432 = vmatpush1.msra.mxu0 0.0
        %433 = vmatprep.subr.mxu0 0.0
        %434 = vmatpush1.msra.mxu0 0.0
        %435 = vmatprep.subr.mxu0 0.0
        %436 = vmatpush1.msra.mxu0 0.0
        %437 = vmatprep.subr.mxu0 0.0
        %438 = vmatpush1.msra.mxu0 0.0
        %439 = vmatprep.subr.mxu0 0.0
        %440 = vmatpush1.msra.mxu0 0.0
        %441 = vmatprep.subr.mxu0 0.0
        %442 = vmatpush1.msra.mxu0 0.0
        %443 = vmatprep.subr.mxu0 0.0
        %444 = vmatpush1.msra.mxu0 0.0
        %445 = vmatprep.subr.mxu0 0.0
        %446 = vmatpush1.msra.mxu0 0.0
        %447 = vmatprep.subr.mxu0 0.0
        %448 = vmatpush1.msra.mxu0 0.0
        %449 = vmatprep.subr.mxu0 0.0
        %450 = vmatpush1.msra.mxu0 0.0
        %451 = vmatprep.subr.mxu0 0.0
        %452 = vmatpush1.msra.mxu0 0.0
        %453 = vmatprep.subr.mxu0 0.0
        %454 = vmatpush1.msra.mxu0 0.0
        %455 = vmatprep.subr.mxu0 0.0
        %456 = vmatpush1.msra.mxu0 0.0
        %457 = vmatprep.subr.mxu0 0.0
        %458 = vmatpush1.msra.mxu0 0.0
        %459 = vmatprep.subr.mxu0 0.0
        %460 = vmatpush1.msra.mxu0 0.0
        %461 = vmatprep.subr.mxu0 0.0
        %462 = vmatpush1.msra.mxu0 0.0
        %463 = vmatprep.subr.mxu0 0.0
        %464 = vmatpush1.msra.mxu0 0.0
        %465 = vmatprep.subr.mxu0 0.0
        %466 = vmatpush1.msra.mxu0 0.0
        %467 = vmatprep.subr.mxu0 0.0
        %468 = vmatpush1.msra.mxu0 0.0
        %469 = vmatprep.subr.mxu0 0.0
        %470 = vmatpush1.msra.mxu0 0.0
        %471 = vmatprep.subr.mxu0 0.0
        %472 = vmatpush1.msra.mxu0 0.0
        %473 = vmatprep.subr.mxu0 0.0
        %474 = vmatpush1.msra.mxu0 0.0
        %475 = vmatprep.subr.mxu0 0.0
        %476 = vmatpush1.msra.mxu0 0.0
        %477 = vmatprep.subr.mxu0 0.0
        %478 = vmatpush1.msra.mxu0 0.0
        %479 = vmatprep.subr.mxu0 0.0
        %480 = vmatpush1.msra.mxu0 0.0
        %481 = vmatprep.subr.mxu0 0.0
        %482 = vmatpush1.msra.mxu0 0.0
        %483 = vmatprep.subr.mxu0 0.0
        %484 = vmatpush1.msra.mxu0 0.0
        %485 = vmatprep.subr.mxu0 0.0
        %486 = vmatpush1.msra.mxu0 0.0
        %487 = vmatprep.mubr.f32.mxu0 0.0
        %488 = vmatmul.mubr.f32.gmra.mrb[0].mxu0 %v376
        %v489 = vpop.f32.mrb[0].mxu0
        %v490 = vadd.f32 0.0, %v489
        %v491 = vpop.f32.mrb[0].mxu0
        %492 = vmatprep.mubr.f32.mxu0 0.0
        %493 = vmatmul.mubr.f32.gmra.mrb[0].mxu0 %v379
        %v494 = vpop.f32.mrb[0].mxu0
        %v495 = vadd.f32 0.0, %v494
        %v496 = vpop.f32.mrb[0].mxu0
        %497 = vmatprep.mubr.f32.mxu0 0.0
        %498 = vmatmul.mubr.f32.gmra.mrb[0].mxu0 %v382
        %v499 = vpop.f32.mrb[0].mxu0
        %v500 = vadd.f32 0.0, %v499
        %v501 = vpop.f32.mrb[0].mxu0
        %502 = vmatprep.mubr.f32.mxu0 0.0
        %503 = vmatmul.mubr.f32.gmra.mrb[0].mxu0 %v385
        %v504 = vpop.f32.mrb[0].mxu0
        %v505 = vadd.f32 0.0, %v504
        %v506 = vpop.f32.mrb[0].mxu0
        %507 = vmatprep.mubr.f32.mxu0 0.0
        %508 = vmatmul.mubr.f32.gmra.mrb[0].mxu0 %v388
        %v509 = vpop.f32.mrb[0].mxu0
        %v510 = vadd.f32 0.0, %v509
        %v511 = vpop.f32.mrb[0].mxu0
        %512 = vmatprep.mubr.f32.mxu0 0.0
        %513 = vmatmul.mubr.f32.gmra.mrb[0].mxu0 %v391
        %v514 = vpop.f32.mrb[0].mxu0
        %v515 = vadd.f32 0.0, %v514
        %v516 = vpop.f32.mrb[0].mxu0
        %517 = vmatprep.mubr.f32.mxu0 0.0
        %518 = vmatmul.mubr.f32.gmra.mrb[0].mxu0 %v394
        %v519 = vpop.f32.mrb[0].mxu0
        %v520 = vadd.f32 0.0, %v519
        %v521 = vpop.f32.mrb[0].mxu0
        %522 = vmatprep.mubr.f32.mxu0 0.0
        %523 = vmatmul.mubr.f32.gmra.mrb[0].mxu0 %v397
        %v524 = vpop.f32.mrb[0].mxu0
        %v525 = vadd.f32 0.0, %v524
        %v526 = vpop.f32.mrb[0].mxu0
        %527 = vmatprep.mubr.f32.mxu0 0.0
        %528 = vmatmul.mubr.f32.gmra.mrb[0].mxu0 %v400
        %v529 = vpop.f32.mrb[0].mxu0
        %v530 = vadd.f32 0.0, %v529
        %v531 = vpop.f32.mrb[0].mxu0
        %532 = vmatprep.mubr.f32.mxu0 0.0
        %533 = vmatmul.mubr.f32.gmra.mrb[0].mxu0 %v403
        %v534 = vpop.f32.mrb[0].mxu0
        %v535 = vadd.f32 0.0, %v534
        %v536 = vpop.f32.mrb[0].mxu0
        %537 = vmatprep.mubr.f32.mxu0 0.0
        %538 = vmatmul.mubr.f32.gmra.mrb[0].mxu0 %v406
        %v539 = vpop.f32.mrb[0].mxu0
        %v540 = vadd.f32 0.0, %v539
        %v541 = vpop.f32.mrb[0].mxu0
        %542 = vmatprep.mubr.f32.mxu0 0.0
        %543 = vmatmul.mubr.f32.gmra.mrb[0].mxu0 %v409
        %v544 = vpop.f32.mrb[0].mxu0
        %v545 = vadd.f32 0.0, %v544
        %v546 = vpop.f32.mrb[0].mxu0
        %547 = vmatprep.mubr.f32.mxu0 0.0
        %548 = vmatmul.mubr.f32.gmra.mrb[0].mxu0 %v412
        %v549 = vpop.f32.mrb[0].mxu0
        %v550 = vadd.f32 0.0, %v549
        %v551 = vpop.f32.mrb[0].mxu0
        %552 = vmatprep.mubr.f32.mxu0 0.0
        %553 = vmatmul.mubr.f32.gmra.mrb[0].mxu0 %v415
        %v554 = vpop.f32.mrb[0].mxu0
        %v555 = vadd.f32 0.0, %v554
        %v556 = vpop.f32.mrb[0].mxu0
        %557 = vmatprep.mubr.f32.mxu0 0.0
        %558 = vmatmul.mubr.f32.gmra.mrb[0].mxu0 %v418
        %v559 = vpop.f32.mrb[0].mxu0
        %v560 = vadd.f32 0.0, %v559
        %v561 = vpop.f32.mrb[0].mxu0
        %562 = vmatprep.mubr.f32.mxu0 0.0
        %563 = vmatmul.mubr.f32.gmra.mrb[0].mxu0 %v421
        %v564 = vpop.f32.mrb[0].mxu0
        %v565 = vadd.f32 0.0, %v564
        %v566 = vpop.f32.mrb[0].mxu0
        %567 = vdwg.mxu0
        %v568 = vld [vmem:[%s5] sm:$0xff]
        %v569 = vld [vmem:[%s5 + $0x8] sm:$0xff]
        %v571 = vsel %vm374, %v490, 0
        %v574 = vsel %vm374, %v495, 0
        %v577 = vsel %vm374, %v500, 0
        %v580 = vsel %vm374, %v505, 0
        %v583 = vsel %vm374, %v510, 0
        %v586 = vsel %vm374, %v515, 0
        %v589 = vsel %vm374, %v520, 0
        %v592 = vsel %vm374, %v525, 0
        %v595 = vsel %vm374, %v530, 0
        %v598 = vsel %vm374, %v535, 0
        %v601 = vsel %vm374, %v540, 0
        %v604 = vsel %vm374, %v545, 0
        %v607 = vsel %vm374, %v550, 0
        %v610 = vsel %vm374, %v555, 0
        %v613 = vsel %vm374, %v560, 0
        %v616 = vsel %vm374, %v565, 0
        %618 = vmatprep.subr.mxu0 0.0
        %619 = vmatpush1.msra.mxu0 %v568
        %620 = vmatprep.subr.mxu0 0.0
        %621 = vmatpush1.msra.mxu0 %v569
        %622 = vmatprep.subr.mxu0 0.0
        %623 = vmatpush1.msra.mxu0 0.0
        %624 = vmatprep.subr.mxu0 0.0
        %625 = vmatpush1.msra.mxu0 0.0
        %626 = vmatprep.subr.mxu0 0.0
        %627 = vmatpush1.msra.mxu0 0.0
        %628 = vmatprep.subr.mxu0 0.0
        %629 = vmatpush1.msra.mxu0 0.0
        %630 = vmatprep.subr.mxu0 0.0
        %631 = vmatpush1.msra.mxu0 0.0
        %632 = vmatprep.subr.mxu0 0.0
        %633 = vmatpush1.msra.mxu0 0.0
        %634 = vmatprep.subr.mxu0 0.0
        %635 = vmatpush1.msra.mxu0 0.0
        %636 = vmatprep.subr.mxu0 0.0
        %637 = vmatpush1.msra.mxu0 0.0
        %638 = vmatprep.subr.mxu0 0.0
        %639 = vmatpush1.msra.mxu0 0.0
        %640 = vmatprep.subr.mxu0 0.0
        %641 = vmatpush1.msra.mxu0 0.0
        %642 = vmatprep.subr.mxu0 0.0
        %643 = vmatpush1.msra.mxu0 0.0
        %644 = vmatprep.subr.mxu0 0.0
        %645 = vmatpush1.msra.mxu0 0.0
        %646 = vmatprep.subr.mxu0 0.0
        %647 = vmatpush1.msra.mxu0 0.0
        %648 = vmatprep.subr.mxu0 0.0
        %649 = vmatpush1.msra.mxu0 0.0
        %650 = vmatprep.subr.mxu0 0.0
        %651 = vmatpush1.msra.mxu0 0.0
        %652 = vmatprep.subr.mxu0 0.0
        %653 = vmatpush1.msra.mxu0 0.0
        %654 = vmatprep.subr.mxu0 0.0
        %655 = vmatpush1.msra.mxu0 0.0
        %656 = vmatprep.subr.mxu0 0.0
        %657 = vmatpush1.msra.mxu0 0.0
        %658 = vmatprep.subr.mxu0 0.0
        %659 = vmatpush1.msra.mxu0 0.0
        %660 = vmatprep.subr.mxu0 0.0
        %661 = vmatpush1.msra.mxu0 0.0
        %662 = vmatprep.subr.mxu0 0.0
        %663 = vmatpush1.msra.mxu0 0.0
        %664 = vmatprep.subr.mxu0 0.0
        %665 = vmatpush1.msra.mxu0 0.0
        %666 = vmatprep.subr.mxu0 0.0
        %667 = vmatpush1.msra.mxu0 0.0
        %668 = vmatprep.subr.mxu0 0.0
        %669 = vmatpush1.msra.mxu0 0.0
        %670 = vmatprep.subr.mxu0 0.0
        %671 = vmatpush1.msra.mxu0 0.0
        %672 = vmatprep.subr.mxu0 0.0
        %673 = vmatpush1.msra.mxu0 0.0
        %674 = vmatprep.subr.mxu0 0.0
        %675 = vmatpush1.msra.mxu0 0.0
        %676 = vmatprep.subr.mxu0 0.0
        %677 = vmatpush1.msra.mxu0 0.0
        %678 = vmatprep.subr.mxu0 0.0
        %679 = vmatpush1.msra.mxu0 0.0
        %680 = vmatprep.subr.mxu0 0.0
        %681 = vmatpush1.msra.mxu0 0.0
        %682 = vmatprep.mubr.f32.mxu0 0.0
        %683 = vmatmul.mubr.f32.gmra.mrb[0].mxu0 %v571
        %v684 = vpop.f32.mrb[0].mxu0
        %v685 = vadd.f32 0.0, %v684
        %v686 = vpop.f32.mrb[0].mxu0
        %687 = vmatprep.mubr.f32.mxu0 0.0
        %688 = vmatmul.mubr.f32.gmra.mrb[0].mxu0 %v574
        %v689 = vpop.f32.mrb[0].mxu0
        %v690 = vadd.f32 0.0, %v689
        %v691 = vpop.f32.mrb[0].mxu0
        %692 = vmatprep.mubr.f32.mxu0 0.0
        %693 = vmatmul.mubr.f32.gmra.mrb[0].mxu0 %v577
        %v694 = vpop.f32.mrb[0].mxu0
        %v695 = vadd.f32 0.0, %v694
        %v696 = vpop.f32.mrb[0].mxu0
        %697 = vmatprep.mubr.f32.mxu0 0.0
        %698 = vmatmul.mubr.f32.gmra.mrb[0].mxu0 %v580
        %v699 = vpop.f32.mrb[0].mxu0
        %v700 = vadd.f32 0.0, %v699
        %v701 = vpop.f32.mrb[0].mxu0
        %702 = vmatprep.mubr.f32.mxu0 0.0
        %703 = vmatmul.mubr.f32.gmra.mrb[0].mxu0 %v583
        %v704 = vpop.f32.mrb[0].mxu0
        %v705 = vadd.f32 0.0, %v704
        %v706 = vpop.f32.mrb[0].mxu0
        %707 = vmatprep.mubr.f32.mxu0 0.0
        %708 = vmatmul.mubr.f32.gmra.mrb[0].mxu0 %v586
        %v709 = vpop.f32.mrb[0].mxu0
        %v710 = vadd.f32 0.0, %v709
        %v711 = vpop.f32.mrb[0].mxu0
        %712 = vmatprep.mubr.f32.mxu0 0.0
        %713 = vmatmul.mubr.f32.gmra.mrb[0].mxu0 %v589
        %v714 = vpop.f32.mrb[0].mxu0
        %v715 = vadd.f32 0.0, %v714
        %v716 = vpop.f32.mrb[0].mxu0
        %717 = vmatprep.mubr.f32.mxu0 0.0
        %718 = vmatmul.mubr.f32.gmra.mrb[0].mxu0 %v592
        %v719 = vpop.f32.mrb[0].mxu0
        %v720 = vadd.f32 0.0, %v719
        %v721 = vpop.f32.mrb[0].mxu0
        %722 = vmatprep.mubr.f32.mxu0 0.0
        %723 = vmatmul.mubr.f32.gmra.mrb[0].mxu0 %v595
        %v724 = vpop.f32.mrb[0].mxu0
        %v725 = vadd.f32 0.0, %v724
        %v726 = vpop.f32.mrb[0].mxu0
        %727 = vmatprep.mubr.f32.mxu0 0.0
        %728 = vmatmul.mubr.f32.gmra.mrb[0].mxu0 %v598
        %v729 = vpop.f32.mrb[0].mxu0
        %v730 = vadd.f32 0.0, %v729
        %v731 = vpop.f32.mrb[0].mxu0
        %732 = vmatprep.mubr.f32.mxu0 0.0
        %733 = vmatmul.mubr.f32.gmra.mrb[0].mxu0 %v601
        %v734 = vpop.f32.mrb[0].mxu0
        %v735 = vadd.f32 0.0, %v734
        %v736 = vpop.f32.mrb[0].mxu0
        %737 = vmatprep.mubr.f32.mxu0 0.0
        %738 = vmatmul.mubr.f32.gmra.mrb[0].mxu0 %v604
        %v739 = vpop.f32.mrb[0].mxu0
        %v740 = vadd.f32 0.0, %v739
        %v741 = vpop.f32.mrb[0].mxu0
        %742 = vmatprep.mubr.f32.mxu0 0.0
        %743 = vmatmul.mubr.f32.gmra.mrb[0].mxu0 %v607
        %v744 = vpop.f32.mrb[0].mxu0
        %v745 = vadd.f32 0.0, %v744
        %v746 = vpop.f32.mrb[0].mxu0
        %747 = vmatprep.mubr.f32.mxu0 0.0
        %748 = vmatmul.mubr.f32.gmra.mrb[0].mxu0 %v610
        %v749 = vpop.f32.mrb[0].mxu0
        %v750 = vadd.f32 0.0, %v749
        %v751 = vpop.f32.mrb[0].mxu0
        %752 = vmatprep.mubr.f32.mxu0 0.0
        %753 = vmatmul.mubr.f32.gmra.mrb[0].mxu0 %v613
        %v754 = vpop.f32.mrb[0].mxu0
        %v755 = vadd.f32 0.0, %v754
        %v756 = vpop.f32.mrb[0].mxu0
        %757 = vmatprep.mubr.f32.mxu0 0.0
        %758 = vmatmul.mubr.f32.gmra.mrb[0].mxu0 %v616
        %v759 = vpop.f32.mrb[0].mxu0
        %v760 = vadd.f32 0.0, %v759
        %v761 = vpop.f32.mrb[0].mxu0
        %762 = vdwg.mxu0
        %vm763 = vcmp.gt.f32.partialorder %v685, 0.9
        %vm764 = vcmp.gt.f32.partialorder %v690, 0.9
        %vm765 = vcmp.gt.f32.partialorder %v695, 0.9
        %vm766 = vcmp.gt.f32.partialorder %v700, 0.9
        %vm767 = vcmp.gt.f32.partialorder %v705, 0.9
        %vm768 = vcmp.gt.f32.partialorder %v710, 0.9
        %vm769 = vcmp.gt.f32.partialorder %v715, 0.9
        %vm770 = vcmp.gt.f32.partialorder %v720, 0.9
        %vm771 = vcmp.gt.f32.partialorder %v725, 0.9
        %vm772 = vcmp.gt.f32.partialorder %v730, 0.9
        %vm773 = vcmp.gt.f32.partialorder %v735, 0.9
        %vm774 = vcmp.gt.f32.partialorder %v740, 0.9
        %vm775 = vcmp.gt.f32.partialorder %v745, 0.9
        %vm776 = vcmp.gt.f32.partialorder %v750, 0.9
        %vm777 = vcmp.gt.f32.partialorder %v755, 0.9
        %vm778 = vcmp.gt.f32.partialorder %v760, 0.9
        %v779 = vsel %vm763, 1, 0
        %v780 = vsel %vm764, 1, 0
        %v781 = vsel %vm765, 1, 0
        %v782 = vsel %vm766, 1, 0
        %v783 = vsel %vm767, 1, 0
        %v784 = vsel %vm768, 1, 0
        %v785 = vsel %vm769, 1, 0
        %v786 = vsel %vm770, 1, 0
        %v787 = vsel %vm771, 1, 0
        %v788 = vsel %vm772, 1, 0
        %v789 = vsel %vm773, 1, 0
        %v790 = vsel %vm774, 1, 0
        %v791 = vsel %vm775, 1, 0
        %v792 = vsel %vm776, 1, 0
        %v793 = vsel %vm777, 1, 0
        %v794 = vsel %vm778, 1, 0
        %v795 = vcvt.s32.f32 %v779
        %v796 = vcvt.s32.f32 %v780
        %v797 = vcvt.s32.f32 %v781
        %v798 = vcvt.s32.f32 %v782
        %v799 = vcvt.s32.f32 %v783
        %v800 = vcvt.s32.f32 %v784
        %v801 = vcvt.s32.f32 %v785
        %v802 = vcvt.s32.f32 %v786
        %v803 = vcvt.s32.f32 %v787
        %v804 = vcvt.s32.f32 %v788
        %v805 = vcvt.s32.f32 %v789
        %v806 = vcvt.s32.f32 %v790
        %v807 = vcvt.s32.f32 %v791
        %v808 = vcvt.s32.f32 %v792
        %v809 = vcvt.s32.f32 %v793
        %v810 = vcvt.s32.f32 %v794
        %s811 = smul.u32 %s20, 128
        %s812 = sld [smem:[#allocation2 + %s811]]
        %s813 = sadd.s32 %s811, 1
        %s814 = sld [smem:[#allocation2 + %s813]]
        %s815 = sadd.s32 %s811, 2
        %s816 = sld [smem:[#allocation2 + %s815]]
        %v817 = vld [vmem:[%s342] sm:$0xff]
        %v818 = vld [vmem:[%s342 + $0x8] sm:$0xff]
        %v819 = vld [vmem:[%s342 + $0x10] sm:$0xff]
        %v820 = vld [vmem:[%s342 + $0x18] sm:$0xff]
        %v821 = vld [vmem:[%s342 + $0x20] sm:$0xff]
        %v822 = vld [vmem:[%s342 + $0x28] sm:$0xff]
        %v823 = vld [vmem:[%s342 + $0x30] sm:$0xff]
        %v824 = vld [vmem:[%s342 + $0x38] sm:$0xff]
        %v825 = vld [vmem:[%s342 + $0x40] sm:$0xff]
        %v826 = vld [vmem:[%s342 + $0x48] sm:$0xff]
        %v827 = vld [vmem:[%s342 + $0x50] sm:$0xff]
        %v828 = vld [vmem:[%s342 + $0x58] sm:$0xff]
        %v829 = vld [vmem:[%s342 + $0x60] sm:$0xff]
        %v830 = vld [vmem:[%s342 + $0x68] sm:$0xff]
        %v831 = vld [vmem:[%s342 + $0x70] sm:$0xff]
        %v832 = vld [vmem:[%s342 + $0x78] sm:$0xff]
        %v833 = vstv %s812
        %v834 = vmul.f32 %v833, %v817
        %v835 = vmul.f32 %v833, %v818
        %v836 = vmul.f32 %v833, %v819
        %v837 = vmul.f32 %v833, %v820
        %v838 = vmul.f32 %v833, %v821
        %v839 = vmul.f32 %v833, %v822
        %v840 = vmul.f32 %v833, %v823
        %v841 = vmul.f32 %v833, %v824
        %v842 = vmul.f32 %v833, %v825
        %v843 = vmul.f32 %v833, %v826
        %v844 = vmul.f32 %v833, %v827
        %v845 = vmul.f32 %v833, %v828
        %v846 = vmul.f32 %v833, %v829
        %v847 = vmul.f32 %v833, %v830
        %v848 = vmul.f32 %v833, %v831
        %v849 = vmul.f32 %v833, %v832
        %s850 = scalar_lea.vmem %s342, 128
        %v851 = vld [vmem:[%s850] sm:$0xff]
        %v852 = vld [vmem:[%s850 + $0x8] sm:$0xff]
        %v853 = vld [vmem:[%s850 + $0x10] sm:$0xff]
        %v854 = vld [vmem:[%s850 + $0x18] sm:$0xff]
        %v855 = vld [vmem:[%s850 + $0x20] sm:$0xff]
        %v856 = vld [vmem:[%s850 + $0x28] sm:$0xff]
        %v857 = vld [vmem:[%s850 + $0x30] sm:$0xff]
        %v858 = vld [vmem:[%s850 + $0x38] sm:$0xff]
        %v859 = vld [vmem:[%s850 + $0x40] sm:$0xff]
        %v860 = vld [vmem:[%s850 + $0x48] sm:$0xff]
        %v861 = vld [vmem:[%s850 + $0x50] sm:$0xff]
        %v862 = vld [vmem:[%s850 + $0x58] sm:$0xff]
        %v863 = vld [vmem:[%s850 + $0x60] sm:$0xff]
        %v864 = vld [vmem:[%s850 + $0x68] sm:$0xff]
        %v865 = vld [vmem:[%s850 + $0x70] sm:$0xff]
        %v866 = vld [vmem:[%s850 + $0x78] sm:$0xff]
        %v867 = vstv %s814
        %v868 = vmul.f32 %v867, %v851
        %v869 = vmul.f32 %v867, %v852
        %v870 = vmul.f32 %v867, %v853
        %v871 = vmul.f32 %v867, %v854
        %v872 = vmul.f32 %v867, %v855
        %v873 = vmul.f32 %v867, %v856
        %v874 = vmul.f32 %v867, %v857
        %v875 = vmul.f32 %v867, %v858
        %v876 = vmul.f32 %v867, %v859
        %v877 = vmul.f32 %v867, %v860
        %v878 = vmul.f32 %v867, %v861
        %v879 = vmul.f32 %v867, %v862
        %v880 = vmul.f32 %v867, %v863
        %v881 = vmul.f32 %v867, %v864
        %v882 = vmul.f32 %v867, %v865
        %v883 = vmul.f32 %v867, %v866
        %v884 = vadd.f32 %v834, %v868
        %v885 = vadd.f32 %v835, %v869
        %v886 = vadd.f32 %v836, %v870
        %v887 = vadd.f32 %v837, %v871
        %v888 = vadd.f32 %v838, %v872
        %v889 = vadd.f32 %v839, %v873
        %v890 = vadd.f32 %v840, %v874
        %v891 = vadd.f32 %v841, %v875
        %v892 = vadd.f32 %v842, %v876
        %v893 = vadd.f32 %v843, %v877
        %v894 = vadd.f32 %v844, %v878
        %v895 = vadd.f32 %v845, %v879
        %v896 = vadd.f32 %v846, %v880
        %v897 = vadd.f32 %v847, %v881
        %v898 = vadd.f32 %v848, %v882
        %v899 = vadd.f32 %v849, %v883
        %s900 = scalar_lea.vmem %s342, 256
        %v901 = vld [vmem:[%s900] sm:$0xff]
        %v902 = vld [vmem:[%s900 + $0x8] sm:$0xff]
        %v903 = vld [vmem:[%s900 + $0x10] sm:$0xff]
        %v904 = vld [vmem:[%s900 + $0x18] sm:$0xff]
        %v905 = vld [vmem:[%s900 + $0x20] sm:$0xff]
        %v906 = vld [vmem:[%s900 + $0x28] sm:$0xff]
        %v907 = vld [vmem:[%s900 + $0x30] sm:$0xff]
        %v908 = vld [vmem:[%s900 + $0x38] sm:$0xff]
        %v909 = vld [vmem:[%s900 + $0x40] sm:$0xff]
        %v910 = vld [vmem:[%s900 + $0x48] sm:$0xff]
        %v911 = vld [vmem:[%s900 + $0x50] sm:$0xff]
        %v912 = vld [vmem:[%s900 + $0x58] sm:$0xff]
        %v913 = vld [vmem:[%s900 + $0x60] sm:$0xff]
        %v914 = vld [vmem:[%s900 + $0x68] sm:$0xff]
        %v915 = vld [vmem:[%s900 + $0x70] sm:$0xff]
        %v916 = vld [vmem:[%s900 + $0x78] sm:$0xff]
        %v917 = vstv %s816
        %v918 = vmul.f32 %v917, %v901
        %v919 = vmul.f32 %v917, %v902
        %v920 = vmul.f32 %v917, %v903
        %v921 = vmul.f32 %v917, %v904
        %v922 = vmul.f32 %v917, %v905
        %v923 = vmul.f32 %v917, %v906
        %v924 = vmul.f32 %v917, %v907
        %v925 = vmul.f32 %v917, %v908
        %v926 = vmul.f32 %v917, %v909
        %v927 = vmul.f32 %v917, %v910
        %v928 = vmul.f32 %v917, %v911
        %v929 = vmul.f32 %v917, %v912
        %v930 = vmul.f32 %v917, %v913
        %v931 = vmul.f32 %v917, %v914
        %v932 = vmul.f32 %v917, %v915
        %v933 = vmul.f32 %v917, %v916
        %v934 = vadd.f32 %v884, %v918
        %v935 = vadd.f32 %v885, %v919
        %v936 = vadd.f32 %v886, %v920
        %v937 = vadd.f32 %v887, %v921
        %v938 = vadd.f32 %v888, %v922
        %v939 = vadd.f32 %v889, %v923
        %v940 = vadd.f32 %v890, %v924
        %v941 = vadd.f32 %v891, %v925
        %v942 = vadd.f32 %v892, %v926
        %v943 = vadd.f32 %v893, %v927
        %v944 = vadd.f32 %v894, %v928
        %v945 = vadd.f32 %v895, %v929
        %v946 = vadd.f32 %v896, %v930
        %v947 = vadd.f32 %v897, %v931
        %v948 = vadd.f32 %v898, %v932
        %v949 = vadd.f32 %v899, %v933
        %v950 = vmul.f32 %v934, 255.0
        %v951 = vmul.f32 %v935, 255.0
        %v952 = vmul.f32 %v936, 255.0
        %v953 = vmul.f32 %v937, 255.0
        %v954 = vmul.f32 %v938, 255.0
        %v955 = vmul.f32 %v939, 255.0
        %v956 = vmul.f32 %v940, 255.0
        %v957 = vmul.f32 %v941, 255.0
        %v958 = vmul.f32 %v942, 255.0
        %v959 = vmul.f32 %v943, 255.0
        %v960 = vmul.f32 %v944, 255.0
        %v961 = vmul.f32 %v945, 255.0
        %v962 = vmul.f32 %v946, 255.0
        %v963 = vmul.f32 %v947, 255.0
        %v964 = vmul.f32 %v948, 255.0
        %v965 = vmul.f32 %v949, 255.0
        %v966 = vld [vmem:[%s347] sm:$0xff]
        %v967 = vld [vmem:[%s347 + $0x8] sm:$0xff]
        %v968 = vld [vmem:[%s347 + $0x10] sm:$0xff]
        %v969 = vld [vmem:[%s347 + $0x18] sm:$0xff]
        %v970 = vld [vmem:[%s347 + $0x20] sm:$0xff]
        %v971 = vld [vmem:[%s347 + $0x28] sm:$0xff]
        %v972 = vld [vmem:[%s347 + $0x30] sm:$0xff]
        %v973 = vld [vmem:[%s347 + $0x38] sm:$0xff]
        %v974 = vld [vmem:[%s347 + $0x40] sm:$0xff]
        %v975 = vld [vmem:[%s347 + $0x48] sm:$0xff]
        %v976 = vld [vmem:[%s347 + $0x50] sm:$0xff]
        %v977 = vld [vmem:[%s347 + $0x58] sm:$0xff]
        %v978 = vld [vmem:[%s347 + $0x60] sm:$0xff]
        %v979 = vld [vmem:[%s347 + $0x68] sm:$0xff]
        %v980 = vld [vmem:[%s347 + $0x70] sm:$0xff]
        %v981 = vld [vmem:[%s347 + $0x78] sm:$0xff]
        %v982 = vmul.f32 %v966, 255.0
        %v983 = vmul.f32 %v967, 255.0
        %v984 = vmul.f32 %v968, 255.0
        %v985 = vmul.f32 %v969, 255.0
        %v986 = vmul.f32 %v970, 255.0
        %v987 = vmul.f32 %v971, 255.0
        %v988 = vmul.f32 %v972, 255.0
        %v989 = vmul.f32 %v973, 255.0
        %v990 = vmul.f32 %v974, 255.0
        %v991 = vmul.f32 %v975, 255.0
        %v992 = vmul.f32 %v976, 255.0
        %v993 = vmul.f32 %v977, 255.0
        %v994 = vmul.f32 %v978, 255.0
        %v995 = vmul.f32 %v979, 255.0
        %v996 = vmul.f32 %v980, 255.0
        %v997 = vmul.f32 %v981, 255.0
        %v998 = vmul.f32 %v950, %v950
        %v999 = vmul.f32 %v951, %v951
        %v1000 = vmul.f32 %v952, %v952
        %v1001 = vmul.f32 %v953, %v953
        %v1002 = vmul.f32 %v954, %v954
        %v1003 = vmul.f32 %v955, %v955
        %v1004 = vmul.f32 %v956, %v956
        %v1005 = vmul.f32 %v957, %v957
        %v1006 = vmul.f32 %v958, %v958
        %v1007 = vmul.f32 %v959, %v959
        %v1008 = vmul.f32 %v960, %v960
        %v1009 = vmul.f32 %v961, %v961
        %v1010 = vmul.f32 %v962, %v962
        %v1011 = vmul.f32 %v963, %v963
        %v1012 = vmul.f32 %v964, %v964
        %v1013 = vmul.f32 %v965, %v965
        %v1014 = vmul.f32 %v982, %v982
        %v1015 = vmul.f32 %v983, %v983
        %v1016 = vmul.f32 %v984, %v984
        %v1017 = vmul.f32 %v985, %v985
        %v1018 = vmul.f32 %v986, %v986
        %v1019 = vmul.f32 %v987, %v987
        %v1020 = vmul.f32 %v988, %v988
        %v1021 = vmul.f32 %v989, %v989
        %v1022 = vmul.f32 %v990, %v990
        %v1023 = vmul.f32 %v991, %v991
        %v1024 = vmul.f32 %v992, %v992
        %v1025 = vmul.f32 %v993, %v993
        %v1026 = vmul.f32 %v994, %v994
        %v1027 = vmul.f32 %v995, %v995
        %v1028 = vmul.f32 %v996, %v996
        %v1029 = vmul.f32 %v997, %v997
        %v1030 = vmul.f32 %v950, %v982
        %v1031 = vmul.f32 %v951, %v983
        %v1032 = vmul.f32 %v952, %v984
        %v1033 = vmul.f32 %v953, %v985
        %v1034 = vmul.f32 %v954, %v986
        %v1035 = vmul.f32 %v955, %v987
        %v1036 = vmul.f32 %v956, %v988
        %v1037 = vmul.f32 %v957, %v989
        %v1038 = vmul.f32 %v958, %v990
        %v1039 = vmul.f32 %v959, %v991
        %v1040 = vmul.f32 %v960, %v992
        %v1041 = vmul.f32 %v961, %v993
        %v1042 = vmul.f32 %v962, %v994
        %v1043 = vmul.f32 %v963, %v995
        %v1044 = vmul.f32 %v964, %v996
        %v1045 = vmul.f32 %v965, %v997
        %v1046 = vld [vmem:[%s6] sm:$0xff]
        %v1047 = vld [vmem:[%s6 + $0x8] sm:$0xff]
        %v1048 = vld [vmem:[%s6 + $0x10] sm:$0xff]
        %v1049 = vld [vmem:[%s6 + $0x18] sm:$0xff]
        %v1050 = vld [vmem:[%s6 + $0x20] sm:$0xff]
        %v1051 = vld [vmem:[%s6 + $0x28] sm:$0xff]
        %v1052 = vld [vmem:[%s6 + $0x30] sm:$0xff]
        %v1053 = vld [vmem:[%s6 + $0x38] sm:$0xff]
        %v1054 = vld [vmem:[%s6 + $0x40] sm:$0xff]
        %v1055 = vld [vmem:[%s6 + $0x48] sm:$0xff]
        %v1056 = vld [vmem:[%s6 + $0x50] sm:$0xff]
        %v1057 = vld [vmem:[%s6 + $0x58] sm:$0xff]
        %v1058 = vld [vmem:[%s6 + $0x60] sm:$0xff]
        %v1059 = vld [vmem:[%s6 + $0x68] sm:$0xff]
        %v1060 = vld [vmem:[%s6 + $0x70] sm:$0xff]
        %v1061 = vld [vmem:[%s6 + $0x78] sm:$0xff]
        %1062 = vmatprep.subr.mxu0 %v982
        %1063 = vmatpush1.msra.mxu0 %v950
        %1064 = vmatprep.subr.mxu0 %v983
        %1065 = vmatpush1.msra.mxu0 %v951
        %1066 = vmatprep.subr.mxu0 %v984
        %1067 = vmatpush1.msra.mxu0 %v952
        %1068 = vmatprep.subr.mxu0 %v985
        %1069 = vmatpush1.msra.mxu0 %v953
        %1070 = vmatprep.subr.mxu0 %v986
        %1071 = vmatpush1.msra.mxu0 %v954
        %1072 = vmatprep.subr.mxu0 %v987
        %1073 = vmatpush1.msra.mxu0 %v955
        %1074 = vmatprep.subr.mxu0 %v988
        %1075 = vmatpush1.msra.mxu0 %v956
        %1076 = vmatprep.subr.mxu0 %v989
        %1077 = vmatpush1.msra.mxu0 %v957
        %1078 = vmatprep.subr.mxu0 %v990
        %1079 = vmatpush1.msra.mxu0 %v958
        %1080 = vmatprep.subr.mxu0 %v991
        %1081 = vmatpush1.msra.mxu0 %v959
        %1082 = vmatprep.subr.mxu0 %v992
        %1083 = vmatpush1.msra.mxu0 %v960
        %1084 = vmatprep.subr.mxu0 %v993
        %1085 = vmatpush1.msra.mxu0 %v961
        %1086 = vmatprep.subr.mxu0 %v994
        %1087 = vmatpush1.msra.mxu0 %v962
        %1088 = vmatprep.subr.mxu0 %v995
        %1089 = vmatpush1.msra.mxu0 %v963
        %1090 = vmatprep.subr.mxu0 %v996
        %1091 = vmatpush1.msra.mxu0 %v964
        %1092 = vmatprep.subr.mxu0 %v997
        %1093 = vmatpush1.msra.mxu0 %v965
        %1094 = vmatprep.subr.mxu0 0.0
        %1095 = vmatpush1.msra.mxu0 0.0
        %1096 = vmatprep.subr.mxu0 0.0
        %1097 = vmatpush1.msra.mxu0 0.0
        %1098 = vmatprep.subr.mxu0 0.0
        %1099 = vmatpush1.msra.mxu0 0.0
        %1100 = vmatprep.subr.mxu0 0.0
        %1101 = vmatpush1.msra.mxu0 0.0
        %1102 = vmatprep.subr.mxu0 0.0
        %1103 = vmatpush1.msra.mxu0 0.0
        %1104 = vmatprep.subr.mxu0 0.0
        %1105 = vmatpush1.msra.mxu0 0.0
        %1106 = vmatprep.subr.mxu0 0.0
        %1107 = vmatpush1.msra.mxu0 0.0
        %1108 = vmatprep.subr.mxu0 0.0
        %1109 = vmatpush1.msra.mxu0 0.0
        %1110 = vmatprep.subr.mxu0 0.0
        %1111 = vmatpush1.msra.mxu0 0.0
        %1112 = vmatprep.subr.mxu0 0.0
        %1113 = vmatpush1.msra.mxu0 0.0
        %1114 = vmatprep.subr.mxu0 0.0
        %1115 = vmatpush1.msra.mxu0 0.0
        %1116 = vmatprep.subr.mxu0 0.0
        %1117 = vmatpush1.msra.mxu0 0.0
        %1118 = vmatprep.subr.mxu0 0.0
        %1119 = vmatpush1.msra.mxu0 0.0
        %1120 = vmatprep.subr.mxu0 0.0
        %1121 = vmatpush1.msra.mxu0 0.0
        %1122 = vmatprep.subr.mxu0 0.0
        %1123 = vmatpush1.msra.mxu0 0.0
        %1124 = vmatprep.subr.mxu0 0.0
        %1125 = vmatpush1.msra.mxu0 0.0
        %1126 = vmatprep.mubr.f32.mxu0 0.0
        %1127 = vmatmul.mubr.f32.gmra.mrb[0].mxu0 %v1046
        %v1128 = vpop.f32.mrb[0].mxu0
        %v1129 = vadd.f32 0.0, %v1128
        %v1130 = vpop.f32.mrb[0].mxu0
        %v1131 = vadd.f32 0.0, %v1130
        %1132 = vmatprep.mubr.f32.mxu0 0.0
        %1133 = vmatmul.mubr.f32.gmra.mrb[0].mxu0 %v1047
        %v1134 = vpop.f32.mrb[0].mxu0
        %v1135 = vadd.f32 0.0, %v1134
        %v1136 = vpop.f32.mrb[0].mxu0
        %v1137 = vadd.f32 0.0, %v1136
        %1138 = vmatprep.mubr.f32.mxu0 0.0
        %1139 = vmatmul.mubr.f32.gmra.mrb[0].mxu0 %v1048
        %v1140 = vpop.f32.mrb[0].mxu0
        %v1141 = vadd.f32 0.0, %v1140
        %v1142 = vpop.f32.mrb[0].mxu0
        %v1143 = vadd.f32 0.0, %v1142
        %1144 = vmatprep.mubr.f32.mxu0 0.0
        %1145 = vmatmul.mubr.f32.gmra.mrb[0].mxu0 %v1049
        %v1146 = vpop.f32.mrb[0].mxu0
        %v1147 = vadd.f32 0.0, %v1146
        %v1148 = vpop.f32.mrb[0].mxu0
        %v1149 = vadd.f32 0.0, %v1148
        %1150 = vmatprep.mubr.f32.mxu0 0.0
        %1151 = vmatmul.mubr.f32.gmra.mrb[0].mxu0 %v1050
        %v1152 = vpop.f32.mrb[0].mxu0
        %v1153 = vadd.f32 0.0, %v1152
        %v1154 = vpop.f32.mrb[0].mxu0
        %v1155 = vadd.f32 0.0, %v1154
        %1156 = vmatprep.mubr.f32.mxu0 0.0
        %1157 = vmatmul.mubr.f32.gmra.mrb[0].mxu0 %v1051
        %v1158 = vpop.f32.mrb[0].mxu0
        %v1159 = vadd.f32 0.0, %v1158
        %v1160 = vpop.f32.mrb[0].mxu0
        %v1161 = vadd.f32 0.0, %v1160
        %1162 = vmatprep.mubr.f32.mxu0 0.0
        %1163 = vmatmul.mubr.f32.gmra.mrb[0].mxu0 %v1052
        %v1164 = vpop.f32.mrb[0].mxu0
        %v1165 = vadd.f32 0.0, %v1164
        %v1166 = vpop.f32.mrb[0].mxu0
        %v1167 = vadd.f32 0.0, %v1166
        %1168 = vmatprep.mubr.f32.mxu0 0.0
        %1169 = vmatmul.mubr.f32.gmra.mrb[0].mxu0 %v1053
        %v1170 = vpop.f32.mrb[0].mxu0
        %v1171 = vadd.f32 0.0, %v1170
        %v1172 = vpop.f32.mrb[0].mxu0
        %v1173 = vadd.f32 0.0, %v1172
        %1174 = vmatprep.mubr.f32.mxu0 0.0
        %1175 = vmatmul.mubr.f32.gmra.mrb[0].mxu0 %v1054
        %v1176 = vpop.f32.mrb[0].mxu0
        %v1177 = vadd.f32 0.0, %v1176
        %v1178 = vpop.f32.mrb[0].mxu0
        %v1179 = vadd.f32 0.0, %v1178
        %1180 = vmatprep.mubr.f32.mxu0 0.0
        %1181 = vmatmul.mubr.f32.gmra.mrb[0].mxu0 %v1055
        %v1182 = vpop.f32.mrb[0].mxu0
        %v1183 = vadd.f32 0.0, %v1182
        %v1184 = vpop.f32.mrb[0].mxu0
        %v1185 = vadd.f32 0.0, %v1184
        %1186 = vmatprep.mubr.f32.mxu0 0.0
        %1187 = vmatmul.mubr.f32.gmra.mrb[0].mxu0 %v1056
        %v1188 = vpop.f32.mrb[0].mxu0
        %v1189 = vadd.f32 0.0, %v1188
        %v1190 = vpop.f32.mrb[0].mxu0
        %v1191 = vadd.f32 0.0, %v1190
        %1192 = vmatprep.mubr.f32.mxu0 0.0
        %1193 = vmatmul.mubr.f32.gmra.mrb[0].mxu0 %v1057
        %v1194 = vpop.f32.mrb[0].mxu0
        %v1195 = vadd.f32 0.0, %v1194
        %v1196 = vpop.f32.mrb[0].mxu0
        %v1197 = vadd.f32 0.0, %v1196
        %1198 = vmatprep.mubr.f32.mxu0 0.0
        %1199 = vmatmul.mubr.f32.gmra.mrb[0].mxu0 %v1058
        %v1200 = vpop.f32.mrb[0].mxu0
        %v1201 = vadd.f32 0.0, %v1200
        %v1202 = vpop.f32.mrb[0].mxu0
        %v1203 = vadd.f32 0.0, %v1202
        %1204 = vmatprep.mubr.f32.mxu0 0.0
        %1205 = vmatmul.mubr.f32.gmra.mrb[0].mxu0 %v1059
        %v1206 = vpop.f32.mrb[0].mxu0
        %v1207 = vadd.f32 0.0, %v1206
        %v1208 = vpop.f32.mrb[0].mxu0
        %v1209 = vadd.f32 0.0, %v1208
        %1210 = vmatprep.mubr.f32.mxu0 0.0
        %1211 = vmatmul.mubr.f32.gmra.mrb[0].mxu0 %v1060
        %v1212 = vpop.f32.mrb[0].mxu0
        %v1213 = vadd.f32 0.0, %v1212
        %v1214 = vpop.f32.mrb[0].mxu0
        %v1215 = vadd.f32 0.0, %v1214
        %1216 = vmatprep.mubr.f32.mxu0 0.0
        %1217 = vmatmul.mubr.f32.gmra.mrb[0].mxu0 %v1061
        %v1218 = vpop.f32.mrb[0].mxu0
        %v1219 = vadd.f32 0.0, %v1218
        %v1220 = vpop.f32.mrb[0].mxu0
        %v1221 = vadd.f32 0.0, %v1220
        %1222 = vdwg.mxu0
        %1223 = vmatprep.subr.mxu0 %v1014
        %1224 = vmatpush1.msra.mxu0 %v998
        %1225 = vmatprep.subr.mxu0 %v1015
        %1226 = vmatpush1.msra.mxu0 %v999
        %1227 = vmatprep.subr.mxu0 %v1016
        %1228 = vmatpush1.msra.mxu0 %v1000
        %1229 = vmatprep.subr.mxu0 %v1017
        %1230 = vmatpush1.msra.mxu0 %v1001
        %1231 = vmatprep.subr.mxu0 %v1018
        %1232 = vmatpush1.msra.mxu0 %v1002
        %1233 = vmatprep.subr.mxu0 %v1019
        %1234 = vmatpush1.msra.mxu0 %v1003
        %1235 = vmatprep.subr.mxu0 %v1020
        %1236 = vmatpush1.msra.mxu0 %v1004
        %1237 = vmatprep.subr.mxu0 %v1021
        %1238 = vmatpush1.msra.mxu0 %v1005
        %1239 = vmatprep.subr.mxu0 %v1022
        %1240 = vmatpush1.msra.mxu0 %v1006
        %1241 = vmatprep.subr.mxu0 %v1023
        %1242 = vmatpush1.msra.mxu0 %v1007
        %1243 = vmatprep.subr.mxu0 %v1024
        %1244 = vmatpush1.msra.mxu0 %v1008
        %1245 = vmatprep.subr.mxu0 %v1025
        %1246 = vmatpush1.msra.mxu0 %v1009
        %1247 = vmatprep.subr.mxu0 %v1026
        %1248 = vmatpush1.msra.mxu0 %v1010
        %1249 = vmatprep.subr.mxu0 %v1027
        %1250 = vmatpush1.msra.mxu0 %v1011
        %1251 = vmatprep.subr.mxu0 %v1028
        %1252 = vmatpush1.msra.mxu0 %v1012
        %1253 = vmatprep.subr.mxu0 %v1029
        %1254 = vmatpush1.msra.mxu0 %v1013
        %1255 = vmatprep.subr.mxu0 0.0
        %1256 = vmatpush1.msra.mxu0 0.0
        %1257 = vmatprep.subr.mxu0 0.0
        %1258 = vmatpush1.msra.mxu0 0.0
        %1259 = vmatprep.subr.mxu0 0.0
        %1260 = vmatpush1.msra.mxu0 0.0
        %1261 = vmatprep.subr.mxu0 0.0
        %1262 = vmatpush1.msra.mxu0 0.0
        %1263 = vmatprep.subr.mxu0 0.0
        %1264 = vmatpush1.msra.mxu0 0.0
        %1265 = vmatprep.subr.mxu0 0.0
        %1266 = vmatpush1.msra.mxu0 0.0
        %1267 = vmatprep.subr.mxu0 0.0
        %1268 = vmatpush1.msra.mxu0 0.0
        %1269 = vmatprep.subr.mxu0 0.0
        %1270 = vmatpush1.msra.mxu0 0.0
        %1271 = vmatprep.subr.mxu0 0.0
        %1272 = vmatpush1.msra.mxu0 0.0
        %1273 = vmatprep.subr.mxu0 0.0
        %1274 = vmatpush1.msra.mxu0 0.0
        %1275 = vmatprep.subr.mxu0 0.0
        %1276 = vmatpush1.msra.mxu0 0.0
        %1277 = vmatprep.subr.mxu0 0.0
        %1278 = vmatpush1.msra.mxu0 0.0
        %1279 = vmatprep.subr.mxu0 0.0
        %1280 = vmatpush1.msra.mxu0 0.0
        %1281 = vmatprep.subr.mxu0 0.0
        %1282 = vmatpush1.msra.mxu0 0.0
        %1283 = vmatprep.subr.mxu0 0.0
        %1284 = vmatpush1.msra.mxu0 0.0
        %1285 = vmatprep.subr.mxu0 0.0
        %1286 = vmatpush1.msra.mxu0 0.0
        %1287 = vmatprep.mubr.f32.mxu0 0.0
        %1288 = vmatmul.mubr.f32.gmra.mrb[0].mxu0 %v1046
        %v1289 = vpop.f32.mrb[0].mxu0
        %v1290 = vadd.f32 0.0, %v1289
        %v1291 = vpop.f32.mrb[0].mxu0
        %v1292 = vadd.f32 0.0, %v1291
        %1293 = vmatprep.mubr.f32.mxu0 0.0
        %1294 = vmatmul.mubr.f32.gmra.mrb[0].mxu0 %v1047
        %v1295 = vpop.f32.mrb[0].mxu0
        %v1296 = vadd.f32 0.0, %v1295
        %v1297 = vpop.f32.mrb[0].mxu0
        %v1298 = vadd.f32 0.0, %v1297
        %1299 = vmatprep.mubr.f32.mxu0 0.0
        %1300 = vmatmul.mubr.f32.gmra.mrb[0].mxu0 %v1048
        %v1301 = vpop.f32.mrb[0].mxu0
        %v1302 = vadd.f32 0.0, %v1301
        %v1303 = vpop.f32.mrb[0].mxu0
        %v1304 = vadd.f32 0.0, %v1303
        %1305 = vmatprep.mubr.f32.mxu0 0.0
        %1306 = vmatmul.mubr.f32.gmra.mrb[0].mxu0 %v1049
        %v1307 = vpop.f32.mrb[0].mxu0
        %v1308 = vadd.f32 0.0, %v1307
        %v1309 = vpop.f32.mrb[0].mxu0
        %v1310 = vadd.f32 0.0, %v1309
        %1311 = vmatprep.mubr.f32.mxu0 0.0
        %1312 = vmatmul.mubr.f32.gmra.mrb[0].mxu0 %v1050
        %v1313 = vpop.f32.mrb[0].mxu0
        %v1314 = vadd.f32 0.0, %v1313
        %v1315 = vpop.f32.mrb[0].mxu0
        %v1316 = vadd.f32 0.0, %v1315
        %1317 = vmatprep.mubr.f32.mxu0 0.0
        %1318 = vmatmul.mubr.f32.gmra.mrb[0].mxu0 %v1051
        %v1319 = vpop.f32.mrb[0].mxu0
        %v1320 = vadd.f32 0.0, %v1319
        %v1321 = vpop.f32.mrb[0].mxu0
        %v1322 = vadd.f32 0.0, %v1321
        %1323 = vmatprep.mubr.f32.mxu0 0.0
        %1324 = vmatmul.mubr.f32.gmra.mrb[0].mxu0 %v1052
        %v1325 = vpop.f32.mrb[0].mxu0
        %v1326 = vadd.f32 0.0, %v1325
        %v1327 = vpop.f32.mrb[0].mxu0
        %v1328 = vadd.f32 0.0, %v1327
        %1329 = vmatprep.mubr.f32.mxu0 0.0
        %1330 = vmatmul.mubr.f32.gmra.mrb[0].mxu0 %v1053
        %v1331 = vpop.f32.mrb[0].mxu0
        %v1332 = vadd.f32 0.0, %v1331
        %v1333 = vpop.f32.mrb[0].mxu0
        %v1334 = vadd.f32 0.0, %v1333
        %1335 = vmatprep.mubr.f32.mxu0 0.0
        %1336 = vmatmul.mubr.f32.gmra.mrb[0].mxu0 %v1054
        %v1337 = vpop.f32.mrb[0].mxu0
        %v1338 = vadd.f32 0.0, %v1337
        %v1339 = vpop.f32.mrb[0].mxu0
        %v1340 = vadd.f32 0.0, %v1339
        %1341 = vmatprep.mubr.f32.mxu0 0.0
        %1342 = vmatmul.mubr.f32.gmra.mrb[0].mxu0 %v1055
        %v1343 = vpop.f32.mrb[0].mxu0
        %v1344 = vadd.f32 0.0, %v1343
        %v1345 = vpop.f32.mrb[0].mxu0
        %v1346 = vadd.f32 0.0, %v1345
        %1347 = vmatprep.mubr.f32.mxu0 0.0
        %1348 = vmatmul.mubr.f32.gmra.mrb[0].mxu0 %v1056
        %v1349 = vpop.f32.mrb[0].mxu0
        %v1350 = vadd.f32 0.0, %v1349
        %v1351 = vpop.f32.mrb[0].mxu0
        %v1352 = vadd.f32 0.0, %v1351
        %1353 = vmatprep.mubr.f32.mxu0 0.0
        %1354 = vmatmul.mubr.f32.gmra.mrb[0].mxu0 %v1057
        %v1355 = vpop.f32.mrb[0].mxu0
        %v1356 = vadd.f32 0.0, %v1355
        %v1357 = vpop.f32.mrb[0].mxu0
        %v1358 = vadd.f32 0.0, %v1357
        %1359 = vmatprep.mubr.f32.mxu0 0.0
        %1360 = vmatmul.mubr.f32.gmra.mrb[0].mxu0 %v1058
        %v1361 = vpop.f32.mrb[0].mxu0
        %v1362 = vadd.f32 0.0, %v1361
        %v1363 = vpop.f32.mrb[0].mxu0
        %v1364 = vadd.f32 0.0, %v1363
        %1365 = vmatprep.mubr.f32.mxu0 0.0
        %1366 = vmatmul.mubr.f32.gmra.mrb[0].mxu0 %v1059
        %v1367 = vpop.f32.mrb[0].mxu0
        %v1368 = vadd.f32 0.0, %v1367
        %v1369 = vpop.f32.mrb[0].mxu0
        %v1370 = vadd.f32 0.0, %v1369
        %1371 = vmatprep.mubr.f32.mxu0 0.0
        %1372 = vmatmul.mubr.f32.gmra.mrb[0].mxu0 %v1060
        %v1373 = vpop.f32.mrb[0].mxu0
        %v1374 = vadd.f32 0.0, %v1373
        %v1375 = vpop.f32.mrb[0].mxu0
        %v1376 = vadd.f32 0.0, %v1375
        %1377 = vmatprep.mubr.f32.mxu0 0.0
        %1378 = vmatmul.mubr.f32.gmra.mrb[0].mxu0 %v1061
        %v1379 = vpop.f32.mrb[0].mxu0
        %v1380 = vadd.f32 0.0, %v1379
        %v1381 = vpop.f32.mrb[0].mxu0
        %v1382 = vadd.f32 0.0, %v1381
        %1383 = vdwg.mxu0
        %1384 = vmatprep.subr.mxu0 0.0
        %1385 = vmatpush1.msra.mxu0 %v1030
        %1386 = vmatprep.subr.mxu0 0.0
        %1387 = vmatpush1.msra.mxu0 %v1031
        %1388 = vmatprep.subr.mxu0 0.0
        %1389 = vmatpush1.msra.mxu0 %v1032
        %1390 = vmatprep.subr.mxu0 0.0
        %1391 = vmatpush1.msra.mxu0 %v1033
        %1392 = vmatprep.subr.mxu0 0.0
        %1393 = vmatpush1.msra.mxu0 %v1034
        %1394 = vmatprep.subr.mxu0 0.0
        %1395 = vmatpush1.msra.mxu0 %v1035
        %1396 = vmatprep.subr.mxu0 0.0
        %1397 = vmatpush1.msra.mxu0 %v1036
        %1398 = vmatprep.subr.mxu0 0.0
        %1399 = vmatpush1.msra.mxu0 %v1037
        %1400 = vmatprep.subr.mxu0 0.0
        %1401 = vmatpush1.msra.mxu0 %v1038
        %1402 = vmatprep.subr.mxu0 0.0
        %1403 = vmatpush1.msra.mxu0 %v1039
        %1404 = vmatprep.subr.mxu0 0.0
        %1405 = vmatpush1.msra.mxu0 %v1040
        %1406 = vmatprep.subr.mxu0 0.0
        %1407 = vmatpush1.msra.mxu0 %v1041
        %1408 = vmatprep.subr.mxu0 0.0
        %1409 = vmatpush1.msra.mxu0 %v1042
        %1410 = vmatprep.subr.mxu0 0.0
        %1411 = vmatpush1.msra.mxu0 %v1043
        %1412 = vmatprep.subr.mxu0 0.0
        %1413 = vmatpush1.msra.mxu0 %v1044
        %1414 = vmatprep.subr.mxu0 0.0
        %1415 = vmatpush1.msra.mxu0 %v1045
        %1416 = vmatprep.subr.mxu0 0.0
        %1417 = vmatpush1.msra.mxu0 0.0
        %1418 = vmatprep.subr.mxu0 0.0
        %1419 = vmatpush1.msra.mxu0 0.0
        %1420 = vmatprep.subr.mxu0 0.0
        %1421 = vmatpush1.msra.mxu0 0.0
        %1422 = vmatprep.subr.mxu0 0.0
        %1423 = vmatpush1.msra.mxu0 0.0
        %1424 = vmatprep.subr.mxu0 0.0
        %1425 = vmatpush1.msra.mxu0 0.0
        %1426 = vmatprep.subr.mxu0 0.0
        %1427 = vmatpush1.msra.mxu0 0.0
        %1428 = vmatprep.subr.mxu0 0.0
        %1429 = vmatpush1.msra.mxu0 0.0
        %1430 = vmatprep.subr.mxu0 0.0
        %1431 = vmatpush1.msra.mxu0 0.0
        %1432 = vmatprep.subr.mxu0 0.0
        %1433 = vmatpush1.msra.mxu0 0.0
        %1434 = vmatprep.subr.mxu0 0.0
        %1435 = vmatpush1.msra.mxu0 0.0
        %1436 = vmatprep.subr.mxu0 0.0
        %1437 = vmatpush1.msra.mxu0 0.0
        %1438 = vmatprep.subr.mxu0 0.0
        %1439 = vmatpush1.msra.mxu0 0.0
        %1440 = vmatprep.subr.mxu0 0.0
        %1441 = vmatpush1.msra.mxu0 0.0
        %1442 = vmatprep.subr.mxu0 0.0
        %1443 = vmatpush1.msra.mxu0 0.0
        %1444 = vmatprep.subr.mxu0 0.0
        %1445 = vmatpush1.msra.mxu0 0.0
        %1446 = vmatprep.subr.mxu0 0.0
        %1447 = vmatpush1.msra.mxu0 0.0
        %1448 = vmatprep.mubr.f32.mxu0 0.0
        %1449 = vmatmul.mubr.f32.gmra.mrb[0].mxu0 %v1046
        %v1450 = vpop.f32.mrb[0].mxu0
        %v1451 = vadd.f32 0.0, %v1450
        %v1452 = vpop.f32.mrb[0].mxu0
        %1453 = vmatprep.mubr.f32.mxu0 0.0
        %1454 = vmatmul.mubr.f32.gmra.mrb[0].mxu0 %v1047
        %v1455 = vpop.f32.mrb[0].mxu0
        %v1456 = vadd.f32 0.0, %v1455
        %v1457 = vpop.f32.mrb[0].mxu0
        %1458 = vmatprep.mubr.f32.mxu0 0.0
        %1459 = vmatmul.mubr.f32.gmra.mrb[0].mxu0 %v1048
        %v1460 = vpop.f32.mrb[0].mxu0
        %v1461 = vadd.f32 0.0, %v1460
        %v1462 = vpop.f32.mrb[0].mxu0
        %1463 = vmatprep.mubr.f32.mxu0 0.0
        %1464 = vmatmul.mubr.f32.gmra.mrb[0].mxu0 %v1049
        %v1465 = vpop.f32.mrb[0].mxu0
        %v1466 = vadd.f32 0.0, %v1465
        %v1467 = vpop.f32.mrb[0].mxu0
        %1468 = vmatprep.mubr.f32.mxu0 0.0
        %1469 = vmatmul.mubr.f32.gmra.mrb[0].mxu0 %v1050
        %v1470 = vpop.f32.mrb[0].mxu0
        %v1471 = vadd.f32 0.0, %v1470
        %v1472 = vpop.f32.mrb[0].mxu0
        %1473 = vmatprep.mubr.f32.mxu0 0.0
        %1474 = vmatmul.mubr.f32.gmra.mrb[0].mxu0 %v1051
        %v1475 = vpop.f32.mrb[0].mxu0
        %v1476 = vadd.f32 0.0, %v1475
        %v1477 = vpop.f32.mrb[0].mxu0
        %1478 = vmatprep.mubr.f32.mxu0 0.0
        %1479 = vmatmul.mubr.f32.gmra.mrb[0].mxu0 %v1052
        %v1480 = vpop.f32.mrb[0].mxu0
        %v1481 = vadd.f32 0.0, %v1480
        %v1482 = vpop.f32.mrb[0].mxu0
        %1483 = vmatprep.mubr.f32.mxu0 0.0
        %1484 = vmatmul.mubr.f32.gmra.mrb[0].mxu0 %v1053
        %v1485 = vpop.f32.mrb[0].mxu0
        %v1486 = vadd.f32 0.0, %v1485
        %v1487 = vpop.f32.mrb[0].mxu0
        %1488 = vmatprep.mubr.f32.mxu0 0.0
        %1489 = vmatmul.mubr.f32.gmra.mrb[0].mxu0 %v1054
        %v1490 = vpop.f32.mrb[0].mxu0
        %v1491 = vadd.f32 0.0, %v1490
        %v1492 = vpop.f32.mrb[0].mxu0
        %1493 = vmatprep.mubr.f32.mxu0 0.0
        %1494 = vmatmul.mubr.f32.gmra.mrb[0].mxu0 %v1055
        %v1495 = vpop.f32.mrb[0].mxu0
        %v1496 = vadd.f32 0.0, %v1495
        %v1497 = vpop.f32.mrb[0].mxu0
        %1498 = vmatprep.mubr.f32.mxu0 0.0
        %1499 = vmatmul.mubr.f32.gmra.mrb[0].mxu0 %v1056
        %v1500 = vpop.f32.mrb[0].mxu0
        %v1501 = vadd.f32 0.0, %v1500
        %v1502 = vpop.f32.mrb[0].mxu0
        %1503 = vmatprep.mubr.f32.mxu0 0.0
        %1504 = vmatmul.mubr.f32.gmra.mrb[0].mxu0 %v1057
        %v1505 = vpop.f32.mrb[0].mxu0
        %v1506 = vadd.f32 0.0, %v1505
        %v1507 = vpop.f32.mrb[0].mxu0
        %1508 = vmatprep.mubr.f32.mxu0 0.0
        %1509 = vmatmul.mubr.f32.gmra.mrb[0].mxu0 %v1058
        %v1510 = vpop.f32.mrb[0].mxu0
        %v1511 = vadd.f32 0.0, %v1510
        %v1512 = vpop.f32.mrb[0].mxu0
        %1513 = vmatprep.mubr.f32.mxu0 0.0
        %1514 = vmatmul.mubr.f32.gmra.mrb[0].mxu0 %v1059
        %v1515 = vpop.f32.mrb[0].mxu0
        %v1516 = vadd.f32 0.0, %v1515
        %v1517 = vpop.f32.mrb[0].mxu0
        %1518 = vmatprep.mubr.f32.mxu0 0.0
        %1519 = vmatmul.mubr.f32.gmra.mrb[0].mxu0 %v1060
        %v1520 = vpop.f32.mrb[0].mxu0
        %v1521 = vadd.f32 0.0, %v1520
        %v1522 = vpop.f32.mrb[0].mxu0
        %1523 = vmatprep.mubr.f32.mxu0 0.0
        %1524 = vmatmul.mubr.f32.gmra.mrb[0].mxu0 %v1061
        %v1525 = vpop.f32.mrb[0].mxu0
        %v1526 = vadd.f32 0.0, %v1525
        %v1527 = vpop.f32.mrb[0].mxu0
        %1528 = vdwg.mxu0
        %v1529 = vld [vmem:[%s7] sm:$0xff]
        %v1530 = vld [vmem:[%s7 + $0x8] sm:$0xff]
        %v1531 = vld [vmem:[%s7 + $0x10] sm:$0xff]
        %v1532 = vld [vmem:[%s7 + $0x18] sm:$0xff]
        %v1533 = vld [vmem:[%s7 + $0x20] sm:$0xff]
        %v1534 = vld [vmem:[%s7 + $0x28] sm:$0xff]
        %v1535 = vld [vmem:[%s7 + $0x30] sm:$0xff]
        %v1536 = vld [vmem:[%s7 + $0x38] sm:$0xff]
        %v1537 = vld [vmem:[%s7 + $0x40] sm:$0xff]
        %v1538 = vld [vmem:[%s7 + $0x48] sm:$0xff]
        %v1539 = vld [vmem:[%s7 + $0x50] sm:$0xff]
        %v1540 = vld [vmem:[%s7 + $0x58] sm:$0xff]
        %v1541 = vld [vmem:[%s7 + $0x60] sm:$0xff]
        %v1542 = vld [vmem:[%s7 + $0x68] sm:$0xff]
        %v1543 = vld [vmem:[%s7 + $0x70] sm:$0xff]
        %v1544 = vld [vmem:[%s7 + $0x78] sm:$0xff]
        %1545 = vmatprep.subr.mxu0 0.0
        %1546 = vmatpush1.msra.mxu0 %v1529
        %1547 = vmatprep.subr.mxu0 0.0
        %1548 = vmatpush1.msra.mxu0 %v1530
        %1549 = vmatprep.subr.mxu0 0.0
        %1550 = vmatpush1.msra.mxu0 %v1531
        %1551 = vmatprep.subr.mxu0 0.0
        %1552 = vmatpush1.msra.mxu0 %v1532
        %1553 = vmatprep.subr.mxu0 0.0
        %1554 = vmatpush1.msra.mxu0 %v1533
        %1555 = vmatprep.subr.mxu0 0.0
        %1556 = vmatpush1.msra.mxu0 %v1534
        %1557 = vmatprep.subr.mxu0 0.0
        %1558 = vmatpush1.msra.mxu0 %v1535
        %1559 = vmatprep.subr.mxu0 0.0
        %1560 = vmatpush1.msra.mxu0 %v1536
        %1561 = vmatprep.subr.mxu0 0.0
        %1562 = vmatpush1.msra.mxu0 %v1537
        %1563 = vmatprep.subr.mxu0 0.0
        %1564 = vmatpush1.msra.mxu0 %v1538
        %1565 = vmatprep.subr.mxu0 0.0
        %1566 = vmatpush1.msra.mxu0 %v1539
        %1567 = vmatprep.subr.mxu0 0.0
        %1568 = vmatpush1.msra.mxu0 %v1540
        %1569 = vmatprep.subr.mxu0 0.0
        %1570 = vmatpush1.msra.mxu0 %v1541
        %1571 = vmatprep.subr.mxu0 0.0
        %1572 = vmatpush1.msra.mxu0 %v1542
        %1573 = vmatprep.subr.mxu0 0.0
        %1574 = vmatpush1.msra.mxu0 %v1543
        %1575 = vmatprep.subr.mxu0 0.0
        %1576 = vmatpush1.msra.mxu0 %v1544
        %1577 = vmatprep.subr.mxu0 0.0
        %1578 = vmatpush1.msra.mxu0 0.0
        %1579 = vmatprep.subr.mxu0 0.0
        %1580 = vmatpush1.msra.mxu0 0.0
        %1581 = vmatprep.subr.mxu0 0.0
        %1582 = vmatpush1.msra.mxu0 0.0
        %1583 = vmatprep.subr.mxu0 0.0
        %1584 = vmatpush1.msra.mxu0 0.0
        %1585 = vmatprep.subr.mxu0 0.0
        %1586 = vmatpush1.msra.mxu0 0.0
        %1587 = vmatprep.subr.mxu0 0.0
        %1588 = vmatpush1.msra.mxu0 0.0
        %1589 = vmatprep.subr.mxu0 0.0
        %1590 = vmatpush1.msra.mxu0 0.0
        %1591 = vmatprep.subr.mxu0 0.0
        %1592 = vmatpush1.msra.mxu0 0.0
        %1593 = vmatprep.subr.mxu0 0.0
        %1594 = vmatpush1.msra.mxu0 0.0
        %1595 = vmatprep.subr.mxu0 0.0
        %1596 = vmatpush1.msra.mxu0 0.0
        %1597 = vmatprep.subr.mxu0 0.0
        %1598 = vmatpush1.msra.mxu0 0.0
        %1599 = vmatprep.subr.mxu0 0.0
        %1600 = vmatpush1.msra.mxu0 0.0
        %1601 = vmatprep.subr.mxu0 0.0
        %1602 = vmatpush1.msra.mxu0 0.0
        %1603 = vmatprep.subr.mxu0 0.0
        %1604 = vmatpush1.msra.mxu0 0.0
        %1605 = vmatprep.subr.mxu0 0.0
        %1606 = vmatpush1.msra.mxu0 0.0
        %1607 = vmatprep.subr.mxu0 0.0
        %1608 = vmatpush1.msra.mxu0 0.0
        %1609 = vmatprep.mubr.f32.mxu0 0.0
        %1610 = vmatmul.mubr.f32.gmra.mrb[0].mxu0 %v1129
        %v1611 = vpop.f32.mrb[0].mxu0
        %v1612 = vadd.f32 0.0, %v1611
        %v1613 = vpop.f32.mrb[0].mxu0
        %1614 = vmatprep.mubr.f32.mxu0 0.0
        %1615 = vmatmul.mubr.f32.gmra.mrb[0].mxu0 %v1135
        %v1616 = vpop.f32.mrb[0].mxu0
        %v1617 = vadd.f32 0.0, %v1616
        %v1618 = vpop.f32.mrb[0].mxu0
        %1619 = vmatprep.mubr.f32.mxu0 0.0
        %1620 = vmatmul.mubr.f32.gmra.mrb[0].mxu0 %v1141
        %v1621 = vpop.f32.mrb[0].mxu0
        %v1622 = vadd.f32 0.0, %v1621
        %v1623 = vpop.f32.mrb[0].mxu0
        %1624 = vmatprep.mubr.f32.mxu0 0.0
        %1625 = vmatmul.mubr.f32.gmra.mrb[0].mxu0 %v1147
        %v1626 = vpop.f32.mrb[0].mxu0
        %v1627 = vadd.f32 0.0, %v1626
        %v1628 = vpop.f32.mrb[0].mxu0
        %1629 = vmatprep.mubr.f32.mxu0 0.0
        %1630 = vmatmul.mubr.f32.gmra.mrb[0].mxu0 %v1153
        %v1631 = vpop.f32.mrb[0].mxu0
        %v1632 = vadd.f32 0.0, %v1631
        %v1633 = vpop.f32.mrb[0].mxu0
        %1634 = vmatprep.mubr.f32.mxu0 0.0
        %1635 = vmatmul.mubr.f32.gmra.mrb[0].mxu0 %v1159
        %v1636 = vpop.f32.mrb[0].mxu0
        %v1637 = vadd.f32 0.0, %v1636
        %v1638 = vpop.f32.mrb[0].mxu0
        %1639 = vmatprep.mubr.f32.mxu0 0.0
        %1640 = vmatmul.mubr.f32.gmra.mrb[0].mxu0 %v1165
        %v1641 = vpop.f32.mrb[0].mxu0
        %v1642 = vadd.f32 0.0, %v1641
        %v1643 = vpop.f32.mrb[0].mxu0
        %1644 = vmatprep.mubr.f32.mxu0 0.0
        %1645 = vmatmul.mubr.f32.gmra.mrb[0].mxu0 %v1171
        %v1646 = vpop.f32.mrb[0].mxu0
        %v1647 = vadd.f32 0.0, %v1646
        %v1648 = vpop.f32.mrb[0].mxu0
        %1649 = vmatprep.mubr.f32.mxu0 0.0
        %1650 = vmatmul.mubr.f32.gmra.mrb[0].mxu0 %v1177
        %v1651 = vpop.f32.mrb[0].mxu0
        %v1652 = vadd.f32 0.0, %v1651
        %v1653 = vpop.f32.mrb[0].mxu0
        %1654 = vmatprep.mubr.f32.mxu0 0.0
        %1655 = vmatmul.mubr.f32.gmra.mrb[0].mxu0 %v1183
        %v1656 = vpop.f32.mrb[0].mxu0
        %v1657 = vadd.f32 0.0, %v1656
        %v1658 = vpop.f32.mrb[0].mxu0
        %1659 = vmatprep.mubr.f32.mxu0 0.0
        %1660 = vmatmul.mubr.f32.gmra.mrb[0].mxu0 %v1189
        %v1661 = vpop.f32.mrb[0].mxu0
        %v1662 = vadd.f32 0.0, %v1661
        %v1663 = vpop.f32.mrb[0].mxu0
        %1664 = vmatprep.mubr.f32.mxu0 0.0
        %1665 = vmatmul.mubr.f32.gmra.mrb[0].mxu0 %v1195
        %v1666 = vpop.f32.mrb[0].mxu0
        %v1667 = vadd.f32 0.0, %v1666
        %v1668 = vpop.f32.mrb[0].mxu0
        %1669 = vmatprep.mubr.f32.mxu0 0.0
        %1670 = vmatmul.mubr.f32.gmra.mrb[0].mxu0 %v1201
        %v1671 = vpop.f32.mrb[0].mxu0
        %v1672 = vadd.f32 0.0, %v1671
        %v1673 = vpop.f32.mrb[0].mxu0
        %1674 = vmatprep.mubr.f32.mxu0 0.0
        %1675 = vmatmul.mubr.f32.gmra.mrb[0].mxu0 %v1207
        %v1676 = vpop.f32.mrb[0].mxu0
        %v1677 = vadd.f32 0.0, %v1676
        %v1678 = vpop.f32.mrb[0].mxu0
        %1679 = vmatprep.mubr.f32.mxu0 0.0
        %1680 = vmatmul.mubr.f32.gmra.mrb[0].mxu0 %v1213
        %v1681 = vpop.f32.mrb[0].mxu0
        %v1682 = vadd.f32 0.0, %v1681
        %v1683 = vpop.f32.mrb[0].mxu0
        %1684 = vmatprep.mubr.f32.mxu0 0.0
        %1685 = vmatmul.mubr.f32.gmra.mrb[0].mxu0 %v1219
        %v1686 = vpop.f32.mrb[0].mxu0
        %v1687 = vadd.f32 0.0, %v1686
        %v1688 = vpop.f32.mrb[0].mxu0
        %1689 = vmatprep.mubr.f32.mxu0 0.0
        %1690 = vmatmul.mubr.f32.gmra.mrb[0].mxu0 %v1131
        %v1691 = vpop.f32.mrb[0].mxu0
        %v1692 = vadd.f32 0.0, %v1691
        %v1693 = vpop.f32.mrb[0].mxu0
        %1694 = vmatprep.mubr.f32.mxu0 0.0
        %1695 = vmatmul.mubr.f32.gmra.mrb[0].mxu0 %v1137
        %v1696 = vpop.f32.mrb[0].mxu0
        %v1697 = vadd.f32 0.0, %v1696
        %v1698 = vpop.f32.mrb[0].mxu0
        %1699 = vmatprep.mubr.f32.mxu0 0.0
        %1700 = vmatmul.mubr.f32.gmra.mrb[0].mxu0 %v1143
        %v1701 = vpop.f32.mrb[0].mxu0
        %v1702 = vadd.f32 0.0, %v1701
        %v1703 = vpop.f32.mrb[0].mxu0
        %1704 = vmatprep.mubr.f32.mxu0 0.0
        %1705 = vmatmul.mubr.f32.gmra.mrb[0].mxu0 %v1149
        %v1706 = vpop.f32.mrb[0].mxu0
        %v1707 = vadd.f32 0.0, %v1706
        %v1708 = vpop.f32.mrb[0].mxu0
        %1709 = vmatprep.mubr.f32.mxu0 0.0
        %1710 = vmatmul.mubr.f32.gmra.mrb[0].mxu0 %v1155
        %v1711 = vpop.f32.mrb[0].mxu0
        %v1712 = vadd.f32 0.0, %v1711
        %v1713 = vpop.f32.mrb[0].mxu0
        %1714 = vmatprep.mubr.f32.mxu0 0.0
        %1715 = vmatmul.mubr.f32.gmra.mrb[0].mxu0 %v1161
        %v1716 = vpop.f32.mrb[0].mxu0
        %v1717 = vadd.f32 0.0, %v1716
        %v1718 = vpop.f32.mrb[0].mxu0
        %1719 = vmatprep.mubr.f32.mxu0 0.0
        %1720 = vmatmul.mubr.f32.gmra.mrb[0].mxu0 %v1167
        %v1721 = vpop.f32.mrb[0].mxu0
        %v1722 = vadd.f32 0.0, %v1721
        %v1723 = vpop.f32.mrb[0].mxu0
        %1724 = vmatprep.mubr.f32.mxu0 0.0
        %1725 = vmatmul.mubr.f32.gmra.mrb[0].mxu0 %v1173
        %v1726 = vpop.f32.mrb[0].mxu0
        %v1727 = vadd.f32 0.0, %v1726
        %v1728 = vpop.f32.mrb[0].mxu0
        %1729 = vmatprep.mubr.f32.mxu0 0.0
        %1730 = vmatmul.mubr.f32.gmra.mrb[0].mxu0 %v1179
        %v1731 = vpop.f32.mrb[0].mxu0
        %v1732 = vadd.f32 0.0, %v1731
        %v1733 = vpop.f32.mrb[0].mxu0
        %1734 = vmatprep.mubr.f32.mxu0 0.0
        %1735 = vmatmul.mubr.f32.gmra.mrb[0].mxu0 %v1185
        %v1736 = vpop.f32.mrb[0].mxu0
        %v1737 = vadd.f32 0.0, %v1736
        %v1738 = vpop.f32.mrb[0].mxu0
        %1739 = vmatprep.mubr.f32.mxu0 0.0
        %1740 = vmatmul.mubr.f32.gmra.mrb[0].mxu0 %v1191
        %v1741 = vpop.f32.mrb[0].mxu0
        %v1742 = vadd.f32 0.0, %v1741
        %v1743 = vpop.f32.mrb[0].mxu0
        %1744 = vmatprep.mubr.f32.mxu0 0.0
        %1745 = vmatmul.mubr.f32.gmra.mrb[0].mxu0 %v1197
        %v1746 = vpop.f32.mrb[0].mxu0
        %v1747 = vadd.f32 0.0, %v1746
        %v1748 = vpop.f32.mrb[0].mxu0
        %1749 = vmatprep.mubr.f32.mxu0 0.0
        %1750 = vmatmul.mubr.f32.gmra.mrb[0].mxu0 %v1203
        %v1751 = vpop.f32.mrb[0].mxu0
        %v1752 = vadd.f32 0.0, %v1751
        %v1753 = vpop.f32.mrb[0].mxu0
        %1754 = vmatprep.mubr.f32.mxu0 0.0
        %1755 = vmatmul.mubr.f32.gmra.mrb[0].mxu0 %v1209
        %v1756 = vpop.f32.mrb[0].mxu0
        %v1757 = vadd.f32 0.0, %v1756
        %v1758 = vpop.f32.mrb[0].mxu0
        %1759 = vmatprep.mubr.f32.mxu0 0.0
        %1760 = vmatmul.mubr.f32.gmra.mrb[0].mxu0 %v1215
        %v1761 = vpop.f32.mrb[0].mxu0
        %v1762 = vadd.f32 0.0, %v1761
        %v1763 = vpop.f32.mrb[0].mxu0
        %1764 = vmatprep.mubr.f32.mxu0 0.0
        %1765 = vmatmul.mubr.f32.gmra.mrb[0].mxu0 %v1221
        %v1766 = vpop.f32.mrb[0].mxu0
        %v1767 = vadd.f32 0.0, %v1766
        %v1768 = vpop.f32.mrb[0].mxu0
        %1769 = vmatprep.mubr.f32.mxu0 0.0
        %1770 = vmatmul.mubr.f32.gmra.mrb[0].mxu0 %v1290
        %v1771 = vpop.f32.mrb[0].mxu0
        %v1772 = vadd.f32 0.0, %v1771
        %v1773 = vpop.f32.mrb[0].mxu0
        %1774 = vmatprep.mubr.f32.mxu0 0.0
        %1775 = vmatmul.mubr.f32.gmra.mrb[0].mxu0 %v1296
        %v1776 = vpop.f32.mrb[0].mxu0
        %v1777 = vadd.f32 0.0, %v1776
        %v1778 = vpop.f32.mrb[0].mxu0
        %1779 = vmatprep.mubr.f32.mxu0 0.0
        %1780 = vmatmul.mubr.f32.gmra.mrb[0].mxu0 %v1302
        %v1781 = vpop.f32.mrb[0].mxu0
        %v1782 = vadd.f32 0.0, %v1781
        %v1783 = vpop.f32.mrb[0].mxu0
        %1784 = vmatprep.mubr.f32.mxu0 0.0
        %1785 = vmatmul.mubr.f32.gmra.mrb[0].mxu0 %v1308
        %v1786 = vpop.f32.mrb[0].mxu0
        %v1787 = vadd.f32 0.0, %v1786
        %v1788 = vpop.f32.mrb[0].mxu0
        %1789 = vmatprep.mubr.f32.mxu0 0.0
        %1790 = vmatmul.mubr.f32.gmra.mrb[0].mxu0 %v1314
        %v1791 = vpop.f32.mrb[0].mxu0
        %v1792 = vadd.f32 0.0, %v1791
        %v1793 = vpop.f32.mrb[0].mxu0
        %1794 = vmatprep.mubr.f32.mxu0 0.0
        %1795 = vmatmul.mubr.f32.gmra.mrb[0].mxu0 %v1320
        %v1796 = vpop.f32.mrb[0].mxu0
        %v1797 = vadd.f32 0.0, %v1796
        %v1798 = vpop.f32.mrb[0].mxu0
        %1799 = vmatprep.mubr.f32.mxu0 0.0
        %1800 = vmatmul.mubr.f32.gmra.mrb[0].mxu0 %v1326
        %v1801 = vpop.f32.mrb[0].mxu0
        %v1802 = vadd.f32 0.0, %v1801
        %v1803 = vpop.f32.mrb[0].mxu0
        %1804 = vmatprep.mubr.f32.mxu0 0.0
        %1805 = vmatmul.mubr.f32.gmra.mrb[0].mxu0 %v1332
        %v1806 = vpop.f32.mrb[0].mxu0
        %v1807 = vadd.f32 0.0, %v1806
        %v1808 = vpop.f32.mrb[0].mxu0
        %1809 = vmatprep.mubr.f32.mxu0 0.0
        %1810 = vmatmul.mubr.f32.gmra.mrb[0].mxu0 %v1338
        %v1811 = vpop.f32.mrb[0].mxu0
        %v1812 = vadd.f32 0.0, %v1811
        %v1813 = vpop.f32.mrb[0].mxu0
        %1814 = vmatprep.mubr.f32.mxu0 0.0
        %1815 = vmatmul.mubr.f32.gmra.mrb[0].mxu0 %v1344
        %v1816 = vpop.f32.mrb[0].mxu0
        %v1817 = vadd.f32 0.0, %v1816
        %v1818 = vpop.f32.mrb[0].mxu0
        %1819 = vmatprep.mubr.f32.mxu0 0.0
        %1820 = vmatmul.mubr.f32.gmra.mrb[0].mxu0 %v1350
        %v1821 = vpop.f32.mrb[0].mxu0
        %v1822 = vadd.f32 0.0, %v1821
        %v1823 = vpop.f32.mrb[0].mxu0
        %1824 = vmatprep.mubr.f32.mxu0 0.0
        %1825 = vmatmul.mubr.f32.gmra.mrb[0].mxu0 %v1356
        %v1826 = vpop.f32.mrb[0].mxu0
        %v1827 = vadd.f32 0.0, %v1826
        %v1828 = vpop.f32.mrb[0].mxu0
        %1829 = vmatprep.mubr.f32.mxu0 0.0
        %1830 = vmatmul.mubr.f32.gmra.mrb[0].mxu0 %v1362
        %v1831 = vpop.f32.mrb[0].mxu0
        %v1832 = vadd.f32 0.0, %v1831
        %v1833 = vpop.f32.mrb[0].mxu0
        %1834 = vmatprep.mubr.f32.mxu0 0.0
        %1835 = vmatmul.mubr.f32.gmra.mrb[0].mxu0 %v1368
        %v1836 = vpop.f32.mrb[0].mxu0
        %v1837 = vadd.f32 0.0, %v1836
        %v1838 = vpop.f32.mrb[0].mxu0
        %1839 = vmatprep.mubr.f32.mxu0 0.0
        %1840 = vmatmul.mubr.f32.gmra.mrb[0].mxu0 %v1374
        %v1841 = vpop.f32.mrb[0].mxu0
        %v1842 = vadd.f32 0.0, %v1841
        %v1843 = vpop.f32.mrb[0].mxu0
        %1844 = vmatprep.mubr.f32.mxu0 0.0
        %1845 = vmatmul.mubr.f32.gmra.mrb[0].mxu0 %v1380
        %v1846 = vpop.f32.mrb[0].mxu0
        %v1847 = vadd.f32 0.0, %v1846
        %v1848 = vpop.f32.mrb[0].mxu0
        %1849 = vmatprep.mubr.f32.mxu0 0.0
        %1850 = vmatmul.mubr.f32.gmra.mrb[0].mxu0 %v1292
        %v1851 = vpop.f32.mrb[0].mxu0
        %v1852 = vadd.f32 0.0, %v1851
        %v1853 = vpop.f32.mrb[0].mxu0
        %1854 = vmatprep.mubr.f32.mxu0 0.0
        %1855 = vmatmul.mubr.f32.gmra.mrb[0].mxu0 %v1298
        %v1856 = vpop.f32.mrb[0].mxu0
        %v1857 = vadd.f32 0.0, %v1856
        %v1858 = vpop.f32.mrb[0].mxu0
        %1859 = vmatprep.mubr.f32.mxu0 0.0
        %1860 = vmatmul.mubr.f32.gmra.mrb[0].mxu0 %v1304
        %v1861 = vpop.f32.mrb[0].mxu0
        %v1862 = vadd.f32 0.0, %v1861
        %v1863 = vpop.f32.mrb[0].mxu0
        %1864 = vmatprep.mubr.f32.mxu0 0.0
        %1865 = vmatmul.mubr.f32.gmra.mrb[0].mxu0 %v1310
        %v1866 = vpop.f32.mrb[0].mxu0
        %v1867 = vadd.f32 0.0, %v1866
        %v1868 = vpop.f32.mrb[0].mxu0
        %1869 = vmatprep.mubr.f32.mxu0 0.0
        %1870 = vmatmul.mubr.f32.gmra.mrb[0].mxu0 %v1316
        %v1871 = vpop.f32.mrb[0].mxu0
        %v1872 = vadd.f32 0.0, %v1871
        %v1873 = vpop.f32.mrb[0].mxu0
        %1874 = vmatprep.mubr.f32.mxu0 0.0
        %1875 = vmatmul.mubr.f32.gmra.mrb[0].mxu0 %v1322
        %v1876 = vpop.f32.mrb[0].mxu0
        %v1877 = vadd.f32 0.0, %v1876
        %v1878 = vpop.f32.mrb[0].mxu0
        %1879 = vmatprep.mubr.f32.mxu0 0.0
        %1880 = vmatmul.mubr.f32.gmra.mrb[0].mxu0 %v1328
        %v1881 = vpop.f32.mrb[0].mxu0
        %v1882 = vadd.f32 0.0, %v1881
        %v1883 = vpop.f32.mrb[0].mxu0
        %1884 = vmatprep.mubr.f32.mxu0 0.0
        %1885 = vmatmul.mubr.f32.gmra.mrb[0].mxu0 %v1334
        %v1886 = vpop.f32.mrb[0].mxu0
        %v1887 = vadd.f32 0.0, %v1886
        %v1888 = vpop.f32.mrb[0].mxu0
        %1889 = vmatprep.mubr.f32.mxu0 0.0
        %1890 = vmatmul.mubr.f32.gmra.mrb[0].mxu0 %v1340
        %v1891 = vpop.f32.mrb[0].mxu0
        %v1892 = vadd.f32 0.0, %v1891
        %v1893 = vpop.f32.mrb[0].mxu0
        %1894 = vmatprep.mubr.f32.mxu0 0.0
        %1895 = vmatmul.mubr.f32.gmra.mrb[0].mxu0 %v1346
        %v1896 = vpop.f32.mrb[0].mxu0
        %v1897 = vadd.f32 0.0, %v1896
        %v1898 = vpop.f32.mrb[0].mxu0
        %1899 = vmatprep.mubr.f32.mxu0 0.0
        %1900 = vmatmul.mubr.f32.gmra.mrb[0].mxu0 %v1352
        %v1901 = vpop.f32.mrb[0].mxu0
        %v1902 = vadd.f32 0.0, %v1901
        %v1903 = vpop.f32.mrb[0].mxu0
        %1904 = vmatprep.mubr.f32.mxu0 0.0
        %1905 = vmatmul.mubr.f32.gmra.mrb[0].mxu0 %v1358
        %v1906 = vpop.f32.mrb[0].mxu0
        %v1907 = vadd.f32 0.0, %v1906
        %v1908 = vpop.f32.mrb[0].mxu0
        %1909 = vmatprep.mubr.f32.mxu0 0.0
        %1910 = vmatmul.mubr.f32.gmra.mrb[0].mxu0 %v1364
        %v1911 = vpop.f32.mrb[0].mxu0
        %v1912 = vadd.f32 0.0, %v1911
        %v1913 = vpop.f32.mrb[0].mxu0
        %1914 = vmatprep.mubr.f32.mxu0 0.0
        %1915 = vmatmul.mubr.f32.gmra.mrb[0].mxu0 %v1370
        %v1916 = vpop.f32.mrb[0].mxu0
        %v1917 = vadd.f32 0.0, %v1916
        %v1918 = vpop.f32.mrb[0].mxu0
        %1919 = vmatprep.mubr.f32.mxu0 0.0
        %1920 = vmatmul.mubr.f32.gmra.mrb[0].mxu0 %v1376
        %v1921 = vpop.f32.mrb[0].mxu0
        %v1922 = vadd.f32 0.0, %v1921
        %v1923 = vpop.f32.mrb[0].mxu0
        %1924 = vmatprep.mubr.f32.mxu0 0.0
        %1925 = vmatmul.mubr.f32.gmra.mrb[0].mxu0 %v1382
        %v1926 = vpop.f32.mrb[0].mxu0
        %v1927 = vadd.f32 0.0, %v1926
        %v1928 = vpop.f32.mrb[0].mxu0
        %1929 = vmatprep.mubr.f32.mxu0 0.0
        %1930 = vmatmul.mubr.f32.gmra.mrb[0].mxu0 %v1451
        %v1931 = vpop.f32.mrb[0].mxu0
        %v1932 = vadd.f32 0.0, %v1931
        %v1933 = vpop.f32.mrb[0].mxu0
        %1934 = vmatprep.mubr.f32.mxu0 0.0
        %1935 = vmatmul.mubr.f32.gmra.mrb[0].mxu0 %v1456
        %v1936 = vpop.f32.mrb[0].mxu0
        %v1937 = vadd.f32 0.0, %v1936
        %v1938 = vpop.f32.mrb[0].mxu0
        %1939 = vmatprep.mubr.f32.mxu0 0.0
        %1940 = vmatmul.mubr.f32.gmra.mrb[0].mxu0 %v1461
        %v1941 = vpop.f32.mrb[0].mxu0
        %v1942 = vadd.f32 0.0, %v1941
        %v1943 = vpop.f32.mrb[0].mxu0
        %1944 = vmatprep.mubr.f32.mxu0 0.0
        %1945 = vmatmul.mubr.f32.gmra.mrb[0].mxu0 %v1466
        %v1946 = vpop.f32.mrb[0].mxu0
        %v1947 = vadd.f32 0.0, %v1946
        %v1948 = vpop.f32.mrb[0].mxu0
        %1949 = vmatprep.mubr.f32.mxu0 0.0
        %1950 = vmatmul.mubr.f32.gmra.mrb[0].mxu0 %v1471
        %v1951 = vpop.f32.mrb[0].mxu0
        %v1952 = vadd.f32 0.0, %v1951
        %v1953 = vpop.f32.mrb[0].mxu0
        %1954 = vmatprep.mubr.f32.mxu0 0.0
        %1955 = vmatmul.mubr.f32.gmra.mrb[0].mxu0 %v1476
        %v1956 = vpop.f32.mrb[0].mxu0
        %v1957 = vadd.f32 0.0, %v1956
        %v1958 = vpop.f32.mrb[0].mxu0
        %1959 = vmatprep.mubr.f32.mxu0 0.0
        %1960 = vmatmul.mubr.f32.gmra.mrb[0].mxu0 %v1481
        %v1961 = vpop.f32.mrb[0].mxu0
        %v1962 = vadd.f32 0.0, %v1961
        %v1963 = vpop.f32.mrb[0].mxu0
        %1964 = vmatprep.mubr.f32.mxu0 0.0
        %1965 = vmatmul.mubr.f32.gmra.mrb[0].mxu0 %v1486
        %v1966 = vpop.f32.mrb[0].mxu0
        %v1967 = vadd.f32 0.0, %v1966
        %v1968 = vpop.f32.mrb[0].mxu0
        %1969 = vmatprep.mubr.f32.mxu0 0.0
        %1970 = vmatmul.mubr.f32.gmra.mrb[0].mxu0 %v1491
        %v1971 = vpop.f32.mrb[0].mxu0
        %v1972 = vadd.f32 0.0, %v1971
        %v1973 = vpop.f32.mrb[0].mxu0
        %1974 = vmatprep.mubr.f32.mxu0 0.0
        %1975 = vmatmul.mubr.f32.gmra.mrb[0].mxu0 %v1496
        %v1976 = vpop.f32.mrb[0].mxu0
        %v1977 = vadd.f32 0.0, %v1976
        %v1978 = vpop.f32.mrb[0].mxu0
        %1979 = vmatprep.mubr.f32.mxu0 0.0
        %1980 = vmatmul.mubr.f32.gmra.mrb[0].mxu0 %v1501
        %v1981 = vpop.f32.mrb[0].mxu0
        %v1982 = vadd.f32 0.0, %v1981
        %v1983 = vpop.f32.mrb[0].mxu0
        %1984 = vmatprep.mubr.f32.mxu0 0.0
        %1985 = vmatmul.mubr.f32.gmra.mrb[0].mxu0 %v1506
        %v1986 = vpop.f32.mrb[0].mxu0
        %v1987 = vadd.f32 0.0, %v1986
        %v1988 = vpop.f32.mrb[0].mxu0
        %1989 = vmatprep.mubr.f32.mxu0 0.0
        %1990 = vmatmul.mubr.f32.gmra.mrb[0].mxu0 %v1511
        %v1991 = vpop.f32.mrb[0].mxu0
        %v1992 = vadd.f32 0.0, %v1991
        %v1993 = vpop.f32.mrb[0].mxu0
        %1994 = vmatprep.mubr.f32.mxu0 0.0
        %1995 = vmatmul.mubr.f32.gmra.mrb[0].mxu0 %v1516
        %v1996 = vpop.f32.mrb[0].mxu0
        %v1997 = vadd.f32 0.0, %v1996
        %v1998 = vpop.f32.mrb[0].mxu0
        %1999 = vmatprep.mubr.f32.mxu0 0.0
        %2000 = vmatmul.mubr.f32.gmra.mrb[0].mxu0 %v1521
        %v2001 = vpop.f32.mrb[0].mxu0
        %v2002 = vadd.f32 0.0, %v2001
        %v2003 = vpop.f32.mrb[0].mxu0
        %2004 = vmatprep.mubr.f32.mxu0 0.0
        %2005 = vmatmul.mubr.f32.gmra.mrb[0].mxu0 %v1526
        %v2006 = vpop.f32.mrb[0].mxu0
        %v2007 = vadd.f32 0.0, %v2006
        %v2008 = vpop.f32.mrb[0].mxu0
        %2009 = vdwg.mxu0
        %v2010 = vmul.f32 %v1612, %v1612
        %v2011 = vmul.f32 %v1617, %v1617
        %v2012 = vmul.f32 %v1622, %v1622
        %v2013 = vmul.f32 %v1627, %v1627
        %v2014 = vmul.f32 %v1632, %v1632
        %v2015 = vmul.f32 %v1637, %v1637
        %v2016 = vmul.f32 %v1642, %v1642
        %v2017 = vmul.f32 %v1647, %v1647
        %v2018 = vmul.f32 %v1652, %v1652
        %v2019 = vmul.f32 %v1657, %v1657
        %v2020 = vmul.f32 %v1662, %v1662
        %v2021 = vmul.f32 %v1667, %v1667
        %v2022 = vmul.f32 %v1672, %v1672
        %v2023 = vmul.f32 %v1677, %v1677
        %v2024 = vmul.f32 %v1682, %v1682
        %v2025 = vmul.f32 %v1687, %v1687
        %v2026 = vmul.f32 %v1692, %v1692
        %v2027 = vmul.f32 %v1697, %v1697
        %v2028 = vmul.f32 %v1702, %v1702
        %v2029 = vmul.f32 %v1707, %v1707
        %v2030 = vmul.f32 %v1712, %v1712
        %v2031 = vmul.f32 %v1717, %v1717
        %v2032 = vmul.f32 %v1722, %v1722
        %v2033 = vmul.f32 %v1727, %v1727
        %v2034 = vmul.f32 %v1732, %v1732
        %v2035 = vmul.f32 %v1737, %v1737
        %v2036 = vmul.f32 %v1742, %v1742
        %v2037 = vmul.f32 %v1747, %v1747
        %v2038 = vmul.f32 %v1752, %v1752
        %v2039 = vmul.f32 %v1757, %v1757
        %v2040 = vmul.f32 %v1762, %v1762
        %v2041 = vmul.f32 %v1767, %v1767
        %v2042 = vmul.f32 %v1612, %v1692
        %v2043 = vmul.f32 %v1617, %v1697
        %v2044 = vmul.f32 %v1622, %v1702
        %v2045 = vmul.f32 %v1627, %v1707
        %v2046 = vmul.f32 %v1632, %v1712
        %v2047 = vmul.f32 %v1637, %v1717
        %v2048 = vmul.f32 %v1642, %v1722
        %v2049 = vmul.f32 %v1647, %v1727
        %v2050 = vmul.f32 %v1652, %v1732
        %v2051 = vmul.f32 %v1657, %v1737
        %v2052 = vmul.f32 %v1662, %v1742
        %v2053 = vmul.f32 %v1667, %v1747
        %v2054 = vmul.f32 %v1672, %v1752
        %v2055 = vmul.f32 %v1677, %v1757
        %v2056 = vmul.f32 %v1682, %v1762
        %v2057 = vmul.f32 %v1687, %v1767
        %v2058 = vsub.f32 %v1772, %v2010
        %v2059 = vsub.f32 %v1777, %v2011
        %v2060 = vsub.f32 %v1782, %v2012
        %v2061 = vsub.f32 %v1787, %v2013
        %v2062 = vsub.f32 %v1792, %v2014
        %v2063 = vsub.f32 %v1797, %v2015
        %v2064 = vsub.f32 %v1802, %v2016
        %v2065 = vsub.f32 %v1807, %v2017
        %v2066 = vsub.f32 %v1812, %v2018
        %v2067 = vsub.f32 %v1817, %v2019
        %v2068 = vsub.f32 %v1822, %v2020
        %v2069 = vsub.f32 %v1827, %v2021
        %v2070 = vsub.f32 %v1832, %v2022
        %v2071 = vsub.f32 %v1837, %v2023
        %v2072 = vsub.f32 %v1842, %v2024
        %v2073 = vsub.f32 %v1847, %v2025
        %v2074 = vsub.f32 %v1852, %v2026
        %v2075 = vsub.f32 %v1857, %v2027
        %v2076 = vsub.f32 %v1862, %v2028
        %v2077 = vsub.f32 %v1867, %v2029
        %v2078 = vsub.f32 %v1872, %v2030
        %v2079 = vsub.f32 %v1877, %v2031
        %v2080 = vsub.f32 %v1882, %v2032
        %v2081 = vsub.f32 %v1887, %v2033
        %v2082 = vsub.f32 %v1892, %v2034
        %v2083 = vsub.f32 %v1897, %v2035
        %v2084 = vsub.f32 %v1902, %v2036
        %v2085 = vsub.f32 %v1907, %v2037
        %v2086 = vsub.f32 %v1912, %v2038
        %v2087 = vsub.f32 %v1917, %v2039
        %v2088 = vsub.f32 %v1922, %v2040
        %v2089 = vsub.f32 %v1927, %v2041
        %v2090 = vsub.f32 %v1932, %v2042
        %v2091 = vsub.f32 %v1937, %v2043
        %v2092 = vsub.f32 %v1942, %v2044
        %v2093 = vsub.f32 %v1947, %v2045
        %v2094 = vsub.f32 %v1952, %v2046
        %v2095 = vsub.f32 %v1957, %v2047
        %v2096 = vsub.f32 %v1962, %v2048
        %v2097 = vsub.f32 %v1967, %v2049
        %v2098 = vsub.f32 %v1972, %v2050
        %v2099 = vsub.f32 %v1977, %v2051
        %v2100 = vsub.f32 %v1982, %v2052
        %v2101 = vsub.f32 %v1987, %v2053
        %v2102 = vsub.f32 %v1992, %v2054
        %v2103 = vsub.f32 %v1997, %v2055
        %v2104 = vsub.f32 %v2002, %v2056
        %v2105 = vsub.f32 %v2007, %v2057
        %v2106 = vmul.f32 %v2042, 2.0
        %v2107 = vmul.f32 %v2043, 2.0
        %v2108 = vmul.f32 %v2044, 2.0
        %v2109 = vmul.f32 %v2045, 2.0
        %v2110 = vmul.f32 %v2046, 2.0
        %v2111 = vmul.f32 %v2047, 2.0
        %v2112 = vmul.f32 %v2048, 2.0
        %v2113 = vmul.f32 %v2049, 2.0
        %v2114 = vmul.f32 %v2050, 2.0
        %v2115 = vmul.f32 %v2051, 2.0
        %v2116 = vmul.f32 %v2052, 2.0
        %v2117 = vmul.f32 %v2053, 2.0
        %v2118 = vmul.f32 %v2054, 2.0
        %v2119 = vmul.f32 %v2055, 2.0
        %v2120 = vmul.f32 %v2056, 2.0
        %v2121 = vmul.f32 %v2057, 2.0
        %v2122 = vadd.f32 %v2106, 6.5025
        %v2123 = vadd.f32 %v2107, 6.5025
        %v2124 = vadd.f32 %v2108, 6.5025
        %v2125 = vadd.f32 %v2109, 6.5025
        %v2126 = vadd.f32 %v2110, 6.5025
        %v2127 = vadd.f32 %v2111, 6.5025
        %v2128 = vadd.f32 %v2112, 6.5025
        %v2129 = vadd.f32 %v2113, 6.5025
        %v2130 = vadd.f32 %v2114, 6.5025
        %v2131 = vadd.f32 %v2115, 6.5025
        %v2132 = vadd.f32 %v2116, 6.5025
        %v2133 = vadd.f32 %v2117, 6.5025
        %v2134 = vadd.f32 %v2118, 6.5025
        %v2135 = vadd.f32 %v2119, 6.5025
        %v2136 = vadd.f32 %v2120, 6.5025
        %v2137 = vadd.f32 %v2121, 6.5025
        %v2138 = vmul.f32 %v2090, 2.0
        %v2139 = vmul.f32 %v2091, 2.0
        %v2140 = vmul.f32 %v2092, 2.0
        %v2141 = vmul.f32 %v2093, 2.0
        %v2142 = vmul.f32 %v2094, 2.0
        %v2143 = vmul.f32 %v2095, 2.0
        %v2144 = vmul.f32 %v2096, 2.0
        %v2145 = vmul.f32 %v2097, 2.0
        %v2146 = vmul.f32 %v2098, 2.0
        %v2147 = vmul.f32 %v2099, 2.0
        %v2148 = vmul.f32 %v2100, 2.0
        %v2149 = vmul.f32 %v2101, 2.0
        %v2150 = vmul.f32 %v2102, 2.0
        %v2151 = vmul.f32 %v2103, 2.0
        %v2152 = vmul.f32 %v2104, 2.0
        %v2153 = vmul.f32 %v2105, 2.0
        %v2154 = vadd.f32 %v2138, 58.5225
        %v2155 = vadd.f32 %v2139, 58.5225
        %v2156 = vadd.f32 %v2140, 58.5225
        %v2157 = vadd.f32 %v2141, 58.5225
        %v2158 = vadd.f32 %v2142, 58.5225
        %v2159 = vadd.f32 %v2143, 58.5225
        %v2160 = vadd.f32 %v2144, 58.5225
        %v2161 = vadd.f32 %v2145, 58.5225
        %v2162 = vadd.f32 %v2146, 58.5225
        %v2163 = vadd.f32 %v2147, 58.5225
        %v2164 = vadd.f32 %v2148, 58.5225
        %v2165 = vadd.f32 %v2149, 58.5225
        %v2166 = vadd.f32 %v2150, 58.5225
        %v2167 = vadd.f32 %v2151, 58.5225
        %v2168 = vadd.f32 %v2152, 58.5225
        %v2169 = vadd.f32 %v2153, 58.5225
        %v2170 = vmul.f32 %v2122, %v2154
        %v2171 = vmul.f32 %v2123, %v2155
        %v2172 = vmul.f32 %v2124, %v2156
        %v2173 = vmul.f32 %v2125, %v2157
        %v2174 = vmul.f32 %v2126, %v2158
        %v2175 = vmul.f32 %v2127, %v2159
        %v2176 = vmul.f32 %v2128, %v2160
        %v2177 = vmul.f32 %v2129, %v2161
        %v2178 = vmul.f32 %v2130, %v2162
        %v2179 = vmul.f32 %v2131, %v2163
        %v2180 = vmul.f32 %v2132, %v2164
        %v2181 = vmul.f32 %v2133, %v2165
        %v2182 = vmul.f32 %v2134, %v2166
        %v2183 = vmul.f32 %v2135, %v2167
        %v2184 = vmul.f32 %v2136, %v2168
        %v2185 = vmul.f32 %v2137, %v2169
        %v2186 = vadd.f32 %v2010, %v2026
        %v2187 = vadd.f32 %v2011, %v2027
        %v2188 = vadd.f32 %v2012, %v2028
        %v2189 = vadd.f32 %v2013, %v2029
        %v2190 = vadd.f32 %v2014, %v2030
        %v2191 = vadd.f32 %v2015, %v2031
        %v2192 = vadd.f32 %v2016, %v2032
        %v2193 = vadd.f32 %v2017, %v2033
        %v2194 = vadd.f32 %v2018, %v2034
        %v2195 = vadd.f32 %v2019, %v2035
        %v2196 = vadd.f32 %v2020, %v2036
        %v2197 = vadd.f32 %v2021, %v2037
        %v2198 = vadd.f32 %v2022, %v2038
        %v2199 = vadd.f32 %v2023, %v2039
        %v2200 = vadd.f32 %v2024, %v2040
        %v2201 = vadd.f32 %v2025, %v2041
        %v2202 = vadd.f32 %v2186, 6.5025
        %v2203 = vadd.f32 %v2187, 6.5025
        %v2204 = vadd.f32 %v2188, 6.5025
        %v2205 = vadd.f32 %v2189, 6.5025
        %v2206 = vadd.f32 %v2190, 6.5025
        %v2207 = vadd.f32 %v2191, 6.5025
        %v2208 = vadd.f32 %v2192, 6.5025
        %v2209 = vadd.f32 %v2193, 6.5025
        %v2210 = vadd.f32 %v2194, 6.5025
        %v2211 = vadd.f32 %v2195, 6.5025
        %v2212 = vadd.f32 %v2196, 6.5025
        %v2213 = vadd.f32 %v2197, 6.5025
        %v2214 = vadd.f32 %v2198, 6.5025
        %v2215 = vadd.f32 %v2199, 6.5025
        %v2216 = vadd.f32 %v2200, 6.5025
        %v2217 = vadd.f32 %v2201, 6.5025
        %v2218 = vadd.f32 %v2058, %v2074
        %v2219 = vadd.f32 %v2059, %v2075
        %v2220 = vadd.f32 %v2060, %v2076
        %v2221 = vadd.f32 %v2061, %v2077
        %v2222 = vadd.f32 %v2062, %v2078
        %v2223 = vadd.f32 %v2063, %v2079
        %v2224 = vadd.f32 %v2064, %v2080
        %v2225 = vadd.f32 %v2065, %v2081
        %v2226 = vadd.f32 %v2066, %v2082
        %v2227 = vadd.f32 %v2067, %v2083
        %v2228 = vadd.f32 %v2068, %v2084
        %v2229 = vadd.f32 %v2069, %v2085
        %v2230 = vadd.f32 %v2070, %v2086
        %v2231 = vadd.f32 %v2071, %v2087
        %v2232 = vadd.f32 %v2072, %v2088
        %v2233 = vadd.f32 %v2073, %v2089
        %v2234 = vadd.f32 %v2218, 58.5225
        %v2235 = vadd.f32 %v2219, 58.5225
        %v2236 = vadd.f32 %v2220, 58.5225
        %v2237 = vadd.f32 %v2221, 58.5225
        %v2238 = vadd.f32 %v2222, 58.5225
        %v2239 = vadd.f32 %v2223, 58.5225
        %v2240 = vadd.f32 %v2224, 58.5225
        %v2241 = vadd.f32 %v2225, 58.5225
        %v2242 = vadd.f32 %v2226, 58.5225
        %v2243 = vadd.f32 %v2227, 58.5225
        %v2244 = vadd.f32 %v2228, 58.5225
        %v2245 = vadd.f32 %v2229, 58.5225
        %v2246 = vadd.f32 %v2230, 58.5225
        %v2247 = vadd.f32 %v2231, 58.5225
        %v2248 = vadd.f32 %v2232, 58.5225
        %v2249 = vadd.f32 %v2233, 58.5225
        %v2250 = vmul.f32 %v2202, %v2234
        %v2251 = vmul.f32 %v2203, %v2235
        %v2252 = vmul.f32 %v2204, %v2236
        %v2253 = vmul.f32 %v2205, %v2237
        %v2254 = vmul.f32 %v2206, %v2238
        %v2255 = vmul.f32 %v2207, %v2239
        %v2256 = vmul.f32 %v2208, %v2240
        %v2257 = vmul.f32 %v2209, %v2241
        %v2258 = vmul.f32 %v2210, %v2242
        %v2259 = vmul.f32 %v2211, %v2243
        %v2260 = vmul.f32 %v2212, %v2244
        %v2261 = vmul.f32 %v2213, %v2245
        %v2262 = vmul.f32 %v2214, %v2246
        %v2263 = vmul.f32 %v2215, %v2247
        %v2264 = vmul.f32 %v2216, %v2248
        %v2265 = vmul.f32 %v2217, %v2249
        %v2266 = vrcp.pop %v2250
        %v2267 = vrcp.pop %v2251
        %v2268 = vrcp.pop %v2252
        %v2269 = vrcp.pop %v2253
        %v2270 = vrcp.pop %v2254
        %v2271 = vrcp.pop %v2255
        %v2272 = vrcp.pop %v2256
        %v2273 = vrcp.pop %v2257
        %v2274 = vrcp.pop %v2258
        %v2275 = vrcp.pop %v2259
        %v2276 = vrcp.pop %v2260
        %v2277 = vrcp.pop %v2261
        %v2278 = vrcp.pop %v2262
        %v2279 = vrcp.pop %v2263
        %v2280 = vrcp.pop %v2264
        %v2281 = vrcp.pop %v2265
        %v2282 = vmul.f32 %v2170, %v2266
        %v2283 = vmul.f32 %v2171, %v2267
        %v2284 = vmul.f32 %v2172, %v2268
        %v2285 = vmul.f32 %v2173, %v2269
        %v2286 = vmul.f32 %v2174, %v2270
        %v2287 = vmul.f32 %v2175, %v2271
        %v2288 = vmul.f32 %v2176, %v2272
        %v2289 = vmul.f32 %v2177, %v2273
        %v2290 = vmul.f32 %v2178, %v2274
        %v2291 = vmul.f32 %v2179, %v2275
        %v2292 = vmul.f32 %v2180, %v2276
        %v2293 = vmul.f32 %v2181, %v2277
        %v2294 = vmul.f32 %v2182, %v2278
        %v2295 = vmul.f32 %v2183, %v2279
        %v2296 = vmul.f32 %v2184, %v2280
        %v2297 = vmul.f32 %v2185, %v2281
        %v2298 = vmul.f32 %v2282, %v795
        %v2299 = vmul.f32 %v2283, %v796
        %v2300 = vmul.f32 %v2284, %v797
        %v2301 = vmul.f32 %v2285, %v798
        %v2302 = vmul.f32 %v2286, %v799
        %v2303 = vmul.f32 %v2287, %v800
        %v2304 = vmul.f32 %v2288, %v801
        %v2305 = vmul.f32 %v2289, %v802
        %v2306 = vmul.f32 %v2290, %v803
        %v2307 = vmul.f32 %v2291, %v804
        %v2308 = vmul.f32 %v2292, %v805
        %v2309 = vmul.f32 %v2293, %v806
        %v2310 = vmul.f32 %v2294, %v807
        %v2311 = vmul.f32 %v2295, %v808
        %v2312 = vmul.f32 %v2296, %v809
        %v2313 = vmul.f32 %v2297, %v810
        %v2314 = vadd.f32 %v2298, %v2299
        %v2315 = vadd.f32 %v2314, %v2300
        %v2316 = vadd.f32 %v2315, %v2301
        %v2317 = vadd.f32 %v2316, %v2302
        %v2318 = vadd.f32 %v2317, %v2303
        %v2319 = vadd.f32 %v2318, %v2304
        %v2320 = vadd.f32 %v2319, %v2305
        %v2321 = vadd.f32 %v2320, %v2306
        %v2322 = vadd.f32 %v2321, %v2307
        %v2323 = vadd.f32 %v2322, %v2308
        %v2324 = vadd.f32 %v2323, %v2309
        %v2325 = vadd.f32 %v2324, %v2310
        %v2326 = vadd.f32 %v2325, %v2311
        %v2327 = vadd.f32 %v2326, %v2312
        %v2328 = vadd.f32 %v2327, %v2313
        %2329 = vadd.xlane.f32.xlu0 %v2328
        %v2330 = vpop.xlane.xlu0 %2329
        %v2331 = vrot.slane %v2330, 4
        %v2332 = vadd.f32 %v2330, %v2331
        %v2333 = vrot.slane %v2332, 2
        %v2334 = vadd.f32 %v2332, %v2333
        %v2335 = vrot.slane %v2334, 1
        %v2336 = vadd.f32 %v2334, %v2335
        %s2337 = vtos %v2336
        %v2338 = vadd.f32 %v795, %v796
        %v2339 = vadd.f32 %v2338, %v797
        %v2340 = vadd.f32 %v2339, %v798
        %v2341 = vadd.f32 %v2340, %v799
        %v2342 = vadd.f32 %v2341, %v800
        %v2343 = vadd.f32 %v2342, %v801
        %v2344 = vadd.f32 %v2343, %v802
        %v2345 = vadd.f32 %v2344, %v803
        %v2346 = vadd.f32 %v2345, %v804
        %v2347 = vadd.f32 %v2346, %v805
        %v2348 = vadd.f32 %v2347, %v806
        %v2349 = vadd.f32 %v2348, %v807
        %v2350 = vadd.f32 %v2349, %v808
        %v2351 = vadd.f32 %v2350, %v809
        %v2352 = vadd.f32 %v2351, %v810
        %2353 = vadd.xlane.f32.xlu0 %v2352
        %v2354 = vpop.xlane.xlu0 %2353
        %v2355 = vrot.slane %v2354, 4
        %v2356 = vadd.f32 %v2354, %v2355
        %v2357 = vrot.slane %v2356, 2
        %v2358 = vadd.f32 %v2356, %v2357
        %v2359 = vrot.slane %v2358, 1
        %v2360 = vadd.f32 %v2358, %v2359
        %s2361 = vtos %v2360
        %v2362 = vlaneseq
        %v2363 = vand.u32 %v2362, 127
        %vm2364 = vcmp.eq.s32.totalorder %v2363, 0
        %vm2365 = vcmp.eq.s32.totalorder %v2363, 1
        %v2366 = vstv %s2361
        %v2367 = vsel %vm2365, %v2366, 0.0
        %v2368 = vstv %s2337
        %v2369 = vsel %vm2364, %v2368, %v2367
        %2370 = vst [vmem:[%s355] sm:$0x1] %v2369
        %p2371 = scmp.lt.s32.totalorder %s20, 1
        %s2372 = scalar_select %p2371, %s20, 1
        %s2373 = scalar_lea.vmem %s8, %s2372
        // Predicated region
        $region57: #{loss_fn.3} parent=51 // pred_check
          %p2374 = pneg %p221
        $region58: #{loss_fn.3} parent=51 // pred_check_branch
          %2376 = sbr.rel (%p2374) target = $region60
        $region59: #{loss_fn.3} parent=51 // pred_region
          _
        $region60: #{loss_fn.3} parent=51 // pred_fallthru
          _
      $region52: #{loss_fn.3} parent=5 // pred_fallthru
        _
      %p2377 = scmp.le.s32.totalorder 2, %s15
      // Predicated region
      $region61: #{loss_fn.3} parent=5 // pred_check
        %p2378 = pneg %p2377
      $region62: #{loss_fn.3} parent=5 // pred_check_branch
        %2380 = sbr.rel (%p2378) target = $region64
      $region63: #{loss_fn.3} parent=5 // pred_region
        %s2381 = ssub.s32 %s15, 2
        // Predicated region
        $region65: #{loss_fn.3} parent=63 // pred_check
          %p2382 = pneg %p227
        $region66: #{loss_fn.3} parent=63 // pred_check_branch
          %2384 = sbr.rel (%p2382) target = $region68
        $region67: #{loss_fn.3} parent=63 // pred_region
          %p2385 = scmp.lt.s32.totalorder %s21, 1
          %s2386 = scalar_select %p2385, %s21, 1
          %s2387 = scalar_lea.vmem %s8, %s2386
        $region68: #{loss_fn.3} parent=63 // pred_fallthru
          _
      $region64: #{loss_fn.3} parent=5 // pred_fallthru
        _
    $region6: #{loss_fn.3} parent=1 // loop_footer
      %s19 = sadd.s32 1, %s15
    $region7: #{loss_fn.3} parent=1 // loop_footer_branch
      %14 = sbr.rel target = $region3
    $region8: #{loss_fn.3} parent=1 // loop_exit
      _
    %2388 = vsyncpa [#allocation3], 1
    %s2389 = scalar_lea.sflag [#allocation3], 1
    %2390 = vsyncpa %s2389, 1

</llo_original>
